<compile_context>
chip_gen: v6e
topology: v6e:2x2x1
jax: 0.10.0
libtpu: 0.0.40
codegen_flags: <defaults>
</compile_context>

<pallas_src>
import functools
import math

import jax
import jax.numpy as jnp
from jax.experimental import pallas as pl
from jax.experimental.pallas import tpu as pltpu


# ----------------------------------------------------------------------------
# Fused whole-network kernel (one grid step == one batch element, all layers)
# ----------------------------------------------------------------------------
def _gnn_kernel(d0_ref, d1_ref,
                wq_s, wkv_s, wm_s, w1_s, w2_s, vc_s, v2_s,     # CrossAttn_d2s stacks
                wv_d, wm_d, w1_d, w2_d, vc_d, v2_d,            # CrossLin_s2d stacks
                o0_ref, o1_ref,
                msg_sc,                                        # (C, N0) VMEM scratch
                *, num_layers, num_heads):
    f32 = jnp.float32
    x0 = d0_ref[0].astype(f32)                 # (C, N0) channel-major
    x1 = d1_ref[0].astype(f32)                 # (C, N1)
    C, N0 = x0.shape
    N1 = x1.shape[1]
    d = C // num_heads
    scale = 1.0 / math.sqrt(d)

    def dot(a, b):
        return jnp.dot(a, b, preferred_element_type=f32)

    def ln_ch(y, g, b, eps=1e-5):
        # LayerNorm over channels (axis 0 in channel-major), biased var like torch.
        mu = jnp.mean(y, axis=0, keepdims=True)
        var = jnp.mean((y - mu) ** 2, axis=0, keepdims=True)
        return (y - mu) * jax.lax.rsqrt(var + eps) * g + b

    def merge_mlp_residual(x, msg, wm, bm, w1, b1, w2, b2, g1, be1, g2, be2):
        m = ln_ch(dot(wm, msg) + bm, g1, be1)
        xm = jnp.concatenate([x, m], axis=0)            # (2C, N) sublane concat
        h = jnp.maximum(dot(w1, xm) + b1, 0.0)
        h = ln_ch(dot(w2, h) + b2, g2, be2)
        return x + h

    for l in range(num_layers):                          # static unroll; L is small
        # ---------------- CrossAttn_d2s: update stream 0 from stream 1 ----------
        vc, v2 = vc_s[l], v2_s[l]
        bq, bm, b2 = vc[:, 0:1], vc[:, 1:2], vc[:, 2:3]
        g1, be1, g2, be2 = vc[:, 3:4], vc[:, 4:5], vc[:, 5:6], vc[:, 6:7]
        bkv, b1 = v2[:, 0:1], v2[:, 1:2]

        q = dot(wq_s[l], x0) + bq                        # (C, N0)
        kv = dot(wkv_s[l], x1) + bkv                     # (2C, N1): packed K|V
        k, v = kv[:C], kv[C:]

        for h in range(num_heads):                       # heads are sublane slices
            sl = slice(h * d, (h + 1) * d)
            # scores (N0, N1) = qh^T @ kh  (transposed-LHS contraction)
            s = jax.lax.dot_general(q[sl], k[sl], (((0,), (0,)), ((), ())),
                                    preferred_element_type=f32) * scale
            s = s - jnp.max(s, axis=-1, keepdims=True)
            p = jnp.exp(s)
            p = p / jnp.sum(p, axis=-1, keepdims=True)   # exact division (parity)
            # head output (d, N0) = vh @ p^T, written into aligned sublane rows
            msg_sc[sl, :] = jax.lax.dot_general(v[sl], p, (((1,), (1,)), ((), ())),
                                                preferred_element_type=f32)

        x0_new = merge_mlp_residual(x0, msg_sc[...], wm_s[l], bm, w1_s[l], b1,
                                    w2_s[l], b2, g1, be1, g2, be2)

        # ---------------- CrossLin_s2d: update stream 1 from OLD stream 0 --------
        # TODO(synk): exact window-based s2d aggregation not in the prompt;
        # approximated with a mean-pooled linear cross message.
        vc, v2 = vc_d[l], v2_d[l]
        bv, bmd, b2d = vc[:, 0:1], vc[:, 1:2], vc[:, 2:3]
        g1d, be1d, g2d, be2d = vc[:, 3:4], vc[:, 4:5], vc[:, 5:6], vc[:, 6:7]
        b1d = v2[:, 0:1]

        vv = dot(wv_d[l], x0) + bv                       # uses OLD x0 (C, N0)
        msg1 = jnp.broadcast_to(jnp.mean(vv, axis=1, keepdims=True), (C, N1))
        x1 = merge_mlp_residual(x1, msg1, wm_d[l], bmd, w1_d[l], b1d,
                                w2_d[l], b2d, g1d, be1d, g2d, be2d)
        x0 = x0_new

    o0_ref[0] = x0.astype(o0_ref.dtype)
    o1_ref[0] = x1.astype(o1_ref.dtype)


# ----------------------------------------------------------------------------
# Single pallas_call wrapper (whole AttentionalGNN_fine forward)
# ----------------------------------------------------------------------------
_WEIGHT_NAMES = ["wq_s", "wkv_s", "wm_s", "w1_s", "w2_s", "vc_s", "v2_s",
                 "wv_d", "wm_d", "w1_d", "w2_d", "vc_d", "v2_d"]


def attentional_gnn_fine(params, desc0, desc1, *, num_layers, num_heads=4):
    """desc0: (B, C, N0), desc1: (B, C, N1) -> ((B, C, N0), (B, C, N1))."""
    B, C, N0 = desc0.shape
    N1 = desc1.shape[2]
    ws = [params[n] for n in _WEIGHT_NAMES]

    def wspec(w):
        nd = w.ndim
        # Constant block index -> weight stack DMA'd once, resident across the grid.
        return pl.BlockSpec(w.shape, lambda b, _nd=nd: (0,) * _nd)

    return pl.pallas_call(
        functools.partial(_gnn_kernel, num_layers=num_layers, num_heads=num_heads),
        out_shape=(jax.ShapeDtypeStruct((B, C, N0), desc0.dtype),
                   jax.ShapeDtypeStruct((B, C, N1), desc1.dtype)),
        grid=(B,),
        in_specs=[pl.BlockSpec((1, C, N0), lambda b: (b, 0, 0)),
                  pl.BlockSpec((1, C, N1), lambda b: (b, 0, 0))]
                 + [wspec(w) for w in ws],
        out_specs=(pl.BlockSpec((1, C, N0), lambda b: (b, 0, 0)),
                   pl.BlockSpec((1, C, N1), lambda b: (b, 0, 0))),
        scratch_shapes=[pltpu.VMEM((C, N0), jnp.float32)],
        compiler_params=pltpu.CompilerParams(
            dimension_semantics=("parallel",)),       # B>=2 -> both v7x TCs used
    )(desc0, desc1, *ws)


# ----------------------------------------------------------------------------
# Deterministic synthetic parameters (stacked per-layer, pre-packed)
# Weight layout is (out, in) so y_cm = W @ x_cm + b in channel-major.
# vc_* columns: [b_proj(q/v), b_merge, b_mlp2, ln1_g, ln1_b, ln2_g, ln2_b]
# v2_s columns: [b_kv, b_mlp1]; v2_d column: [b_mlp1]
# ----------------------------------------------------------------------------
def _w(key, fout, fin):
    return jax.random.normal(key, (fout, fin), jnp.float32) / jnp.sqrt(fin)


def _b(key, n):
    return 0.1 * jax.random.normal(key, (n, 1), jnp.float32)


def init_params(key, dim, num_layers):
    C = dim
    ones = jnp.ones((C, 1), jnp.float32)
    zeros = jnp.zeros((C, 1), jnp.float32)
    s_list, d_list = [], []
    for lk in jax.random.split(key, num_layers):
        k = jax.random.split(lk, 18)
        s_list.append(dict(
            wq=_w(k[0], C, C), wkv=_w(k[1], 2 * C, C), wm=_w(k[2], C, C),
            w1=_w(k[3], 2 * C, 2 * C), w2=_w(k[4], C, 2 * C),
            vc=jnp.concatenate([_b(k[5], C), _b(k[6], C), _b(k[7], C),
                                ones, zeros, ones, zeros], axis=1),
            v2=jnp.concatenate([_b(k[8], 2 * C), _b(k[9], 2 * C)], axis=1)))
        d_list.append(dict(
            wv=_w(k[10], C, C), wm=_w(k[11], C, C),
            w1=_w(k[12], 2 * C, 2 * C), w2=_w(k[13], C, 2 * C),
            vc=jnp.concatenate([_b(k[14], C), _b(k[15], C), _b(k[16], C),
                                ones, zeros, ones, zeros], axis=1),
            v2=_b(k[17], 2 * C)))

    def stk(lst, name):
        return jnp.stack([p[name] for p in lst], axis=0)

    return {"wq_s": stk(s_list, "wq"), "wkv_s": stk(s_list, "wkv"),
            "wm_s": stk(s_list, "wm"), "w1_s": stk(s_list, "w1"),
            "w2_s": stk(s_list, "w2"), "vc_s": stk(s_list, "vc"),
            "v2_s": stk(s_list, "v2"),
            "wv_d": stk(d_list, "wv"), "wm_d": stk(d_list, "wm"),
            "w1_d": stk(d_list, "w1"), "w2_d": stk(d_list, "w2"),
            "vc_d": stk(d_list, "vc"), "v2_d": stk(d_list, "v2")}


# ----------------------------------------------------------------------------
# Pure-JAX reference (same reconstructed math) for a sanity check
# ----------------------------------------------------------------------------
def _reference_forward(params, desc0, desc1, *, num_layers, num_heads):
    C = desc0.shape[1]
    d = C // num_heads
    scale = 1.0 / math.sqrt(d)
    hi = jax.lax.Precision.HIGHEST

    def ln(y, g, b, eps=1e-5):
        mu = jnp.mean(y, axis=1, keepdims=True)
        var = jnp.mean((y - mu) ** 2, axis=1, keepdims=True)
        return (y - mu) / jnp.sqrt(var + eps) * g + b

    def mm(w, x):
        return jnp.einsum("oc,bcn->bon", w, x, precision=hi)

    def merge_mlp_res(x, msg, wm, bm, w1, b1, w2, b2, g1, be1, g2, be2):
        m = ln(mm(wm, msg) + bm, g1, be1)
        xm = jnp.concatenate([x, m], axis=1)
        h = jax.nn.relu(mm(w1, xm) + b1)
        h = ln(mm(w2, h) + b2, g2, be2)
        return x + h

    x0, x1 = desc0, desc1
    for l in range(num_layers):
        vc, v2 = params["vc_s"][l], params["v2_s"][l]
        bq, bm, b2 = vc[:, 0:1], vc[:, 1:2], vc[:, 2:3]
        g1, be1, g2, be2 = vc[:, 3:4], vc[:, 4:5], vc[:, 5:6], vc[:, 6:7]
        bkv, b1 = v2[:, 0:1], v2[:, 1:2]
        q = mm(params["wq_s"][l], x0) + bq
        kv = mm(params["wkv_s"][l], x1) + bkv
        k, v = kv[:, :C], kv[:, C:]
        B = q.shape[0]
        qh = q.reshape(B, num_heads, d, -1)
        kh = k.reshape(B, num_heads, d, -1)
        vh = v.reshape(B, num_heads, d, -1)
        s = jnp.einsum("bhdq,bhdk->bhqk", qh, kh, precision=hi) * scale
        p = jax.nn.softmax(s, axis=-1)
        msg = jnp.einsum("bhdk,bhqk->bhdq", vh, p, precision=hi).reshape(B, C, -1)
        x0n = merge_mlp_res(x0, msg, params["wm_s"][l], bm, params["w1_s"][l], b1,
                            params["w2_s"][l], b2, g1, be1, g2, be2)

        vc, v2 = params["vc_d"][l], params["v2_d"][l]
        bv, bmd, b2d = vc[:, 0:1], vc[:, 1:2], vc[:, 2:3]
        g1d, be1d, g2d, be2d = vc[:, 3:4], vc[:, 4:5], vc[:, 5:6], vc[:, 6:7]
        b1d = v2[:, 0:1]
        vv = mm(params["wv_d"][l], x0) + bv
        msg1 = jnp.broadcast_to(jnp.mean(vv, axis=2, keepdims=True),
                                (B, C, x1.shape[2]))
        x1 = merge_mlp_res(x1, msg1, params["wm_d"][l], bmd, params["w1_d"][l], b1d,
                           params["w2_d"][l], b2d, g1d, be1d, g2d, be2d)
        x0 = x0n
    return x0, x1


# ----------------------------------------------------------------------------
if __name__ == "__main__":
    B, C, N0, N1 = 2, 32, 16, 8
    num_layers, num_heads = 2, 4

    key = jax.random.PRNGKey(0)
    k0, k1, kp = jax.random.split(key, 3)
    desc0 = jax.random.normal(k0, (B, C, N0), jnp.float32)
    desc1 = jax.random.normal(k1, (B, C, N1), jnp.float32)
    params = init_params(kp, C, num_layers)

    fwd = jax.jit(functools.partial(attentional_gnn_fine,
                                    num_layers=num_layers, num_heads=num_heads))
    out0, out1 = fwd(params, desc0, desc1)
    jax.block_until_ready((out0, out1))

    assert out0.shape == (B, C, N0) and out1.shape == (B, C, N1)
    assert bool(jnp.all(jnp.isfinite(out0))) and bool(jnp.all(jnp.isfinite(out1)))

    ref0, ref1 = _reference_forward(params, desc0, desc1,
                                    num_layers=num_layers, num_heads=num_heads)
    assert bool(jnp.allclose(out0, ref0, atol=5e-2, rtol=5e-2))
    assert bool(jnp.allclose(out1, ref1, atol=5e-2, rtol=5e-2))

    print("KERNEL_OK")
</pallas_src>

<mosaic_0001>
module attributes {stable_mosaic.version = 11 : i64} {
  func.func @_gnn_kernel(%arg0: i32, %arg1: memref<1x32x16xf32, #tpu.memory_space<vmem>>, %arg2: memref<1x32x8xf32, #tpu.memory_space<vmem>>, %arg3: memref<2x32x32xf32, #tpu.memory_space<vmem>>, %arg4: memref<2x64x32xf32, #tpu.memory_space<vmem>>, %arg5: memref<2x32x32xf32, #tpu.memory_space<vmem>>, %arg6: memref<2x64x64xf32, #tpu.memory_space<vmem>>, %arg7: memref<2x32x64xf32, #tpu.memory_space<vmem>>, %arg8: memref<2x32x7xf32, #tpu.memory_space<vmem>>, %arg9: memref<2x64x2xf32, #tpu.memory_space<vmem>>, %arg10: memref<2x32x32xf32, #tpu.memory_space<vmem>>, %arg11: memref<2x32x32xf32, #tpu.memory_space<vmem>>, %arg12: memref<2x64x64xf32, #tpu.memory_space<vmem>>, %arg13: memref<2x32x64xf32, #tpu.memory_space<vmem>>, %arg14: memref<2x32x7xf32, #tpu.memory_space<vmem>>, %arg15: memref<2x64x1xf32, #tpu.memory_space<vmem>>, %arg16: memref<1x32x16xf32, #tpu.memory_space<vmem>>, %arg17: memref<1x32x8xf32, #tpu.memory_space<vmem>>, %arg18: memref<32x16xf32, #tpu.memory_space<vmem>>) attributes {dimension_semantics = [#tpu.dimension_semantics<parallel>], iteration_bounds = array<i64: 2>, scalar_prefetch = 0 : i64, scratch_operands = 1 : i64, tpu.core_type = #tpu.core_type<tc>, window_params = [{transform_indices = @transform_0, window_bounds = array<i64: 1, 32, 16>}, {transform_indices = @transform_1, window_bounds = array<i64: 1, 32, 8>}, {pipeline_mode = #tpu.pipeline_mode<synchronous>, transform_indices = @transform_2, window_bounds = array<i64: 2, 32, 32>}, {pipeline_mode = #tpu.pipeline_mode<synchronous>, transform_indices = @transform_3, window_bounds = array<i64: 2, 64, 32>}, {pipeline_mode = #tpu.pipeline_mode<synchronous>, transform_indices = @transform_4, window_bounds = array<i64: 2, 32, 32>}, {pipeline_mode = #tpu.pipeline_mode<synchronous>, transform_indices = @transform_5, window_bounds = array<i64: 2, 64, 64>}, {pipeline_mode = #tpu.pipeline_mode<synchronous>, transform_indices = @transform_6, window_bounds = array<i64: 2, 32, 64>}, {pipeline_mode = #tpu.pipeline_mode<synchronous>, transform_indices = @transform_7, window_bounds = array<i64: 2, 32, 7>}, {pipeline_mode = #tpu.pipeline_mode<synchronous>, transform_indices = @transform_8, window_bounds = array<i64: 2, 64, 2>}, {pipeline_mode = #tpu.pipeline_mode<synchronous>, transform_indices = @transform_9, window_bounds = array<i64: 2, 32, 32>}, {pipeline_mode = #tpu.pipeline_mode<synchronous>, transform_indices = @transform_10, window_bounds = array<i64: 2, 32, 32>}, {pipeline_mode = #tpu.pipeline_mode<synchronous>, transform_indices = @transform_11, window_bounds = array<i64: 2, 64, 64>}, {pipeline_mode = #tpu.pipeline_mode<synchronous>, transform_indices = @transform_12, window_bounds = array<i64: 2, 32, 64>}, {pipeline_mode = #tpu.pipeline_mode<synchronous>, transform_indices = @transform_13, window_bounds = array<i64: 2, 32, 7>}, {pipeline_mode = #tpu.pipeline_mode<synchronous>, transform_indices = @transform_14, window_bounds = array<i64: 2, 64, 1>}, {transform_indices = @transform_15, window_bounds = array<i64: 1, 32, 16>}, {transform_indices = @transform_16, window_bounds = array<i64: 1, 32, 8>}]} {
    %c0 = arith.constant 0 : index
    %c0_0 = arith.constant 0 : index
    %c0_1 = arith.constant 0 : index
    %0 = vector.load %arg1[%c0, %c0_0, %c0_1] : memref<1x32x16xf32, #tpu.memory_space<vmem>>, vector<1x32x16xf32>
    %1 = vector.shape_cast %0 : vector<1x32x16xf32> to vector<32x16xf32>
    %c0_2 = arith.constant 0 : index
    %c0_3 = arith.constant 0 : index
    %c0_4 = arith.constant 0 : index
    %2 = vector.load %arg2[%c0_2, %c0_3, %c0_4] : memref<1x32x8xf32, #tpu.memory_space<vmem>>, vector<1x32x8xf32>
    %3 = vector.shape_cast %2 : vector<1x32x8xf32> to vector<32x8xf32>
    %c0_5 = arith.constant 0 : index
    %c0_6 = arith.constant 0 : index
    %c0_7 = arith.constant 0 : index
    %4 = vector.load %arg8[%c0_5, %c0_6, %c0_7] : memref<2x32x7xf32, #tpu.memory_space<vmem>>, vector<1x32x7xf32>
    %5 = vector.shape_cast %4 : vector<1x32x7xf32> to vector<32x7xf32>
    %c0_8 = arith.constant 0 : index
    %c0_9 = arith.constant 0 : index
    %c0_10 = arith.constant 0 : index
    %6 = vector.load %arg9[%c0_8, %c0_9, %c0_10] : memref<2x64x2xf32, #tpu.memory_space<vmem>>, vector<1x64x2xf32>
    %7 = vector.shape_cast %6 : vector<1x64x2xf32> to vector<64x2xf32>
    %8 = vector.extract_strided_slice %5 {offsets = [0, 0], sizes = [32, 1], strides = [1, 1]} : vector<32x7xf32> to vector<32x1xf32>
    %9 = vector.extract_strided_slice %5 {offsets = [0, 1], sizes = [32, 1], strides = [1, 1]} : vector<32x7xf32> to vector<32x1xf32>
    %10 = vector.extract_strided_slice %5 {offsets = [0, 2], sizes = [32, 1], strides = [1, 1]} : vector<32x7xf32> to vector<32x1xf32>
    %11 = vector.extract_strided_slice %5 {offsets = [0, 3], sizes = [32, 1], strides = [1, 1]} : vector<32x7xf32> to vector<32x1xf32>
    %12 = vector.extract_strided_slice %5 {offsets = [0, 4], sizes = [32, 1], strides = [1, 1]} : vector<32x7xf32> to vector<32x1xf32>
    %13 = vector.extract_strided_slice %5 {offsets = [0, 5], sizes = [32, 1], strides = [1, 1]} : vector<32x7xf32> to vector<32x1xf32>
    %14 = vector.extract_strided_slice %5 {offsets = [0, 6], sizes = [32, 1], strides = [1, 1]} : vector<32x7xf32> to vector<32x1xf32>
    %15 = vector.extract_strided_slice %7 {offsets = [0, 0], sizes = [64, 1], strides = [1, 1]} : vector<64x2xf32> to vector<64x1xf32>
    %16 = vector.extract_strided_slice %7 {offsets = [0, 1], sizes = [64, 1], strides = [1, 1]} : vector<64x2xf32> to vector<64x1xf32>
    %c0_11 = arith.constant 0 : index
    %c0_12 = arith.constant 0 : index
    %c0_13 = arith.constant 0 : index
    %17 = vector.load %arg3[%c0_11, %c0_12, %c0_13] : memref<2x32x32xf32, #tpu.memory_space<vmem>>, vector<1x32x32xf32>
    %18 = vector.shape_cast %17 : vector<1x32x32xf32> to vector<32x32xf32>
    %cst = arith.constant dense<0.000000e+00> : vector<32x16xf32>
    %19 = tpu.matmul %18, %1, %cst {dimension_numbers = #tpu.dot_dimension_numbers<[1], [0], [0], [1], [0, 0, 1, 1], [], []>} : vector<32x32xf32>, vector<32x16xf32>, vector<32x16xf32> -> vector<32x16xf32>
    %20 = vector.broadcast %8 : vector<32x1xf32> to vector<32x16xf32>
    %21 = arith.addf %19, %20 : vector<32x16xf32>
    %c0_14 = arith.constant 0 : index
    %c0_15 = arith.constant 0 : index
    %c0_16 = arith.constant 0 : index
    %22 = vector.load %arg4[%c0_14, %c0_15, %c0_16] : memref<2x64x32xf32, #tpu.memory_space<vmem>>, vector<1x64x32xf32>
    %23 = vector.shape_cast %22 : vector<1x64x32xf32> to vector<64x32xf32>
    %cst_17 = arith.constant dense<0.000000e+00> : vector<64x8xf32>
    %24 = tpu.matmul %23, %3, %cst_17 {dimension_numbers = #tpu.dot_dimension_numbers<[1], [0], [0], [1], [0, 0, 1, 1], [], []>} : vector<64x32xf32>, vector<32x8xf32>, vector<64x8xf32> -> vector<64x8xf32>
    %25 = vector.broadcast %15 : vector<64x1xf32> to vector<64x8xf32>
    %26 = arith.addf %24, %25 : vector<64x8xf32>
    %27 = vector.extract_strided_slice %26 {offsets = [0, 0], sizes = [32, 8], strides = [1, 1]} : vector<64x8xf32> to vector<32x8xf32>
    %28 = vector.extract_strided_slice %26 {offsets = [32, 0], sizes = [32, 8], strides = [1, 1]} : vector<64x8xf32> to vector<32x8xf32>
    %29 = vector.extract_strided_slice %21 {offsets = [0, 0], sizes = [8, 16], strides = [1, 1]} : vector<32x16xf32> to vector<8x16xf32>
    %30 = vector.extract_strided_slice %27 {offsets = [0, 0], sizes = [8, 8], strides = [1, 1]} : vector<32x8xf32> to vector<8x8xf32>
    %cst_18 = arith.constant dense<0.000000e+00> : vector<16x8xf32>
    %31 = tpu.matmul %29, %30, %cst_18 {dimension_numbers = #tpu.dot_dimension_numbers<[0], [0], [1], [1], [0, 1, 1, 1], [], []>} : vector<8x16xf32>, vector<8x8xf32>, vector<16x8xf32> -> vector<16x8xf32>
    %cst_19 = arith.constant 0.353553385 : f32
    %32 = vector.broadcast %cst_19 : f32 to vector<16x8xf32>
    %33 = arith.mulf %31, %32 : vector<16x8xf32>
    %cst_20 = arith.constant dense<0xFF800000> : vector<16xf32>
    %34 = vector.multi_reduction <maximumf>, %33, %cst_20 [1] : vector<16x8xf32> to vector<16xf32>
    %35 = vector.shape_cast %34 : vector<16xf32> to vector<16x1xf32>
    %36 = vector.broadcast %35 : vector<16x1xf32> to vector<16x8xf32>
    %37 = arith.subf %33, %36 : vector<16x8xf32>
    %38 = math.exp %37 : vector<16x8xf32>
    %cst_21 = arith.constant dense<0.000000e+00> : vector<16xf32>
    %39 = vector.multi_reduction <add>, %38, %cst_21 [1] : vector<16x8xf32> to vector<16xf32>
    %40 = vector.shape_cast %39 : vector<16xf32> to vector<16x1xf32>
    %41 = vector.broadcast %40 : vector<16x1xf32> to vector<16x8xf32>
    %42 = arith.divf %38, %41 : vector<16x8xf32>
    %43 = vector.extract_strided_slice %28 {offsets = [0, 0], sizes = [8, 8], strides = [1, 1]} : vector<32x8xf32> to vector<8x8xf32>
    %cst_22 = arith.constant dense<0.000000e+00> : vector<8x16xf32>
    %44 = tpu.matmul %43, %42, %cst_22 {dimension_numbers = #tpu.dot_dimension_numbers<[1], [1], [0], [0], [0, 0, 1, 0], [], []>} : vector<8x8xf32>, vector<16x8xf32>, vector<8x16xf32> -> vector<8x16xf32>
    %c0_23 = arith.constant 0 : index
    %c0_24 = arith.constant 0 : index
    %45 = vector.load %arg18[%c0_23, %c0_24] : memref<32x16xf32, #tpu.memory_space<vmem>>, vector<8x16xf32>
    tpu.vector_store %arg18[%c0_23, %c0_24], %44 {strides = array<i32>} : memref<32x16xf32, #tpu.memory_space<vmem>>, vector<8x16xf32>,
    %46 = vector.extract_strided_slice %21 {offsets = [8, 0], sizes = [8, 16], strides = [1, 1]} : vector<32x16xf32> to vector<8x16xf32>
    %47 = vector.extract_strided_slice %27 {offsets = [8, 0], sizes = [8, 8], strides = [1, 1]} : vector<32x8xf32> to vector<8x8xf32>
    %cst_25 = arith.constant dense<0.000000e+00> : vector<16x8xf32>
    %48 = tpu.matmul %46, %47, %cst_25 {dimension_numbers = #tpu.dot_dimension_numbers<[0], [0], [1], [1], [0, 1, 1, 1], [], []>} : vector<8x16xf32>, vector<8x8xf32>, vector<16x8xf32> -> vector<16x8xf32>
    %cst_26 = arith.constant 0.353553385 : f32
    %49 = vector.broadcast %cst_26 : f32 to vector<16x8xf32>
    %50 = arith.mulf %48, %49 : vector<16x8xf32>
    %cst_27 = arith.constant dense<0xFF800000> : vector<16xf32>
    %51 = vector.multi_reduction <maximumf>, %50, %cst_27 [1] : vector<16x8xf32> to vector<16xf32>
    %52 = vector.shape_cast %51 : vector<16xf32> to vector<16x1xf32>
    %53 = vector.broadcast %52 : vector<16x1xf32> to vector<16x8xf32>
    %54 = arith.subf %50, %53 : vector<16x8xf32>
    %55 = math.exp %54 : vector<16x8xf32>
    %cst_28 = arith.constant dense<0.000000e+00> : vector<16xf32>
    %56 = vector.multi_reduction <add>, %55, %cst_28 [1] : vector<16x8xf32> to vector<16xf32>
    %57 = vector.shape_cast %56 : vector<16xf32> to vector<16x1xf32>
    %58 = vector.broadcast %57 : vector<16x1xf32> to vector<16x8xf32>
    %59 = arith.divf %55, %58 : vector<16x8xf32>
    %60 = vector.extract_strided_slice %28 {offsets = [8, 0], sizes = [8, 8], strides = [1, 1]} : vector<32x8xf32> to vector<8x8xf32>
    %cst_29 = arith.constant dense<0.000000e+00> : vector<8x16xf32>
    %61 = tpu.matmul %60, %59, %cst_29 {dimension_numbers = #tpu.dot_dimension_numbers<[1], [1], [0], [0], [0, 0, 1, 0], [], []>} : vector<8x8xf32>, vector<16x8xf32>, vector<8x16xf32> -> vector<8x16xf32>
    %c8 = arith.constant 8 : index
    %c0_30 = arith.constant 0 : index
    %62 = vector.load %arg18[%c8, %c0_30] : memref<32x16xf32, #tpu.memory_space<vmem>>, vector<8x16xf32>
    tpu.vector_store %arg18[%c8, %c0_30], %61 {strides = array<i32>} : memref<32x16xf32, #tpu.memory_space<vmem>>, vector<8x16xf32>,
    %63 = vector.extract_strided_slice %21 {offsets = [16, 0], sizes = [8, 16], strides = [1, 1]} : vector<32x16xf32> to vector<8x16xf32>
    %64 = vector.extract_strided_slice %27 {offsets = [16, 0], sizes = [8, 8], strides = [1, 1]} : vector<32x8xf32> to vector<8x8xf32>
    %cst_31 = arith.constant dense<0.000000e+00> : vector<16x8xf32>
    %65 = tpu.matmul %63, %64, %cst_31 {dimension_numbers = #tpu.dot_dimension_numbers<[0], [0], [1], [1], [0, 1, 1, 1], [], []>} : vector<8x16xf32>, vector<8x8xf32>, vector<16x8xf32> -> vector<16x8xf32>
    %cst_32 = arith.constant 0.353553385 : f32
    %66 = vector.broadcast %cst_32 : f32 to vector<16x8xf32>
    %67 = arith.mulf %65, %66 : vector<16x8xf32>
    %cst_33 = arith.constant dense<0xFF800000> : vector<16xf32>
    %68 = vector.multi_reduction <maximumf>, %67, %cst_33 [1] : vector<16x8xf32> to vector<16xf32>
    %69 = vector.shape_cast %68 : vector<16xf32> to vector<16x1xf32>
    %70 = vector.broadcast %69 : vector<16x1xf32> to vector<16x8xf32>
    %71 = arith.subf %67, %70 : vector<16x8xf32>
    %72 = math.exp %71 : vector<16x8xf32>
    %cst_34 = arith.constant dense<0.000000e+00> : vector<16xf32>
    %73 = vector.multi_reduction <add>, %72, %cst_34 [1] : vector<16x8xf32> to vector<16xf32>
    %74 = vector.shape_cast %73 : vector<16xf32> to vector<16x1xf32>
    %75 = vector.broadcast %74 : vector<16x1xf32> to vector<16x8xf32>
    %76 = arith.divf %72, %75 : vector<16x8xf32>
    %77 = vector.extract_strided_slice %28 {offsets = [16, 0], sizes = [8, 8], strides = [1, 1]} : vector<32x8xf32> to vector<8x8xf32>
    %cst_35 = arith.constant dense<0.000000e+00> : vector<8x16xf32>
    %78 = tpu.matmul %77, %76, %cst_35 {dimension_numbers = #tpu.dot_dimension_numbers<[1], [1], [0], [0], [0, 0, 1, 0], [], []>} : vector<8x8xf32>, vector<16x8xf32>, vector<8x16xf32> -> vector<8x16xf32>
    %c16 = arith.constant 16 : index
    %c0_36 = arith.constant 0 : index
    %79 = vector.load %arg18[%c16, %c0_36] : memref<32x16xf32, #tpu.memory_space<vmem>>, vector<8x16xf32>
    tpu.vector_store %arg18[%c16, %c0_36], %78 {strides = array<i32>} : memref<32x16xf32, #tpu.memory_space<vmem>>, vector<8x16xf32>,
    %80 = vector.extract_strided_slice %21 {offsets = [24, 0], sizes = [8, 16], strides = [1, 1]} : vector<32x16xf32> to vector<8x16xf32>
    %81 = vector.extract_strided_slice %27 {offsets = [24, 0], sizes = [8, 8], strides = [1, 1]} : vector<32x8xf32> to vector<8x8xf32>
    %cst_37 = arith.constant dense<0.000000e+00> : vector<16x8xf32>
    %82 = tpu.matmul %80, %81, %cst_37 {dimension_numbers = #tpu.dot_dimension_numbers<[0], [0], [1], [1], [0, 1, 1, 1], [], []>} : vector<8x16xf32>, vector<8x8xf32>, vector<16x8xf32> -> vector<16x8xf32>
    %cst_38 = arith.constant 0.353553385 : f32
    %83 = vector.broadcast %cst_38 : f32 to vector<16x8xf32>
    %84 = arith.mulf %82, %83 : vector<16x8xf32>
    %cst_39 = arith.constant dense<0xFF800000> : vector<16xf32>
    %85 = vector.multi_reduction <maximumf>, %84, %cst_39 [1] : vector<16x8xf32> to vector<16xf32>
    %86 = vector.shape_cast %85 : vector<16xf32> to vector<16x1xf32>
    %87 = vector.broadcast %86 : vector<16x1xf32> to vector<16x8xf32>
    %88 = arith.subf %84, %87 : vector<16x8xf32>
    %89 = math.exp %88 : vector<16x8xf32>
    %cst_40 = arith.constant dense<0.000000e+00> : vector<16xf32>
    %90 = vector.multi_reduction <add>, %89, %cst_40 [1] : vector<16x8xf32> to vector<16xf32>
    %91 = vector.shape_cast %90 : vector<16xf32> to vector<16x1xf32>
    %92 = vector.broadcast %91 : vector<16x1xf32> to vector<16x8xf32>
    %93 = arith.divf %89, %92 : vector<16x8xf32>
    %94 = vector.extract_strided_slice %28 {offsets = [24, 0], sizes = [8, 8], strides = [1, 1]} : vector<32x8xf32> to vector<8x8xf32>
    %cst_41 = arith.constant dense<0.000000e+00> : vector<8x16xf32>
    %95 = tpu.matmul %94, %93, %cst_41 {dimension_numbers = #tpu.dot_dimension_numbers<[1], [1], [0], [0], [0, 0, 1, 0], [], []>} : vector<8x8xf32>, vector<16x8xf32>, vector<8x16xf32> -> vector<8x16xf32>
    %c24 = arith.constant 24 : index
    %c0_42 = arith.constant 0 : index
    %96 = vector.load %arg18[%c24, %c0_42] : memref<32x16xf32, #tpu.memory_space<vmem>>, vector<8x16xf32>
    tpu.vector_store %arg18[%c24, %c0_42], %95 {strides = array<i32>} : memref<32x16xf32, #tpu.memory_space<vmem>>, vector<8x16xf32>,
    %c0_43 = arith.constant 0 : index
    %c0_44 = arith.constant 0 : index
    %97 = vector.load %arg18[%c0_43, %c0_44] : memref<32x16xf32, #tpu.memory_space<vmem>>, vector<32x16xf32>
    %c0_45 = arith.constant 0 : index
    %c0_46 = arith.constant 0 : index
    %c0_47 = arith.constant 0 : index
    %98 = vector.load %arg5[%c0_45, %c0_46, %c0_47] : memref<2x32x32xf32, #tpu.memory_space<vmem>>, vector<1x32x32xf32>
    %99 = vector.shape_cast %98 : vector<1x32x32xf32> to vector<32x32xf32>
    %c0_48 = arith.constant 0 : index
    %c0_49 = arith.constant 0 : index
    %c0_50 = arith.constant 0 : index
    %100 = vector.load %arg6[%c0_48, %c0_49, %c0_50] : memref<2x64x64xf32, #tpu.memory_space<vmem>>, vector<1x64x64xf32>
    %101 = vector.shape_cast %100 : vector<1x64x64xf32> to vector<64x64xf32>
    %c0_51 = arith.constant 0 : index
    %c0_52 = arith.constant 0 : index
    %c0_53 = arith.constant 0 : index
    %102 = vector.load %arg7[%c0_51, %c0_52, %c0_53] : memref<2x32x64xf32, #tpu.memory_space<vmem>>, vector<1x32x64xf32>
    %103 = vector.shape_cast %102 : vector<1x32x64xf32> to vector<32x64xf32>
    %cst_54 = arith.constant dense<0.000000e+00> : vector<32x16xf32>
    %104 = tpu.matmul %99, %97, %cst_54 {dimension_numbers = #tpu.dot_dimension_numbers<[1], [0], [0], [1], [0, 0, 1, 1], [], []>} : vector<32x32xf32>, vector<32x16xf32>, vector<32x16xf32> -> vector<32x16xf32>
    %105 = vector.broadcast %9 : vector<32x1xf32> to vector<32x16xf32>
    %106 = arith.addf %104, %105 : vector<32x16xf32>
    %cst_55 = arith.constant dense<0.000000e+00> : vector<16xf32>
    %107 = vector.multi_reduction <add>, %106, %cst_55 [0] : vector<32x16xf32> to vector<16xf32>
    %108 = vector.shape_cast %107 : vector<16xf32> to vector<1x16xf32>
    %cst_56 = arith.constant 3.200000e+01 : f32
    %109 = vector.broadcast %cst_56 : f32 to vector<1x16xf32>
    %110 = arith.divf %108, %109 : vector<1x16xf32>
    %111 = vector.broadcast %110 : vector<1x16xf32> to vector<32x16xf32>
    %112 = arith.subf %106, %111 : vector<32x16xf32>
    %113 = arith.mulf %112, %112 : vector<32x16xf32>
    %cst_57 = arith.constant dense<0.000000e+00> : vector<16xf32>
    %114 = vector.multi_reduction <add>, %113, %cst_57 [0] : vector<32x16xf32> to vector<16xf32>
    %115 = vector.shape_cast %114 : vector<16xf32> to vector<1x16xf32>
    %cst_58 = arith.constant 3.200000e+01 : f32
    %116 = vector.broadcast %cst_58 : f32 to vector<1x16xf32>
    %117 = arith.divf %115, %116 : vector<1x16xf32>
    %118 = vector.broadcast %110 : vector<1x16xf32> to vector<32x16xf32>
    %119 = arith.subf %106, %118 : vector<32x16xf32>
    %cst_59 = arith.constant 9.99999974E-6 : f32
    %120 = vector.broadcast %cst_59 : f32 to vector<1x16xf32>
    %121 = arith.addf %117, %120 : vector<1x16xf32>
    %122 = math.rsqrt %121 : vector<1x16xf32>
    %123 = vector.broadcast %122 : vector<1x16xf32> to vector<32x16xf32>
    %124 = arith.mulf %119, %123 : vector<32x16xf32>
    %125 = vector.broadcast %11 : vector<32x1xf32> to vector<32x16xf32>
    %126 = arith.mulf %124, %125 : vector<32x16xf32>
    %127 = vector.broadcast %12 : vector<32x1xf32> to vector<32x16xf32>
    %128 = arith.addf %126, %127 : vector<32x16xf32>
    %129 = tpu.concatenate %1, %128 in 0 : vector<32x16xf32>, vector<32x16xf32> -> vector<64x16xf32>
    %cst_60 = arith.constant dense<0.000000e+00> : vector<64x16xf32>
    %130 = tpu.matmul %101, %129, %cst_60 {dimension_numbers = #tpu.dot_dimension_numbers<[1], [0], [0], [1], [0, 0, 1, 1], [], []>} : vector<64x64xf32>, vector<64x16xf32>, vector<64x16xf32> -> vector<64x16xf32>
    %131 = vector.broadcast %16 : vector<64x1xf32> to vector<64x16xf32>
    %132 = arith.addf %130, %131 : vector<64x16xf32>
    %cst_61 = arith.constant 0.000000e+00 : f32
    %133 = vector.broadcast %cst_61 : f32 to vector<64x16xf32>
    %134 = arith.maximumf %132, %133 : vector<64x16xf32>
    %cst_62 = arith.constant dense<0.000000e+00> : vector<32x16xf32>
    %135 = tpu.matmul %103, %134, %cst_62 {dimension_numbers = #tpu.dot_dimension_numbers<[1], [0], [0], [1], [0, 0, 1, 1], [], []>} : vector<32x64xf32>, vector<64x16xf32>, vector<32x16xf32> -> vector<32x16xf32>
    %136 = vector.broadcast %10 : vector<32x1xf32> to vector<32x16xf32>
    %137 = arith.addf %135, %136 : vector<32x16xf32>
    %cst_63 = arith.constant dense<0.000000e+00> : vector<16xf32>
    %138 = vector.multi_reduction <add>, %137, %cst_63 [0] : vector<32x16xf32> to vector<16xf32>
    %139 = vector.shape_cast %138 : vector<16xf32> to vector<1x16xf32>
    %cst_64 = arith.constant 3.200000e+01 : f32
    %140 = vector.broadcast %cst_64 : f32 to vector<1x16xf32>
    %141 = arith.divf %139, %140 : vector<1x16xf32>
    %142 = vector.broadcast %141 : vector<1x16xf32> to vector<32x16xf32>
    %143 = arith.subf %137, %142 : vector<32x16xf32>
    %144 = arith.mulf %143, %143 : vector<32x16xf32>
    %cst_65 = arith.constant dense<0.000000e+00> : vector<16xf32>
    %145 = vector.multi_reduction <add>, %144, %cst_65 [0] : vector<32x16xf32> to vector<16xf32>
    %146 = vector.shape_cast %145 : vector<16xf32> to vector<1x16xf32>
    %cst_66 = arith.constant 3.200000e+01 : f32
    %147 = vector.broadcast %cst_66 : f32 to vector<1x16xf32>
    %148 = arith.divf %146, %147 : vector<1x16xf32>
    %149 = vector.broadcast %141 : vector<1x16xf32> to vector<32x16xf32>
    %150 = arith.subf %137, %149 : vector<32x16xf32>
    %cst_67 = arith.constant 9.99999974E-6 : f32
    %151 = vector.broadcast %cst_67 : f32 to vector<1x16xf32>
    %152 = arith.addf %148, %151 : vector<1x16xf32>
    %153 = math.rsqrt %152 : vector<1x16xf32>
    %154 = vector.broadcast %153 : vector<1x16xf32> to vector<32x16xf32>
    %155 = arith.mulf %150, %154 : vector<32x16xf32>
    %156 = vector.broadcast %13 : vector<32x1xf32> to vector<32x16xf32>
    %157 = arith.mulf %155, %156 : vector<32x16xf32>
    %158 = vector.broadcast %14 : vector<32x1xf32> to vector<32x16xf32>
    %159 = arith.addf %157, %158 : vector<32x16xf32>
    %160 = arith.addf %1, %159 : vector<32x16xf32>
    %c0_68 = arith.constant 0 : index
    %c0_69 = arith.constant 0 : index
    %c0_70 = arith.constant 0 : index
    %161 = vector.load %arg14[%c0_68, %c0_69, %c0_70] : memref<2x32x7xf32, #tpu.memory_space<vmem>>, vector<1x32x7xf32>
    %162 = vector.shape_cast %161 : vector<1x32x7xf32> to vector<32x7xf32>
    %c0_71 = arith.constant 0 : index
    %c0_72 = arith.constant 0 : index
    %c0_73 = arith.constant 0 : index
    %163 = vector.load %arg15[%c0_71, %c0_72, %c0_73] : memref<2x64x1xf32, #tpu.memory_space<vmem>>, vector<1x64x1xf32>
    %164 = vector.shape_cast %163 : vector<1x64x1xf32> to vector<64x1xf32>
    %165 = vector.extract_strided_slice %162 {offsets = [0, 0], sizes = [32, 1], strides = [1, 1]} : vector<32x7xf32> to vector<32x1xf32>
    %166 = vector.extract_strided_slice %162 {offsets = [0, 1], sizes = [32, 1], strides = [1, 1]} : vector<32x7xf32> to vector<32x1xf32>
    %167 = vector.extract_strided_slice %162 {offsets = [0, 2], sizes = [32, 1], strides = [1, 1]} : vector<32x7xf32> to vector<32x1xf32>
    %168 = vector.extract_strided_slice %162 {offsets = [0, 3], sizes = [32, 1], strides = [1, 1]} : vector<32x7xf32> to vector<32x1xf32>
    %169 = vector.extract_strided_slice %162 {offsets = [0, 4], sizes = [32, 1], strides = [1, 1]} : vector<32x7xf32> to vector<32x1xf32>
    %170 = vector.extract_strided_slice %162 {offsets = [0, 5], sizes = [32, 1], strides = [1, 1]} : vector<32x7xf32> to vector<32x1xf32>
    %171 = vector.extract_strided_slice %162 {offsets = [0, 6], sizes = [32, 1], strides = [1, 1]} : vector<32x7xf32> to vector<32x1xf32>
    %c0_74 = arith.constant 0 : index
    %c0_75 = arith.constant 0 : index
    %c0_76 = arith.constant 0 : index
    %172 = vector.load %arg10[%c0_74, %c0_75, %c0_76] : memref<2x32x32xf32, #tpu.memory_space<vmem>>, vector<1x32x32xf32>
    %173 = vector.shape_cast %172 : vector<1x32x32xf32> to vector<32x32xf32>
    %cst_77 = arith.constant dense<0.000000e+00> : vector<32x16xf32>
    %174 = tpu.matmul %173, %1, %cst_77 {dimension_numbers = #tpu.dot_dimension_numbers<[1], [0], [0], [1], [0, 0, 1, 1], [], []>} : vector<32x32xf32>, vector<32x16xf32>, vector<32x16xf32> -> vector<32x16xf32>
    %175 = vector.broadcast %165 : vector<32x1xf32> to vector<32x16xf32>
    %176 = arith.addf %174, %175 : vector<32x16xf32>
    %cst_78 = arith.constant dense<0.000000e+00> : vector<32xf32>
    %177 = vector.multi_reduction <add>, %176, %cst_78 [1] : vector<32x16xf32> to vector<32xf32>
    %178 = vector.shape_cast %177 : vector<32xf32> to vector<32x1xf32>
    %cst_79 = arith.constant 1.600000e+01 : f32
    %179 = vector.broadcast %cst_79 : f32 to vector<32x1xf32>
    %180 = arith.divf %178, %179 : vector<32x1xf32>
    %181 = vector.shape_cast %180 : vector<32x1xf32> to vector<32x1xf32>
    %182 = vector.broadcast %181 : vector<32x1xf32> to vector<32x8xf32>
    %c0_80 = arith.constant 0 : index
    %c0_81 = arith.constant 0 : index
    %c0_82 = arith.constant 0 : index
    %183 = vector.load %arg11[%c0_80, %c0_81, %c0_82] : memref<2x32x32xf32, #tpu.memory_space<vmem>>, vector<1x32x32xf32>
    %184 = vector.shape_cast %183 : vector<1x32x32xf32> to vector<32x32xf32>
    %c0_83 = arith.constant 0 : index
    %c0_84 = arith.constant 0 : index
    %c0_85 = arith.constant 0 : index
    %185 = vector.load %arg12[%c0_83, %c0_84, %c0_85] : memref<2x64x64xf32, #tpu.memory_space<vmem>>, vector<1x64x64xf32>
    %186 = vector.shape_cast %185 : vector<1x64x64xf32> to vector<64x64xf32>
    %c0_86 = arith.constant 0 : index
    %c0_87 = arith.constant 0 : index
    %c0_88 = arith.constant 0 : index
    %187 = vector.load %arg13[%c0_86, %c0_87, %c0_88] : memref<2x32x64xf32, #tpu.memory_space<vmem>>, vector<1x32x64xf32>
    %188 = vector.shape_cast %187 : vector<1x32x64xf32> to vector<32x64xf32>
    %cst_89 = arith.constant dense<0.000000e+00> : vector<32x8xf32>
    %189 = tpu.matmul %184, %182, %cst_89 {dimension_numbers = #tpu.dot_dimension_numbers<[1], [0], [0], [1], [0, 0, 1, 1], [], []>} : vector<32x32xf32>, vector<32x8xf32>, vector<32x8xf32> -> vector<32x8xf32>
    %190 = vector.broadcast %166 : vector<32x1xf32> to vector<32x8xf32>
    %191 = arith.addf %189, %190 : vector<32x8xf32>
    %cst_90 = arith.constant dense<0.000000e+00> : vector<8xf32>
    %192 = vector.multi_reduction <add>, %191, %cst_90 [0] : vector<32x8xf32> to vector<8xf32>
    %193 = vector.shape_cast %192 : vector<8xf32> to vector<1x8xf32>
    %cst_91 = arith.constant 3.200000e+01 : f32
    %194 = vector.broadcast %cst_91 : f32 to vector<1x8xf32>
    %195 = arith.divf %193, %194 : vector<1x8xf32>
    %196 = vector.broadcast %195 : vector<1x8xf32> to vector<32x8xf32>
    %197 = arith.subf %191, %196 : vector<32x8xf32>
    %198 = arith.mulf %197, %197 : vector<32x8xf32>
    %cst_92 = arith.constant dense<0.000000e+00> : vector<8xf32>
    %199 = vector.multi_reduction <add>, %198, %cst_92 [0] : vector<32x8xf32> to vector<8xf32>
    %200 = vector.shape_cast %199 : vector<8xf32> to vector<1x8xf32>
    %cst_93 = arith.constant 3.200000e+01 : f32
    %201 = vector.broadcast %cst_93 : f32 to vector<1x8xf32>
    %202 = arith.divf %200, %201 : vector<1x8xf32>
    %203 = vector.broadcast %195 : vector<1x8xf32> to vector<32x8xf32>
    %204 = arith.subf %191, %203 : vector<32x8xf32>
    %cst_94 = arith.constant 9.99999974E-6 : f32
    %205 = vector.broadcast %cst_94 : f32 to vector<1x8xf32>
    %206 = arith.addf %202, %205 : vector<1x8xf32>
    %207 = math.rsqrt %206 : vector<1x8xf32>
    %208 = vector.broadcast %207 : vector<1x8xf32> to vector<32x8xf32>
    %209 = arith.mulf %204, %208 : vector<32x8xf32>
    %210 = vector.broadcast %168 : vector<32x1xf32> to vector<32x8xf32>
    %211 = arith.mulf %209, %210 : vector<32x8xf32>
    %212 = vector.broadcast %169 : vector<32x1xf32> to vector<32x8xf32>
    %213 = arith.addf %211, %212 : vector<32x8xf32>
    %214 = tpu.concatenate %3, %213 in 0 : vector<32x8xf32>, vector<32x8xf32> -> vector<64x8xf32>
    %cst_95 = arith.constant dense<0.000000e+00> : vector<64x8xf32>
    %215 = tpu.matmul %186, %214, %cst_95 {dimension_numbers = #tpu.dot_dimension_numbers<[1], [0], [0], [1], [0, 0, 1, 1], [], []>} : vector<64x64xf32>, vector<64x8xf32>, vector<64x8xf32> -> vector<64x8xf32>
    %216 = vector.broadcast %164 : vector<64x1xf32> to vector<64x8xf32>
    %217 = arith.addf %215, %216 : vector<64x8xf32>
    %cst_96 = arith.constant 0.000000e+00 : f32
    %218 = vector.broadcast %cst_96 : f32 to vector<64x8xf32>
    %219 = arith.maximumf %217, %218 : vector<64x8xf32>
    %cst_97 = arith.constant dense<0.000000e+00> : vector<32x8xf32>
    %220 = tpu.matmul %188, %219, %cst_97 {dimension_numbers = #tpu.dot_dimension_numbers<[1], [0], [0], [1], [0, 0, 1, 1], [], []>} : vector<32x64xf32>, vector<64x8xf32>, vector<32x8xf32> -> vector<32x8xf32>
    %221 = vector.broadcast %167 : vector<32x1xf32> to vector<32x8xf32>
    %222 = arith.addf %220, %221 : vector<32x8xf32>
    %cst_98 = arith.constant dense<0.000000e+00> : vector<8xf32>
    %223 = vector.multi_reduction <add>, %222, %cst_98 [0] : vector<32x8xf32> to vector<8xf32>
    %224 = vector.shape_cast %223 : vector<8xf32> to vector<1x8xf32>
    %cst_99 = arith.constant 3.200000e+01 : f32
    %225 = vector.broadcast %cst_99 : f32 to vector<1x8xf32>
    %226 = arith.divf %224, %225 : vector<1x8xf32>
    %227 = vector.broadcast %226 : vector<1x8xf32> to vector<32x8xf32>
    %228 = arith.subf %222, %227 : vector<32x8xf32>
    %229 = arith.mulf %228, %228 : vector<32x8xf32>
    %cst_100 = arith.constant dense<0.000000e+00> : vector<8xf32>
    %230 = vector.multi_reduction <add>, %229, %cst_100 [0] : vector<32x8xf32> to vector<8xf32>
    %231 = vector.shape_cast %230 : vector<8xf32> to vector<1x8xf32>
    %cst_101 = arith.constant 3.200000e+01 : f32
    %232 = vector.broadcast %cst_101 : f32 to vector<1x8xf32>
    %233 = arith.divf %231, %232 : vector<1x8xf32>
    %234 = vector.broadcast %226 : vector<1x8xf32> to vector<32x8xf32>
    %235 = arith.subf %222, %234 : vector<32x8xf32>
    %cst_102 = arith.constant 9.99999974E-6 : f32
    %236 = vector.broadcast %cst_102 : f32 to vector<1x8xf32>
    %237 = arith.addf %233, %236 : vector<1x8xf32>
    %238 = math.rsqrt %237 : vector<1x8xf32>
    %239 = vector.broadcast %238 : vector<1x8xf32> to vector<32x8xf32>
    %240 = arith.mulf %235, %239 : vector<32x8xf32>
    %241 = vector.broadcast %170 : vector<32x1xf32> to vector<32x8xf32>
    %242 = arith.mulf %240, %241 : vector<32x8xf32>
    %243 = vector.broadcast %171 : vector<32x1xf32> to vector<32x8xf32>
    %244 = arith.addf %242, %243 : vector<32x8xf32>
    %245 = arith.addf %3, %244 : vector<32x8xf32>
    %c1 = arith.constant 1 : index
    %c0_103 = arith.constant 0 : index
    %c0_104 = arith.constant 0 : index
    %246 = vector.load %arg8[%c1, %c0_103, %c0_104] : memref<2x32x7xf32, #tpu.memory_space<vmem>>, vector<1x32x7xf32>
    %247 = vector.shape_cast %246 : vector<1x32x7xf32> to vector<32x7xf32>
    %c1_105 = arith.constant 1 : index
    %c0_106 = arith.constant 0 : index
    %c0_107 = arith.constant 0 : index
    %248 = vector.load %arg9[%c1_105, %c0_106, %c0_107] : memref<2x64x2xf32, #tpu.memory_space<vmem>>, vector<1x64x2xf32>
    %249 = vector.shape_cast %248 : vector<1x64x2xf32> to vector<64x2xf32>
    %250 = vector.extract_strided_slice %247 {offsets = [0, 0], sizes = [32, 1], strides = [1, 1]} : vector<32x7xf32> to vector<32x1xf32>
    %251 = vector.extract_strided_slice %247 {offsets = [0, 1], sizes = [32, 1], strides = [1, 1]} : vector<32x7xf32> to vector<32x1xf32>
    %252 = vector.extract_strided_slice %247 {offsets = [0, 2], sizes = [32, 1], strides = [1, 1]} : vector<32x7xf32> to vector<32x1xf32>
    %253 = vector.extract_strided_slice %247 {offsets = [0, 3], sizes = [32, 1], strides = [1, 1]} : vector<32x7xf32> to vector<32x1xf32>
    %254 = vector.extract_strided_slice %247 {offsets = [0, 4], sizes = [32, 1], strides = [1, 1]} : vector<32x7xf32> to vector<32x1xf32>
    %255 = vector.extract_strided_slice %247 {offsets = [0, 5], sizes = [32, 1], strides = [1, 1]} : vector<32x7xf32> to vector<32x1xf32>
    %256 = vector.extract_strided_slice %247 {offsets = [0, 6], sizes = [32, 1], strides = [1, 1]} : vector<32x7xf32> to vector<32x1xf32>
    %257 = vector.extract_strided_slice %249 {offsets = [0, 0], sizes = [64, 1], strides = [1, 1]} : vector<64x2xf32> to vector<64x1xf32>
    %258 = vector.extract_strided_slice %249 {offsets = [0, 1], sizes = [64, 1], strides = [1, 1]} : vector<64x2xf32> to vector<64x1xf32>
    %c1_108 = arith.constant 1 : index
    %c0_109 = arith.constant 0 : index
    %c0_110 = arith.constant 0 : index
    %259 = vector.load %arg3[%c1_108, %c0_109, %c0_110] : memref<2x32x32xf32, #tpu.memory_space<vmem>>, vector<1x32x32xf32>
    %260 = vector.shape_cast %259 : vector<1x32x32xf32> to vector<32x32xf32>
    %cst_111 = arith.constant dense<0.000000e+00> : vector<32x16xf32>
    %261 = tpu.matmul %260, %160, %cst_111 {dimension_numbers = #tpu.dot_dimension_numbers<[1], [0], [0], [1], [0, 0, 1, 1], [], []>} : vector<32x32xf32>, vector<32x16xf32>, vector<32x16xf32> -> vector<32x16xf32>
    %262 = vector.broadcast %250 : vector<32x1xf32> to vector<32x16xf32>
    %263 = arith.addf %261, %262 : vector<32x16xf32>
    %c1_112 = arith.constant 1 : index
    %c0_113 = arith.constant 0 : index
    %c0_114 = arith.constant 0 : index
    %264 = vector.load %arg4[%c1_112, %c0_113, %c0_114] : memref<2x64x32xf32, #tpu.memory_space<vmem>>, vector<1x64x32xf32>
    %265 = vector.shape_cast %264 : vector<1x64x32xf32> to vector<64x32xf32>
    %cst_115 = arith.constant dense<0.000000e+00> : vector<64x8xf32>
    %266 = tpu.matmul %265, %245, %cst_115 {dimension_numbers = #tpu.dot_dimension_numbers<[1], [0], [0], [1], [0, 0, 1, 1], [], []>} : vector<64x32xf32>, vector<32x8xf32>, vector<64x8xf32> -> vector<64x8xf32>
    %267 = vector.broadcast %257 : vector<64x1xf32> to vector<64x8xf32>
    %268 = arith.addf %266, %267 : vector<64x8xf32>
    %269 = vector.extract_strided_slice %268 {offsets = [0, 0], sizes = [32, 8], strides = [1, 1]} : vector<64x8xf32> to vector<32x8xf32>
    %270 = vector.extract_strided_slice %268 {offsets = [32, 0], sizes = [32, 8], strides = [1, 1]} : vector<64x8xf32> to vector<32x8xf32>
    %271 = vector.extract_strided_slice %263 {offsets = [0, 0], sizes = [8, 16], strides = [1, 1]} : vector<32x16xf32> to vector<8x16xf32>
    %272 = vector.extract_strided_slice %269 {offsets = [0, 0], sizes = [8, 8], strides = [1, 1]} : vector<32x8xf32> to vector<8x8xf32>
    %cst_116 = arith.constant dense<0.000000e+00> : vector<16x8xf32>
    %273 = tpu.matmul %271, %272, %cst_116 {dimension_numbers = #tpu.dot_dimension_numbers<[0], [0], [1], [1], [0, 1, 1, 1], [], []>} : vector<8x16xf32>, vector<8x8xf32>, vector<16x8xf32> -> vector<16x8xf32>
    %cst_117 = arith.constant 0.353553385 : f32
    %274 = vector.broadcast %cst_117 : f32 to vector<16x8xf32>
    %275 = arith.mulf %273, %274 : vector<16x8xf32>
    %cst_118 = arith.constant dense<0xFF800000> : vector<16xf32>
    %276 = vector.multi_reduction <maximumf>, %275, %cst_118 [1] : vector<16x8xf32> to vector<16xf32>
    %277 = vector.shape_cast %276 : vector<16xf32> to vector<16x1xf32>
    %278 = vector.broadcast %277 : vector<16x1xf32> to vector<16x8xf32>
    %279 = arith.subf %275, %278 : vector<16x8xf32>
    %280 = math.exp %279 : vector<16x8xf32>
    %cst_119 = arith.constant dense<0.000000e+00> : vector<16xf32>
    %281 = vector.multi_reduction <add>, %280, %cst_119 [1] : vector<16x8xf32> to vector<16xf32>
    %282 = vector.shape_cast %281 : vector<16xf32> to vector<16x1xf32>
    %283 = vector.broadcast %282 : vector<16x1xf32> to vector<16x8xf32>
    %284 = arith.divf %280, %283 : vector<16x8xf32>
    %285 = vector.extract_strided_slice %270 {offsets = [0, 0], sizes = [8, 8], strides = [1, 1]} : vector<32x8xf32> to vector<8x8xf32>
    %cst_120 = arith.constant dense<0.000000e+00> : vector<8x16xf32>
    %286 = tpu.matmul %285, %284, %cst_120 {dimension_numbers = #tpu.dot_dimension_numbers<[1], [1], [0], [0], [0, 0, 1, 0], [], []>} : vector<8x8xf32>, vector<16x8xf32>, vector<8x16xf32> -> vector<8x16xf32>
    %c0_121 = arith.constant 0 : index
    %c0_122 = arith.constant 0 : index
    %287 = vector.load %arg18[%c0_121, %c0_122] : memref<32x16xf32, #tpu.memory_space<vmem>>, vector<8x16xf32>
    tpu.vector_store %arg18[%c0_121, %c0_122], %286 {strides = array<i32>} : memref<32x16xf32, #tpu.memory_space<vmem>>, vector<8x16xf32>,
    %288 = vector.extract_strided_slice %263 {offsets = [8, 0], sizes = [8, 16], strides = [1, 1]} : vector<32x16xf32> to vector<8x16xf32>
    %289 = vector.extract_strided_slice %269 {offsets = [8, 0], sizes = [8, 8], strides = [1, 1]} : vector<32x8xf32> to vector<8x8xf32>
    %cst_123 = arith.constant dense<0.000000e+00> : vector<16x8xf32>
    %290 = tpu.matmul %288, %289, %cst_123 {dimension_numbers = #tpu.dot_dimension_numbers<[0], [0], [1], [1], [0, 1, 1, 1], [], []>} : vector<8x16xf32>, vector<8x8xf32>, vector<16x8xf32> -> vector<16x8xf32>
    %cst_124 = arith.constant 0.353553385 : f32
    %291 = vector.broadcast %cst_124 : f32 to vector<16x8xf32>
    %292 = arith.mulf %290, %291 : vector<16x8xf32>
    %cst_125 = arith.constant dense<0xFF800000> : vector<16xf32>
    %293 = vector.multi_reduction <maximumf>, %292, %cst_125 [1] : vector<16x8xf32> to vector<16xf32>
    %294 = vector.shape_cast %293 : vector<16xf32> to vector<16x1xf32>
    %295 = vector.broadcast %294 : vector<16x1xf32> to vector<16x8xf32>
    %296 = arith.subf %292, %295 : vector<16x8xf32>
    %297 = math.exp %296 : vector<16x8xf32>
    %cst_126 = arith.constant dense<0.000000e+00> : vector<16xf32>
    %298 = vector.multi_reduction <add>, %297, %cst_126 [1] : vector<16x8xf32> to vector<16xf32>
    %299 = vector.shape_cast %298 : vector<16xf32> to vector<16x1xf32>
    %300 = vector.broadcast %299 : vector<16x1xf32> to vector<16x8xf32>
    %301 = arith.divf %297, %300 : vector<16x8xf32>
    %302 = vector.extract_strided_slice %270 {offsets = [8, 0], sizes = [8, 8], strides = [1, 1]} : vector<32x8xf32> to vector<8x8xf32>
    %cst_127 = arith.constant dense<0.000000e+00> : vector<8x16xf32>
    %303 = tpu.matmul %302, %301, %cst_127 {dimension_numbers = #tpu.dot_dimension_numbers<[1], [1], [0], [0], [0, 0, 1, 0], [], []>} : vector<8x8xf32>, vector<16x8xf32>, vector<8x16xf32> -> vector<8x16xf32>
    %c8_128 = arith.constant 8 : index
    %c0_129 = arith.constant 0 : index
    %304 = vector.load %arg18[%c8_128, %c0_129] : memref<32x16xf32, #tpu.memory_space<vmem>>, vector<8x16xf32>
    tpu.vector_store %arg18[%c8_128, %c0_129], %303 {strides = array<i32>} : memref<32x16xf32, #tpu.memory_space<vmem>>, vector<8x16xf32>,
    %305 = vector.extract_strided_slice %263 {offsets = [16, 0], sizes = [8, 16], strides = [1, 1]} : vector<32x16xf32> to vector<8x16xf32>
    %306 = vector.extract_strided_slice %269 {offsets = [16, 0], sizes = [8, 8], strides = [1, 1]} : vector<32x8xf32> to vector<8x8xf32>
    %cst_130 = arith.constant dense<0.000000e+00> : vector<16x8xf32>
    %307 = tpu.matmul %305, %306, %cst_130 {dimension_numbers = #tpu.dot_dimension_numbers<[0], [0], [1], [1], [0, 1, 1, 1], [], []>} : vector<8x16xf32>, vector<8x8xf32>, vector<16x8xf32> -> vector<16x8xf32>
    %cst_131 = arith.constant 0.353553385 : f32
    %308 = vector.broadcast %cst_131 : f32 to vector<16x8xf32>
    %309 = arith.mulf %307, %308 : vector<16x8xf32>
    %cst_132 = arith.constant dense<0xFF800000> : vector<16xf32>
    %310 = vector.multi_reduction <maximumf>, %309, %cst_132 [1] : vector<16x8xf32> to vector<16xf32>
    %311 = vector.shape_cast %310 : vector<16xf32> to vector<16x1xf32>
    %312 = vector.broadcast %311 : vector<16x1xf32> to vector<16x8xf32>
    %313 = arith.subf %309, %312 : vector<16x8xf32>
    %314 = math.exp %313 : vector<16x8xf32>
    %cst_133 = arith.constant dense<0.000000e+00> : vector<16xf32>
    %315 = vector.multi_reduction <add>, %314, %cst_133 [1] : vector<16x8xf32> to vector<16xf32>
    %316 = vector.shape_cast %315 : vector<16xf32> to vector<16x1xf32>
    %317 = vector.broadcast %316 : vector<16x1xf32> to vector<16x8xf32>
    %318 = arith.divf %314, %317 : vector<16x8xf32>
    %319 = vector.extract_strided_slice %270 {offsets = [16, 0], sizes = [8, 8], strides = [1, 1]} : vector<32x8xf32> to vector<8x8xf32>
    %cst_134 = arith.constant dense<0.000000e+00> : vector<8x16xf32>
    %320 = tpu.matmul %319, %318, %cst_134 {dimension_numbers = #tpu.dot_dimension_numbers<[1], [1], [0], [0], [0, 0, 1, 0], [], []>} : vector<8x8xf32>, vector<16x8xf32>, vector<8x16xf32> -> vector<8x16xf32>
    %c16_135 = arith.constant 16 : index
    %c0_136 = arith.constant 0 : index
    %321 = vector.load %arg18[%c16_135, %c0_136] : memref<32x16xf32, #tpu.memory_space<vmem>>, vector<8x16xf32>
    tpu.vector_store %arg18[%c16_135, %c0_136], %320 {strides = array<i32>} : memref<32x16xf32, #tpu.memory_space<vmem>>, vector<8x16xf32>,
    %322 = vector.extract_strided_slice %263 {offsets = [24, 0], sizes = [8, 16], strides = [1, 1]} : vector<32x16xf32> to vector<8x16xf32>
    %323 = vector.extract_strided_slice %269 {offsets = [24, 0], sizes = [8, 8], strides = [1, 1]} : vector<32x8xf32> to vector<8x8xf32>
    %cst_137 = arith.constant dense<0.000000e+00> : vector<16x8xf32>
    %324 = tpu.matmul %322, %323, %cst_137 {dimension_numbers = #tpu.dot_dimension_numbers<[0], [0], [1], [1], [0, 1, 1, 1], [], []>} : vector<8x16xf32>, vector<8x8xf32>, vector<16x8xf32> -> vector<16x8xf32>
    %cst_138 = arith.constant 0.353553385 : f32
    %325 = vector.broadcast %cst_138 : f32 to vector<16x8xf32>
    %326 = arith.mulf %324, %325 : vector<16x8xf32>
    %cst_139 = arith.constant dense<0xFF800000> : vector<16xf32>
    %327 = vector.multi_reduction <maximumf>, %326, %cst_139 [1] : vector<16x8xf32> to vector<16xf32>
    %328 = vector.shape_cast %327 : vector<16xf32> to vector<16x1xf32>
    %329 = vector.broadcast %328 : vector<16x1xf32> to vector<16x8xf32>
    %330 = arith.subf %326, %329 : vector<16x8xf32>
    %331 = math.exp %330 : vector<16x8xf32>
    %cst_140 = arith.constant dense<0.000000e+00> : vector<16xf32>
    %332 = vector.multi_reduction <add>, %331, %cst_140 [1] : vector<16x8xf32> to vector<16xf32>
    %333 = vector.shape_cast %332 : vector<16xf32> to vector<16x1xf32>
    %334 = vector.broadcast %333 : vector<16x1xf32> to vector<16x8xf32>
    %335 = arith.divf %331, %334 : vector<16x8xf32>
    %336 = vector.extract_strided_slice %270 {offsets = [24, 0], sizes = [8, 8], strides = [1, 1]} : vector<32x8xf32> to vector<8x8xf32>
    %cst_141 = arith.constant dense<0.000000e+00> : vector<8x16xf32>
    %337 = tpu.matmul %336, %335, %cst_141 {dimension_numbers = #tpu.dot_dimension_numbers<[1], [1], [0], [0], [0, 0, 1, 0], [], []>} : vector<8x8xf32>, vector<16x8xf32>, vector<8x16xf32> -> vector<8x16xf32>
    %c24_142 = arith.constant 24 : index
    %c0_143 = arith.constant 0 : index
    %338 = vector.load %arg18[%c24_142, %c0_143] : memref<32x16xf32, #tpu.memory_space<vmem>>, vector<8x16xf32>
    tpu.vector_store %arg18[%c24_142, %c0_143], %337 {strides = array<i32>} : memref<32x16xf32, #tpu.memory_space<vmem>>, vector<8x16xf32>,
    %c0_144 = arith.constant 0 : index
    %c0_145 = arith.constant 0 : index
    %339 = vector.load %arg18[%c0_144, %c0_145] : memref<32x16xf32, #tpu.memory_space<vmem>>, vector<32x16xf32>
    %c1_146 = arith.constant 1 : index
    %c0_147 = arith.constant 0 : index
    %c0_148 = arith.constant 0 : index
    %340 = vector.load %arg5[%c1_146, %c0_147, %c0_148] : memref<2x32x32xf32, #tpu.memory_space<vmem>>, vector<1x32x32xf32>
    %341 = vector.shape_cast %340 : vector<1x32x32xf32> to vector<32x32xf32>
    %c1_149 = arith.constant 1 : index
    %c0_150 = arith.constant 0 : index
    %c0_151 = arith.constant 0 : index
    %342 = vector.load %arg6[%c1_149, %c0_150, %c0_151] : memref<2x64x64xf32, #tpu.memory_space<vmem>>, vector<1x64x64xf32>
    %343 = vector.shape_cast %342 : vector<1x64x64xf32> to vector<64x64xf32>
    %c1_152 = arith.constant 1 : index
    %c0_153 = arith.constant 0 : index
    %c0_154 = arith.constant 0 : index
    %344 = vector.load %arg7[%c1_152, %c0_153, %c0_154] : memref<2x32x64xf32, #tpu.memory_space<vmem>>, vector<1x32x64xf32>
    %345 = vector.shape_cast %344 : vector<1x32x64xf32> to vector<32x64xf32>
    %cst_155 = arith.constant dense<0.000000e+00> : vector<32x16xf32>
    %346 = tpu.matmul %341, %339, %cst_155 {dimension_numbers = #tpu.dot_dimension_numbers<[1], [0], [0], [1], [0, 0, 1, 1], [], []>} : vector<32x32xf32>, vector<32x16xf32>, vector<32x16xf32> -> vector<32x16xf32>
    %347 = vector.broadcast %251 : vector<32x1xf32> to vector<32x16xf32>
    %348 = arith.addf %346, %347 : vector<32x16xf32>
    %cst_156 = arith.constant dense<0.000000e+00> : vector<16xf32>
    %349 = vector.multi_reduction <add>, %348, %cst_156 [0] : vector<32x16xf32> to vector<16xf32>
    %350 = vector.shape_cast %349 : vector<16xf32> to vector<1x16xf32>
    %cst_157 = arith.constant 3.200000e+01 : f32
    %351 = vector.broadcast %cst_157 : f32 to vector<1x16xf32>
    %352 = arith.divf %350, %351 : vector<1x16xf32>
    %353 = vector.broadcast %352 : vector<1x16xf32> to vector<32x16xf32>
    %354 = arith.subf %348, %353 : vector<32x16xf32>
    %355 = arith.mulf %354, %354 : vector<32x16xf32>
    %cst_158 = arith.constant dense<0.000000e+00> : vector<16xf32>
    %356 = vector.multi_reduction <add>, %355, %cst_158 [0] : vector<32x16xf32> to vector<16xf32>
    %357 = vector.shape_cast %356 : vector<16xf32> to vector<1x16xf32>
    %cst_159 = arith.constant 3.200000e+01 : f32
    %358 = vector.broadcast %cst_159 : f32 to vector<1x16xf32>
    %359 = arith.divf %357, %358 : vector<1x16xf32>
    %360 = vector.broadcast %352 : vector<1x16xf32> to vector<32x16xf32>
    %361 = arith.subf %348, %360 : vector<32x16xf32>
    %cst_160 = arith.constant 9.99999974E-6 : f32
    %362 = vector.broadcast %cst_160 : f32 to vector<1x16xf32>
    %363 = arith.addf %359, %362 : vector<1x16xf32>
    %364 = math.rsqrt %363 : vector<1x16xf32>
    %365 = vector.broadcast %364 : vector<1x16xf32> to vector<32x16xf32>
    %366 = arith.mulf %361, %365 : vector<32x16xf32>
    %367 = vector.broadcast %253 : vector<32x1xf32> to vector<32x16xf32>
    %368 = arith.mulf %366, %367 : vector<32x16xf32>
    %369 = vector.broadcast %254 : vector<32x1xf32> to vector<32x16xf32>
    %370 = arith.addf %368, %369 : vector<32x16xf32>
    %371 = tpu.concatenate %160, %370 in 0 : vector<32x16xf32>, vector<32x16xf32> -> vector<64x16xf32>
    %cst_161 = arith.constant dense<0.000000e+00> : vector<64x16xf32>
    %372 = tpu.matmul %343, %371, %cst_161 {dimension_numbers = #tpu.dot_dimension_numbers<[1], [0], [0], [1], [0, 0, 1, 1], [], []>} : vector<64x64xf32>, vector<64x16xf32>, vector<64x16xf32> -> vector<64x16xf32>
    %373 = vector.broadcast %258 : vector<64x1xf32> to vector<64x16xf32>
    %374 = arith.addf %372, %373 : vector<64x16xf32>
    %cst_162 = arith.constant 0.000000e+00 : f32
    %375 = vector.broadcast %cst_162 : f32 to vector<64x16xf32>
    %376 = arith.maximumf %374, %375 : vector<64x16xf32>
    %cst_163 = arith.constant dense<0.000000e+00> : vector<32x16xf32>
    %377 = tpu.matmul %345, %376, %cst_163 {dimension_numbers = #tpu.dot_dimension_numbers<[1], [0], [0], [1], [0, 0, 1, 1], [], []>} : vector<32x64xf32>, vector<64x16xf32>, vector<32x16xf32> -> vector<32x16xf32>
    %378 = vector.broadcast %252 : vector<32x1xf32> to vector<32x16xf32>
    %379 = arith.addf %377, %378 : vector<32x16xf32>
    %cst_164 = arith.constant dense<0.000000e+00> : vector<16xf32>
    %380 = vector.multi_reduction <add>, %379, %cst_164 [0] : vector<32x16xf32> to vector<16xf32>
    %381 = vector.shape_cast %380 : vector<16xf32> to vector<1x16xf32>
    %cst_165 = arith.constant 3.200000e+01 : f32
    %382 = vector.broadcast %cst_165 : f32 to vector<1x16xf32>
    %383 = arith.divf %381, %382 : vector<1x16xf32>
    %384 = vector.broadcast %383 : vector<1x16xf32> to vector<32x16xf32>
    %385 = arith.subf %379, %384 : vector<32x16xf32>
    %386 = arith.mulf %385, %385 : vector<32x16xf32>
    %cst_166 = arith.constant dense<0.000000e+00> : vector<16xf32>
    %387 = vector.multi_reduction <add>, %386, %cst_166 [0] : vector<32x16xf32> to vector<16xf32>
    %388 = vector.shape_cast %387 : vector<16xf32> to vector<1x16xf32>
    %cst_167 = arith.constant 3.200000e+01 : f32
    %389 = vector.broadcast %cst_167 : f32 to vector<1x16xf32>
    %390 = arith.divf %388, %389 : vector<1x16xf32>
    %391 = vector.broadcast %383 : vector<1x16xf32> to vector<32x16xf32>
    %392 = arith.subf %379, %391 : vector<32x16xf32>
    %cst_168 = arith.constant 9.99999974E-6 : f32
    %393 = vector.broadcast %cst_168 : f32 to vector<1x16xf32>
    %394 = arith.addf %390, %393 : vector<1x16xf32>
    %395 = math.rsqrt %394 : vector<1x16xf32>
    %396 = vector.broadcast %395 : vector<1x16xf32> to vector<32x16xf32>
    %397 = arith.mulf %392, %396 : vector<32x16xf32>
    %398 = vector.broadcast %255 : vector<32x1xf32> to vector<32x16xf32>
    %399 = arith.mulf %397, %398 : vector<32x16xf32>
    %400 = vector.broadcast %256 : vector<32x1xf32> to vector<32x16xf32>
    %401 = arith.addf %399, %400 : vector<32x16xf32>
    %402 = arith.addf %160, %401 : vector<32x16xf32>
    %c1_169 = arith.constant 1 : index
    %c0_170 = arith.constant 0 : index
    %c0_171 = arith.constant 0 : index
    %403 = vector.load %arg14[%c1_169, %c0_170, %c0_171] : memref<2x32x7xf32, #tpu.memory_space<vmem>>, vector<1x32x7xf32>
    %404 = vector.shape_cast %403 : vector<1x32x7xf32> to vector<32x7xf32>
    %c1_172 = arith.constant 1 : index
    %c0_173 = arith.constant 0 : index
    %c0_174 = arith.constant 0 : index
    %405 = vector.load %arg15[%c1_172, %c0_173, %c0_174] : memref<2x64x1xf32, #tpu.memory_space<vmem>>, vector<1x64x1xf32>
    %406 = vector.shape_cast %405 : vector<1x64x1xf32> to vector<64x1xf32>
    %407 = vector.extract_strided_slice %404 {offsets = [0, 0], sizes = [32, 1], strides = [1, 1]} : vector<32x7xf32> to vector<32x1xf32>
    %408 = vector.extract_strided_slice %404 {offsets = [0, 1], sizes = [32, 1], strides = [1, 1]} : vector<32x7xf32> to vector<32x1xf32>
    %409 = vector.extract_strided_slice %404 {offsets = [0, 2], sizes = [32, 1], strides = [1, 1]} : vector<32x7xf32> to vector<32x1xf32>
    %410 = vector.extract_strided_slice %404 {offsets = [0, 3], sizes = [32, 1], strides = [1, 1]} : vector<32x7xf32> to vector<32x1xf32>
    %411 = vector.extract_strided_slice %404 {offsets = [0, 4], sizes = [32, 1], strides = [1, 1]} : vector<32x7xf32> to vector<32x1xf32>
    %412 = vector.extract_strided_slice %404 {offsets = [0, 5], sizes = [32, 1], strides = [1, 1]} : vector<32x7xf32> to vector<32x1xf32>
    %413 = vector.extract_strided_slice %404 {offsets = [0, 6], sizes = [32, 1], strides = [1, 1]} : vector<32x7xf32> to vector<32x1xf32>
    %c1_175 = arith.constant 1 : index
    %c0_176 = arith.constant 0 : index
    %c0_177 = arith.constant 0 : index
    %414 = vector.load %arg10[%c1_175, %c0_176, %c0_177] : memref<2x32x32xf32, #tpu.memory_space<vmem>>, vector<1x32x32xf32>
    %415 = vector.shape_cast %414 : vector<1x32x32xf32> to vector<32x32xf32>
    %cst_178 = arith.constant dense<0.000000e+00> : vector<32x16xf32>
    %416 = tpu.matmul %415, %160, %cst_178 {dimension_numbers = #tpu.dot_dimension_numbers<[1], [0], [0], [1], [0, 0, 1, 1], [], []>} : vector<32x32xf32>, vector<32x16xf32>, vector<32x16xf32> -> vector<32x16xf32>
    %417 = vector.broadcast %407 : vector<32x1xf32> to vector<32x16xf32>
    %418 = arith.addf %416, %417 : vector<32x16xf32>
    %cst_179 = arith.constant dense<0.000000e+00> : vector<32xf32>
    %419 = vector.multi_reduction <add>, %418, %cst_179 [1] : vector<32x16xf32> to vector<32xf32>
    %420 = vector.shape_cast %419 : vector<32xf32> to vector<32x1xf32>
    %cst_180 = arith.constant 1.600000e+01 : f32
    %421 = vector.broadcast %cst_180 : f32 to vector<32x1xf32>
    %422 = arith.divf %420, %421 : vector<32x1xf32>
    %423 = vector.shape_cast %422 : vector<32x1xf32> to vector<32x1xf32>
    %424 = vector.broadcast %423 : vector<32x1xf32> to vector<32x8xf32>
    %c1_181 = arith.constant 1 : index
    %c0_182 = arith.constant 0 : index
    %c0_183 = arith.constant 0 : index
    %425 = vector.load %arg11[%c1_181, %c0_182, %c0_183] : memref<2x32x32xf32, #tpu.memory_space<vmem>>, vector<1x32x32xf32>
    %426 = vector.shape_cast %425 : vector<1x32x32xf32> to vector<32x32xf32>
    %c1_184 = arith.constant 1 : index
    %c0_185 = arith.constant 0 : index
    %c0_186 = arith.constant 0 : index
    %427 = vector.load %arg12[%c1_184, %c0_185, %c0_186] : memref<2x64x64xf32, #tpu.memory_space<vmem>>, vector<1x64x64xf32>
    %428 = vector.shape_cast %427 : vector<1x64x64xf32> to vector<64x64xf32>
    %c1_187 = arith.constant 1 : index
    %c0_188 = arith.constant 0 : index
    %c0_189 = arith.constant 0 : index
    %429 = vector.load %arg13[%c1_187, %c0_188, %c0_189] : memref<2x32x64xf32, #tpu.memory_space<vmem>>, vector<1x32x64xf32>
    %430 = vector.shape_cast %429 : vector<1x32x64xf32> to vector<32x64xf32>
    %cst_190 = arith.constant dense<0.000000e+00> : vector<32x8xf32>
    %431 = tpu.matmul %426, %424, %cst_190 {dimension_numbers = #tpu.dot_dimension_numbers<[1], [0], [0], [1], [0, 0, 1, 1], [], []>} : vector<32x32xf32>, vector<32x8xf32>, vector<32x8xf32> -> vector<32x8xf32>
    %432 = vector.broadcast %408 : vector<32x1xf32> to vector<32x8xf32>
    %433 = arith.addf %431, %432 : vector<32x8xf32>
    %cst_191 = arith.constant dense<0.000000e+00> : vector<8xf32>
    %434 = vector.multi_reduction <add>, %433, %cst_191 [0] : vector<32x8xf32> to vector<8xf32>
    %435 = vector.shape_cast %434 : vector<8xf32> to vector<1x8xf32>
    %cst_192 = arith.constant 3.200000e+01 : f32
    %436 = vector.broadcast %cst_192 : f32 to vector<1x8xf32>
    %437 = arith.divf %435, %436 : vector<1x8xf32>
    %438 = vector.broadcast %437 : vector<1x8xf32> to vector<32x8xf32>
    %439 = arith.subf %433, %438 : vector<32x8xf32>
    %440 = arith.mulf %439, %439 : vector<32x8xf32>
    %cst_193 = arith.constant dense<0.000000e+00> : vector<8xf32>
    %441 = vector.multi_reduction <add>, %440, %cst_193 [0] : vector<32x8xf32> to vector<8xf32>
    %442 = vector.shape_cast %441 : vector<8xf32> to vector<1x8xf32>
    %cst_194 = arith.constant 3.200000e+01 : f32
    %443 = vector.broadcast %cst_194 : f32 to vector<1x8xf32>
    %444 = arith.divf %442, %443 : vector<1x8xf32>
    %445 = vector.broadcast %437 : vector<1x8xf32> to vector<32x8xf32>
    %446 = arith.subf %433, %445 : vector<32x8xf32>
    %cst_195 = arith.constant 9.99999974E-6 : f32
    %447 = vector.broadcast %cst_195 : f32 to vector<1x8xf32>
    %448 = arith.addf %444, %447 : vector<1x8xf32>
    %449 = math.rsqrt %448 : vector<1x8xf32>
    %450 = vector.broadcast %449 : vector<1x8xf32> to vector<32x8xf32>
    %451 = arith.mulf %446, %450 : vector<32x8xf32>
    %452 = vector.broadcast %410 : vector<32x1xf32> to vector<32x8xf32>
    %453 = arith.mulf %451, %452 : vector<32x8xf32>
    %454 = vector.broadcast %411 : vector<32x1xf32> to vector<32x8xf32>
    %455 = arith.addf %453, %454 : vector<32x8xf32>
    %456 = tpu.concatenate %245, %455 in 0 : vector<32x8xf32>, vector<32x8xf32> -> vector<64x8xf32>
    %cst_196 = arith.constant dense<0.000000e+00> : vector<64x8xf32>
    %457 = tpu.matmul %428, %456, %cst_196 {dimension_numbers = #tpu.dot_dimension_numbers<[1], [0], [0], [1], [0, 0, 1, 1], [], []>} : vector<64x64xf32>, vector<64x8xf32>, vector<64x8xf32> -> vector<64x8xf32>
    %458 = vector.broadcast %406 : vector<64x1xf32> to vector<64x8xf32>
    %459 = arith.addf %457, %458 : vector<64x8xf32>
    %cst_197 = arith.constant 0.000000e+00 : f32
    %460 = vector.broadcast %cst_197 : f32 to vector<64x8xf32>
    %461 = arith.maximumf %459, %460 : vector<64x8xf32>
    %cst_198 = arith.constant dense<0.000000e+00> : vector<32x8xf32>
    %462 = tpu.matmul %430, %461, %cst_198 {dimension_numbers = #tpu.dot_dimension_numbers<[1], [0], [0], [1], [0, 0, 1, 1], [], []>} : vector<32x64xf32>, vector<64x8xf32>, vector<32x8xf32> -> vector<32x8xf32>
    %463 = vector.broadcast %409 : vector<32x1xf32> to vector<32x8xf32>
    %464 = arith.addf %462, %463 : vector<32x8xf32>
    %cst_199 = arith.constant dense<0.000000e+00> : vector<8xf32>
    %465 = vector.multi_reduction <add>, %464, %cst_199 [0] : vector<32x8xf32> to vector<8xf32>
    %466 = vector.shape_cast %465 : vector<8xf32> to vector<1x8xf32>
    %cst_200 = arith.constant 3.200000e+01 : f32
    %467 = vector.broadcast %cst_200 : f32 to vector<1x8xf32>
    %468 = arith.divf %466, %467 : vector<1x8xf32>
    %469 = vector.broadcast %468 : vector<1x8xf32> to vector<32x8xf32>
    %470 = arith.subf %464, %469 : vector<32x8xf32>
    %471 = arith.mulf %470, %470 : vector<32x8xf32>
    %cst_201 = arith.constant dense<0.000000e+00> : vector<8xf32>
    %472 = vector.multi_reduction <add>, %471, %cst_201 [0] : vector<32x8xf32> to vector<8xf32>
    %473 = vector.shape_cast %472 : vector<8xf32> to vector<1x8xf32>
    %cst_202 = arith.constant 3.200000e+01 : f32
    %474 = vector.broadcast %cst_202 : f32 to vector<1x8xf32>
    %475 = arith.divf %473, %474 : vector<1x8xf32>
    %476 = vector.broadcast %468 : vector<1x8xf32> to vector<32x8xf32>
    %477 = arith.subf %464, %476 : vector<32x8xf32>
    %cst_203 = arith.constant 9.99999974E-6 : f32
    %478 = vector.broadcast %cst_203 : f32 to vector<1x8xf32>
    %479 = arith.addf %475, %478 : vector<1x8xf32>
    %480 = math.rsqrt %479 : vector<1x8xf32>
    %481 = vector.broadcast %480 : vector<1x8xf32> to vector<32x8xf32>
    %482 = arith.mulf %477, %481 : vector<32x8xf32>
    %483 = vector.broadcast %412 : vector<32x1xf32> to vector<32x8xf32>
    %484 = arith.mulf %482, %483 : vector<32x8xf32>
    %485 = vector.broadcast %413 : vector<32x1xf32> to vector<32x8xf32>
    %486 = arith.addf %484, %485 : vector<32x8xf32>
    %487 = arith.addf %245, %486 : vector<32x8xf32>
    %c0_204 = arith.constant 0 : index
    %c0_205 = arith.constant 0 : index
    %c0_206 = arith.constant 0 : index
    %488 = vector.load %arg16[%c0_204, %c0_205, %c0_206] : memref<1x32x16xf32, #tpu.memory_space<vmem>>, vector<1x32x16xf32>
    %489 = vector.shape_cast %488 : vector<1x32x16xf32> to vector<32x16xf32>
    %490 = vector.shape_cast %402 : vector<32x16xf32> to vector<1x32x16xf32>
    tpu.vector_store %arg16[%c0_204, %c0_205, %c0_206], %490 {strides = array<i32>} : memref<1x32x16xf32, #tpu.memory_space<vmem>>, vector<1x32x16xf32>,
    %c0_207 = arith.constant 0 : index
    %c0_208 = arith.constant 0 : index
    %c0_209 = arith.constant 0 : index
    %491 = vector.load %arg17[%c0_207, %c0_208, %c0_209] : memref<1x32x8xf32, #tpu.memory_space<vmem>>, vector<1x32x8xf32>
    %492 = vector.shape_cast %491 : vector<1x32x8xf32> to vector<32x8xf32>
    %493 = vector.shape_cast %487 : vector<32x8xf32> to vector<1x32x8xf32>
    tpu.vector_store %arg17[%c0_207, %c0_208, %c0_209], %493 {strides = array<i32>} : memref<1x32x8xf32, #tpu.memory_space<vmem>>, vector<1x32x8xf32>,
    return
  }
  func.func @transform_0(%arg0: i32) -> (i32, i32, i32) {
    %c0_i32 = arith.constant 0 : i32
    %c0_i32_0 = arith.constant 0 : i32
    %c0_i32_1 = arith.constant 0 : i32
    return %arg0, %c0_i32, %c0_i32_0 : i32, i32, i32
  }
  func.func @transform_1(%arg0: i32) -> (i32, i32, i32) {
    %c0_i32 = arith.constant 0 : i32
    %c0_i32_0 = arith.constant 0 : i32
    %c0_i32_1 = arith.constant 0 : i32
    return %arg0, %c0_i32, %c0_i32_0 : i32, i32, i32
  }
  func.func @transform_2(%arg0: i32) -> (i32, i32, i32) {
    %c0_i32 = arith.constant 0 : i32
    %c0_i32_0 = arith.constant 0 : i32
    %c0_i32_1 = arith.constant 0 : i32
    %c0_i32_2 = arith.constant 0 : i32
    return %c0_i32, %c0_i32_0, %c0_i32_1 : i32, i32, i32
  }
  func.func @transform_3(%arg0: i32) -> (i32, i32, i32) {
    %c0_i32 = arith.constant 0 : i32
    %c0_i32_0 = arith.constant 0 : i32
    %c0_i32_1 = arith.constant 0 : i32
    %c0_i32_2 = arith.constant 0 : i32
    return %c0_i32, %c0_i32_0, %c0_i32_1 : i32, i32, i32
  }
  func.func @transform_4(%arg0: i32) -> (i32, i32, i32) {
    %c0_i32 = arith.constant 0 : i32
    %c0_i32_0 = arith.constant 0 : i32
    %c0_i32_1 = arith.constant 0 : i32
    %c0_i32_2 = arith.constant 0 : i32
    return %c0_i32, %c0_i32_0, %c0_i32_1 : i32, i32, i32
  }
  func.func @transform_5(%arg0: i32) -> (i32, i32, i32) {
    %c0_i32 = arith.constant 0 : i32
    %c0_i32_0 = arith.constant 0 : i32
    %c0_i32_1 = arith.constant 0 : i32
    %c0_i32_2 = arith.constant 0 : i32
    return %c0_i32, %c0_i32_0, %c0_i32_1 : i32, i32, i32
  }
  func.func @transform_6(%arg0: i32) -> (i32, i32, i32) {
    %c0_i32 = arith.constant 0 : i32
    %c0_i32_0 = arith.constant 0 : i32
    %c0_i32_1 = arith.constant 0 : i32
    %c0_i32_2 = arith.constant 0 : i32
    return %c0_i32, %c0_i32_0, %c0_i32_1 : i32, i32, i32
  }
  func.func @transform_7(%arg0: i32) -> (i32, i32, i32) {
    %c0_i32 = arith.constant 0 : i32
    %c0_i32_0 = arith.constant 0 : i32
    %c0_i32_1 = arith.constant 0 : i32
    %c0_i32_2 = arith.constant 0 : i32
    return %c0_i32, %c0_i32_0, %c0_i32_1 : i32, i32, i32
  }
  func.func @transform_8(%arg0: i32) -> (i32, i32, i32) {
    %c0_i32 = arith.constant 0 : i32
    %c0_i32_0 = arith.constant 0 : i32
    %c0_i32_1 = arith.constant 0 : i32
    %c0_i32_2 = arith.constant 0 : i32
    return %c0_i32, %c0_i32_0, %c0_i32_1 : i32, i32, i32
  }
  func.func @transform_9(%arg0: i32) -> (i32, i32, i32) {
    %c0_i32 = arith.constant 0 : i32
    %c0_i32_0 = arith.constant 0 : i32
    %c0_i32_1 = arith.constant 0 : i32
    %c0_i32_2 = arith.constant 0 : i32
    return %c0_i32, %c0_i32_0, %c0_i32_1 : i32, i32, i32
  }
  func.func @transform_10(%arg0: i32) -> (i32, i32, i32) {
    %c0_i32 = arith.constant 0 : i32
    %c0_i32_0 = arith.constant 0 : i32
    %c0_i32_1 = arith.constant 0 : i32
    %c0_i32_2 = arith.constant 0 : i32
    return %c0_i32, %c0_i32_0, %c0_i32_1 : i32, i32, i32
  }
  func.func @transform_11(%arg0: i32) -> (i32, i32, i32) {
    %c0_i32 = arith.constant 0 : i32
    %c0_i32_0 = arith.constant 0 : i32
    %c0_i32_1 = arith.constant 0 : i32
    %c0_i32_2 = arith.constant 0 : i32
    return %c0_i32, %c0_i32_0, %c0_i32_1 : i32, i32, i32
  }
  func.func @transform_12(%arg0: i32) -> (i32, i32, i32) {
    %c0_i32 = arith.constant 0 : i32
    %c0_i32_0 = arith.constant 0 : i32
    %c0_i32_1 = arith.constant 0 : i32
    %c0_i32_2 = arith.constant 0 : i32
    return %c0_i32, %c0_i32_0, %c0_i32_1 : i32, i32, i32
  }
  func.func @transform_13(%arg0: i32) -> (i32, i32, i32) {
    %c0_i32 = arith.constant 0 : i32
    %c0_i32_0 = arith.constant 0 : i32
    %c0_i32_1 = arith.constant 0 : i32
    %c0_i32_2 = arith.constant 0 : i32
    return %c0_i32, %c0_i32_0, %c0_i32_1 : i32, i32, i32
  }
  func.func @transform_14(%arg0: i32) -> (i32, i32, i32) {
    %c0_i32 = arith.constant 0 : i32
    %c0_i32_0 = arith.constant 0 : i32
    %c0_i32_1 = arith.constant 0 : i32
    %c0_i32_2 = arith.constant 0 : i32
    return %c0_i32, %c0_i32_0, %c0_i32_1 : i32, i32, i32
  }
  func.func @transform_15(%arg0: i32) -> (i32, i32, i32) {
    %c0_i32 = arith.constant 0 : i32
    %c0_i32_0 = arith.constant 0 : i32
    %c0_i32_1 = arith.constant 0 : i32
    return %arg0, %c0_i32, %c0_i32_0 : i32, i32, i32
  }
  func.func @transform_16(%arg0: i32) -> (i32, i32, i32) {
    %c0_i32 = arith.constant 0 : i32
    %c0_i32_0 = arith.constant 0 : i32
    %c0_i32_1 = arith.constant 0 : i32
    return %arg0, %c0_i32, %c0_i32_0 : i32, i32, i32
  }
}

</mosaic_0001>

<llo_original>
// kernel: attentional_gnn_fine.1
$region0: #{attentional_gnn_fine.1}
  #allocation0 [shape = 'u32[]', space=smem, size = 0x4, offset = 0x4, fixed_abs, tag = 'smem constant byte address 0x4 - core index']
  #allocation1 [shape = 'u32[144,128]{1,0:T(1,128)}', space=vmem, size = 0x12000, scoped, tag = 'internal scratch']
  #allocation2 [shape = 'f32[32,16]{1,0:T(8,128)}', space=vmem, size = 0x4000, scoped, tag = 'scratch operand']
  %s0 = inlined_call_operand.vmem [shape: f32[2,32,16], index: 0, kind: input, shape index: {}]
  %s1 = inlined_call_operand.vmem [shape: f32[2,32,8], index: 1, kind: input, shape index: {}]
  %s2 = inlined_call_operand.vmem [shape: f32[2,32,32], index: 2, kind: input, shape index: {}]
  %s3 = inlined_call_operand.vmem [shape: f32[2,64,32], index: 3, kind: input, shape index: {}]
  %s4 = inlined_call_operand.vmem [shape: f32[2,32,32], index: 4, kind: input, shape index: {}]
  %s5 = inlined_call_operand.vmem [shape: f32[2,64,64], index: 5, kind: input, shape index: {}]
  %s6 = inlined_call_operand.vmem [shape: f32[2,32,64], index: 6, kind: input, shape index: {}]
  %s7 = inlined_call_operand.vmem [shape: f32[2,32,7], index: 7, kind: input, shape index: {}]
  %s8 = inlined_call_operand.vmem [shape: f32[2,64,2], index: 8, kind: input, shape index: {}]
  %s9 = inlined_call_operand.vmem [shape: f32[2,32,32], index: 9, kind: input, shape index: {}]
  %s10 = inlined_call_operand.vmem [shape: f32[2,32,32], index: 10, kind: input, shape index: {}]
  %s11 = inlined_call_operand.vmem [shape: f32[2,64,64], index: 11, kind: input, shape index: {}]
  %s12 = inlined_call_operand.vmem [shape: f32[2,32,64], index: 12, kind: input, shape index: {}]
  %s13 = inlined_call_operand.vmem [shape: f32[2,32,7], index: 13, kind: input, shape index: {}]
  %s14 = inlined_call_operand.vmem [shape: f32[2,64,1], index: 14, kind: input, shape index: {}]
  %s15 = inlined_call_operand.vmem [shape: f32[2,32,16], index: 15, kind: output, shape index: {0}]
  %s16 = inlined_call_operand.vmem [shape: f32[2,32,8], index: 16, kind: output, shape index: {1}]
  %17 = xla_tuple %s15, %s16
  %s18 = sld [smem:[#allocation0]]
  $region101: #{attentional_gnn_fine.1} parent=0
    _
  %s20 = ssub.s32 1, %s18
  %s21 = scalar_select 0, %s20, %s18
  loop: start=0, step=1, limit=4
  $region2: #{attentional_gnn_fine.1} parent=0 // loop_pre_header
    _
  $region3: #{attentional_gnn_fine.1} parent=0 // loop_header
    %s23 = sphi 0, %s27
    %p24 = scmp.ge.s32.totalorder %s23, 4
    %s33 = sphi 0, %s35
    %s36 = sphi 0, %s33
    %s37 = sphi 0, %s36
    %s53 = sphi 0, %s37
    %s59 = sphi 0, %s61
    %s62 = sphi 0, %s59
    %s63 = sphi 0, %s62
    %s79 = sphi 0, %s63
    %s83 = sphi 0, %s83
    %s85 = sphi 0, %s83
    %s86 = sphi 0, %s85
    %s100 = sphi 0, %s86
    %s104 = sphi 0, %s104
    %s106 = sphi 0, %s104
    %s107 = sphi 0, %s106
    %s121 = sphi 0, %s107
    %s125 = sphi 0, %s125
    %s127 = sphi 0, %s125
    %s128 = sphi 0, %s127
    %s142 = sphi 0, %s128
    %s146 = sphi 0, %s146
    %s148 = sphi 0, %s146
    %s149 = sphi 0, %s148
    %s163 = sphi 0, %s149
    %s167 = sphi 0, %s167
    %s169 = sphi 0, %s167
    %s170 = sphi 0, %s169
    %s184 = sphi 0, %s170
    %s188 = sphi 0, %s188
    %s190 = sphi 0, %s188
    %s191 = sphi 0, %s190
    %s205 = sphi 0, %s191
    %s209 = sphi 0, %s209
    %s211 = sphi 0, %s209
    %s212 = sphi 0, %s211
    %s226 = sphi 0, %s212
    %s230 = sphi 0, %s230
    %s232 = sphi 0, %s230
    %s233 = sphi 0, %s232
    %s247 = sphi 0, %s233
    %s251 = sphi 0, %s251
    %s253 = sphi 0, %s251
    %s254 = sphi 0, %s253
    %s268 = sphi 0, %s254
    %s272 = sphi 0, %s272
    %s274 = sphi 0, %s272
    %s275 = sphi 0, %s274
    %s289 = sphi 0, %s275
    %s293 = sphi 0, %s293
    %s295 = sphi 0, %s293
    %s296 = sphi 0, %s295
    %s310 = sphi 0, %s296
    %s314 = sphi 0, %s314
    %s316 = sphi 0, %s314
    %s317 = sphi 0, %s316
    %s331 = sphi 0, %s317
    %s335 = sphi 0, %s335
    %s337 = sphi 0, %s335
    %s338 = sphi 0, %s337
    %s352 = sphi 0, %s338
    %s358 = sphi 0, %s360
    %s361 = sphi 0, %s358
    %s362 = sphi 0, %s361
    %s378 = sphi 0, %s362
    %s384 = sphi 0, %s386
    %s387 = sphi 0, %s384
    %s388 = sphi 0, %s387
    %s404 = sphi 0, %s388
  $region4: #{attentional_gnn_fine.1} parent=0 // loop_header_branch
    %26 = sbr.rel (%p24) target = $region8
  $region5: #{attentional_gnn_fine.1} parent=0 // loop_body
    %s28 = ssub.s32 %s23, 1
    %s29 = ssub.s32 %s23, 2
    %s30 = sadd.s32 %s23, 1
    %s31 = ssub.s32 %s23, %s30
    %p32 = scmp.eq.s32.totalorder %s31, 0
    %s34 = sadd.s32 %s33, 1
    %s35 = scalar_select %p32, %s33, %s34
    %p38 = pneg %p32
    %p39 = scmp.eq.s32.totalorder %s23, 1
    %p40 = por %p38, %p39
    %p41 = scmp.ne.s32.totalorder %s33, %s36
    %p42 = scmp.eq.s32.totalorder %s23, 0
    %p43 = por %p41, %p42
    %p44 = scmp.ne.s32.totalorder %s33, %s36
    %p45 = scmp.eq.s32.totalorder %s28, 1
    %p46 = por %p44, %p45
    %p47 = scmp.ne.s32.totalorder %s36, %s37
    %p48 = scmp.eq.s32.totalorder %s28, 0
    %p49 = por %p47, %p48
    %p50 = scmp.ne.s32.totalorder %s36, %s37
    %p51 = scmp.eq.s32.totalorder %s29, 1
    %p52 = por %p50, %p51
    %p54 = scmp.ne.s32.totalorder %s37, %s53
    %p55 = scmp.eq.s32.totalorder %s29, 0
    %p56 = por %p54, %p55
    %s57 = ssub.s32 %s23, %s30
    %p58 = scmp.eq.s32.totalorder %s57, 0
    %s60 = sadd.s32 %s59, 1
    %s61 = scalar_select %p58, %s59, %s60
    %p64 = pneg %p58
    %p65 = scmp.eq.s32.totalorder %s23, 1
    %p66 = por %p64, %p65
    %p67 = scmp.ne.s32.totalorder %s59, %s62
    %p68 = scmp.eq.s32.totalorder %s23, 0
    %p69 = por %p67, %p68
    %p70 = scmp.ne.s32.totalorder %s59, %s62
    %p71 = scmp.eq.s32.totalorder %s28, 1
    %p72 = por %p70, %p71
    %p73 = scmp.ne.s32.totalorder %s62, %s63
    %p74 = scmp.eq.s32.totalorder %s28, 0
    %p75 = por %p73, %p74
    %p76 = scmp.ne.s32.totalorder %s62, %s63
    %p77 = scmp.eq.s32.totalorder %s29, 1
    %p78 = por %p76, %p77
    %p80 = scmp.ne.s32.totalorder %s63, %s79
    %p81 = scmp.eq.s32.totalorder %s29, 0
    %p82 = por %p80, %p81
    %s84 = sadd.s32 %s83, 1
    %p87 = scmp.eq.s32.totalorder %s23, 1
    %p88 = scmp.ne.s32.totalorder %s83, %s85
    %p89 = scmp.eq.s32.totalorder %s23, 0
    %p90 = por %p88, %p89
    %p91 = scmp.ne.s32.totalorder %s83, %s85
    %p92 = scmp.eq.s32.totalorder %s28, 1
    %p93 = por %p91, %p92
    %p94 = scmp.ne.s32.totalorder %s85, %s86
    %p95 = scmp.eq.s32.totalorder %s28, 0
    %p96 = por %p94, %p95
    %p97 = scmp.ne.s32.totalorder %s85, %s86
    %p98 = scmp.eq.s32.totalorder %s29, 1
    %p99 = por %p97, %p98
    %p101 = scmp.ne.s32.totalorder %s86, %s100
    %p102 = scmp.eq.s32.totalorder %s29, 0
    %p103 = por %p101, %p102
    %s105 = sadd.s32 %s104, 1
    %p108 = scmp.eq.s32.totalorder %s23, 1
    %p109 = scmp.ne.s32.totalorder %s104, %s106
    %p110 = scmp.eq.s32.totalorder %s23, 0
    %p111 = por %p109, %p110
    %p112 = scmp.ne.s32.totalorder %s104, %s106
    %p113 = scmp.eq.s32.totalorder %s28, 1
    %p114 = por %p112, %p113
    %p115 = scmp.ne.s32.totalorder %s106, %s107
    %p116 = scmp.eq.s32.totalorder %s28, 0
    %p117 = por %p115, %p116
    %p118 = scmp.ne.s32.totalorder %s106, %s107
    %p119 = scmp.eq.s32.totalorder %s29, 1
    %p120 = por %p118, %p119
    %p122 = scmp.ne.s32.totalorder %s107, %s121
    %p123 = scmp.eq.s32.totalorder %s29, 0
    %p124 = por %p122, %p123
    %s126 = sadd.s32 %s125, 1
    %p129 = scmp.eq.s32.totalorder %s23, 1
    %p130 = scmp.ne.s32.totalorder %s125, %s127
    %p131 = scmp.eq.s32.totalorder %s23, 0
    %p132 = por %p130, %p131
    %p133 = scmp.ne.s32.totalorder %s125, %s127
    %p134 = scmp.eq.s32.totalorder %s28, 1
    %p135 = por %p133, %p134
    %p136 = scmp.ne.s32.totalorder %s127, %s128
    %p137 = scmp.eq.s32.totalorder %s28, 0
    %p138 = por %p136, %p137
    %p139 = scmp.ne.s32.totalorder %s127, %s128
    %p140 = scmp.eq.s32.totalorder %s29, 1
    %p141 = por %p139, %p140
    %p143 = scmp.ne.s32.totalorder %s128, %s142
    %p144 = scmp.eq.s32.totalorder %s29, 0
    %p145 = por %p143, %p144
    %s147 = sadd.s32 %s146, 1
    %p150 = scmp.eq.s32.totalorder %s23, 1
    %p151 = scmp.ne.s32.totalorder %s146, %s148
    %p152 = scmp.eq.s32.totalorder %s23, 0
    %p153 = por %p151, %p152
    %p154 = scmp.ne.s32.totalorder %s146, %s148
    %p155 = scmp.eq.s32.totalorder %s28, 1
    %p156 = por %p154, %p155
    %p157 = scmp.ne.s32.totalorder %s148, %s149
    %p158 = scmp.eq.s32.totalorder %s28, 0
    %p159 = por %p157, %p158
    %p160 = scmp.ne.s32.totalorder %s148, %s149
    %p161 = scmp.eq.s32.totalorder %s29, 1
    %p162 = por %p160, %p161
    %p164 = scmp.ne.s32.totalorder %s149, %s163
    %p165 = scmp.eq.s32.totalorder %s29, 0
    %p166 = por %p164, %p165
    %s168 = sadd.s32 %s167, 1
    %p171 = scmp.eq.s32.totalorder %s23, 1
    %p172 = scmp.ne.s32.totalorder %s167, %s169
    %p173 = scmp.eq.s32.totalorder %s23, 0
    %p174 = por %p172, %p173
    %p175 = scmp.ne.s32.totalorder %s167, %s169
    %p176 = scmp.eq.s32.totalorder %s28, 1
    %p177 = por %p175, %p176
    %p178 = scmp.ne.s32.totalorder %s169, %s170
    %p179 = scmp.eq.s32.totalorder %s28, 0
    %p180 = por %p178, %p179
    %p181 = scmp.ne.s32.totalorder %s169, %s170
    %p182 = scmp.eq.s32.totalorder %s29, 1
    %p183 = por %p181, %p182
    %p185 = scmp.ne.s32.totalorder %s170, %s184
    %p186 = scmp.eq.s32.totalorder %s29, 0
    %p187 = por %p185, %p186
    %s189 = sadd.s32 %s188, 1
    %p192 = scmp.eq.s32.totalorder %s23, 1
    %p193 = scmp.ne.s32.totalorder %s188, %s190
    %p194 = scmp.eq.s32.totalorder %s23, 0
    %p195 = por %p193, %p194
    %p196 = scmp.ne.s32.totalorder %s188, %s190
    %p197 = scmp.eq.s32.totalorder %s28, 1
    %p198 = por %p196, %p197
    %p199 = scmp.ne.s32.totalorder %s190, %s191
    %p200 = scmp.eq.s32.totalorder %s28, 0
    %p201 = por %p199, %p200
    %p202 = scmp.ne.s32.totalorder %s190, %s191
    %p203 = scmp.eq.s32.totalorder %s29, 1
    %p204 = por %p202, %p203
    %p206 = scmp.ne.s32.totalorder %s191, %s205
    %p207 = scmp.eq.s32.totalorder %s29, 0
    %p208 = por %p206, %p207
    %s210 = sadd.s32 %s209, 1
    %p213 = scmp.eq.s32.totalorder %s23, 1
    %p214 = scmp.ne.s32.totalorder %s209, %s211
    %p215 = scmp.eq.s32.totalorder %s23, 0
    %p216 = por %p214, %p215
    %p217 = scmp.ne.s32.totalorder %s209, %s211
    %p218 = scmp.eq.s32.totalorder %s28, 1
    %p219 = por %p217, %p218
    %p220 = scmp.ne.s32.totalorder %s211, %s212
    %p221 = scmp.eq.s32.totalorder %s28, 0
    %p222 = por %p220, %p221
    %p223 = scmp.ne.s32.totalorder %s211, %s212
    %p224 = scmp.eq.s32.totalorder %s29, 1
    %p225 = por %p223, %p224
    %p227 = scmp.ne.s32.totalorder %s212, %s226
    %p228 = scmp.eq.s32.totalorder %s29, 0
    %p229 = por %p227, %p228
    %s231 = sadd.s32 %s230, 1
    %p234 = scmp.eq.s32.totalorder %s23, 1
    %p235 = scmp.ne.s32.totalorder %s230, %s232
    %p236 = scmp.eq.s32.totalorder %s23, 0
    %p237 = por %p235, %p236
    %p238 = scmp.ne.s32.totalorder %s230, %s232
    %p239 = scmp.eq.s32.totalorder %s28, 1
    %p240 = por %p238, %p239
    %p241 = scmp.ne.s32.totalorder %s232, %s233
    %p242 = scmp.eq.s32.totalorder %s28, 0
    %p243 = por %p241, %p242
    %p244 = scmp.ne.s32.totalorder %s232, %s233
    %p245 = scmp.eq.s32.totalorder %s29, 1
    %p246 = por %p244, %p245
    %p248 = scmp.ne.s32.totalorder %s233, %s247
    %p249 = scmp.eq.s32.totalorder %s29, 0
    %p250 = por %p248, %p249
    %s252 = sadd.s32 %s251, 1
    %p255 = scmp.eq.s32.totalorder %s23, 1
    %p256 = scmp.ne.s32.totalorder %s251, %s253
    %p257 = scmp.eq.s32.totalorder %s23, 0
    %p258 = por %p256, %p257
    %p259 = scmp.ne.s32.totalorder %s251, %s253
    %p260 = scmp.eq.s32.totalorder %s28, 1
    %p261 = por %p259, %p260
    %p262 = scmp.ne.s32.totalorder %s253, %s254
    %p263 = scmp.eq.s32.totalorder %s28, 0
    %p264 = por %p262, %p263
    %p265 = scmp.ne.s32.totalorder %s253, %s254
    %p266 = scmp.eq.s32.totalorder %s29, 1
    %p267 = por %p265, %p266
    %p269 = scmp.ne.s32.totalorder %s254, %s268
    %p270 = scmp.eq.s32.totalorder %s29, 0
    %p271 = por %p269, %p270
    %s273 = sadd.s32 %s272, 1
    %p276 = scmp.eq.s32.totalorder %s23, 1
    %p277 = scmp.ne.s32.totalorder %s272, %s274
    %p278 = scmp.eq.s32.totalorder %s23, 0
    %p279 = por %p277, %p278
    %p280 = scmp.ne.s32.totalorder %s272, %s274
    %p281 = scmp.eq.s32.totalorder %s28, 1
    %p282 = por %p280, %p281
    %p283 = scmp.ne.s32.totalorder %s274, %s275
    %p284 = scmp.eq.s32.totalorder %s28, 0
    %p285 = por %p283, %p284
    %p286 = scmp.ne.s32.totalorder %s274, %s275
    %p287 = scmp.eq.s32.totalorder %s29, 1
    %p288 = por %p286, %p287
    %p290 = scmp.ne.s32.totalorder %s275, %s289
    %p291 = scmp.eq.s32.totalorder %s29, 0
    %p292 = por %p290, %p291
    %s294 = sadd.s32 %s293, 1
    %p297 = scmp.eq.s32.totalorder %s23, 1
    %p298 = scmp.ne.s32.totalorder %s293, %s295
    %p299 = scmp.eq.s32.totalorder %s23, 0
    %p300 = por %p298, %p299
    %p301 = scmp.ne.s32.totalorder %s293, %s295
    %p302 = scmp.eq.s32.totalorder %s28, 1
    %p303 = por %p301, %p302
    %p304 = scmp.ne.s32.totalorder %s295, %s296
    %p305 = scmp.eq.s32.totalorder %s28, 0
    %p306 = por %p304, %p305
    %p307 = scmp.ne.s32.totalorder %s295, %s296
    %p308 = scmp.eq.s32.totalorder %s29, 1
    %p309 = por %p307, %p308
    %p311 = scmp.ne.s32.totalorder %s296, %s310
    %p312 = scmp.eq.s32.totalorder %s29, 0
    %p313 = por %p311, %p312
    %s315 = sadd.s32 %s314, 1
    %p318 = scmp.eq.s32.totalorder %s23, 1
    %p319 = scmp.ne.s32.totalorder %s314, %s316
    %p320 = scmp.eq.s32.totalorder %s23, 0
    %p321 = por %p319, %p320
    %p322 = scmp.ne.s32.totalorder %s314, %s316
    %p323 = scmp.eq.s32.totalorder %s28, 1
    %p324 = por %p322, %p323
    %p325 = scmp.ne.s32.totalorder %s316, %s317
    %p326 = scmp.eq.s32.totalorder %s28, 0
    %p327 = por %p325, %p326
    %p328 = scmp.ne.s32.totalorder %s316, %s317
    %p329 = scmp.eq.s32.totalorder %s29, 1
    %p330 = por %p328, %p329
    %p332 = scmp.ne.s32.totalorder %s317, %s331
    %p333 = scmp.eq.s32.totalorder %s29, 0
    %p334 = por %p332, %p333
    %s336 = sadd.s32 %s335, 1
    %p339 = scmp.eq.s32.totalorder %s23, 1
    %p340 = scmp.ne.s32.totalorder %s335, %s337
    %p341 = scmp.eq.s32.totalorder %s23, 0
    %p342 = por %p340, %p341
    %p343 = scmp.ne.s32.totalorder %s335, %s337
    %p344 = scmp.eq.s32.totalorder %s28, 1
    %p345 = por %p343, %p344
    %p346 = scmp.ne.s32.totalorder %s337, %s338
    %p347 = scmp.eq.s32.totalorder %s28, 0
    %p348 = por %p346, %p347
    %p349 = scmp.ne.s32.totalorder %s337, %s338
    %p350 = scmp.eq.s32.totalorder %s29, 1
    %p351 = por %p349, %p350
    %p353 = scmp.ne.s32.totalorder %s338, %s352
    %p354 = scmp.eq.s32.totalorder %s29, 0
    %p355 = por %p353, %p354
    %s356 = ssub.s32 %s23, %s30
    %p357 = scmp.eq.s32.totalorder %s356, 0
    %s359 = sadd.s32 %s358, 1
    %s360 = scalar_select %p357, %s358, %s359
    %p363 = pneg %p357
    %p364 = scmp.eq.s32.totalorder %s23, 1
    %p365 = por %p363, %p364
    %p366 = scmp.ne.s32.totalorder %s358, %s361
    %p367 = scmp.eq.s32.totalorder %s23, 0
    %p368 = por %p366, %p367
    %p369 = scmp.ne.s32.totalorder %s358, %s361
    %p370 = scmp.eq.s32.totalorder %s28, 1
    %p371 = por %p369, %p370
    %p372 = scmp.ne.s32.totalorder %s361, %s362
    %p373 = scmp.eq.s32.totalorder %s28, 0
    %p374 = por %p372, %p373
    %p375 = scmp.ne.s32.totalorder %s361, %s362
    %p376 = scmp.eq.s32.totalorder %s29, 1
    %p377 = por %p375, %p376
    %p379 = scmp.ne.s32.totalorder %s362, %s378
    %p380 = scmp.eq.s32.totalorder %s29, 0
    %p381 = por %p379, %p380
    %s382 = ssub.s32 %s23, %s30
    %p383 = scmp.eq.s32.totalorder %s382, 0
    %s385 = sadd.s32 %s384, 1
    %s386 = scalar_select %p383, %s384, %s385
    %p389 = pneg %p383
    %p390 = scmp.eq.s32.totalorder %s23, 1
    %p391 = por %p389, %p390
    %p392 = scmp.ne.s32.totalorder %s384, %s387
    %p393 = scmp.eq.s32.totalorder %s23, 0
    %p394 = por %p392, %p393
    %p395 = scmp.ne.s32.totalorder %s384, %s387
    %p396 = scmp.eq.s32.totalorder %s28, 1
    %p397 = por %p395, %p396
    %p398 = scmp.ne.s32.totalorder %s387, %s388
    %p399 = scmp.eq.s32.totalorder %s28, 0
    %p400 = por %p398, %p399
    %p401 = scmp.ne.s32.totalorder %s387, %s388
    %p402 = scmp.eq.s32.totalorder %s29, 1
    %p403 = por %p401, %p402
    %p405 = scmp.ne.s32.totalorder %s388, %s404
    %p406 = scmp.eq.s32.totalorder %s29, 0
    %p407 = por %p405, %p406
    %p408 = scmp.le.s32.totalorder 1, %s23
    %p409 = scmp.lt.s32.totalorder %s23, 3
    %p410 = pnand %p408, %p409
    %p411 = pneg %p410
    // Predicated region
    $region9: #{attentional_gnn_fine.1} parent=5 // pred_check
      _
    $region10: #{attentional_gnn_fine.1} parent=5 // pred_check_branch
      %413 = sbr.rel (%p410) target = $region12
    $region11: #{attentional_gnn_fine.1} parent=5 // pred_region
      %s414 = ssub.s32 %s23, 1
      // Predicated region
      $region13: #{attentional_gnn_fine.1} parent=11 // pred_check
        %p415 = pneg %p96
      $region14: #{attentional_gnn_fine.1} parent=11 // pred_check_branch
        %417 = sbr.rel (%p415) target = $region16
      $region15: #{attentional_gnn_fine.1} parent=11 // pred_region
        _
      $region16: #{attentional_gnn_fine.1} parent=11 // pred_fallthru
        _
      // Predicated region
      $region17: #{attentional_gnn_fine.1} parent=11 // pred_check
        %p418 = pneg %p117
      $region18: #{attentional_gnn_fine.1} parent=11 // pred_check_branch
        %420 = sbr.rel (%p418) target = $region20
      $region19: #{attentional_gnn_fine.1} parent=11 // pred_region
        _
      $region20: #{attentional_gnn_fine.1} parent=11 // pred_fallthru
        _
      // Predicated region
      $region21: #{attentional_gnn_fine.1} parent=11 // pred_check
        %p421 = pneg %p138
      $region22: #{attentional_gnn_fine.1} parent=11 // pred_check_branch
        %423 = sbr.rel (%p421) target = $region24
      $region23: #{attentional_gnn_fine.1} parent=11 // pred_region
        _
      $region24: #{attentional_gnn_fine.1} parent=11 // pred_fallthru
        _
      // Predicated region
      $region25: #{attentional_gnn_fine.1} parent=11 // pred_check
        %p424 = pneg %p159
      $region26: #{attentional_gnn_fine.1} parent=11 // pred_check_branch
        %426 = sbr.rel (%p424) target = $region28
      $region27: #{attentional_gnn_fine.1} parent=11 // pred_region
        _
      $region28: #{attentional_gnn_fine.1} parent=11 // pred_fallthru
        _
      // Predicated region
      $region29: #{attentional_gnn_fine.1} parent=11 // pred_check
        %p427 = pneg %p180
      $region30: #{attentional_gnn_fine.1} parent=11 // pred_check_branch
        %429 = sbr.rel (%p427) target = $region32
      $region31: #{attentional_gnn_fine.1} parent=11 // pred_region
        _
      $region32: #{attentional_gnn_fine.1} parent=11 // pred_fallthru
        _
      // Predicated region
      $region33: #{attentional_gnn_fine.1} parent=11 // pred_check
        %p430 = pneg %p201
      $region34: #{attentional_gnn_fine.1} parent=11 // pred_check_branch
        %432 = sbr.rel (%p430) target = $region36
      $region35: #{attentional_gnn_fine.1} parent=11 // pred_region
        _
      $region36: #{attentional_gnn_fine.1} parent=11 // pred_fallthru
        _
      // Predicated region
      $region37: #{attentional_gnn_fine.1} parent=11 // pred_check
        %p433 = pneg %p222
      $region38: #{attentional_gnn_fine.1} parent=11 // pred_check_branch
        %435 = sbr.rel (%p433) target = $region40
      $region39: #{attentional_gnn_fine.1} parent=11 // pred_region
        _
      $region40: #{attentional_gnn_fine.1} parent=11 // pred_fallthru
        _
      // Predicated region
      $region41: #{attentional_gnn_fine.1} parent=11 // pred_check
        %p436 = pneg %p243
      $region42: #{attentional_gnn_fine.1} parent=11 // pred_check_branch
        %438 = sbr.rel (%p436) target = $region44
      $region43: #{attentional_gnn_fine.1} parent=11 // pred_region
        _
      $region44: #{attentional_gnn_fine.1} parent=11 // pred_fallthru
        _
      // Predicated region
      $region45: #{attentional_gnn_fine.1} parent=11 // pred_check
        %p439 = pneg %p264
      $region46: #{attentional_gnn_fine.1} parent=11 // pred_check_branch
        %441 = sbr.rel (%p439) target = $region48
      $region47: #{attentional_gnn_fine.1} parent=11 // pred_region
        _
      $region48: #{attentional_gnn_fine.1} parent=11 // pred_fallthru
        _
      // Predicated region
      $region49: #{attentional_gnn_fine.1} parent=11 // pred_check
        %p442 = pneg %p285
      $region50: #{attentional_gnn_fine.1} parent=11 // pred_check_branch
        %444 = sbr.rel (%p442) target = $region52
      $region51: #{attentional_gnn_fine.1} parent=11 // pred_region
        _
      $region52: #{attentional_gnn_fine.1} parent=11 // pred_fallthru
        _
      // Predicated region
      $region53: #{attentional_gnn_fine.1} parent=11 // pred_check
        %p445 = pneg %p306
      $region54: #{attentional_gnn_fine.1} parent=11 // pred_check_branch
        %447 = sbr.rel (%p445) target = $region56
      $region55: #{attentional_gnn_fine.1} parent=11 // pred_region
        _
      $region56: #{attentional_gnn_fine.1} parent=11 // pred_fallthru
        _
      // Predicated region
      $region57: #{attentional_gnn_fine.1} parent=11 // pred_check
        %p448 = pneg %p327
      $region58: #{attentional_gnn_fine.1} parent=11 // pred_check_branch
        %450 = sbr.rel (%p448) target = $region60
      $region59: #{attentional_gnn_fine.1} parent=11 // pred_region
        _
      $region60: #{attentional_gnn_fine.1} parent=11 // pred_fallthru
        _
      // Predicated region
      $region61: #{attentional_gnn_fine.1} parent=11 // pred_check
        %p451 = pneg %p348
      $region62: #{attentional_gnn_fine.1} parent=11 // pred_check_branch
        %453 = sbr.rel (%p451) target = $region64
      $region63: #{attentional_gnn_fine.1} parent=11 // pred_region
        _
      $region64: #{attentional_gnn_fine.1} parent=11 // pred_fallthru
        _
    $region12: #{attentional_gnn_fine.1} parent=5 // pred_fallthru
      _
    %p454 = scmp.lt.s32.totalorder %s23, 2
    // Predicated region
    $region65: #{attentional_gnn_fine.1} parent=5 // pred_check
      %p455 = pneg %p454
    $region66: #{attentional_gnn_fine.1} parent=5 // pred_check_branch
      %457 = sbr.rel (%p455) target = $region68
    $region67: #{attentional_gnn_fine.1} parent=5 // pred_region
      // Predicated region
      $region69: #{attentional_gnn_fine.1} parent=67 // pred_check
        %p458 = pneg %p43
      $region70: #{attentional_gnn_fine.1} parent=67 // pred_check_branch
        %460 = sbr.rel (%p458) target = $region72
      $region71: #{attentional_gnn_fine.1} parent=67 // pred_region
        %p461 = scmp.lt.s32.totalorder %s23, 1
        %s462 = scalar_select %p461, %s23, 1
        %s463 = smul.addr %s462, 4
        %s464 = smul.addr %s463, 8
        %s465 = scalar_lea.vmem %s0, %s464
      $region72: #{attentional_gnn_fine.1} parent=67 // pred_fallthru
        _
      // Predicated region
      $region73: #{attentional_gnn_fine.1} parent=67 // pred_check
        %p466 = pneg %p69
      $region74: #{attentional_gnn_fine.1} parent=67 // pred_check_branch
        %468 = sbr.rel (%p466) target = $region76
      $region75: #{attentional_gnn_fine.1} parent=67 // pred_region
        %p469 = scmp.lt.s32.totalorder %s23, 1
        %s470 = scalar_select %p469, %s23, 1
        %s471 = smul.addr %s470, 4
        %s472 = smul.addr %s471, 8
        %s473 = scalar_lea.vmem %s1, %s472
      $region76: #{attentional_gnn_fine.1} parent=67 // pred_fallthru
        _
    $region68: #{attentional_gnn_fine.1} parent=5 // pred_fallthru
      _
    %p474 = scmp.le.s32.totalorder 1, %s23
    %p475 = scmp.lt.s32.totalorder %s23, 3
    %p476 = pnand %p474, %p475
    %p477 = pneg %p476
    // Predicated region
    $region77: #{attentional_gnn_fine.1} parent=5 // pred_check
      _
    $region78: #{attentional_gnn_fine.1} parent=5 // pred_check_branch
      %479 = sbr.rel (%p476) target = $region80
    $region79: #{attentional_gnn_fine.1} parent=5 // pred_region
      %s480 = ssub.s32 %s23, 1
      %p481 = scmp.lt.s32.totalorder %s28, 1
      %s482 = scalar_select %p481, %s28, 1
      %s483 = smul.addr %s482, 4
      %s484 = smul.addr %s483, 8
      %s485 = scalar_lea.vmem %s0, %s484
      %p486 = pneg %p49
      %p487 = pneg %p46
      %p488 = scmp.lt.s32.totalorder %s28, 1
      %s489 = scalar_select %p488, %s28, 1
      %s490 = smul.addr %s489, 4
      %s491 = smul.addr %s490, 8
      %s492 = scalar_lea.vmem %s1, %s491
      %p493 = pneg %p75
      %p494 = pneg %p72
      %p495 = pneg %p96
      %p496 = pneg %p93
      %p497 = pneg %p117
      %p498 = pneg %p114
      %p499 = pneg %p138
      %p500 = pneg %p135
      %p501 = pneg %p159
      %p502 = pneg %p156
      %p503 = pneg %p180
      %p504 = pneg %p177
      %p505 = pneg %p201
      %p506 = pneg %p198
      %p507 = pneg %p222
      %p508 = pneg %p219
      %p509 = pneg %p243
      %p510 = pneg %p240
      %p511 = pneg %p264
      %p512 = pneg %p261
      %p513 = pneg %p285
      %p514 = pneg %p282
      %p515 = pneg %p306
      %p516 = pneg %p303
      %p517 = pneg %p327
      %p518 = pneg %p324
      %p519 = pneg %p348
      %p520 = pneg %p345
      %p521 = pneg %p374
      %p522 = pneg %p371
      %p523 = scmp.lt.s32.totalorder %s28, 1
      %s524 = scalar_select %p523, %s28, 1
      %s525 = smul.addr %s524, 4
      %s526 = smul.addr %s525, 8
      %s527 = scalar_lea.vmem %s15, %s526
      %p528 = pneg %p400
      %p529 = pneg %p397
      %p530 = scmp.lt.s32.totalorder %s28, 1
      %s531 = scalar_select %p530, %s28, 1
      %s532 = smul.addr %s531, 4
      %s533 = smul.addr %s532, 8
      %s534 = scalar_lea.vmem %s16, %s533
      %p535 = scmp.lt.s32.totalorder %s28, 1
      %s536 = scalar_select %p535, %s28, 1
      %s537 = smul.addr %s536, 4
      %s538 = smul.addr %s537, 8
      %s539 = scalar_lea.vmem %s0, %s538
      %p540 = scmp.lt.s32.totalorder %s28, 1
      %s541 = scalar_select %p540, %s28, 1
      %s542 = smul.addr %s541, 4
      %s543 = smul.addr %s542, 8
      %s544 = scalar_lea.vmem %s1, %s543
      %p545 = scmp.lt.s32.totalorder %s28, 1
      %s546 = scalar_select %p545, %s28, 1
      %s547 = smul.addr %s546, 4
      %s548 = smul.addr %s547, 8
      %s549 = scalar_lea.vmem %s15, %s548
      %p550 = scmp.lt.s32.totalorder %s28, 1
      %s551 = scalar_select %p550, %s28, 1
      %s552 = smul.addr %s551, 4
      %s553 = smul.addr %s552, 8
      %s554 = scalar_lea.vmem %s16, %s553
      %v555 = vld [vmem:[%s539] sm:$0xff]
      %v556 = vld [vmem:[%s539 + $0x8] sm:$0xff]
      %v557 = vld [vmem:[%s539 + $0x10] sm:$0xff]
      %v558 = vld [vmem:[%s539 + $0x18] sm:$0xff]
      %v559 = vld [vmem:[%s544] sm:$0xff]
      %v560 = vld [vmem:[%s544 + $0x8] sm:$0xff]
      %v561 = vld [vmem:[%s544 + $0x10] sm:$0xff]
      %v562 = vld [vmem:[%s544 + $0x18] sm:$0xff]
      %v563 = vld [vmem:[%s7] sm:$0xff]
      %v564 = vld [vmem:[%s7 + $0x8] sm:$0xff]
      %v565 = vld [vmem:[%s7 + $0x10] sm:$0xff]
      %v566 = vld [vmem:[%s7 + $0x18] sm:$0xff]
      %v567 = vld [vmem:[%s8] sm:$0xff]
      %v568 = vld [vmem:[%s8 + $0x8] sm:$0xff]
      %v569 = vld [vmem:[%s8 + $0x10] sm:$0xff]
      %v570 = vld [vmem:[%s8 + $0x18] sm:$0xff]
      %v571 = vld [vmem:[%s8 + $0x20] sm:$0xff]
      %v572 = vld [vmem:[%s8 + $0x28] sm:$0xff]
      %v573 = vld [vmem:[%s8 + $0x30] sm:$0xff]
      %v574 = vld [vmem:[%s8 + $0x38] sm:$0xff]
      %v575 = vld [vmem:[%s2] sm:$0xff]
      %v576 = vld [vmem:[%s2 + $0x8] sm:$0xff]
      %v577 = vld [vmem:[%s2 + $0x10] sm:$0xff]
      %v578 = vld [vmem:[%s2 + $0x18] sm:$0xff]
      %580 = vset.pattern.permute.xlu0 0
      %581 = vperm.xlu0 %580, %v563
      %v582 = vpop.permute.xlu0 %581
      %585 = vset.pattern.permute.xlu0 0
      %586 = vperm.xlu0 %585, %v564
      %v587 = vpop.permute.xlu0 %586
      %590 = vset.pattern.permute.xlu0 0
      %591 = vperm.xlu0 %590, %v565
      %v592 = vpop.permute.xlu0 %591
      %595 = vset.pattern.permute.xlu0 0
      %596 = vperm.xlu0 %595, %v566
      %v597 = vpop.permute.xlu0 %596
      %vm599 = vcmask 261120
      %v601 = vsel %vm599, %v575, 0
      %v604 = vsel %vm599, %v576, 0
      %v607 = vsel %vm599, %v577, 0
      %v610 = vsel %vm599, %v578, 0
      %612 = vmatprep.subr.mxu0 0.0
      %613 = vmatpush1.msra.mxu0 0.0
      %614 = vmatprep.subr.mxu0 0.0
      %615 = vmatpush1.msra.mxu0 0.0
      %616 = vmatprep.subr.mxu0 0.0
      %617 = vmatpush1.msra.mxu0 0.0
      %618 = vmatprep.subr.mxu0 0.0
      %619 = vmatpush1.msra.mxu0 0.0
      %620 = vmatprep.subr.mxu0 0.0
      %621 = vmatpush1.msra.mxu0 0.0
      %622 = vmatprep.subr.mxu0 0.0
      %623 = vmatpush1.msra.mxu0 0.0
      %624 = vmatprep.subr.mxu0 0.0
      %625 = vmatpush1.msra.mxu0 0.0
      %626 = vmatprep.subr.mxu0 0.0
      %627 = vmatpush1.msra.mxu0 0.0
      %628 = vmatprep.subr.mxu0 0.0
      %629 = vmatpush1.msra.mxu0 0.0
      %630 = vmatprep.subr.mxu0 0.0
      %631 = vmatpush1.msra.mxu0 0.0
      %632 = vmatprep.subr.mxu0 0.0
      %633 = vmatpush1.msra.mxu0 0.0
      %634 = vmatprep.subr.mxu0 0.0
      %635 = vmatpush1.msra.mxu0 0.0
      %636 = vmatprep.subr.mxu0 0.0
      %637 = vmatpush1.msra.mxu0 %v558
      %638 = vmatprep.subr.mxu0 0.0
      %639 = vmatpush1.msra.mxu0 %v557
      %640 = vmatprep.subr.mxu0 0.0
      %641 = vmatpush1.msra.mxu0 %v556
      %642 = vmatprep.subr.mxu0 0.0
      %643 = vmatpush1.msra.mxu0 %v555
      %644 = vmatprep.subr.mxu0 0.0
      %645 = vmatpush2.msra.mxu0 0.0
      %646 = vmatprep.subr.mxu0 0.0
      %647 = vmatpush2.msra.mxu0 0.0
      %648 = vmatprep.subr.mxu0 0.0
      %649 = vmatpush2.msra.mxu0 0.0
      %650 = vmatprep.subr.mxu0 0.0
      %651 = vmatpush2.msra.mxu0 0.0
      %652 = vmatprep.subr.mxu0 0.0
      %653 = vmatpush2.msra.mxu0 0.0
      %654 = vmatprep.subr.mxu0 0.0
      %655 = vmatpush2.msra.mxu0 0.0
      %656 = vmatprep.subr.mxu0 0.0
      %657 = vmatpush2.msra.mxu0 0.0
      %658 = vmatprep.subr.mxu0 0.0
      %659 = vmatpush2.msra.mxu0 0.0
      %660 = vmatprep.subr.mxu0 0.0
      %661 = vmatpush2.msra.mxu0 0.0
      %662 = vmatprep.subr.mxu0 0.0
      %663 = vmatpush2.msra.mxu0 0.0
      %664 = vmatprep.subr.mxu0 0.0
      %665 = vmatpush2.msra.mxu0 0.0
      %666 = vmatprep.subr.mxu0 0.0
      %667 = vmatpush2.msra.mxu0 0.0
      %668 = vmatprep.subr.mxu0 0.0
      %669 = vmatpush2.msra.mxu0 0.0
      %670 = vmatprep.subr.mxu0 0.0
      %671 = vmatpush2.msra.mxu0 0.0
      %672 = vmatprep.subr.mxu0 0.0
      %673 = vmatpush2.msra.mxu0 0.0
      %674 = vmatprep.subr.mxu0 0.0
      %675 = vmatpush2.msra.mxu0 0.0
      %676 = vmatprep.mubr.f32.mxu0 0.0
      %677 = vmatmul.mubr.f32.gmra.mxu0 %v601
      %v678 = vpop.f32.mrf.mxu0
      %v679 = vadd.f32 %v582, %v678
      %v680 = vpop.f32.mrf.mxu0
      %681 = vmatprep.mubr.f32.mxu0 0.0
      %682 = vmatmul.mubr.f32.gmra.mxu0 %v604
      %v683 = vpop.f32.mrf.mxu0
      %v684 = vadd.f32 %v587, %v683
      %v685 = vpop.f32.mrf.mxu0
      %686 = vmatprep.mubr.f32.mxu0 0.0
      %687 = vmatmul.mubr.f32.gmra.mxu0 %v607
      %v688 = vpop.f32.mrf.mxu0
      %v689 = vadd.f32 %v592, %v688
      %v690 = vpop.f32.mrf.mxu0
      %691 = vmatprep.mubr.f32.mxu0 0.0
      %692 = vmatmul.mubr.f32.gmra.mxu0 %v610
      %v693 = vpop.f32.mrf.mxu0
      %v694 = vadd.f32 %v597, %v693
      %v695 = vpop.f32.mrf.mxu0
      %696 = vdwg.mxu0
      %v697 = vld [vmem:[%s3] sm:$0xff]
      %v698 = vld [vmem:[%s3 + $0x8] sm:$0xff]
      %v699 = vld [vmem:[%s3 + $0x10] sm:$0xff]
      %v700 = vld [vmem:[%s3 + $0x18] sm:$0xff]
      %v701 = vld [vmem:[%s3 + $0x20] sm:$0xff]
      %v702 = vld [vmem:[%s3 + $0x28] sm:$0xff]
      %v703 = vld [vmem:[%s3 + $0x30] sm:$0xff]
      %v704 = vld [vmem:[%s3 + $0x38] sm:$0xff]
      %706 = vset.pattern.permute.xlu0 0
      %707 = vperm.xlu0 %706, %v567
      %v708 = vpop.permute.xlu0 %707
      %711 = vset.pattern.permute.xlu0 0
      %712 = vperm.xlu0 %711, %v568
      %v713 = vpop.permute.xlu0 %712
      %716 = vset.pattern.permute.xlu0 0
      %717 = vperm.xlu0 %716, %v569
      %v718 = vpop.permute.xlu0 %717
      %721 = vset.pattern.permute.xlu0 0
      %722 = vperm.xlu0 %721, %v570
      %v723 = vpop.permute.xlu0 %722
      %726 = vset.pattern.permute.xlu0 0
      %727 = vperm.xlu0 %726, %v571
      %v728 = vpop.permute.xlu0 %727
      %731 = vset.pattern.permute.xlu0 0
      %732 = vperm.xlu0 %731, %v572
      %v733 = vpop.permute.xlu0 %732
      %736 = vset.pattern.permute.xlu0 0
      %737 = vperm.xlu0 %736, %v573
      %v738 = vpop.permute.xlu0 %737
      %741 = vset.pattern.permute.xlu0 0
      %742 = vperm.xlu0 %741, %v574
      %v743 = vpop.permute.xlu0 %742
      %v746 = vsel %vm599, %v697, 0
      %v749 = vsel %vm599, %v698, 0
      %v752 = vsel %vm599, %v699, 0
      %v755 = vsel %vm599, %v700, 0
      %v758 = vsel %vm599, %v701, 0
      %v761 = vsel %vm599, %v702, 0
      %v764 = vsel %vm599, %v703, 0
      %v767 = vsel %vm599, %v704, 0
      %769 = vmatprep.subr.mxu0 0.0
      %770 = vmatpush1.msra.mxu0 0.0
      %771 = vmatprep.subr.mxu0 0.0
      %772 = vmatpush1.msra.mxu0 0.0
      %773 = vmatprep.subr.mxu0 0.0
      %774 = vmatpush1.msra.mxu0 0.0
      %775 = vmatprep.subr.mxu0 0.0
      %776 = vmatpush1.msra.mxu0 0.0
      %777 = vmatprep.subr.mxu0 0.0
      %778 = vmatpush1.msra.mxu0 0.0
      %779 = vmatprep.subr.mxu0 0.0
      %780 = vmatpush1.msra.mxu0 0.0
      %781 = vmatprep.subr.mxu0 0.0
      %782 = vmatpush1.msra.mxu0 0.0
      %783 = vmatprep.subr.mxu0 0.0
      %784 = vmatpush1.msra.mxu0 0.0
      %785 = vmatprep.subr.mxu0 0.0
      %786 = vmatpush1.msra.mxu0 0.0
      %787 = vmatprep.subr.mxu0 0.0
      %788 = vmatpush1.msra.mxu0 0.0
      %789 = vmatprep.subr.mxu0 0.0
      %790 = vmatpush1.msra.mxu0 0.0
      %791 = vmatprep.subr.mxu0 0.0
      %792 = vmatpush1.msra.mxu0 0.0
      %793 = vmatprep.subr.mxu0 0.0
      %794 = vmatpush1.msra.mxu0 %v562
      %795 = vmatprep.subr.mxu0 0.0
      %796 = vmatpush1.msra.mxu0 %v561
      %797 = vmatprep.subr.mxu0 0.0
      %798 = vmatpush1.msra.mxu0 %v560
      %799 = vmatprep.subr.mxu0 0.0
      %800 = vmatpush1.msra.mxu0 %v559
      %801 = vmatprep.subr.mxu0 0.0
      %802 = vmatpush2.msra.mxu0 0.0
      %803 = vmatprep.subr.mxu0 0.0
      %804 = vmatpush2.msra.mxu0 0.0
      %805 = vmatprep.subr.mxu0 0.0
      %806 = vmatpush2.msra.mxu0 0.0
      %807 = vmatprep.subr.mxu0 0.0
      %808 = vmatpush2.msra.mxu0 0.0
      %809 = vmatprep.subr.mxu0 0.0
      %810 = vmatpush2.msra.mxu0 0.0
      %811 = vmatprep.subr.mxu0 0.0
      %812 = vmatpush2.msra.mxu0 0.0
      %813 = vmatprep.subr.mxu0 0.0
      %814 = vmatpush2.msra.mxu0 0.0
      %815 = vmatprep.subr.mxu0 0.0
      %816 = vmatpush2.msra.mxu0 0.0
      %817 = vmatprep.subr.mxu0 0.0
      %818 = vmatpush2.msra.mxu0 0.0
      %819 = vmatprep.subr.mxu0 0.0
      %820 = vmatpush2.msra.mxu0 0.0
      %821 = vmatprep.subr.mxu0 0.0
      %822 = vmatpush2.msra.mxu0 0.0
      %823 = vmatprep.subr.mxu0 0.0
      %824 = vmatpush2.msra.mxu0 0.0
      %825 = vmatprep.subr.mxu0 0.0
      %826 = vmatpush2.msra.mxu0 0.0
      %827 = vmatprep.subr.mxu0 0.0
      %828 = vmatpush2.msra.mxu0 0.0
      %829 = vmatprep.subr.mxu0 0.0
      %830 = vmatpush2.msra.mxu0 0.0
      %831 = vmatprep.subr.mxu0 0.0
      %832 = vmatpush2.msra.mxu0 0.0
      %833 = vmatprep.mubr.f32.mxu0 0.0
      %834 = vmatmul.mubr.f32.gmra.mxu0 %v746
      %v835 = vpop.f32.mrf.mxu0
      %v836 = vadd.f32 %v708, %v835
      %v837 = vpop.f32.mrf.mxu0
      %838 = vmatprep.mubr.f32.mxu0 0.0
      %839 = vmatmul.mubr.f32.gmra.mxu0 %v749
      %v840 = vpop.f32.mrf.mxu0
      %v841 = vadd.f32 %v713, %v840
      %v842 = vpop.f32.mrf.mxu0
      %843 = vmatprep.mubr.f32.mxu0 0.0
      %844 = vmatmul.mubr.f32.gmra.mxu0 %v752
      %v845 = vpop.f32.mrf.mxu0
      %v846 = vadd.f32 %v718, %v845
      %v847 = vpop.f32.mrf.mxu0
      %848 = vmatprep.mubr.f32.mxu0 0.0
      %849 = vmatmul.mubr.f32.gmra.mxu0 %v755
      %v850 = vpop.f32.mrf.mxu0
      %v851 = vadd.f32 %v723, %v850
      %v852 = vpop.f32.mrf.mxu0
      %853 = vmatprep.mubr.f32.mxu0 0.0
      %854 = vmatmul.mubr.f32.gmra.mxu0 %v758
      %v855 = vpop.f32.mrf.mxu0
      %v856 = vadd.f32 %v728, %v855
      %v857 = vpop.f32.mrf.mxu0
      %858 = vmatprep.mubr.f32.mxu0 0.0
      %859 = vmatmul.mubr.f32.gmra.mxu0 %v761
      %v860 = vpop.f32.mrf.mxu0
      %v861 = vadd.f32 %v733, %v860
      %v862 = vpop.f32.mrf.mxu0
      %863 = vmatprep.mubr.f32.mxu0 0.0
      %864 = vmatmul.mubr.f32.gmra.mxu0 %v764
      %v865 = vpop.f32.mrf.mxu0
      %v866 = vadd.f32 %v738, %v865
      %v867 = vpop.f32.mrf.mxu0
      %868 = vmatprep.mubr.f32.mxu0 0.0
      %869 = vmatmul.mubr.f32.gmra.mxu0 %v767
      %v870 = vpop.f32.mrf.mxu0
      %v871 = vadd.f32 %v743, %v870
      %v872 = vpop.f32.mrf.mxu0
      %873 = vdwg.mxu0
      %874 = vxpose.xlu0.b32.start [1/16] %v679, 128
      %875 = vxpose.xlu0.b32.cont [2/16] 0.0, 128
      %876 = vxpose.xlu0.b32.cont [3/16] 0.0, 128
      %877 = vxpose.xlu0.b32.cont [4/16] 0.0, 128
      %878 = vxpose.xlu0.b32.cont [5/16] 0.0, 128
      %879 = vxpose.xlu0.b32.cont [6/16] 0.0, 128
      %880 = vxpose.xlu0.b32.cont [7/16] 0.0, 128
      %881 = vxpose.xlu0.b32.cont [8/16] 0.0, 128
      %882 = vxpose.xlu0.b32.cont [9/16] 0.0, 128
      %883 = vxpose.xlu0.b32.cont [10/16] 0.0, 128
      %884 = vxpose.xlu0.b32.cont [11/16] 0.0, 128
      %885 = vxpose.xlu0.b32.cont [12/16] 0.0, 128
      %886 = vxpose.xlu0.b32.cont [13/16] 0.0, 128
      %887 = vxpose.xlu0.b32.cont [14/16] 0.0, 128
      %888 = vxpose.xlu0.b32.cont [15/16] 0.0, 128
      %889 = vxpose.xlu0.b32.end [16/16] 0.0, 128
      %v890 = vpop.trf.xlu0
      %v891 = vpop.trf.xlu0
      %v892 = vpop.trf.xlu0
      %v893 = vpop.trf.xlu0
      %v894 = vpop.trf.xlu0
      %v895 = vpop.trf.xlu0
      %v896 = vpop.trf.xlu0
      %v897 = vpop.trf.xlu0
      %v898 = vpop.trf.xlu0
      %v899 = vpop.trf.xlu0
      %v900 = vpop.trf.xlu0
      %v901 = vpop.trf.xlu0
      %v902 = vpop.trf.xlu0
      %v903 = vpop.trf.xlu0
      %v904 = vpop.trf.xlu0
      %v905 = vpop.trf.xlu0
      %vm906 = vcmask 64512
      %v908 = vsel %vm906, %v890, 0
      %v911 = vsel %vm906, %v891, 0
      %913 = vmatprep.subr.mxu0 0.0
      %914 = vmatpush1.msra.mxu0 0.0
      %915 = vmatprep.subr.mxu0 0.0
      %916 = vmatpush1.msra.mxu0 0.0
      %917 = vmatprep.subr.mxu0 0.0
      %918 = vmatpush1.msra.mxu0 0.0
      %919 = vmatprep.subr.mxu0 0.0
      %920 = vmatpush1.msra.mxu0 0.0
      %921 = vmatprep.subr.mxu0 0.0
      %922 = vmatpush1.msra.mxu0 0.0
      %923 = vmatprep.subr.mxu0 0.0
      %924 = vmatpush1.msra.mxu0 0.0
      %925 = vmatprep.subr.mxu0 0.0
      %926 = vmatpush1.msra.mxu0 0.0
      %927 = vmatprep.subr.mxu0 0.0
      %928 = vmatpush1.msra.mxu0 0.0
      %929 = vmatprep.subr.mxu0 0.0
      %930 = vmatpush1.msra.mxu0 0.0
      %931 = vmatprep.subr.mxu0 0.0
      %932 = vmatpush1.msra.mxu0 0.0
      %933 = vmatprep.subr.mxu0 0.0
      %934 = vmatpush1.msra.mxu0 0.0
      %935 = vmatprep.subr.mxu0 0.0
      %936 = vmatpush1.msra.mxu0 0.0
      %937 = vmatprep.subr.mxu0 0.0
      %938 = vmatpush1.msra.mxu0 0.0
      %939 = vmatprep.subr.mxu0 0.0
      %940 = vmatpush1.msra.mxu0 0.0
      %941 = vmatprep.subr.mxu0 0.0
      %942 = vmatpush1.msra.mxu0 0.0
      %943 = vmatprep.subr.mxu0 0.0
      %944 = vmatpush1.msra.mxu0 %v836
      %945 = vmatprep.subr.mxu0 0.0
      %946 = vmatpush2.msra.mxu0 0.0
      %947 = vmatprep.subr.mxu0 0.0
      %948 = vmatpush2.msra.mxu0 0.0
      %949 = vmatprep.subr.mxu0 0.0
      %950 = vmatpush2.msra.mxu0 0.0
      %951 = vmatprep.subr.mxu0 0.0
      %952 = vmatpush2.msra.mxu0 0.0
      %953 = vmatprep.subr.mxu0 0.0
      %954 = vmatpush2.msra.mxu0 0.0
      %955 = vmatprep.subr.mxu0 0.0
      %956 = vmatpush2.msra.mxu0 0.0
      %957 = vmatprep.subr.mxu0 0.0
      %958 = vmatpush2.msra.mxu0 0.0
      %959 = vmatprep.subr.mxu0 0.0
      %960 = vmatpush2.msra.mxu0 0.0
      %961 = vmatprep.subr.mxu0 0.0
      %962 = vmatpush2.msra.mxu0 0.0
      %963 = vmatprep.subr.mxu0 0.0
      %964 = vmatpush2.msra.mxu0 0.0
      %965 = vmatprep.subr.mxu0 0.0
      %966 = vmatpush2.msra.mxu0 0.0
      %967 = vmatprep.subr.mxu0 0.0
      %968 = vmatpush2.msra.mxu0 0.0
      %969 = vmatprep.subr.mxu0 0.0
      %970 = vmatpush2.msra.mxu0 0.0
      %971 = vmatprep.subr.mxu0 0.0
      %972 = vmatpush2.msra.mxu0 0.0
      %973 = vmatprep.subr.mxu0 0.0
      %974 = vmatpush2.msra.mxu0 0.0
      %975 = vmatprep.subr.mxu0 0.0
      %976 = vmatpush2.msra.mxu0 0.0
      %977 = vmatprep.mubr.f32.mxu0 0.0
      %978 = vmatmul.mubr.f32.gmra.mxu0 %v908
      %v979 = vpop.f32.mrf.mxu0
      %v980 = vadd.f32 0.0, %v979
      %v981 = vpop.f32.mrf.mxu0
      %982 = vmatprep.mubr.f32.mxu0 0.0
      %983 = vmatmul.mubr.f32.gmra.mxu0 %v911
      %v984 = vpop.f32.mrf.mxu0
      %v985 = vadd.f32 0.0, %v984
      %v986 = vpop.f32.mrf.mxu0
      %987 = vdwg.mxu0
      %v988 = vmul.f32 %v980, 0.35355338
      %v989 = vmul.f32 %v985, 0.35355338
      %v990 = vsel %vm906, %v988, -inf
      %991 = vmax.xlane.f32.xlu0 %v990
      %v992 = vpop.xlane.xlu0 %991
      %v993 = vsel %vm906, %v989, -inf
      %994 = vmax.xlane.f32.xlu0 %v993
      %v995 = vpop.xlane.xlu0 %994
      %v996 = vsub.f32 %v988, %v992
      %v997 = vsub.f32 %v989, %v995
      %v998 = vmul.f32 %v996, 1.442695
      %v999 = vpow.pop %v998
      %v1000 = vmul.f32 %v997, 1.442695
      %v1001 = vpow.pop %v1000
      %v1002 = vsel %vm906, %v999, 0.0
      %1003 = vadd.xlane.f32.xlu0 %v1002
      %v1004 = vpop.xlane.xlu0 %1003
      %v1005 = vsel %vm906, %v1001, 0.0
      %1006 = vadd.xlane.f32.xlu0 %v1005
      %v1007 = vpop.xlane.xlu0 %1006
      %v1008 = vrcp.pop %v1004
      %v1009 = vmul.f32 %v999, %v1008
      %v1010 = vrcp.pop %v1007
      %v1011 = vmul.f32 %v1001, %v1010
      %v1013 = vsel %vm906, %v856, 0
      %v1016 = vsel %vm906, %v1009, 0
      %v1019 = vsel %vm906, %v1011, 0
      %1021 = vmatprep.subr.mxu0 0.0
      %1022 = vmatpush1.xpose.msra.mxu0 0.0
      %1023 = vmatprep.subr.mxu0 0.0
      %1024 = vmatpush1.xpose.msra.mxu0 0.0
      %1025 = vmatprep.subr.mxu0 0.0
      %1026 = vmatpush1.xpose.msra.mxu0 0.0
      %1027 = vmatprep.subr.mxu0 0.0
      %1028 = vmatpush1.xpose.msra.mxu0 0.0
      %1029 = vmatprep.subr.mxu0 0.0
      %1030 = vmatpush1.xpose.msra.mxu0 0.0
      %1031 = vmatprep.subr.mxu0 0.0
      %1032 = vmatpush1.xpose.msra.mxu0 0.0
      %1033 = vmatprep.subr.mxu0 0.0
      %1034 = vmatpush1.xpose.msra.mxu0 0.0
      %1035 = vmatprep.subr.mxu0 0.0
      %1036 = vmatpush1.xpose.msra.mxu0 0.0
      %1037 = vmatprep.subr.mxu0 0.0
      %1038 = vmatpush1.xpose.msra.mxu0 0.0
      %1039 = vmatprep.subr.mxu0 0.0
      %1040 = vmatpush1.xpose.msra.mxu0 0.0
      %1041 = vmatprep.subr.mxu0 0.0
      %1042 = vmatpush1.xpose.msra.mxu0 0.0
      %1043 = vmatprep.subr.mxu0 0.0
      %1044 = vmatpush1.xpose.msra.mxu0 0.0
      %1045 = vmatprep.subr.mxu0 0.0
      %1046 = vmatpush1.xpose.msra.mxu0 0.0
      %1047 = vmatprep.subr.mxu0 0.0
      %1048 = vmatpush1.xpose.msra.mxu0 0.0
      %1049 = vmatprep.subr.mxu0 0.0
      %1050 = vmatpush1.xpose.msra.mxu0 %v1019
      %1051 = vmatprep.subr.mxu0 0.0
      %1052 = vmatpush1.xpose.msra.mxu0 %v1016
      %1053 = vmatprep.subr.mxu0 0.0
      %1054 = vmatpush2.xpose.msra.mxu0 0.0
      %1055 = vmatprep.subr.mxu0 0.0
      %1056 = vmatpush2.xpose.msra.mxu0 0.0
      %1057 = vmatprep.subr.mxu0 0.0
      %1058 = vmatpush2.xpose.msra.mxu0 0.0
      %1059 = vmatprep.subr.mxu0 0.0
      %1060 = vmatpush2.xpose.msra.mxu0 0.0
      %1061 = vmatprep.subr.mxu0 0.0
      %1062 = vmatpush2.xpose.msra.mxu0 0.0
      %1063 = vmatprep.subr.mxu0 0.0
      %1064 = vmatpush2.xpose.msra.mxu0 0.0
      %1065 = vmatprep.subr.mxu0 0.0
      %1066 = vmatpush2.xpose.msra.mxu0 0.0
      %1067 = vmatprep.subr.mxu0 0.0
      %1068 = vmatpush2.xpose.msra.mxu0 0.0
      %1069 = vmatprep.subr.mxu0 0.0
      %1070 = vmatpush2.xpose.msra.mxu0 0.0
      %1071 = vmatprep.subr.mxu0 0.0
      %1072 = vmatpush2.xpose.msra.mxu0 0.0
      %1073 = vmatprep.subr.mxu0 0.0
      %1074 = vmatpush2.xpose.msra.mxu0 0.0
      %1075 = vmatprep.subr.mxu0 0.0
      %1076 = vmatpush2.xpose.msra.mxu0 0.0
      %1077 = vmatprep.subr.mxu0 0.0
      %1078 = vmatpush2.xpose.msra.mxu0 0.0
      %1079 = vmatprep.subr.mxu0 0.0
      %1080 = vmatpush2.xpose.msra.mxu0 0.0
      %1081 = vmatprep.subr.mxu0 0.0
      %1082 = vmatpush2.xpose.msra.mxu0 0.0
      %1083 = vmatprep.subr.mxu0 0.0
      %1084 = vmatpush2.xpose.msra.mxu0 0.0
      %1085 = vmatprep.mubr.f32.mxu0 0.0
      %1086 = vmatmul.mubr.f32.gmra.mxu0 %v1013
      %v1087 = vpop.f32.mrf.mxu0
      %v1088 = vadd.f32 0.0, %v1087
      %v1089 = vpop.f32.mrf.mxu0
      %1090 = vdwg.mxu0
      %vm1091 = vcmask 130048
      %1092 = vst.msk [vmem:[#allocation2] sm:$0xff] %vm1091, %v1088
      %1093 = vxpose.xlu0.b32.start [1/16] %v684, 128
      %1094 = vxpose.xlu0.b32.cont [2/16] 0.0, 128
      %1095 = vxpose.xlu0.b32.cont [3/16] 0.0, 128
      %1096 = vxpose.xlu0.b32.cont [4/16] 0.0, 128
      %1097 = vxpose.xlu0.b32.cont [5/16] 0.0, 128
      %1098 = vxpose.xlu0.b32.cont [6/16] 0.0, 128
      %1099 = vxpose.xlu0.b32.cont [7/16] 0.0, 128
      %1100 = vxpose.xlu0.b32.cont [8/16] 0.0, 128
      %1101 = vxpose.xlu0.b32.cont [9/16] 0.0, 128
      %1102 = vxpose.xlu0.b32.cont [10/16] 0.0, 128
      %1103 = vxpose.xlu0.b32.cont [11/16] 0.0, 128
      %1104 = vxpose.xlu0.b32.cont [12/16] 0.0, 128
      %1105 = vxpose.xlu0.b32.cont [13/16] 0.0, 128
      %1106 = vxpose.xlu0.b32.cont [14/16] 0.0, 128
      %1107 = vxpose.xlu0.b32.cont [15/16] 0.0, 128
      %1108 = vxpose.xlu0.b32.end [16/16] 0.0, 128
      %v1109 = vpop.trf.xlu0
      %v1110 = vpop.trf.xlu0
      %v1111 = vpop.trf.xlu0
      %v1112 = vpop.trf.xlu0
      %v1113 = vpop.trf.xlu0
      %v1114 = vpop.trf.xlu0
      %v1115 = vpop.trf.xlu0
      %v1116 = vpop.trf.xlu0
      %v1117 = vpop.trf.xlu0
      %v1118 = vpop.trf.xlu0
      %v1119 = vpop.trf.xlu0
      %v1120 = vpop.trf.xlu0
      %v1121 = vpop.trf.xlu0
      %v1122 = vpop.trf.xlu0
      %v1123 = vpop.trf.xlu0
      %v1124 = vpop.trf.xlu0
      %v1126 = vsel %vm906, %v1109, 0
      %v1129 = vsel %vm906, %v1110, 0
      %1131 = vmatprep.subr.mxu0 0.0
      %1132 = vmatpush1.msra.mxu0 0.0
      %1133 = vmatprep.subr.mxu0 0.0
      %1134 = vmatpush1.msra.mxu0 0.0
      %1135 = vmatprep.subr.mxu0 0.0
      %1136 = vmatpush1.msra.mxu0 0.0
      %1137 = vmatprep.subr.mxu0 0.0
      %1138 = vmatpush1.msra.mxu0 0.0
      %1139 = vmatprep.subr.mxu0 0.0
      %1140 = vmatpush1.msra.mxu0 0.0
      %1141 = vmatprep.subr.mxu0 0.0
      %1142 = vmatpush1.msra.mxu0 0.0
      %1143 = vmatprep.subr.mxu0 0.0
      %1144 = vmatpush1.msra.mxu0 0.0
      %1145 = vmatprep.subr.mxu0 0.0
      %1146 = vmatpush1.msra.mxu0 0.0
      %1147 = vmatprep.subr.mxu0 0.0
      %1148 = vmatpush1.msra.mxu0 0.0
      %1149 = vmatprep.subr.mxu0 0.0
      %1150 = vmatpush1.msra.mxu0 0.0
      %1151 = vmatprep.subr.mxu0 0.0
      %1152 = vmatpush1.msra.mxu0 0.0
      %1153 = vmatprep.subr.mxu0 0.0
      %1154 = vmatpush1.msra.mxu0 0.0
      %1155 = vmatprep.subr.mxu0 0.0
      %1156 = vmatpush1.msra.mxu0 0.0
      %1157 = vmatprep.subr.mxu0 0.0
      %1158 = vmatpush1.msra.mxu0 0.0
      %1159 = vmatprep.subr.mxu0 0.0
      %1160 = vmatpush1.msra.mxu0 0.0
      %1161 = vmatprep.subr.mxu0 0.0
      %1162 = vmatpush1.msra.mxu0 %v841
      %1163 = vmatprep.subr.mxu0 0.0
      %1164 = vmatpush2.msra.mxu0 0.0
      %1165 = vmatprep.subr.mxu0 0.0
      %1166 = vmatpush2.msra.mxu0 0.0
      %1167 = vmatprep.subr.mxu0 0.0
      %1168 = vmatpush2.msra.mxu0 0.0
      %1169 = vmatprep.subr.mxu0 0.0
      %1170 = vmatpush2.msra.mxu0 0.0
      %1171 = vmatprep.subr.mxu0 0.0
      %1172 = vmatpush2.msra.mxu0 0.0
      %1173 = vmatprep.subr.mxu0 0.0
      %1174 = vmatpush2.msra.mxu0 0.0
      %1175 = vmatprep.subr.mxu0 0.0
      %1176 = vmatpush2.msra.mxu0 0.0
      %1177 = vmatprep.subr.mxu0 0.0
      %1178 = vmatpush2.msra.mxu0 0.0
      %1179 = vmatprep.subr.mxu0 0.0
      %1180 = vmatpush2.msra.mxu0 0.0
      %1181 = vmatprep.subr.mxu0 0.0
      %1182 = vmatpush2.msra.mxu0 0.0
      %1183 = vmatprep.subr.mxu0 0.0
      %1184 = vmatpush2.msra.mxu0 0.0
      %1185 = vmatprep.subr.mxu0 0.0
      %1186 = vmatpush2.msra.mxu0 0.0
      %1187 = vmatprep.subr.mxu0 0.0
      %1188 = vmatpush2.msra.mxu0 0.0
      %1189 = vmatprep.subr.mxu0 0.0
      %1190 = vmatpush2.msra.mxu0 0.0
      %1191 = vmatprep.subr.mxu0 0.0
      %1192 = vmatpush2.msra.mxu0 0.0
      %1193 = vmatprep.subr.mxu0 0.0
      %1194 = vmatpush2.msra.mxu0 0.0
      %1195 = vmatprep.mubr.f32.mxu0 0.0
      %1196 = vmatmul.mubr.f32.gmra.mxu0 %v1126
      %v1197 = vpop.f32.mrf.mxu0
      %v1198 = vadd.f32 0.0, %v1197
      %v1199 = vpop.f32.mrf.mxu0
      %1200 = vmatprep.mubr.f32.mxu0 0.0
      %1201 = vmatmul.mubr.f32.gmra.mxu0 %v1129
      %v1202 = vpop.f32.mrf.mxu0
      %v1203 = vadd.f32 0.0, %v1202
      %v1204 = vpop.f32.mrf.mxu0
      %1205 = vdwg.mxu0
      %v1206 = vmul.f32 %v1198, 0.35355338
      %v1207 = vmul.f32 %v1203, 0.35355338
      %v1208 = vsel %vm906, %v1206, -inf
      %1209 = vmax.xlane.f32.xlu0 %v1208
      %v1210 = vpop.xlane.xlu0 %1209
      %v1211 = vsel %vm906, %v1207, -inf
      %1212 = vmax.xlane.f32.xlu0 %v1211
      %v1213 = vpop.xlane.xlu0 %1212
      %v1214 = vsub.f32 %v1206, %v1210
      %v1215 = vsub.f32 %v1207, %v1213
      %v1216 = vmul.f32 %v1214, 1.442695
      %v1217 = vpow.pop %v1216
      %v1218 = vmul.f32 %v1215, 1.442695
      %v1219 = vpow.pop %v1218
      %v1220 = vsel %vm906, %v1217, 0.0
      %1221 = vadd.xlane.f32.xlu0 %v1220
      %v1222 = vpop.xlane.xlu0 %1221
      %v1223 = vsel %vm906, %v1219, 0.0
      %1224 = vadd.xlane.f32.xlu0 %v1223
      %v1225 = vpop.xlane.xlu0 %1224
      %v1226 = vrcp.pop %v1222
      %v1227 = vmul.f32 %v1217, %v1226
      %v1228 = vrcp.pop %v1225
      %v1229 = vmul.f32 %v1219, %v1228
      %v1231 = vsel %vm906, %v861, 0
      %v1234 = vsel %vm906, %v1227, 0
      %v1237 = vsel %vm906, %v1229, 0
      %1239 = vmatprep.subr.mxu0 0.0
      %1240 = vmatpush1.xpose.msra.mxu0 0.0
      %1241 = vmatprep.subr.mxu0 0.0
      %1242 = vmatpush1.xpose.msra.mxu0 0.0
      %1243 = vmatprep.subr.mxu0 0.0
      %1244 = vmatpush1.xpose.msra.mxu0 0.0
      %1245 = vmatprep.subr.mxu0 0.0
      %1246 = vmatpush1.xpose.msra.mxu0 0.0
      %1247 = vmatprep.subr.mxu0 0.0
      %1248 = vmatpush1.xpose.msra.mxu0 0.0
      %1249 = vmatprep.subr.mxu0 0.0
      %1250 = vmatpush1.xpose.msra.mxu0 0.0
      %1251 = vmatprep.subr.mxu0 0.0
      %1252 = vmatpush1.xpose.msra.mxu0 0.0
      %1253 = vmatprep.subr.mxu0 0.0
      %1254 = vmatpush1.xpose.msra.mxu0 0.0
      %1255 = vmatprep.subr.mxu0 0.0
      %1256 = vmatpush1.xpose.msra.mxu0 0.0
      %1257 = vmatprep.subr.mxu0 0.0
      %1258 = vmatpush1.xpose.msra.mxu0 0.0
      %1259 = vmatprep.subr.mxu0 0.0
      %1260 = vmatpush1.xpose.msra.mxu0 0.0
      %1261 = vmatprep.subr.mxu0 0.0
      %1262 = vmatpush1.xpose.msra.mxu0 0.0
      %1263 = vmatprep.subr.mxu0 0.0
      %1264 = vmatpush1.xpose.msra.mxu0 0.0
      %1265 = vmatprep.subr.mxu0 0.0
      %1266 = vmatpush1.xpose.msra.mxu0 0.0
      %1267 = vmatprep.subr.mxu0 0.0
      %1268 = vmatpush1.xpose.msra.mxu0 %v1237
      %1269 = vmatprep.subr.mxu0 0.0
      %1270 = vmatpush1.xpose.msra.mxu0 %v1234
      %1271 = vmatprep.subr.mxu0 0.0
      %1272 = vmatpush2.xpose.msra.mxu0 0.0
      %1273 = vmatprep.subr.mxu0 0.0
      %1274 = vmatpush2.xpose.msra.mxu0 0.0
      %1275 = vmatprep.subr.mxu0 0.0
      %1276 = vmatpush2.xpose.msra.mxu0 0.0
      %1277 = vmatprep.subr.mxu0 0.0
      %1278 = vmatpush2.xpose.msra.mxu0 0.0
      %1279 = vmatprep.subr.mxu0 0.0
      %1280 = vmatpush2.xpose.msra.mxu0 0.0
      %1281 = vmatprep.subr.mxu0 0.0
      %1282 = vmatpush2.xpose.msra.mxu0 0.0
      %1283 = vmatprep.subr.mxu0 0.0
      %1284 = vmatpush2.xpose.msra.mxu0 0.0
      %1285 = vmatprep.subr.mxu0 0.0
      %1286 = vmatpush2.xpose.msra.mxu0 0.0
      %1287 = vmatprep.subr.mxu0 0.0
      %1288 = vmatpush2.xpose.msra.mxu0 0.0
      %1289 = vmatprep.subr.mxu0 0.0
      %1290 = vmatpush2.xpose.msra.mxu0 0.0
      %1291 = vmatprep.subr.mxu0 0.0
      %1292 = vmatpush2.xpose.msra.mxu0 0.0
      %1293 = vmatprep.subr.mxu0 0.0
      %1294 = vmatpush2.xpose.msra.mxu0 0.0
      %1295 = vmatprep.subr.mxu0 0.0
      %1296 = vmatpush2.xpose.msra.mxu0 0.0
      %1297 = vmatprep.subr.mxu0 0.0
      %1298 = vmatpush2.xpose.msra.mxu0 0.0
      %1299 = vmatprep.subr.mxu0 0.0
      %1300 = vmatpush2.xpose.msra.mxu0 0.0
      %1301 = vmatprep.subr.mxu0 0.0
      %1302 = vmatpush2.xpose.msra.mxu0 0.0
      %1303 = vmatprep.mubr.f32.mxu0 0.0
      %1304 = vmatmul.mubr.f32.gmra.mxu0 %v1231
      %v1305 = vpop.f32.mrf.mxu0
      %v1306 = vadd.f32 0.0, %v1305
      %v1307 = vpop.f32.mrf.mxu0
      %1308 = vdwg.mxu0
      %1309 = vst.msk [vmem:[#allocation2 + $0x8] sm:$0xff] %vm1091, %v1306
      %1310 = vxpose.xlu0.b32.start [1/16] %v689, 128
      %1311 = vxpose.xlu0.b32.cont [2/16] 0.0, 128
      %1312 = vxpose.xlu0.b32.cont [3/16] 0.0, 128
      %1313 = vxpose.xlu0.b32.cont [4/16] 0.0, 128
      %1314 = vxpose.xlu0.b32.cont [5/16] 0.0, 128
      %1315 = vxpose.xlu0.b32.cont [6/16] 0.0, 128
      %1316 = vxpose.xlu0.b32.cont [7/16] 0.0, 128
      %1317 = vxpose.xlu0.b32.cont [8/16] 0.0, 128
      %1318 = vxpose.xlu0.b32.cont [9/16] 0.0, 128
      %1319 = vxpose.xlu0.b32.cont [10/16] 0.0, 128
      %1320 = vxpose.xlu0.b32.cont [11/16] 0.0, 128
      %1321 = vxpose.xlu0.b32.cont [12/16] 0.0, 128
      %1322 = vxpose.xlu0.b32.cont [13/16] 0.0, 128
      %1323 = vxpose.xlu0.b32.cont [14/16] 0.0, 128
      %1324 = vxpose.xlu0.b32.cont [15/16] 0.0, 128
      %1325 = vxpose.xlu0.b32.end [16/16] 0.0, 128
      %v1326 = vpop.trf.xlu0
      %v1327 = vpop.trf.xlu0
      %v1328 = vpop.trf.xlu0
      %v1329 = vpop.trf.xlu0
      %v1330 = vpop.trf.xlu0
      %v1331 = vpop.trf.xlu0
      %v1332 = vpop.trf.xlu0
      %v1333 = vpop.trf.xlu0
      %v1334 = vpop.trf.xlu0
      %v1335 = vpop.trf.xlu0
      %v1336 = vpop.trf.xlu0
      %v1337 = vpop.trf.xlu0
      %v1338 = vpop.trf.xlu0
      %v1339 = vpop.trf.xlu0
      %v1340 = vpop.trf.xlu0
      %v1341 = vpop.trf.xlu0
      %v1343 = vsel %vm906, %v1326, 0
      %v1346 = vsel %vm906, %v1327, 0
      %1348 = vmatprep.subr.mxu0 0.0
      %1349 = vmatpush1.msra.mxu0 0.0
      %1350 = vmatprep.subr.mxu0 0.0
      %1351 = vmatpush1.msra.mxu0 0.0
      %1352 = vmatprep.subr.mxu0 0.0
      %1353 = vmatpush1.msra.mxu0 0.0
      %1354 = vmatprep.subr.mxu0 0.0
      %1355 = vmatpush1.msra.mxu0 0.0
      %1356 = vmatprep.subr.mxu0 0.0
      %1357 = vmatpush1.msra.mxu0 0.0
      %1358 = vmatprep.subr.mxu0 0.0
      %1359 = vmatpush1.msra.mxu0 0.0
      %1360 = vmatprep.subr.mxu0 0.0
      %1361 = vmatpush1.msra.mxu0 0.0
      %1362 = vmatprep.subr.mxu0 0.0
      %1363 = vmatpush1.msra.mxu0 0.0
      %1364 = vmatprep.subr.mxu0 0.0
      %1365 = vmatpush1.msra.mxu0 0.0
      %1366 = vmatprep.subr.mxu0 0.0
      %1367 = vmatpush1.msra.mxu0 0.0
      %1368 = vmatprep.subr.mxu0 0.0
      %1369 = vmatpush1.msra.mxu0 0.0
      %1370 = vmatprep.subr.mxu0 0.0
      %1371 = vmatpush1.msra.mxu0 0.0
      %1372 = vmatprep.subr.mxu0 0.0
      %1373 = vmatpush1.msra.mxu0 0.0
      %1374 = vmatprep.subr.mxu0 0.0
      %1375 = vmatpush1.msra.mxu0 0.0
      %1376 = vmatprep.subr.mxu0 0.0
      %1377 = vmatpush1.msra.mxu0 0.0
      %1378 = vmatprep.subr.mxu0 0.0
      %1379 = vmatpush1.msra.mxu0 %v846
      %1380 = vmatprep.subr.mxu0 0.0
      %1381 = vmatpush2.msra.mxu0 0.0
      %1382 = vmatprep.subr.mxu0 0.0
      %1383 = vmatpush2.msra.mxu0 0.0
      %1384 = vmatprep.subr.mxu0 0.0
      %1385 = vmatpush2.msra.mxu0 0.0
      %1386 = vmatprep.subr.mxu0 0.0
      %1387 = vmatpush2.msra.mxu0 0.0
      %1388 = vmatprep.subr.mxu0 0.0
      %1389 = vmatpush2.msra.mxu0 0.0
      %1390 = vmatprep.subr.mxu0 0.0
      %1391 = vmatpush2.msra.mxu0 0.0
      %1392 = vmatprep.subr.mxu0 0.0
      %1393 = vmatpush2.msra.mxu0 0.0
      %1394 = vmatprep.subr.mxu0 0.0
      %1395 = vmatpush2.msra.mxu0 0.0
      %1396 = vmatprep.subr.mxu0 0.0
      %1397 = vmatpush2.msra.mxu0 0.0
      %1398 = vmatprep.subr.mxu0 0.0
      %1399 = vmatpush2.msra.mxu0 0.0
      %1400 = vmatprep.subr.mxu0 0.0
      %1401 = vmatpush2.msra.mxu0 0.0
      %1402 = vmatprep.subr.mxu0 0.0
      %1403 = vmatpush2.msra.mxu0 0.0
      %1404 = vmatprep.subr.mxu0 0.0
      %1405 = vmatpush2.msra.mxu0 0.0
      %1406 = vmatprep.subr.mxu0 0.0
      %1407 = vmatpush2.msra.mxu0 0.0
      %1408 = vmatprep.subr.mxu0 0.0
      %1409 = vmatpush2.msra.mxu0 0.0
      %1410 = vmatprep.subr.mxu0 0.0
      %1411 = vmatpush2.msra.mxu0 0.0
      %1412 = vmatprep.mubr.f32.mxu0 0.0
      %1413 = vmatmul.mubr.f32.gmra.mxu0 %v1343
      %v1414 = vpop.f32.mrf.mxu0
      %v1415 = vadd.f32 0.0, %v1414
      %v1416 = vpop.f32.mrf.mxu0
      %1417 = vmatprep.mubr.f32.mxu0 0.0
      %1418 = vmatmul.mubr.f32.gmra.mxu0 %v1346
      %v1419 = vpop.f32.mrf.mxu0
      %v1420 = vadd.f32 0.0, %v1419
      %v1421 = vpop.f32.mrf.mxu0
      %1422 = vdwg.mxu0
      %v1423 = vmul.f32 %v1415, 0.35355338
      %v1424 = vmul.f32 %v1420, 0.35355338
      %v1425 = vsel %vm906, %v1423, -inf
      %1426 = vmax.xlane.f32.xlu0 %v1425
      %v1427 = vpop.xlane.xlu0 %1426
      %v1428 = vsel %vm906, %v1424, -inf
      %1429 = vmax.xlane.f32.xlu0 %v1428
      %v1430 = vpop.xlane.xlu0 %1429
      %v1431 = vsub.f32 %v1423, %v1427
      %v1432 = vsub.f32 %v1424, %v1430
      %v1433 = vmul.f32 %v1431, 1.442695
      %v1434 = vpow.pop %v1433
      %v1435 = vmul.f32 %v1432, 1.442695
      %v1436 = vpow.pop %v1435
      %v1437 = vsel %vm906, %v1434, 0.0
      %1438 = vadd.xlane.f32.xlu0 %v1437
      %v1439 = vpop.xlane.xlu0 %1438
      %v1440 = vsel %vm906, %v1436, 0.0
      %1441 = vadd.xlane.f32.xlu0 %v1440
      %v1442 = vpop.xlane.xlu0 %1441
      %v1443 = vrcp.pop %v1439
      %v1444 = vmul.f32 %v1434, %v1443
      %v1445 = vrcp.pop %v1442
      %v1446 = vmul.f32 %v1436, %v1445
      %v1448 = vsel %vm906, %v866, 0
      %v1451 = vsel %vm906, %v1444, 0
      %v1454 = vsel %vm906, %v1446, 0
      %1456 = vmatprep.subr.mxu0 0.0
      %1457 = vmatpush1.xpose.msra.mxu0 0.0
      %1458 = vmatprep.subr.mxu0 0.0
      %1459 = vmatpush1.xpose.msra.mxu0 0.0
      %1460 = vmatprep.subr.mxu0 0.0
      %1461 = vmatpush1.xpose.msra.mxu0 0.0
      %1462 = vmatprep.subr.mxu0 0.0
      %1463 = vmatpush1.xpose.msra.mxu0 0.0
      %1464 = vmatprep.subr.mxu0 0.0
      %1465 = vmatpush1.xpose.msra.mxu0 0.0
      %1466 = vmatprep.subr.mxu0 0.0
      %1467 = vmatpush1.xpose.msra.mxu0 0.0
      %1468 = vmatprep.subr.mxu0 0.0
      %1469 = vmatpush1.xpose.msra.mxu0 0.0
      %1470 = vmatprep.subr.mxu0 0.0
      %1471 = vmatpush1.xpose.msra.mxu0 0.0
      %1472 = vmatprep.subr.mxu0 0.0
      %1473 = vmatpush1.xpose.msra.mxu0 0.0
      %1474 = vmatprep.subr.mxu0 0.0
      %1475 = vmatpush1.xpose.msra.mxu0 0.0
      %1476 = vmatprep.subr.mxu0 0.0
      %1477 = vmatpush1.xpose.msra.mxu0 0.0
      %1478 = vmatprep.subr.mxu0 0.0
      %1479 = vmatpush1.xpose.msra.mxu0 0.0
      %1480 = vmatprep.subr.mxu0 0.0
      %1481 = vmatpush1.xpose.msra.mxu0 0.0
      %1482 = vmatprep.subr.mxu0 0.0
      %1483 = vmatpush1.xpose.msra.mxu0 0.0
      %1484 = vmatprep.subr.mxu0 0.0
      %1485 = vmatpush1.xpose.msra.mxu0 %v1454
      %1486 = vmatprep.subr.mxu0 0.0
      %1487 = vmatpush1.xpose.msra.mxu0 %v1451
      %1488 = vmatprep.subr.mxu0 0.0
      %1489 = vmatpush2.xpose.msra.mxu0 0.0
      %1490 = vmatprep.subr.mxu0 0.0
      %1491 = vmatpush2.xpose.msra.mxu0 0.0
      %1492 = vmatprep.subr.mxu0 0.0
      %1493 = vmatpush2.xpose.msra.mxu0 0.0
      %1494 = vmatprep.subr.mxu0 0.0
      %1495 = vmatpush2.xpose.msra.mxu0 0.0
      %1496 = vmatprep.subr.mxu0 0.0
      %1497 = vmatpush2.xpose.msra.mxu0 0.0
      %1498 = vmatprep.subr.mxu0 0.0
      %1499 = vmatpush2.xpose.msra.mxu0 0.0
      %1500 = vmatprep.subr.mxu0 0.0
      %1501 = vmatpush2.xpose.msra.mxu0 0.0
      %1502 = vmatprep.subr.mxu0 0.0
      %1503 = vmatpush2.xpose.msra.mxu0 0.0
      %1504 = vmatprep.subr.mxu0 0.0
      %1505 = vmatpush2.xpose.msra.mxu0 0.0
      %1506 = vmatprep.subr.mxu0 0.0
      %1507 = vmatpush2.xpose.msra.mxu0 0.0
      %1508 = vmatprep.subr.mxu0 0.0
      %1509 = vmatpush2.xpose.msra.mxu0 0.0
      %1510 = vmatprep.subr.mxu0 0.0
      %1511 = vmatpush2.xpose.msra.mxu0 0.0
      %1512 = vmatprep.subr.mxu0 0.0
      %1513 = vmatpush2.xpose.msra.mxu0 0.0
      %1514 = vmatprep.subr.mxu0 0.0
      %1515 = vmatpush2.xpose.msra.mxu0 0.0
      %1516 = vmatprep.subr.mxu0 0.0
      %1517 = vmatpush2.xpose.msra.mxu0 0.0
      %1518 = vmatprep.subr.mxu0 0.0
      %1519 = vmatpush2.xpose.msra.mxu0 0.0
      %1520 = vmatprep.mubr.f32.mxu0 0.0
      %1521 = vmatmul.mubr.f32.gmra.mxu0 %v1448
      %v1522 = vpop.f32.mrf.mxu0
      %v1523 = vadd.f32 0.0, %v1522
      %v1524 = vpop.f32.mrf.mxu0
      %1525 = vdwg.mxu0
      %1526 = vst.msk [vmem:[#allocation2 + $0x10] sm:$0xff] %vm1091, %v1523
      %1527 = vxpose.xlu0.b32.start [1/16] %v694, 128
      %1528 = vxpose.xlu0.b32.cont [2/16] 0.0, 128
      %1529 = vxpose.xlu0.b32.cont [3/16] 0.0, 128
      %1530 = vxpose.xlu0.b32.cont [4/16] 0.0, 128
      %1531 = vxpose.xlu0.b32.cont [5/16] 0.0, 128
      %1532 = vxpose.xlu0.b32.cont [6/16] 0.0, 128
      %1533 = vxpose.xlu0.b32.cont [7/16] 0.0, 128
      %1534 = vxpose.xlu0.b32.cont [8/16] 0.0, 128
      %1535 = vxpose.xlu0.b32.cont [9/16] 0.0, 128
      %1536 = vxpose.xlu0.b32.cont [10/16] 0.0, 128
      %1537 = vxpose.xlu0.b32.cont [11/16] 0.0, 128
      %1538 = vxpose.xlu0.b32.cont [12/16] 0.0, 128
      %1539 = vxpose.xlu0.b32.cont [13/16] 0.0, 128
      %1540 = vxpose.xlu0.b32.cont [14/16] 0.0, 128
      %1541 = vxpose.xlu0.b32.cont [15/16] 0.0, 128
      %1542 = vxpose.xlu0.b32.end [16/16] 0.0, 128
      %v1543 = vpop.trf.xlu0
      %v1544 = vpop.trf.xlu0
      %v1545 = vpop.trf.xlu0
      %v1546 = vpop.trf.xlu0
      %v1547 = vpop.trf.xlu0
      %v1548 = vpop.trf.xlu0
      %v1549 = vpop.trf.xlu0
      %v1550 = vpop.trf.xlu0
      %v1551 = vpop.trf.xlu0
      %v1552 = vpop.trf.xlu0
      %v1553 = vpop.trf.xlu0
      %v1554 = vpop.trf.xlu0
      %v1555 = vpop.trf.xlu0
      %v1556 = vpop.trf.xlu0
      %v1557 = vpop.trf.xlu0
      %v1558 = vpop.trf.xlu0
      %v1560 = vsel %vm906, %v1543, 0
      %v1563 = vsel %vm906, %v1544, 0
      %1565 = vmatprep.subr.mxu0 0.0
      %1566 = vmatpush1.msra.mxu0 0.0
      %1567 = vmatprep.subr.mxu0 0.0
      %1568 = vmatpush1.msra.mxu0 0.0
      %1569 = vmatprep.subr.mxu0 0.0
      %1570 = vmatpush1.msra.mxu0 0.0
      %1571 = vmatprep.subr.mxu0 0.0
      %1572 = vmatpush1.msra.mxu0 0.0
      %1573 = vmatprep.subr.mxu0 0.0
      %1574 = vmatpush1.msra.mxu0 0.0
      %1575 = vmatprep.subr.mxu0 0.0
      %1576 = vmatpush1.msra.mxu0 0.0
      %1577 = vmatprep.subr.mxu0 0.0
      %1578 = vmatpush1.msra.mxu0 0.0
      %1579 = vmatprep.subr.mxu0 0.0
      %1580 = vmatpush1.msra.mxu0 0.0
      %1581 = vmatprep.subr.mxu0 0.0
      %1582 = vmatpush1.msra.mxu0 0.0
      %1583 = vmatprep.subr.mxu0 0.0
      %1584 = vmatpush1.msra.mxu0 0.0
      %1585 = vmatprep.subr.mxu0 0.0
      %1586 = vmatpush1.msra.mxu0 0.0
      %1587 = vmatprep.subr.mxu0 0.0
      %1588 = vmatpush1.msra.mxu0 0.0
      %1589 = vmatprep.subr.mxu0 0.0
      %1590 = vmatpush1.msra.mxu0 0.0
      %1591 = vmatprep.subr.mxu0 0.0
      %1592 = vmatpush1.msra.mxu0 0.0
      %1593 = vmatprep.subr.mxu0 0.0
      %1594 = vmatpush1.msra.mxu0 0.0
      %1595 = vmatprep.subr.mxu0 0.0
      %1596 = vmatpush1.msra.mxu0 %v851
      %1597 = vmatprep.subr.mxu0 0.0
      %1598 = vmatpush2.msra.mxu0 0.0
      %1599 = vmatprep.subr.mxu0 0.0
      %1600 = vmatpush2.msra.mxu0 0.0
      %1601 = vmatprep.subr.mxu0 0.0
      %1602 = vmatpush2.msra.mxu0 0.0
      %1603 = vmatprep.subr.mxu0 0.0
      %1604 = vmatpush2.msra.mxu0 0.0
      %1605 = vmatprep.subr.mxu0 0.0
      %1606 = vmatpush2.msra.mxu0 0.0
      %1607 = vmatprep.subr.mxu0 0.0
      %1608 = vmatpush2.msra.mxu0 0.0
      %1609 = vmatprep.subr.mxu0 0.0
      %1610 = vmatpush2.msra.mxu0 0.0
      %1611 = vmatprep.subr.mxu0 0.0
      %1612 = vmatpush2.msra.mxu0 0.0
      %1613 = vmatprep.subr.mxu0 0.0
      %1614 = vmatpush2.msra.mxu0 0.0
      %1615 = vmatprep.subr.mxu0 0.0
      %1616 = vmatpush2.msra.mxu0 0.0
      %1617 = vmatprep.subr.mxu0 0.0
      %1618 = vmatpush2.msra.mxu0 0.0
      %1619 = vmatprep.subr.mxu0 0.0
      %1620 = vmatpush2.msra.mxu0 0.0
      %1621 = vmatprep.subr.mxu0 0.0
      %1622 = vmatpush2.msra.mxu0 0.0
      %1623 = vmatprep.subr.mxu0 0.0
      %1624 = vmatpush2.msra.mxu0 0.0
      %1625 = vmatprep.subr.mxu0 0.0
      %1626 = vmatpush2.msra.mxu0 0.0
      %1627 = vmatprep.subr.mxu0 0.0
      %1628 = vmatpush2.msra.mxu0 0.0
      %1629 = vmatprep.mubr.f32.mxu0 0.0
      %1630 = vmatmul.mubr.f32.gmra.mxu0 %v1560
      %v1631 = vpop.f32.mrf.mxu0
      %v1632 = vadd.f32 0.0, %v1631
      %v1633 = vpop.f32.mrf.mxu0
      %1634 = vmatprep.mubr.f32.mxu0 0.0
      %1635 = vmatmul.mubr.f32.gmra.mxu0 %v1563
      %v1636 = vpop.f32.mrf.mxu0
      %v1637 = vadd.f32 0.0, %v1636
      %v1638 = vpop.f32.mrf.mxu0
      %1639 = vdwg.mxu0
      %v1640 = vmul.f32 %v1632, 0.35355338
      %v1641 = vmul.f32 %v1637, 0.35355338
      %v1642 = vsel %vm906, %v1640, -inf
      %1643 = vmax.xlane.f32.xlu0 %v1642
      %v1644 = vpop.xlane.xlu0 %1643
      %v1645 = vsel %vm906, %v1641, -inf
      %1646 = vmax.xlane.f32.xlu0 %v1645
      %v1647 = vpop.xlane.xlu0 %1646
      %v1648 = vsub.f32 %v1640, %v1644
      %v1649 = vsub.f32 %v1641, %v1647
      %v1650 = vmul.f32 %v1648, 1.442695
      %v1651 = vpow.pop %v1650
      %v1652 = vmul.f32 %v1649, 1.442695
      %v1653 = vpow.pop %v1652
      %v1654 = vsel %vm906, %v1651, 0.0
      %1655 = vadd.xlane.f32.xlu0 %v1654
      %v1656 = vpop.xlane.xlu0 %1655
      %v1657 = vsel %vm906, %v1653, 0.0
      %1658 = vadd.xlane.f32.xlu0 %v1657
      %v1659 = vpop.xlane.xlu0 %1658
      %v1660 = vrcp.pop %v1656
      %v1661 = vmul.f32 %v1651, %v1660
      %v1662 = vrcp.pop %v1659
      %v1663 = vmul.f32 %v1653, %v1662
      %v1665 = vsel %vm906, %v871, 0
      %v1668 = vsel %vm906, %v1661, 0
      %v1671 = vsel %vm906, %v1663, 0
      %1673 = vmatprep.subr.mxu0 0.0
      %1674 = vmatpush1.xpose.msra.mxu0 0.0
      %1675 = vmatprep.subr.mxu0 0.0
      %1676 = vmatpush1.xpose.msra.mxu0 0.0
      %1677 = vmatprep.subr.mxu0 0.0
      %1678 = vmatpush1.xpose.msra.mxu0 0.0
      %1679 = vmatprep.subr.mxu0 0.0
      %1680 = vmatpush1.xpose.msra.mxu0 0.0
      %1681 = vmatprep.subr.mxu0 0.0
      %1682 = vmatpush1.xpose.msra.mxu0 0.0
      %1683 = vmatprep.subr.mxu0 0.0
      %1684 = vmatpush1.xpose.msra.mxu0 0.0
      %1685 = vmatprep.subr.mxu0 0.0
      %1686 = vmatpush1.xpose.msra.mxu0 0.0
      %1687 = vmatprep.subr.mxu0 0.0
      %1688 = vmatpush1.xpose.msra.mxu0 0.0
      %1689 = vmatprep.subr.mxu0 0.0
      %1690 = vmatpush1.xpose.msra.mxu0 0.0
      %1691 = vmatprep.subr.mxu0 0.0
      %1692 = vmatpush1.xpose.msra.mxu0 0.0
      %1693 = vmatprep.subr.mxu0 0.0
      %1694 = vmatpush1.xpose.msra.mxu0 0.0
      %1695 = vmatprep.subr.mxu0 0.0
      %1696 = vmatpush1.xpose.msra.mxu0 0.0
      %1697 = vmatprep.subr.mxu0 0.0
      %1698 = vmatpush1.xpose.msra.mxu0 0.0
      %1699 = vmatprep.subr.mxu0 0.0
      %1700 = vmatpush1.xpose.msra.mxu0 0.0
      %1701 = vmatprep.subr.mxu0 0.0
      %1702 = vmatpush1.xpose.msra.mxu0 %v1671
      %1703 = vmatprep.subr.mxu0 0.0
      %1704 = vmatpush1.xpose.msra.mxu0 %v1668
      %1705 = vmatprep.subr.mxu0 0.0
      %1706 = vmatpush2.xpose.msra.mxu0 0.0
      %1707 = vmatprep.subr.mxu0 0.0
      %1708 = vmatpush2.xpose.msra.mxu0 0.0
      %1709 = vmatprep.subr.mxu0 0.0
      %1710 = vmatpush2.xpose.msra.mxu0 0.0
      %1711 = vmatprep.subr.mxu0 0.0
      %1712 = vmatpush2.xpose.msra.mxu0 0.0
      %1713 = vmatprep.subr.mxu0 0.0
      %1714 = vmatpush2.xpose.msra.mxu0 0.0
      %1715 = vmatprep.subr.mxu0 0.0
      %1716 = vmatpush2.xpose.msra.mxu0 0.0
      %1717 = vmatprep.subr.mxu0 0.0
      %1718 = vmatpush2.xpose.msra.mxu0 0.0
      %1719 = vmatprep.subr.mxu0 0.0
      %1720 = vmatpush2.xpose.msra.mxu0 0.0
      %1721 = vmatprep.subr.mxu0 0.0
      %1722 = vmatpush2.xpose.msra.mxu0 0.0
      %1723 = vmatprep.subr.mxu0 0.0
      %1724 = vmatpush2.xpose.msra.mxu0 0.0
      %1725 = vmatprep.subr.mxu0 0.0
      %1726 = vmatpush2.xpose.msra.mxu0 0.0
      %1727 = vmatprep.subr.mxu0 0.0
      %1728 = vmatpush2.xpose.msra.mxu0 0.0
      %1729 = vmatprep.subr.mxu0 0.0
      %1730 = vmatpush2.xpose.msra.mxu0 0.0
      %1731 = vmatprep.subr.mxu0 0.0
      %1732 = vmatpush2.xpose.msra.mxu0 0.0
      %1733 = vmatprep.subr.mxu0 0.0
      %1734 = vmatpush2.xpose.msra.mxu0 0.0
      %1735 = vmatprep.subr.mxu0 0.0
      %1736 = vmatpush2.xpose.msra.mxu0 0.0
      %1737 = vmatprep.mubr.f32.mxu0 0.0
      %1738 = vmatmul.mubr.f32.gmra.mxu0 %v1665
      %v1739 = vpop.f32.mrf.mxu0
      %v1740 = vadd.f32 0.0, %v1739
      %v1741 = vpop.f32.mrf.mxu0
      %1742 = vdwg.mxu0
      %1743 = vst.msk [vmem:[#allocation2 + $0x18] sm:$0xff] %vm1091, %v1740
      %v1744 = vld [vmem:[#allocation2] sm:$0xff]
      %v1745 = vld [vmem:[#allocation2 + $0x8] sm:$0xff]
      %v1746 = vld [vmem:[#allocation2 + $0x10] sm:$0xff]
      %v1747 = vld [vmem:[#allocation2 + $0x18] sm:$0xff]
      %v1748 = vld [vmem:[%s4] sm:$0xff]
      %v1749 = vld [vmem:[%s4 + $0x8] sm:$0xff]
      %v1750 = vld [vmem:[%s4 + $0x10] sm:$0xff]
      %v1751 = vld [vmem:[%s4 + $0x18] sm:$0xff]
      %v1752 = vld [vmem:[%s5] sm:$0xff]
      %v1753 = vld [vmem:[%s5 + $0x8] sm:$0xff]
      %v1754 = vld [vmem:[%s5 + $0x10] sm:$0xff]
      %v1755 = vld [vmem:[%s5 + $0x18] sm:$0xff]
      %v1756 = vld [vmem:[%s5 + $0x20] sm:$0xff]
      %v1757 = vld [vmem:[%s5 + $0x28] sm:$0xff]
      %v1758 = vld [vmem:[%s5 + $0x30] sm:$0xff]
      %v1759 = vld [vmem:[%s5 + $0x38] sm:$0xff]
      %v1760 = vld [vmem:[%s6] sm:$0xff]
      %v1761 = vld [vmem:[%s6 + $0x8] sm:$0xff]
      %v1762 = vld [vmem:[%s6 + $0x10] sm:$0xff]
      %v1763 = vld [vmem:[%s6 + $0x18] sm:$0xff]
      %1764 = vset.pattern.permute.xlu0 1
      %1765 = vperm.xlu0 %1764, %v563
      %v1766 = vpop.permute.xlu0 %1765
      %1768 = vset.pattern.permute.xlu0 1
      %1769 = vperm.xlu0 %1768, %v564
      %v1770 = vpop.permute.xlu0 %1769
      %1772 = vset.pattern.permute.xlu0 1
      %1773 = vperm.xlu0 %1772, %v565
      %v1774 = vpop.permute.xlu0 %1773
      %1776 = vset.pattern.permute.xlu0 1
      %1777 = vperm.xlu0 %1776, %v566
      %v1778 = vpop.permute.xlu0 %1777
      %v1781 = vsel %vm599, %v1748, 0
      %v1784 = vsel %vm599, %v1749, 0
      %v1787 = vsel %vm599, %v1750, 0
      %v1790 = vsel %vm599, %v1751, 0
      %1792 = vmatprep.subr.mxu0 0.0
      %1793 = vmatpush1.msra.mxu0 0.0
      %1794 = vmatprep.subr.mxu0 0.0
      %1795 = vmatpush1.msra.mxu0 0.0
      %1796 = vmatprep.subr.mxu0 0.0
      %1797 = vmatpush1.msra.mxu0 0.0
      %1798 = vmatprep.subr.mxu0 0.0
      %1799 = vmatpush1.msra.mxu0 0.0
      %1800 = vmatprep.subr.mxu0 0.0
      %1801 = vmatpush1.msra.mxu0 0.0
      %1802 = vmatprep.subr.mxu0 0.0
      %1803 = vmatpush1.msra.mxu0 0.0
      %1804 = vmatprep.subr.mxu0 0.0
      %1805 = vmatpush1.msra.mxu0 0.0
      %1806 = vmatprep.subr.mxu0 0.0
      %1807 = vmatpush1.msra.mxu0 0.0
      %1808 = vmatprep.subr.mxu0 0.0
      %1809 = vmatpush1.msra.mxu0 0.0
      %1810 = vmatprep.subr.mxu0 0.0
      %1811 = vmatpush1.msra.mxu0 0.0
      %1812 = vmatprep.subr.mxu0 0.0
      %1813 = vmatpush1.msra.mxu0 0.0
      %1814 = vmatprep.subr.mxu0 0.0
      %1815 = vmatpush1.msra.mxu0 0.0
      %1816 = vmatprep.subr.mxu0 0.0
      %1817 = vmatpush1.msra.mxu0 %v1747
      %1818 = vmatprep.subr.mxu0 0.0
      %1819 = vmatpush1.msra.mxu0 %v1746
      %1820 = vmatprep.subr.mxu0 0.0
      %1821 = vmatpush1.msra.mxu0 %v1745
      %1822 = vmatprep.subr.mxu0 0.0
      %1823 = vmatpush1.msra.mxu0 %v1744
      %1824 = vmatprep.subr.mxu0 0.0
      %1825 = vmatpush2.msra.mxu0 0.0
      %1826 = vmatprep.subr.mxu0 0.0
      %1827 = vmatpush2.msra.mxu0 0.0
      %1828 = vmatprep.subr.mxu0 0.0
      %1829 = vmatpush2.msra.mxu0 0.0
      %1830 = vmatprep.subr.mxu0 0.0
      %1831 = vmatpush2.msra.mxu0 0.0
      %1832 = vmatprep.subr.mxu0 0.0
      %1833 = vmatpush2.msra.mxu0 0.0
      %1834 = vmatprep.subr.mxu0 0.0
      %1835 = vmatpush2.msra.mxu0 0.0
      %1836 = vmatprep.subr.mxu0 0.0
      %1837 = vmatpush2.msra.mxu0 0.0
      %1838 = vmatprep.subr.mxu0 0.0
      %1839 = vmatpush2.msra.mxu0 0.0
      %1840 = vmatprep.subr.mxu0 0.0
      %1841 = vmatpush2.msra.mxu0 0.0
      %1842 = vmatprep.subr.mxu0 0.0
      %1843 = vmatpush2.msra.mxu0 0.0
      %1844 = vmatprep.subr.mxu0 0.0
      %1845 = vmatpush2.msra.mxu0 0.0
      %1846 = vmatprep.subr.mxu0 0.0
      %1847 = vmatpush2.msra.mxu0 0.0
      %1848 = vmatprep.subr.mxu0 0.0
      %1849 = vmatpush2.msra.mxu0 0.0
      %1850 = vmatprep.subr.mxu0 0.0
      %1851 = vmatpush2.msra.mxu0 0.0
      %1852 = vmatprep.subr.mxu0 0.0
      %1853 = vmatpush2.msra.mxu0 0.0
      %1854 = vmatprep.subr.mxu0 0.0
      %1855 = vmatpush2.msra.mxu0 0.0
      %1856 = vmatprep.mubr.f32.mxu0 0.0
      %1857 = vmatmul.mubr.f32.gmra.mxu0 %v1781
      %v1858 = vpop.f32.mrf.mxu0
      %v1859 = vadd.f32 %v1766, %v1858
      %v1860 = vpop.f32.mrf.mxu0
      %1861 = vmatprep.mubr.f32.mxu0 0.0
      %1862 = vmatmul.mubr.f32.gmra.mxu0 %v1784
      %v1863 = vpop.f32.mrf.mxu0
      %v1864 = vadd.f32 %v1770, %v1863
      %v1865 = vpop.f32.mrf.mxu0
      %1866 = vmatprep.mubr.f32.mxu0 0.0
      %1867 = vmatmul.mubr.f32.gmra.mxu0 %v1787
      %v1868 = vpop.f32.mrf.mxu0
      %v1869 = vadd.f32 %v1774, %v1868
      %v1870 = vpop.f32.mrf.mxu0
      %1871 = vmatprep.mubr.f32.mxu0 0.0
      %1872 = vmatmul.mubr.f32.gmra.mxu0 %v1790
      %v1873 = vpop.f32.mrf.mxu0
      %v1874 = vadd.f32 %v1778, %v1873
      %v1875 = vpop.f32.mrf.mxu0
      %1876 = vdwg.mxu0
      %v1877 = vsel %vm1091, %v1859, 0.0
      %v1878 = vsel %vm1091, %v1864, 0.0
      %v1879 = vadd.f32 %v1877, %v1878
      %v1880 = vsel %vm1091, %v1869, 0.0
      %v1881 = vadd.f32 %v1879, %v1880
      %v1882 = vsel %vm1091, %v1874, 0.0
      %v1883 = vadd.f32 %v1881, %v1882
      %v1884 = vrot.slane %v1883, 4
      %v1885 = vadd.f32 %v1883, %v1884
      %v1886 = vrot.slane %v1885, 2
      %v1887 = vadd.f32 %v1885, %v1886
      %v1888 = vrot.slane %v1887, 1
      %v1889 = vadd.f32 %v1887, %v1888
      %v1890 = vrcp.pop 32.0
      %v1891 = vmul.f32 %v1889, %v1890
      %v1892 = vsub.f32 %v1859, %v1891
      %v1893 = vsub.f32 %v1864, %v1891
      %v1894 = vsub.f32 %v1869, %v1891
      %v1895 = vsub.f32 %v1874, %v1891
      %v1896 = vmul.f32 %v1892, %v1892
      %v1897 = vmul.f32 %v1893, %v1893
      %v1898 = vmul.f32 %v1894, %v1894
      %v1899 = vmul.f32 %v1895, %v1895
      %v1900 = vsel %vm1091, %v1896, 0.0
      %v1901 = vsel %vm1091, %v1897, 0.0
      %v1902 = vadd.f32 %v1900, %v1901
      %v1903 = vsel %vm1091, %v1898, 0.0
      %v1904 = vadd.f32 %v1902, %v1903
      %v1905 = vsel %vm1091, %v1899, 0.0
      %v1906 = vadd.f32 %v1904, %v1905
      %v1907 = vrot.slane %v1906, 4
      %v1908 = vadd.f32 %v1906, %v1907
      %v1909 = vrot.slane %v1908, 2
      %v1910 = vadd.f32 %v1908, %v1909
      %v1911 = vrot.slane %v1910, 1
      %v1912 = vadd.f32 %v1910, %v1911
      %v1913 = vmul.f32 %v1912, %v1890
      %v1914 = vadd.f32 %v1913, 1e-05
      %v1915 = vrsqrt.pop %v1914
      %v1916 = vmul.f32 %v1892, %v1915
      %v1917 = vmul.f32 %v1893, %v1915
      %v1918 = vmul.f32 %v1894, %v1915
      %v1919 = vmul.f32 %v1895, %v1915
      %1920 = vset.pattern.permute.xlu0 3
      %1921 = vperm.xlu0 %1920, %v563
      %v1922 = vpop.permute.xlu0 %1921
      %1924 = vset.pattern.permute.xlu0 3
      %1925 = vperm.xlu0 %1924, %v564
      %v1926 = vpop.permute.xlu0 %1925
      %1928 = vset.pattern.permute.xlu0 3
      %1929 = vperm.xlu0 %1928, %v565
      %v1930 = vpop.permute.xlu0 %1929
      %1932 = vset.pattern.permute.xlu0 3
      %1933 = vperm.xlu0 %1932, %v566
      %v1934 = vpop.permute.xlu0 %1933
      %v1936 = vmul.f32 %v1916, %v1922
      %v1937 = vmul.f32 %v1917, %v1926
      %v1938 = vmul.f32 %v1918, %v1930
      %v1939 = vmul.f32 %v1919, %v1934
      %1940 = vset.pattern.permute.xlu0 4
      %1941 = vperm.xlu0 %1940, %v563
      %v1942 = vpop.permute.xlu0 %1941
      %1944 = vset.pattern.permute.xlu0 4
      %1945 = vperm.xlu0 %1944, %v564
      %v1946 = vpop.permute.xlu0 %1945
      %1948 = vset.pattern.permute.xlu0 4
      %1949 = vperm.xlu0 %1948, %v565
      %v1950 = vpop.permute.xlu0 %1949
      %1952 = vset.pattern.permute.xlu0 4
      %1953 = vperm.xlu0 %1952, %v566
      %v1954 = vpop.permute.xlu0 %1953
      %v1956 = vadd.f32 %v1936, %v1942
      %v1957 = vadd.f32 %v1937, %v1946
      %v1958 = vadd.f32 %v1938, %v1950
      %v1959 = vadd.f32 %v1939, %v1954
      %1960 = vset.pattern.permute.xlu0 1
      %1961 = vperm.xlu0 %1960, %v567
      %v1962 = vpop.permute.xlu0 %1961
      %1964 = vset.pattern.permute.xlu0 1
      %1965 = vperm.xlu0 %1964, %v568
      %v1966 = vpop.permute.xlu0 %1965
      %1968 = vset.pattern.permute.xlu0 1
      %1969 = vperm.xlu0 %1968, %v569
      %v1970 = vpop.permute.xlu0 %1969
      %1972 = vset.pattern.permute.xlu0 1
      %1973 = vperm.xlu0 %1972, %v570
      %v1974 = vpop.permute.xlu0 %1973
      %1976 = vset.pattern.permute.xlu0 1
      %1977 = vperm.xlu0 %1976, %v571
      %v1978 = vpop.permute.xlu0 %1977
      %1980 = vset.pattern.permute.xlu0 1
      %1981 = vperm.xlu0 %1980, %v572
      %v1982 = vpop.permute.xlu0 %1981
      %1984 = vset.pattern.permute.xlu0 1
      %1985 = vperm.xlu0 %1984, %v573
      %v1986 = vpop.permute.xlu0 %1985
      %1988 = vset.pattern.permute.xlu0 1
      %1989 = vperm.xlu0 %1988, %v574
      %v1990 = vpop.permute.xlu0 %1989
      %vm1992 = vcmask 523264
      %v1994 = vsel %vm1992, %v1752, 0
      %v1997 = vsel %vm1992, %v1753, 0
      %v2000 = vsel %vm1992, %v1754, 0
      %v2003 = vsel %vm1992, %v1755, 0
      %v2006 = vsel %vm1992, %v1756, 0
      %v2009 = vsel %vm1992, %v1757, 0
      %v2012 = vsel %vm1992, %v1758, 0
      %v2015 = vsel %vm1992, %v1759, 0
      %2017 = vmatprep.subr.mxu0 0.0
      %2018 = vmatpush1.msra.mxu0 0.0
      %2019 = vmatprep.subr.mxu0 0.0
      %2020 = vmatpush1.msra.mxu0 0.0
      %2021 = vmatprep.subr.mxu0 0.0
      %2022 = vmatpush1.msra.mxu0 0.0
      %2023 = vmatprep.subr.mxu0 0.0
      %2024 = vmatpush1.msra.mxu0 0.0
      %2025 = vmatprep.subr.mxu0 0.0
      %2026 = vmatpush1.msra.mxu0 0.0
      %2027 = vmatprep.subr.mxu0 0.0
      %2028 = vmatpush1.msra.mxu0 0.0
      %2029 = vmatprep.subr.mxu0 0.0
      %2030 = vmatpush1.msra.mxu0 0.0
      %2031 = vmatprep.subr.mxu0 0.0
      %2032 = vmatpush1.msra.mxu0 0.0
      %2033 = vmatprep.subr.mxu0 0.0
      %2034 = vmatpush1.msra.mxu0 %v1959
      %2035 = vmatprep.subr.mxu0 0.0
      %2036 = vmatpush1.msra.mxu0 %v1958
      %2037 = vmatprep.subr.mxu0 0.0
      %2038 = vmatpush1.msra.mxu0 %v1957
      %2039 = vmatprep.subr.mxu0 0.0
      %2040 = vmatpush1.msra.mxu0 %v1956
      %2041 = vmatprep.subr.mxu0 0.0
      %2042 = vmatpush1.msra.mxu0 %v558
      %2043 = vmatprep.subr.mxu0 0.0
      %2044 = vmatpush1.msra.mxu0 %v557
      %2045 = vmatprep.subr.mxu0 0.0
      %2046 = vmatpush1.msra.mxu0 %v556
      %2047 = vmatprep.subr.mxu0 0.0
      %2048 = vmatpush1.msra.mxu0 %v555
      %2049 = vmatprep.subr.mxu0 0.0
      %2050 = vmatpush2.msra.mxu0 0.0
      %2051 = vmatprep.subr.mxu0 0.0
      %2052 = vmatpush2.msra.mxu0 0.0
      %2053 = vmatprep.subr.mxu0 0.0
      %2054 = vmatpush2.msra.mxu0 0.0
      %2055 = vmatprep.subr.mxu0 0.0
      %2056 = vmatpush2.msra.mxu0 0.0
      %2057 = vmatprep.subr.mxu0 0.0
      %2058 = vmatpush2.msra.mxu0 0.0
      %2059 = vmatprep.subr.mxu0 0.0
      %2060 = vmatpush2.msra.mxu0 0.0
      %2061 = vmatprep.subr.mxu0 0.0
      %2062 = vmatpush2.msra.mxu0 0.0
      %2063 = vmatprep.subr.mxu0 0.0
      %2064 = vmatpush2.msra.mxu0 0.0
      %2065 = vmatprep.subr.mxu0 0.0
      %2066 = vmatpush2.msra.mxu0 0.0
      %2067 = vmatprep.subr.mxu0 0.0
      %2068 = vmatpush2.msra.mxu0 0.0
      %2069 = vmatprep.subr.mxu0 0.0
      %2070 = vmatpush2.msra.mxu0 0.0
      %2071 = vmatprep.subr.mxu0 0.0
      %2072 = vmatpush2.msra.mxu0 0.0
      %2073 = vmatprep.subr.mxu0 0.0
      %2074 = vmatpush2.msra.mxu0 0.0
      %2075 = vmatprep.subr.mxu0 0.0
      %2076 = vmatpush2.msra.mxu0 0.0
      %2077 = vmatprep.subr.mxu0 0.0
      %2078 = vmatpush2.msra.mxu0 0.0
      %2079 = vmatprep.subr.mxu0 0.0
      %2080 = vmatpush2.msra.mxu0 0.0
      %2081 = vmatprep.mubr.f32.mxu0 0.0
      %2082 = vmatmul.mubr.f32.gmra.mxu0 %v1994
      %v2083 = vpop.f32.mrf.mxu0
      %v2084 = vadd.f32 %v1962, %v2083
      %v2085 = vpop.f32.mrf.mxu0
      %2086 = vmatprep.mubr.f32.mxu0 0.0
      %2087 = vmatmul.mubr.f32.gmra.mxu0 %v1997
      %v2088 = vpop.f32.mrf.mxu0
      %v2089 = vadd.f32 %v1966, %v2088
      %v2090 = vpop.f32.mrf.mxu0
      %2091 = vmatprep.mubr.f32.mxu0 0.0
      %2092 = vmatmul.mubr.f32.gmra.mxu0 %v2000
      %v2093 = vpop.f32.mrf.mxu0
      %v2094 = vadd.f32 %v1970, %v2093
      %v2095 = vpop.f32.mrf.mxu0
      %2096 = vmatprep.mubr.f32.mxu0 0.0
      %2097 = vmatmul.mubr.f32.gmra.mxu0 %v2003
      %v2098 = vpop.f32.mrf.mxu0
      %v2099 = vadd.f32 %v1974, %v2098
      %v2100 = vpop.f32.mrf.mxu0
      %2101 = vmatprep.mubr.f32.mxu0 0.0
      %2102 = vmatmul.mubr.f32.gmra.mxu0 %v2006
      %v2103 = vpop.f32.mrf.mxu0
      %v2104 = vadd.f32 %v1978, %v2103
      %v2105 = vpop.f32.mrf.mxu0
      %2106 = vmatprep.mubr.f32.mxu0 0.0
      %2107 = vmatmul.mubr.f32.gmra.mxu0 %v2009
      %v2108 = vpop.f32.mrf.mxu0
      %v2109 = vadd.f32 %v1982, %v2108
      %v2110 = vpop.f32.mrf.mxu0
      %2111 = vmatprep.mubr.f32.mxu0 0.0
      %2112 = vmatmul.mubr.f32.gmra.mxu0 %v2012
      %v2113 = vpop.f32.mrf.mxu0
      %v2114 = vadd.f32 %v1986, %v2113
      %v2115 = vpop.f32.mrf.mxu0
      %2116 = vmatprep.mubr.f32.mxu0 0.0
      %2117 = vmatmul.mubr.f32.gmra.mxu0 %v2015
      %v2118 = vpop.f32.mrf.mxu0
      %v2119 = vadd.f32 %v1990, %v2118
      %v2120 = vpop.f32.mrf.mxu0
      %2121 = vdwg.mxu0
      %v2122 = vmax.f32 %v2084, 0.0
      %v2123 = vmax.f32 %v2089, 0.0
      %v2124 = vmax.f32 %v2094, 0.0
      %v2125 = vmax.f32 %v2099, 0.0
      %v2126 = vmax.f32 %v2104, 0.0
      %v2127 = vmax.f32 %v2109, 0.0
      %v2128 = vmax.f32 %v2114, 0.0
      %v2129 = vmax.f32 %v2119, 0.0
      %2130 = vset.pattern.permute.xlu0 2
      %2131 = vperm.xlu0 %2130, %v563
      %v2132 = vpop.permute.xlu0 %2131
      %2134 = vset.pattern.permute.xlu0 2
      %2135 = vperm.xlu0 %2134, %v564
      %v2136 = vpop.permute.xlu0 %2135
      %2138 = vset.pattern.permute.xlu0 2
      %2139 = vperm.xlu0 %2138, %v565
      %v2140 = vpop.permute.xlu0 %2139
      %2142 = vset.pattern.permute.xlu0 2
      %2143 = vperm.xlu0 %2142, %v566
      %v2144 = vpop.permute.xlu0 %2143
      %v2147 = vsel %vm1992, %v1760, 0
      %v2150 = vsel %vm1992, %v1761, 0
      %v2153 = vsel %vm1992, %v1762, 0
      %v2156 = vsel %vm1992, %v1763, 0
      %2158 = vmatprep.subr.mxu0 0.0
      %2159 = vmatpush1.msra.mxu0 0.0
      %2160 = vmatprep.subr.mxu0 0.0
      %2161 = vmatpush1.msra.mxu0 0.0
      %2162 = vmatprep.subr.mxu0 0.0
      %2163 = vmatpush1.msra.mxu0 0.0
      %2164 = vmatprep.subr.mxu0 0.0
      %2165 = vmatpush1.msra.mxu0 0.0
      %2166 = vmatprep.subr.mxu0 0.0
      %2167 = vmatpush1.msra.mxu0 0.0
      %2168 = vmatprep.subr.mxu0 0.0
      %2169 = vmatpush1.msra.mxu0 0.0
      %2170 = vmatprep.subr.mxu0 0.0
      %2171 = vmatpush1.msra.mxu0 0.0
      %2172 = vmatprep.subr.mxu0 0.0
      %2173 = vmatpush1.msra.mxu0 0.0
      %2174 = vmatprep.subr.mxu0 0.0
      %2175 = vmatpush1.msra.mxu0 %v2129
      %2176 = vmatprep.subr.mxu0 0.0
      %2177 = vmatpush1.msra.mxu0 %v2128
      %2178 = vmatprep.subr.mxu0 0.0
      %2179 = vmatpush1.msra.mxu0 %v2127
      %2180 = vmatprep.subr.mxu0 0.0
      %2181 = vmatpush1.msra.mxu0 %v2126
      %2182 = vmatprep.subr.mxu0 0.0
      %2183 = vmatpush1.msra.mxu0 %v2125
      %2184 = vmatprep.subr.mxu0 0.0
      %2185 = vmatpush1.msra.mxu0 %v2124
      %2186 = vmatprep.subr.mxu0 0.0
      %2187 = vmatpush1.msra.mxu0 %v2123
      %2188 = vmatprep.subr.mxu0 0.0
      %2189 = vmatpush1.msra.mxu0 %v2122
      %2190 = vmatprep.subr.mxu0 0.0
      %2191 = vmatpush2.msra.mxu0 0.0
      %2192 = vmatprep.subr.mxu0 0.0
      %2193 = vmatpush2.msra.mxu0 0.0
      %2194 = vmatprep.subr.mxu0 0.0
      %2195 = vmatpush2.msra.mxu0 0.0
      %2196 = vmatprep.subr.mxu0 0.0
      %2197 = vmatpush2.msra.mxu0 0.0
      %2198 = vmatprep.subr.mxu0 0.0
      %2199 = vmatpush2.msra.mxu0 0.0
      %2200 = vmatprep.subr.mxu0 0.0
      %2201 = vmatpush2.msra.mxu0 0.0
      %2202 = vmatprep.subr.mxu0 0.0
      %2203 = vmatpush2.msra.mxu0 0.0
      %2204 = vmatprep.subr.mxu0 0.0
      %2205 = vmatpush2.msra.mxu0 0.0
      %2206 = vmatprep.subr.mxu0 0.0
      %2207 = vmatpush2.msra.mxu0 0.0
      %2208 = vmatprep.subr.mxu0 0.0
      %2209 = vmatpush2.msra.mxu0 0.0
      %2210 = vmatprep.subr.mxu0 0.0
      %2211 = vmatpush2.msra.mxu0 0.0
      %2212 = vmatprep.subr.mxu0 0.0
      %2213 = vmatpush2.msra.mxu0 0.0
      %2214 = vmatprep.subr.mxu0 0.0
      %2215 = vmatpush2.msra.mxu0 0.0
      %2216 = vmatprep.subr.mxu0 0.0
      %2217 = vmatpush2.msra.mxu0 0.0
      %2218 = vmatprep.subr.mxu0 0.0
      %2219 = vmatpush2.msra.mxu0 0.0
      %2220 = vmatprep.subr.mxu0 0.0
      %2221 = vmatpush2.msra.mxu0 0.0
      %2222 = vmatprep.mubr.f32.mxu0 0.0
      %2223 = vmatmul.mubr.f32.gmra.mxu0 %v2147
      %v2224 = vpop.f32.mrf.mxu0
      %v2225 = vadd.f32 %v2132, %v2224
      %v2226 = vpop.f32.mrf.mxu0
      %2227 = vmatprep.mubr.f32.mxu0 0.0
      %2228 = vmatmul.mubr.f32.gmra.mxu0 %v2150
      %v2229 = vpop.f32.mrf.mxu0
      %v2230 = vadd.f32 %v2136, %v2229
      %v2231 = vpop.f32.mrf.mxu0
      %2232 = vmatprep.mubr.f32.mxu0 0.0
      %2233 = vmatmul.mubr.f32.gmra.mxu0 %v2153
      %v2234 = vpop.f32.mrf.mxu0
      %v2235 = vadd.f32 %v2140, %v2234
      %v2236 = vpop.f32.mrf.mxu0
      %2237 = vmatprep.mubr.f32.mxu0 0.0
      %2238 = vmatmul.mubr.f32.gmra.mxu0 %v2156
      %v2239 = vpop.f32.mrf.mxu0
      %v2240 = vadd.f32 %v2144, %v2239
      %v2241 = vpop.f32.mrf.mxu0
      %2242 = vdwg.mxu0
      %v2243 = vsel %vm1091, %v2225, 0.0
      %v2244 = vsel %vm1091, %v2230, 0.0
      %v2245 = vadd.f32 %v2243, %v2244
      %v2246 = vsel %vm1091, %v2235, 0.0
      %v2247 = vadd.f32 %v2245, %v2246
      %v2248 = vsel %vm1091, %v2240, 0.0
      %v2249 = vadd.f32 %v2247, %v2248
      %v2250 = vrot.slane %v2249, 4
      %v2251 = vadd.f32 %v2249, %v2250
      %v2252 = vrot.slane %v2251, 2
      %v2253 = vadd.f32 %v2251, %v2252
      %v2254 = vrot.slane %v2253, 1
      %v2255 = vadd.f32 %v2253, %v2254
      %v2256 = vmul.f32 %v2255, %v1890
      %v2257 = vsub.f32 %v2225, %v2256
      %v2258 = vsub.f32 %v2230, %v2256
      %v2259 = vsub.f32 %v2235, %v2256
      %v2260 = vsub.f32 %v2240, %v2256
      %v2261 = vmul.f32 %v2257, %v2257
      %v2262 = vmul.f32 %v2258, %v2258
      %v2263 = vmul.f32 %v2259, %v2259
      %v2264 = vmul.f32 %v2260, %v2260
      %v2265 = vsel %vm1091, %v2261, 0.0
      %v2266 = vsel %vm1091, %v2262, 0.0
      %v2267 = vadd.f32 %v2265, %v2266
      %v2268 = vsel %vm1091, %v2263, 0.0
      %v2269 = vadd.f32 %v2267, %v2268
      %v2270 = vsel %vm1091, %v2264, 0.0
      %v2271 = vadd.f32 %v2269, %v2270
      %v2272 = vrot.slane %v2271, 4
      %v2273 = vadd.f32 %v2271, %v2272
      %v2274 = vrot.slane %v2273, 2
      %v2275 = vadd.f32 %v2273, %v2274
      %v2276 = vrot.slane %v2275, 1
      %v2277 = vadd.f32 %v2275, %v2276
      %v2278 = vmul.f32 %v2277, %v1890
      %v2279 = vadd.f32 %v2278, 1e-05
      %v2280 = vrsqrt.pop %v2279
      %v2281 = vmul.f32 %v2257, %v2280
      %v2282 = vmul.f32 %v2258, %v2280
      %v2283 = vmul.f32 %v2259, %v2280
      %v2284 = vmul.f32 %v2260, %v2280
      %2285 = vset.pattern.permute.xlu0 5
      %2286 = vperm.xlu0 %2285, %v563
      %v2287 = vpop.permute.xlu0 %2286
      %2289 = vset.pattern.permute.xlu0 5
      %2290 = vperm.xlu0 %2289, %v564
      %v2291 = vpop.permute.xlu0 %2290
      %2293 = vset.pattern.permute.xlu0 5
      %2294 = vperm.xlu0 %2293, %v565
      %v2295 = vpop.permute.xlu0 %2294
      %2297 = vset.pattern.permute.xlu0 5
      %2298 = vperm.xlu0 %2297, %v566
      %v2299 = vpop.permute.xlu0 %2298
      %v2301 = vmul.f32 %v2281, %v2287
      %v2302 = vmul.f32 %v2282, %v2291
      %v2303 = vmul.f32 %v2283, %v2295
      %v2304 = vmul.f32 %v2284, %v2299
      %2305 = vset.pattern.permute.xlu0 6
      %2306 = vperm.xlu0 %2305, %v563
      %v2307 = vpop.permute.xlu0 %2306
      %2309 = vset.pattern.permute.xlu0 6
      %2310 = vperm.xlu0 %2309, %v564
      %v2311 = vpop.permute.xlu0 %2310
      %2313 = vset.pattern.permute.xlu0 6
      %2314 = vperm.xlu0 %2313, %v565
      %v2315 = vpop.permute.xlu0 %2314
      %2317 = vset.pattern.permute.xlu0 6
      %2318 = vperm.xlu0 %2317, %v566
      %v2319 = vpop.permute.xlu0 %2318
      %v2321 = vadd.f32 %v2301, %v2307
      %v2322 = vadd.f32 %v2302, %v2311
      %v2323 = vadd.f32 %v2303, %v2315
      %v2324 = vadd.f32 %v2304, %v2319
      %v2325 = vadd.f32 %v555, %v2321
      %v2326 = vadd.f32 %v556, %v2322
      %v2327 = vadd.f32 %v557, %v2323
      %v2328 = vadd.f32 %v558, %v2324
      %v2329 = vld [vmem:[%s13] sm:$0xff]
      %v2330 = vld [vmem:[%s13 + $0x8] sm:$0xff]
      %v2331 = vld [vmem:[%s13 + $0x10] sm:$0xff]
      %v2332 = vld [vmem:[%s13 + $0x18] sm:$0xff]
      %v2333 = vld [vmem:[%s14] sm:$0xff]
      %v2334 = vld [vmem:[%s14 + $0x8] sm:$0xff]
      %v2335 = vld [vmem:[%s14 + $0x10] sm:$0xff]
      %v2336 = vld [vmem:[%s14 + $0x18] sm:$0xff]
      %v2337 = vld [vmem:[%s14 + $0x20] sm:$0xff]
      %v2338 = vld [vmem:[%s14 + $0x28] sm:$0xff]
      %v2339 = vld [vmem:[%s14 + $0x30] sm:$0xff]
      %v2340 = vld [vmem:[%s14 + $0x38] sm:$0xff]
      %v2341 = vld [vmem:[%s9] sm:$0xff]
      %v2342 = vld [vmem:[%s9 + $0x8] sm:$0xff]
      %v2343 = vld [vmem:[%s9 + $0x10] sm:$0xff]
      %v2344 = vld [vmem:[%s9 + $0x18] sm:$0xff]
      %2346 = vset.pattern.permute.xlu0 0
      %2347 = vperm.xlu0 %2346, %v2329
      %v2348 = vpop.permute.xlu0 %2347
      %2351 = vset.pattern.permute.xlu0 0
      %2352 = vperm.xlu0 %2351, %v2330
      %v2353 = vpop.permute.xlu0 %2352
      %2356 = vset.pattern.permute.xlu0 0
      %2357 = vperm.xlu0 %2356, %v2331
      %v2358 = vpop.permute.xlu0 %2357
      %2361 = vset.pattern.permute.xlu0 0
      %2362 = vperm.xlu0 %2361, %v2332
      %v2363 = vpop.permute.xlu0 %2362
      %v2366 = vsel %vm599, %v2341, 0
      %v2369 = vsel %vm599, %v2342, 0
      %v2372 = vsel %vm599, %v2343, 0
      %v2375 = vsel %vm599, %v2344, 0
      %2377 = vmatprep.subr.mxu0 0.0
      %2378 = vmatpush1.msra.mxu0 0.0
      %2379 = vmatprep.subr.mxu0 0.0
      %2380 = vmatpush1.msra.mxu0 0.0
      %2381 = vmatprep.subr.mxu0 0.0
      %2382 = vmatpush1.msra.mxu0 0.0
      %2383 = vmatprep.subr.mxu0 0.0
      %2384 = vmatpush1.msra.mxu0 0.0
      %2385 = vmatprep.subr.mxu0 0.0
      %2386 = vmatpush1.msra.mxu0 0.0
      %2387 = vmatprep.subr.mxu0 0.0
      %2388 = vmatpush1.msra.mxu0 0.0
      %2389 = vmatprep.subr.mxu0 0.0
      %2390 = vmatpush1.msra.mxu0 0.0
      %2391 = vmatprep.subr.mxu0 0.0
      %2392 = vmatpush1.msra.mxu0 0.0
      %2393 = vmatprep.subr.mxu0 0.0
      %2394 = vmatpush1.msra.mxu0 0.0
      %2395 = vmatprep.subr.mxu0 0.0
      %2396 = vmatpush1.msra.mxu0 0.0
      %2397 = vmatprep.subr.mxu0 0.0
      %2398 = vmatpush1.msra.mxu0 0.0
      %2399 = vmatprep.subr.mxu0 0.0
      %2400 = vmatpush1.msra.mxu0 0.0
      %2401 = vmatprep.subr.mxu0 0.0
      %2402 = vmatpush1.msra.mxu0 %v558
      %2403 = vmatprep.subr.mxu0 0.0
      %2404 = vmatpush1.msra.mxu0 %v557
      %2405 = vmatprep.subr.mxu0 0.0
      %2406 = vmatpush1.msra.mxu0 %v556
      %2407 = vmatprep.subr.mxu0 0.0
      %2408 = vmatpush1.msra.mxu0 %v555
      %2409 = vmatprep.subr.mxu0 0.0
      %2410 = vmatpush2.msra.mxu0 0.0
      %2411 = vmatprep.subr.mxu0 0.0
      %2412 = vmatpush2.msra.mxu0 0.0
      %2413 = vmatprep.subr.mxu0 0.0
      %2414 = vmatpush2.msra.mxu0 0.0
      %2415 = vmatprep.subr.mxu0 0.0
      %2416 = vmatpush2.msra.mxu0 0.0
      %2417 = vmatprep.subr.mxu0 0.0
      %2418 = vmatpush2.msra.mxu0 0.0
      %2419 = vmatprep.subr.mxu0 0.0
      %2420 = vmatpush2.msra.mxu0 0.0
      %2421 = vmatprep.subr.mxu0 0.0
      %2422 = vmatpush2.msra.mxu0 0.0
      %2423 = vmatprep.subr.mxu0 0.0
      %2424 = vmatpush2.msra.mxu0 0.0
      %2425 = vmatprep.subr.mxu0 0.0
      %2426 = vmatpush2.msra.mxu0 0.0
      %2427 = vmatprep.subr.mxu0 0.0
      %2428 = vmatpush2.msra.mxu0 0.0
      %2429 = vmatprep.subr.mxu0 0.0
      %2430 = vmatpush2.msra.mxu0 0.0
      %2431 = vmatprep.subr.mxu0 0.0
      %2432 = vmatpush2.msra.mxu0 0.0
      %2433 = vmatprep.subr.mxu0 0.0
      %2434 = vmatpush2.msra.mxu0 0.0
      %2435 = vmatprep.subr.mxu0 0.0
      %2436 = vmatpush2.msra.mxu0 0.0
      %2437 = vmatprep.subr.mxu0 0.0
      %2438 = vmatpush2.msra.mxu0 0.0
      %2439 = vmatprep.subr.mxu0 0.0
      %2440 = vmatpush2.msra.mxu0 0.0
      %2441 = vmatprep.mubr.f32.mxu0 0.0
      %2442 = vmatmul.mubr.f32.gmra.mxu0 %v2366
      %v2443 = vpop.f32.mrf.mxu0
      %v2444 = vadd.f32 %v2348, %v2443
      %v2445 = vpop.f32.mrf.mxu0
      %2446 = vmatprep.mubr.f32.mxu0 0.0
      %2447 = vmatmul.mubr.f32.gmra.mxu0 %v2369
      %v2448 = vpop.f32.mrf.mxu0
      %v2449 = vadd.f32 %v2353, %v2448
      %v2450 = vpop.f32.mrf.mxu0
      %2451 = vmatprep.mubr.f32.mxu0 0.0
      %2452 = vmatmul.mubr.f32.gmra.mxu0 %v2372
      %v2453 = vpop.f32.mrf.mxu0
      %v2454 = vadd.f32 %v2358, %v2453
      %v2455 = vpop.f32.mrf.mxu0
      %2456 = vmatprep.mubr.f32.mxu0 0.0
      %2457 = vmatmul.mubr.f32.gmra.mxu0 %v2375
      %v2458 = vpop.f32.mrf.mxu0
      %v2459 = vadd.f32 %v2363, %v2458
      %v2460 = vpop.f32.mrf.mxu0
      %2461 = vdwg.mxu0
      %v2462 = vsel %vm1091, %v2444, 0.0
      %2463 = vadd.xlane.f32.xlu0 %v2462
      %v2464 = vpop.xlane.xlu0 %2463
      %v2465 = vsel %vm1091, %v2449, 0.0
      %2466 = vadd.xlane.f32.xlu0 %v2465
      %v2467 = vpop.xlane.xlu0 %2466
      %v2468 = vsel %vm1091, %v2454, 0.0
      %2469 = vadd.xlane.f32.xlu0 %v2468
      %v2470 = vpop.xlane.xlu0 %2469
      %v2471 = vsel %vm1091, %v2459, 0.0
      %2472 = vadd.xlane.f32.xlu0 %v2471
      %v2473 = vpop.xlane.xlu0 %2472
      %v2474 = vrcp.pop 16.0
      %v2475 = vmul.f32 %v2464, %v2474
      %v2476 = vmul.f32 %v2467, %v2474
      %v2477 = vmul.f32 %v2470, %v2474
      %v2478 = vmul.f32 %v2473, %v2474
      %v2479 = vld [vmem:[%s10] sm:$0xff]
      %v2480 = vld [vmem:[%s10 + $0x8] sm:$0xff]
      %v2481 = vld [vmem:[%s10 + $0x10] sm:$0xff]
      %v2482 = vld [vmem:[%s10 + $0x18] sm:$0xff]
      %v2483 = vld [vmem:[%s11] sm:$0xff]
      %v2484 = vld [vmem:[%s11 + $0x8] sm:$0xff]
      %v2485 = vld [vmem:[%s11 + $0x10] sm:$0xff]
      %v2486 = vld [vmem:[%s11 + $0x18] sm:$0xff]
      %v2487 = vld [vmem:[%s11 + $0x20] sm:$0xff]
      %v2488 = vld [vmem:[%s11 + $0x28] sm:$0xff]
      %v2489 = vld [vmem:[%s11 + $0x30] sm:$0xff]
      %v2490 = vld [vmem:[%s11 + $0x38] sm:$0xff]
      %v2491 = vld [vmem:[%s12] sm:$0xff]
      %v2492 = vld [vmem:[%s12 + $0x8] sm:$0xff]
      %v2493 = vld [vmem:[%s12 + $0x10] sm:$0xff]
      %v2494 = vld [vmem:[%s12 + $0x18] sm:$0xff]
      %2495 = vset.pattern.permute.xlu0 1
      %2496 = vperm.xlu0 %2495, %v2329
      %v2497 = vpop.permute.xlu0 %2496
      %2499 = vset.pattern.permute.xlu0 1
      %2500 = vperm.xlu0 %2499, %v2330
      %v2501 = vpop.permute.xlu0 %2500
      %2503 = vset.pattern.permute.xlu0 1
      %2504 = vperm.xlu0 %2503, %v2331
      %v2505 = vpop.permute.xlu0 %2504
      %2507 = vset.pattern.permute.xlu0 1
      %2508 = vperm.xlu0 %2507, %v2332
      %v2509 = vpop.permute.xlu0 %2508
      %v2512 = vsel %vm599, %v2479, 0
      %v2515 = vsel %vm599, %v2480, 0
      %v2518 = vsel %vm599, %v2481, 0
      %v2521 = vsel %vm599, %v2482, 0
      %2523 = vmatprep.subr.mxu0 0.0
      %2524 = vmatpush1.msra.mxu0 0.0
      %2525 = vmatprep.subr.mxu0 0.0
      %2526 = vmatpush1.msra.mxu0 0.0
      %2527 = vmatprep.subr.mxu0 0.0
      %2528 = vmatpush1.msra.mxu0 0.0
      %2529 = vmatprep.subr.mxu0 0.0
      %2530 = vmatpush1.msra.mxu0 0.0
      %2531 = vmatprep.subr.mxu0 0.0
      %2532 = vmatpush1.msra.mxu0 0.0
      %2533 = vmatprep.subr.mxu0 0.0
      %2534 = vmatpush1.msra.mxu0 0.0
      %2535 = vmatprep.subr.mxu0 0.0
      %2536 = vmatpush1.msra.mxu0 0.0
      %2537 = vmatprep.subr.mxu0 0.0
      %2538 = vmatpush1.msra.mxu0 0.0
      %2539 = vmatprep.subr.mxu0 0.0
      %2540 = vmatpush1.msra.mxu0 0.0
      %2541 = vmatprep.subr.mxu0 0.0
      %2542 = vmatpush1.msra.mxu0 0.0
      %2543 = vmatprep.subr.mxu0 0.0
      %2544 = vmatpush1.msra.mxu0 0.0
      %2545 = vmatprep.subr.mxu0 0.0
      %2546 = vmatpush1.msra.mxu0 0.0
      %2547 = vmatprep.subr.mxu0 0.0
      %2548 = vmatpush1.msra.mxu0 %v2478
      %2549 = vmatprep.subr.mxu0 0.0
      %2550 = vmatpush1.msra.mxu0 %v2477
      %2551 = vmatprep.subr.mxu0 0.0
      %2552 = vmatpush1.msra.mxu0 %v2476
      %2553 = vmatprep.subr.mxu0 0.0
      %2554 = vmatpush1.msra.mxu0 %v2475
      %2555 = vmatprep.subr.mxu0 0.0
      %2556 = vmatpush2.msra.mxu0 0.0
      %2557 = vmatprep.subr.mxu0 0.0
      %2558 = vmatpush2.msra.mxu0 0.0
      %2559 = vmatprep.subr.mxu0 0.0
      %2560 = vmatpush2.msra.mxu0 0.0
      %2561 = vmatprep.subr.mxu0 0.0
      %2562 = vmatpush2.msra.mxu0 0.0
      %2563 = vmatprep.subr.mxu0 0.0
      %2564 = vmatpush2.msra.mxu0 0.0
      %2565 = vmatprep.subr.mxu0 0.0
      %2566 = vmatpush2.msra.mxu0 0.0
      %2567 = vmatprep.subr.mxu0 0.0
      %2568 = vmatpush2.msra.mxu0 0.0
      %2569 = vmatprep.subr.mxu0 0.0
      %2570 = vmatpush2.msra.mxu0 0.0
      %2571 = vmatprep.subr.mxu0 0.0
      %2572 = vmatpush2.msra.mxu0 0.0
      %2573 = vmatprep.subr.mxu0 0.0
      %2574 = vmatpush2.msra.mxu0 0.0
      %2575 = vmatprep.subr.mxu0 0.0
      %2576 = vmatpush2.msra.mxu0 0.0
      %2577 = vmatprep.subr.mxu0 0.0
      %2578 = vmatpush2.msra.mxu0 0.0
      %2579 = vmatprep.subr.mxu0 0.0
      %2580 = vmatpush2.msra.mxu0 0.0
      %2581 = vmatprep.subr.mxu0 0.0
      %2582 = vmatpush2.msra.mxu0 0.0
      %2583 = vmatprep.subr.mxu0 0.0
      %2584 = vmatpush2.msra.mxu0 0.0
      %2585 = vmatprep.subr.mxu0 0.0
      %2586 = vmatpush2.msra.mxu0 0.0
      %2587 = vmatprep.mubr.f32.mxu0 0.0
      %2588 = vmatmul.mubr.f32.gmra.mxu0 %v2512
      %v2589 = vpop.f32.mrf.mxu0
      %v2590 = vadd.f32 %v2497, %v2589
      %v2591 = vpop.f32.mrf.mxu0
      %2592 = vmatprep.mubr.f32.mxu0 0.0
      %2593 = vmatmul.mubr.f32.gmra.mxu0 %v2515
      %v2594 = vpop.f32.mrf.mxu0
      %v2595 = vadd.f32 %v2501, %v2594
      %v2596 = vpop.f32.mrf.mxu0
      %2597 = vmatprep.mubr.f32.mxu0 0.0
      %2598 = vmatmul.mubr.f32.gmra.mxu0 %v2518
      %v2599 = vpop.f32.mrf.mxu0
      %v2600 = vadd.f32 %v2505, %v2599
      %v2601 = vpop.f32.mrf.mxu0
      %2602 = vmatprep.mubr.f32.mxu0 0.0
      %2603 = vmatmul.mubr.f32.gmra.mxu0 %v2521
      %v2604 = vpop.f32.mrf.mxu0
      %v2605 = vadd.f32 %v2509, %v2604
      %v2606 = vpop.f32.mrf.mxu0
      %2607 = vdwg.mxu0
      %v2608 = vsel %vm906, %v2590, 0.0
      %v2609 = vsel %vm906, %v2595, 0.0
      %v2610 = vadd.f32 %v2608, %v2609
      %v2611 = vsel %vm906, %v2600, 0.0
      %v2612 = vadd.f32 %v2610, %v2611
      %v2613 = vsel %vm906, %v2605, 0.0
      %v2614 = vadd.f32 %v2612, %v2613
      %v2615 = vrot.slane %v2614, 4
      %v2616 = vadd.f32 %v2614, %v2615
      %v2617 = vrot.slane %v2616, 2
      %v2618 = vadd.f32 %v2616, %v2617
      %v2619 = vrot.slane %v2618, 1
      %v2620 = vadd.f32 %v2618, %v2619
      %v2621 = vmul.f32 %v2620, %v1890
      %v2622 = vsub.f32 %v2590, %v2621
      %v2623 = vsub.f32 %v2595, %v2621
      %v2624 = vsub.f32 %v2600, %v2621
      %v2625 = vsub.f32 %v2605, %v2621
      %v2626 = vmul.f32 %v2622, %v2622
      %v2627 = vmul.f32 %v2623, %v2623
      %v2628 = vmul.f32 %v2624, %v2624
      %v2629 = vmul.f32 %v2625, %v2625
      %v2630 = vsel %vm906, %v2626, 0.0
      %v2631 = vsel %vm906, %v2627, 0.0
      %v2632 = vadd.f32 %v2630, %v2631
      %v2633 = vsel %vm906, %v2628, 0.0
      %v2634 = vadd.f32 %v2632, %v2633
      %v2635 = vsel %vm906, %v2629, 0.0
      %v2636 = vadd.f32 %v2634, %v2635
      %v2637 = vrot.slane %v2636, 4
      %v2638 = vadd.f32 %v2636, %v2637
      %v2639 = vrot.slane %v2638, 2
      %v2640 = vadd.f32 %v2638, %v2639
      %v2641 = vrot.slane %v2640, 1
      %v2642 = vadd.f32 %v2640, %v2641
      %v2643 = vmul.f32 %v2642, %v1890
      %v2644 = vadd.f32 %v2643, 1e-05
      %v2645 = vrsqrt.pop %v2644
      %v2646 = vmul.f32 %v2622, %v2645
      %v2647 = vmul.f32 %v2623, %v2645
      %v2648 = vmul.f32 %v2624, %v2645
      %v2649 = vmul.f32 %v2625, %v2645
      %2650 = vset.pattern.permute.xlu0 3
      %2651 = vperm.xlu0 %2650, %v2329
      %v2652 = vpop.permute.xlu0 %2651
      %2654 = vset.pattern.permute.xlu0 3
      %2655 = vperm.xlu0 %2654, %v2330
      %v2656 = vpop.permute.xlu0 %2655
      %2658 = vset.pattern.permute.xlu0 3
      %2659 = vperm.xlu0 %2658, %v2331
      %v2660 = vpop.permute.xlu0 %2659
      %2662 = vset.pattern.permute.xlu0 3
      %2663 = vperm.xlu0 %2662, %v2332
      %v2664 = vpop.permute.xlu0 %2663
      %v2666 = vmul.f32 %v2646, %v2652
      %v2667 = vmul.f32 %v2647, %v2656
      %v2668 = vmul.f32 %v2648, %v2660
      %v2669 = vmul.f32 %v2649, %v2664
      %2670 = vset.pattern.permute.xlu0 4
      %2671 = vperm.xlu0 %2670, %v2329
      %v2672 = vpop.permute.xlu0 %2671
      %2674 = vset.pattern.permute.xlu0 4
      %2675 = vperm.xlu0 %2674, %v2330
      %v2676 = vpop.permute.xlu0 %2675
      %2678 = vset.pattern.permute.xlu0 4
      %2679 = vperm.xlu0 %2678, %v2331
      %v2680 = vpop.permute.xlu0 %2679
      %2682 = vset.pattern.permute.xlu0 4
      %2683 = vperm.xlu0 %2682, %v2332
      %v2684 = vpop.permute.xlu0 %2683
      %v2686 = vadd.f32 %v2666, %v2672
      %v2687 = vadd.f32 %v2667, %v2676
      %v2688 = vadd.f32 %v2668, %v2680
      %v2689 = vadd.f32 %v2669, %v2684
      %2691 = vset.pattern.permute.xlu0 0
      %2692 = vperm.xlu0 %2691, %v2333
      %v2693 = vpop.permute.xlu0 %2692
      %2696 = vset.pattern.permute.xlu0 0
      %2697 = vperm.xlu0 %2696, %v2334
      %v2698 = vpop.permute.xlu0 %2697
      %2701 = vset.pattern.permute.xlu0 0
      %2702 = vperm.xlu0 %2701, %v2335
      %v2703 = vpop.permute.xlu0 %2702
      %2706 = vset.pattern.permute.xlu0 0
      %2707 = vperm.xlu0 %2706, %v2336
      %v2708 = vpop.permute.xlu0 %2707
      %2711 = vset.pattern.permute.xlu0 0
      %2712 = vperm.xlu0 %2711, %v2337
      %v2713 = vpop.permute.xlu0 %2712
      %2716 = vset.pattern.permute.xlu0 0
      %2717 = vperm.xlu0 %2716, %v2338
      %v2718 = vpop.permute.xlu0 %2717
      %2721 = vset.pattern.permute.xlu0 0
      %2722 = vperm.xlu0 %2721, %v2339
      %v2723 = vpop.permute.xlu0 %2722
      %2726 = vset.pattern.permute.xlu0 0
      %2727 = vperm.xlu0 %2726, %v2340
      %v2728 = vpop.permute.xlu0 %2727
      %v2731 = vsel %vm1992, %v2483, 0
      %v2734 = vsel %vm1992, %v2484, 0
      %v2737 = vsel %vm1992, %v2485, 0
      %v2740 = vsel %vm1992, %v2486, 0
      %v2743 = vsel %vm1992, %v2487, 0
      %v2746 = vsel %vm1992, %v2488, 0
      %v2749 = vsel %vm1992, %v2489, 0
      %v2752 = vsel %vm1992, %v2490, 0
      %2754 = vmatprep.subr.mxu0 0.0
      %2755 = vmatpush1.msra.mxu0 0.0
      %2756 = vmatprep.subr.mxu0 0.0
      %2757 = vmatpush1.msra.mxu0 0.0
      %2758 = vmatprep.subr.mxu0 0.0
      %2759 = vmatpush1.msra.mxu0 0.0
      %2760 = vmatprep.subr.mxu0 0.0
      %2761 = vmatpush1.msra.mxu0 0.0
      %2762 = vmatprep.subr.mxu0 0.0
      %2763 = vmatpush1.msra.mxu0 0.0
      %2764 = vmatprep.subr.mxu0 0.0
      %2765 = vmatpush1.msra.mxu0 0.0
      %2766 = vmatprep.subr.mxu0 0.0
      %2767 = vmatpush1.msra.mxu0 0.0
      %2768 = vmatprep.subr.mxu0 0.0
      %2769 = vmatpush1.msra.mxu0 0.0
      %2770 = vmatprep.subr.mxu0 0.0
      %2771 = vmatpush1.msra.mxu0 %v2689
      %2772 = vmatprep.subr.mxu0 0.0
      %2773 = vmatpush1.msra.mxu0 %v2688
      %2774 = vmatprep.subr.mxu0 0.0
      %2775 = vmatpush1.msra.mxu0 %v2687
      %2776 = vmatprep.subr.mxu0 0.0
      %2777 = vmatpush1.msra.mxu0 %v2686
      %2778 = vmatprep.subr.mxu0 0.0
      %2779 = vmatpush1.msra.mxu0 %v562
      %2780 = vmatprep.subr.mxu0 0.0
      %2781 = vmatpush1.msra.mxu0 %v561
      %2782 = vmatprep.subr.mxu0 0.0
      %2783 = vmatpush1.msra.mxu0 %v560
      %2784 = vmatprep.subr.mxu0 0.0
      %2785 = vmatpush1.msra.mxu0 %v559
      %2786 = vmatprep.subr.mxu0 0.0
      %2787 = vmatpush2.msra.mxu0 0.0
      %2788 = vmatprep.subr.mxu0 0.0
      %2789 = vmatpush2.msra.mxu0 0.0
      %2790 = vmatprep.subr.mxu0 0.0
      %2791 = vmatpush2.msra.mxu0 0.0
      %2792 = vmatprep.subr.mxu0 0.0
      %2793 = vmatpush2.msra.mxu0 0.0
      %2794 = vmatprep.subr.mxu0 0.0
      %2795 = vmatpush2.msra.mxu0 0.0
      %2796 = vmatprep.subr.mxu0 0.0
      %2797 = vmatpush2.msra.mxu0 0.0
      %2798 = vmatprep.subr.mxu0 0.0
      %2799 = vmatpush2.msra.mxu0 0.0
      %2800 = vmatprep.subr.mxu0 0.0
      %2801 = vmatpush2.msra.mxu0 0.0
      %2802 = vmatprep.subr.mxu0 0.0
      %2803 = vmatpush2.msra.mxu0 0.0
      %2804 = vmatprep.subr.mxu0 0.0
      %2805 = vmatpush2.msra.mxu0 0.0
      %2806 = vmatprep.subr.mxu0 0.0
      %2807 = vmatpush2.msra.mxu0 0.0
      %2808 = vmatprep.subr.mxu0 0.0
      %2809 = vmatpush2.msra.mxu0 0.0
      %2810 = vmatprep.subr.mxu0 0.0
      %2811 = vmatpush2.msra.mxu0 0.0
      %2812 = vmatprep.subr.mxu0 0.0
      %2813 = vmatpush2.msra.mxu0 0.0
      %2814 = vmatprep.subr.mxu0 0.0
      %2815 = vmatpush2.msra.mxu0 0.0
      %2816 = vmatprep.subr.mxu0 0.0
      %2817 = vmatpush2.msra.mxu0 0.0
      %2818 = vmatprep.mubr.f32.mxu0 0.0
      %2819 = vmatmul.mubr.f32.gmra.mxu0 %v2731
      %v2820 = vpop.f32.mrf.mxu0
      %v2821 = vadd.f32 %v2693, %v2820
      %v2822 = vpop.f32.mrf.mxu0
      %2823 = vmatprep.mubr.f32.mxu0 0.0
      %2824 = vmatmul.mubr.f32.gmra.mxu0 %v2734
      %v2825 = vpop.f32.mrf.mxu0
      %v2826 = vadd.f32 %v2698, %v2825
      %v2827 = vpop.f32.mrf.mxu0
      %2828 = vmatprep.mubr.f32.mxu0 0.0
      %2829 = vmatmul.mubr.f32.gmra.mxu0 %v2737
      %v2830 = vpop.f32.mrf.mxu0
      %v2831 = vadd.f32 %v2703, %v2830
      %v2832 = vpop.f32.mrf.mxu0
      %2833 = vmatprep.mubr.f32.mxu0 0.0
      %2834 = vmatmul.mubr.f32.gmra.mxu0 %v2740
      %v2835 = vpop.f32.mrf.mxu0
      %v2836 = vadd.f32 %v2708, %v2835
      %v2837 = vpop.f32.mrf.mxu0
      %2838 = vmatprep.mubr.f32.mxu0 0.0
      %2839 = vmatmul.mubr.f32.gmra.mxu0 %v2743
      %v2840 = vpop.f32.mrf.mxu0
      %v2841 = vadd.f32 %v2713, %v2840
      %v2842 = vpop.f32.mrf.mxu0
      %2843 = vmatprep.mubr.f32.mxu0 0.0
      %2844 = vmatmul.mubr.f32.gmra.mxu0 %v2746
      %v2845 = vpop.f32.mrf.mxu0
      %v2846 = vadd.f32 %v2718, %v2845
      %v2847 = vpop.f32.mrf.mxu0
      %2848 = vmatprep.mubr.f32.mxu0 0.0
      %2849 = vmatmul.mubr.f32.gmra.mxu0 %v2749
      %v2850 = vpop.f32.mrf.mxu0
      %v2851 = vadd.f32 %v2723, %v2850
      %v2852 = vpop.f32.mrf.mxu0
      %2853 = vmatprep.mubr.f32.mxu0 0.0
      %2854 = vmatmul.mubr.f32.gmra.mxu0 %v2752
      %v2855 = vpop.f32.mrf.mxu0
      %v2856 = vadd.f32 %v2728, %v2855
      %v2857 = vpop.f32.mrf.mxu0
      %2858 = vdwg.mxu0
      %v2859 = vmax.f32 %v2821, 0.0
      %v2860 = vmax.f32 %v2826, 0.0
      %v2861 = vmax.f32 %v2831, 0.0
      %v2862 = vmax.f32 %v2836, 0.0
      %v2863 = vmax.f32 %v2841, 0.0
      %v2864 = vmax.f32 %v2846, 0.0
      %v2865 = vmax.f32 %v2851, 0.0
      %v2866 = vmax.f32 %v2856, 0.0
      %2867 = vset.pattern.permute.xlu0 2
      %2868 = vperm.xlu0 %2867, %v2329
      %v2869 = vpop.permute.xlu0 %2868
      %2871 = vset.pattern.permute.xlu0 2
      %2872 = vperm.xlu0 %2871, %v2330
      %v2873 = vpop.permute.xlu0 %2872
      %2875 = vset.pattern.permute.xlu0 2
      %2876 = vperm.xlu0 %2875, %v2331
      %v2877 = vpop.permute.xlu0 %2876
      %2879 = vset.pattern.permute.xlu0 2
      %2880 = vperm.xlu0 %2879, %v2332
      %v2881 = vpop.permute.xlu0 %2880
      %v2884 = vsel %vm1992, %v2491, 0
      %v2887 = vsel %vm1992, %v2492, 0
      %v2890 = vsel %vm1992, %v2493, 0
      %v2893 = vsel %vm1992, %v2494, 0
      %2895 = vmatprep.subr.mxu0 0.0
      %2896 = vmatpush1.msra.mxu0 0.0
      %2897 = vmatprep.subr.mxu0 0.0
      %2898 = vmatpush1.msra.mxu0 0.0
      %2899 = vmatprep.subr.mxu0 0.0
      %2900 = vmatpush1.msra.mxu0 0.0
      %2901 = vmatprep.subr.mxu0 0.0
      %2902 = vmatpush1.msra.mxu0 0.0
      %2903 = vmatprep.subr.mxu0 0.0
      %2904 = vmatpush1.msra.mxu0 0.0
      %2905 = vmatprep.subr.mxu0 0.0
      %2906 = vmatpush1.msra.mxu0 0.0
      %2907 = vmatprep.subr.mxu0 0.0
      %2908 = vmatpush1.msra.mxu0 0.0
      %2909 = vmatprep.subr.mxu0 0.0
      %2910 = vmatpush1.msra.mxu0 0.0
      %2911 = vmatprep.subr.mxu0 0.0
      %2912 = vmatpush1.msra.mxu0 %v2866
      %2913 = vmatprep.subr.mxu0 0.0
      %2914 = vmatpush1.msra.mxu0 %v2865
      %2915 = vmatprep.subr.mxu0 0.0
      %2916 = vmatpush1.msra.mxu0 %v2864
      %2917 = vmatprep.subr.mxu0 0.0
      %2918 = vmatpush1.msra.mxu0 %v2863
      %2919 = vmatprep.subr.mxu0 0.0
      %2920 = vmatpush1.msra.mxu0 %v2862
      %2921 = vmatprep.subr.mxu0 0.0
      %2922 = vmatpush1.msra.mxu0 %v2861
      %2923 = vmatprep.subr.mxu0 0.0
      %2924 = vmatpush1.msra.mxu0 %v2860
      %2925 = vmatprep.subr.mxu0 0.0
      %2926 = vmatpush1.msra.mxu0 %v2859
      %2927 = vmatprep.subr.mxu0 0.0
      %2928 = vmatpush2.msra.mxu0 0.0
      %2929 = vmatprep.subr.mxu0 0.0
      %2930 = vmatpush2.msra.mxu0 0.0
      %2931 = vmatprep.subr.mxu0 0.0
      %2932 = vmatpush2.msra.mxu0 0.0
      %2933 = vmatprep.subr.mxu0 0.0
      %2934 = vmatpush2.msra.mxu0 0.0
      %2935 = vmatprep.subr.mxu0 0.0
      %2936 = vmatpush2.msra.mxu0 0.0
      %2937 = vmatprep.subr.mxu0 0.0
      %2938 = vmatpush2.msra.mxu0 0.0
      %2939 = vmatprep.subr.mxu0 0.0
      %2940 = vmatpush2.msra.mxu0 0.0
      %2941 = vmatprep.subr.mxu0 0.0
      %2942 = vmatpush2.msra.mxu0 0.0
      %2943 = vmatprep.subr.mxu0 0.0
      %2944 = vmatpush2.msra.mxu0 0.0
      %2945 = vmatprep.subr.mxu0 0.0
      %2946 = vmatpush2.msra.mxu0 0.0
      %2947 = vmatprep.subr.mxu0 0.0
      %2948 = vmatpush2.msra.mxu0 0.0
      %2949 = vmatprep.subr.mxu0 0.0
      %2950 = vmatpush2.msra.mxu0 0.0
      %2951 = vmatprep.subr.mxu0 0.0
      %2952 = vmatpush2.msra.mxu0 0.0
      %2953 = vmatprep.subr.mxu0 0.0
      %2954 = vmatpush2.msra.mxu0 0.0
      %2955 = vmatprep.subr.mxu0 0.0
      %2956 = vmatpush2.msra.mxu0 0.0
      %2957 = vmatprep.subr.mxu0 0.0
      %2958 = vmatpush2.msra.mxu0 0.0
      %2959 = vmatprep.mubr.f32.mxu0 0.0
      %2960 = vmatmul.mubr.f32.gmra.mxu0 %v2884
      %v2961 = vpop.f32.mrf.mxu0
      %v2962 = vadd.f32 %v2869, %v2961
      %v2963 = vpop.f32.mrf.mxu0
      %2964 = vmatprep.mubr.f32.mxu0 0.0
      %2965 = vmatmul.mubr.f32.gmra.mxu0 %v2887
      %v2966 = vpop.f32.mrf.mxu0
      %v2967 = vadd.f32 %v2873, %v2966
      %v2968 = vpop.f32.mrf.mxu0
      %2969 = vmatprep.mubr.f32.mxu0 0.0
      %2970 = vmatmul.mubr.f32.gmra.mxu0 %v2890
      %v2971 = vpop.f32.mrf.mxu0
      %v2972 = vadd.f32 %v2877, %v2971
      %v2973 = vpop.f32.mrf.mxu0
      %2974 = vmatprep.mubr.f32.mxu0 0.0
      %2975 = vmatmul.mubr.f32.gmra.mxu0 %v2893
      %v2976 = vpop.f32.mrf.mxu0
      %v2977 = vadd.f32 %v2881, %v2976
      %v2978 = vpop.f32.mrf.mxu0
      %2979 = vdwg.mxu0
      %v2980 = vsel %vm906, %v2962, 0.0
      %v2981 = vsel %vm906, %v2967, 0.0
      %v2982 = vadd.f32 %v2980, %v2981
      %v2983 = vsel %vm906, %v2972, 0.0
      %v2984 = vadd.f32 %v2982, %v2983
      %v2985 = vsel %vm906, %v2977, 0.0
      %v2986 = vadd.f32 %v2984, %v2985
      %v2987 = vrot.slane %v2986, 4
      %v2988 = vadd.f32 %v2986, %v2987
      %v2989 = vrot.slane %v2988, 2
      %v2990 = vadd.f32 %v2988, %v2989
      %v2991 = vrot.slane %v2990, 1
      %v2992 = vadd.f32 %v2990, %v2991
      %v2993 = vmul.f32 %v2992, %v1890
      %v2994 = vsub.f32 %v2962, %v2993
      %v2995 = vsub.f32 %v2967, %v2993
      %v2996 = vsub.f32 %v2972, %v2993
      %v2997 = vsub.f32 %v2977, %v2993
      %v2998 = vmul.f32 %v2994, %v2994
      %v2999 = vmul.f32 %v2995, %v2995
      %v3000 = vmul.f32 %v2996, %v2996
      %v3001 = vmul.f32 %v2997, %v2997
      %v3002 = vsel %vm906, %v2998, 0.0
      %v3003 = vsel %vm906, %v2999, 0.0
      %v3004 = vadd.f32 %v3002, %v3003
      %v3005 = vsel %vm906, %v3000, 0.0
      %v3006 = vadd.f32 %v3004, %v3005
      %v3007 = vsel %vm906, %v3001, 0.0
      %v3008 = vadd.f32 %v3006, %v3007
      %v3009 = vrot.slane %v3008, 4
      %v3010 = vadd.f32 %v3008, %v3009
      %v3011 = vrot.slane %v3010, 2
      %v3012 = vadd.f32 %v3010, %v3011
      %v3013 = vrot.slane %v3012, 1
      %v3014 = vadd.f32 %v3012, %v3013
      %v3015 = vmul.f32 %v3014, %v1890
      %v3016 = vadd.f32 %v3015, 1e-05
      %v3017 = vrsqrt.pop %v3016
      %v3018 = vmul.f32 %v2994, %v3017
      %v3019 = vmul.f32 %v2995, %v3017
      %v3020 = vmul.f32 %v2996, %v3017
      %v3021 = vmul.f32 %v2997, %v3017
      %3022 = vset.pattern.permute.xlu0 5
      %3023 = vperm.xlu0 %3022, %v2329
      %v3024 = vpop.permute.xlu0 %3023
      %3026 = vset.pattern.permute.xlu0 5
      %3027 = vperm.xlu0 %3026, %v2330
      %v3028 = vpop.permute.xlu0 %3027
      %3030 = vset.pattern.permute.xlu0 5
      %3031 = vperm.xlu0 %3030, %v2331
      %v3032 = vpop.permute.xlu0 %3031
      %3034 = vset.pattern.permute.xlu0 5
      %3035 = vperm.xlu0 %3034, %v2332
      %v3036 = vpop.permute.xlu0 %3035
      %v3038 = vmul.f32 %v3018, %v3024
      %v3039 = vmul.f32 %v3019, %v3028
      %v3040 = vmul.f32 %v3020, %v3032
      %v3041 = vmul.f32 %v3021, %v3036
      %3042 = vset.pattern.permute.xlu0 6
      %3043 = vperm.xlu0 %3042, %v2329
      %v3044 = vpop.permute.xlu0 %3043
      %3046 = vset.pattern.permute.xlu0 6
      %3047 = vperm.xlu0 %3046, %v2330
      %v3048 = vpop.permute.xlu0 %3047
      %3050 = vset.pattern.permute.xlu0 6
      %3051 = vperm.xlu0 %3050, %v2331
      %v3052 = vpop.permute.xlu0 %3051
      %3054 = vset.pattern.permute.xlu0 6
      %3055 = vperm.xlu0 %3054, %v2332
      %v3056 = vpop.permute.xlu0 %3055
      %v3058 = vadd.f32 %v3038, %v3044
      %v3059 = vadd.f32 %v3039, %v3048
      %v3060 = vadd.f32 %v3040, %v3052
      %v3061 = vadd.f32 %v3041, %v3056
      %v3062 = vadd.f32 %v559, %v3058
      %v3063 = vadd.f32 %v560, %v3059
      %v3064 = vadd.f32 %v561, %v3060
      %v3065 = vadd.f32 %v562, %v3061
      %s3066 = scalar_lea.vmem %s7, 32
      %v3067 = vld [vmem:[%s3066] sm:$0xff]
      %v3068 = vld [vmem:[%s3066 + $0x8] sm:$0xff]
      %v3069 = vld [vmem:[%s3066 + $0x10] sm:$0xff]
      %v3070 = vld [vmem:[%s3066 + $0x18] sm:$0xff]
      %s3071 = scalar_lea.vmem %s8, 64
      %v3072 = vld [vmem:[%s3071] sm:$0xff]
      %v3073 = vld [vmem:[%s3071 + $0x8] sm:$0xff]
      %v3074 = vld [vmem:[%s3071 + $0x10] sm:$0xff]
      %v3075 = vld [vmem:[%s3071 + $0x18] sm:$0xff]
      %v3076 = vld [vmem:[%s3071 + $0x20] sm:$0xff]
      %v3077 = vld [vmem:[%s3071 + $0x28] sm:$0xff]
      %v3078 = vld [vmem:[%s3071 + $0x30] sm:$0xff]
      %v3079 = vld [vmem:[%s3071 + $0x38] sm:$0xff]
      %s3080 = scalar_lea.vmem %s2, 32
      %v3081 = vld [vmem:[%s3080] sm:$0xff]
      %v3082 = vld [vmem:[%s3080 + $0x8] sm:$0xff]
      %v3083 = vld [vmem:[%s3080 + $0x10] sm:$0xff]
      %v3084 = vld [vmem:[%s3080 + $0x18] sm:$0xff]
      %3086 = vset.pattern.permute.xlu0 0
      %3087 = vperm.xlu0 %3086, %v3067
      %v3088 = vpop.permute.xlu0 %3087
      %3091 = vset.pattern.permute.xlu0 0
      %3092 = vperm.xlu0 %3091, %v3068
      %v3093 = vpop.permute.xlu0 %3092
      %3096 = vset.pattern.permute.xlu0 0
      %3097 = vperm.xlu0 %3096, %v3069
      %v3098 = vpop.permute.xlu0 %3097
      %3101 = vset.pattern.permute.xlu0 0
      %3102 = vperm.xlu0 %3101, %v3070
      %v3103 = vpop.permute.xlu0 %3102
      %v3106 = vsel %vm599, %v3081, 0
      %v3109 = vsel %vm599, %v3082, 0
      %v3112 = vsel %vm599, %v3083, 0
      %v3115 = vsel %vm599, %v3084, 0
      %3117 = vmatprep.subr.mxu0 0.0
      %3118 = vmatpush1.msra.mxu0 0.0
      %3119 = vmatprep.subr.mxu0 0.0
      %3120 = vmatpush1.msra.mxu0 0.0
      %3121 = vmatprep.subr.mxu0 0.0
      %3122 = vmatpush1.msra.mxu0 0.0
      %3123 = vmatprep.subr.mxu0 0.0
      %3124 = vmatpush1.msra.mxu0 0.0
      %3125 = vmatprep.subr.mxu0 0.0
      %3126 = vmatpush1.msra.mxu0 0.0
      %3127 = vmatprep.subr.mxu0 0.0
      %3128 = vmatpush1.msra.mxu0 0.0
      %3129 = vmatprep.subr.mxu0 0.0
      %3130 = vmatpush1.msra.mxu0 0.0
      %3131 = vmatprep.subr.mxu0 0.0
      %3132 = vmatpush1.msra.mxu0 0.0
      %3133 = vmatprep.subr.mxu0 0.0
      %3134 = vmatpush1.msra.mxu0 0.0
      %3135 = vmatprep.subr.mxu0 0.0
      %3136 = vmatpush1.msra.mxu0 0.0
      %3137 = vmatprep.subr.mxu0 0.0
      %3138 = vmatpush1.msra.mxu0 0.0
      %3139 = vmatprep.subr.mxu0 0.0
      %3140 = vmatpush1.msra.mxu0 0.0
      %3141 = vmatprep.subr.mxu0 0.0
      %3142 = vmatpush1.msra.mxu0 %v2328
      %3143 = vmatprep.subr.mxu0 0.0
      %3144 = vmatpush1.msra.mxu0 %v2327
      %3145 = vmatprep.subr.mxu0 0.0
      %3146 = vmatpush1.msra.mxu0 %v2326
      %3147 = vmatprep.subr.mxu0 0.0
      %3148 = vmatpush1.msra.mxu0 %v2325
      %3149 = vmatprep.subr.mxu0 0.0
      %3150 = vmatpush2.msra.mxu0 0.0
      %3151 = vmatprep.subr.mxu0 0.0
      %3152 = vmatpush2.msra.mxu0 0.0
      %3153 = vmatprep.subr.mxu0 0.0
      %3154 = vmatpush2.msra.mxu0 0.0
      %3155 = vmatprep.subr.mxu0 0.0
      %3156 = vmatpush2.msra.mxu0 0.0
      %3157 = vmatprep.subr.mxu0 0.0
      %3158 = vmatpush2.msra.mxu0 0.0
      %3159 = vmatprep.subr.mxu0 0.0
      %3160 = vmatpush2.msra.mxu0 0.0
      %3161 = vmatprep.subr.mxu0 0.0
      %3162 = vmatpush2.msra.mxu0 0.0
      %3163 = vmatprep.subr.mxu0 0.0
      %3164 = vmatpush2.msra.mxu0 0.0
      %3165 = vmatprep.subr.mxu0 0.0
      %3166 = vmatpush2.msra.mxu0 0.0
      %3167 = vmatprep.subr.mxu0 0.0
      %3168 = vmatpush2.msra.mxu0 0.0
      %3169 = vmatprep.subr.mxu0 0.0
      %3170 = vmatpush2.msra.mxu0 0.0
      %3171 = vmatprep.subr.mxu0 0.0
      %3172 = vmatpush2.msra.mxu0 0.0
      %3173 = vmatprep.subr.mxu0 0.0
      %3174 = vmatpush2.msra.mxu0 0.0
      %3175 = vmatprep.subr.mxu0 0.0
      %3176 = vmatpush2.msra.mxu0 0.0
      %3177 = vmatprep.subr.mxu0 0.0
      %3178 = vmatpush2.msra.mxu0 0.0
      %3179 = vmatprep.subr.mxu0 0.0
      %3180 = vmatpush2.msra.mxu0 0.0
      %3181 = vmatprep.mubr.f32.mxu0 0.0
      %3182 = vmatmul.mubr.f32.gmra.mxu0 %v3106
      %v3183 = vpop.f32.mrf.mxu0
      %v3184 = vadd.f32 %v3088, %v3183
      %v3185 = vpop.f32.mrf.mxu0
      %3186 = vmatprep.mubr.f32.mxu0 0.0
      %3187 = vmatmul.mubr.f32.gmra.mxu0 %v3109
      %v3188 = vpop.f32.mrf.mxu0
      %v3189 = vadd.f32 %v3093, %v3188
      %v3190 = vpop.f32.mrf.mxu0
      %3191 = vmatprep.mubr.f32.mxu0 0.0
      %3192 = vmatmul.mubr.f32.gmra.mxu0 %v3112
      %v3193 = vpop.f32.mrf.mxu0
      %v3194 = vadd.f32 %v3098, %v3193
      %v3195 = vpop.f32.mrf.mxu0
      %3196 = vmatprep.mubr.f32.mxu0 0.0
      %3197 = vmatmul.mubr.f32.gmra.mxu0 %v3115
      %v3198 = vpop.f32.mrf.mxu0
      %v3199 = vadd.f32 %v3103, %v3198
      %v3200 = vpop.f32.mrf.mxu0
      %3201 = vdwg.mxu0
      %s3202 = scalar_lea.vmem %s3, 64
      %v3203 = vld [vmem:[%s3202] sm:$0xff]
      %v3204 = vld [vmem:[%s3202 + $0x8] sm:$0xff]
      %v3205 = vld [vmem:[%s3202 + $0x10] sm:$0xff]
      %v3206 = vld [vmem:[%s3202 + $0x18] sm:$0xff]
      %v3207 = vld [vmem:[%s3202 + $0x20] sm:$0xff]
      %v3208 = vld [vmem:[%s3202 + $0x28] sm:$0xff]
      %v3209 = vld [vmem:[%s3202 + $0x30] sm:$0xff]
      %v3210 = vld [vmem:[%s3202 + $0x38] sm:$0xff]
      %3212 = vset.pattern.permute.xlu0 0
      %3213 = vperm.xlu0 %3212, %v3072
      %v3214 = vpop.permute.xlu0 %3213
      %3217 = vset.pattern.permute.xlu0 0
      %3218 = vperm.xlu0 %3217, %v3073
      %v3219 = vpop.permute.xlu0 %3218
      %3222 = vset.pattern.permute.xlu0 0
      %3223 = vperm.xlu0 %3222, %v3074
      %v3224 = vpop.permute.xlu0 %3223
      %3227 = vset.pattern.permute.xlu0 0
      %3228 = vperm.xlu0 %3227, %v3075
      %v3229 = vpop.permute.xlu0 %3228
      %3232 = vset.pattern.permute.xlu0 0
      %3233 = vperm.xlu0 %3232, %v3076
      %v3234 = vpop.permute.xlu0 %3233
      %3237 = vset.pattern.permute.xlu0 0
      %3238 = vperm.xlu0 %3237, %v3077
      %v3239 = vpop.permute.xlu0 %3238
      %3242 = vset.pattern.permute.xlu0 0
      %3243 = vperm.xlu0 %3242, %v3078
      %v3244 = vpop.permute.xlu0 %3243
      %3247 = vset.pattern.permute.xlu0 0
      %3248 = vperm.xlu0 %3247, %v3079
      %v3249 = vpop.permute.xlu0 %3248
      %v3252 = vsel %vm599, %v3203, 0
      %v3255 = vsel %vm599, %v3204, 0
      %v3258 = vsel %vm599, %v3205, 0
      %v3261 = vsel %vm599, %v3206, 0
      %v3264 = vsel %vm599, %v3207, 0
      %v3267 = vsel %vm599, %v3208, 0
      %v3270 = vsel %vm599, %v3209, 0
      %v3273 = vsel %vm599, %v3210, 0
      %3275 = vmatprep.subr.mxu0 0.0
      %3276 = vmatpush1.msra.mxu0 0.0
      %3277 = vmatprep.subr.mxu0 0.0
      %3278 = vmatpush1.msra.mxu0 0.0
      %3279 = vmatprep.subr.mxu0 0.0
      %3280 = vmatpush1.msra.mxu0 0.0
      %3281 = vmatprep.subr.mxu0 0.0
      %3282 = vmatpush1.msra.mxu0 0.0
      %3283 = vmatprep.subr.mxu0 0.0
      %3284 = vmatpush1.msra.mxu0 0.0
      %3285 = vmatprep.subr.mxu0 0.0
      %3286 = vmatpush1.msra.mxu0 0.0
      %3287 = vmatprep.subr.mxu0 0.0
      %3288 = vmatpush1.msra.mxu0 0.0
      %3289 = vmatprep.subr.mxu0 0.0
      %3290 = vmatpush1.msra.mxu0 0.0
      %3291 = vmatprep.subr.mxu0 0.0
      %3292 = vmatpush1.msra.mxu0 0.0
      %3293 = vmatprep.subr.mxu0 0.0
      %3294 = vmatpush1.msra.mxu0 0.0
      %3295 = vmatprep.subr.mxu0 0.0
      %3296 = vmatpush1.msra.mxu0 0.0
      %3297 = vmatprep.subr.mxu0 0.0
      %3298 = vmatpush1.msra.mxu0 0.0
      %3299 = vmatprep.subr.mxu0 0.0
      %3300 = vmatpush1.msra.mxu0 %v3065
      %3301 = vmatprep.subr.mxu0 0.0
      %3302 = vmatpush1.msra.mxu0 %v3064
      %3303 = vmatprep.subr.mxu0 0.0
      %3304 = vmatpush1.msra.mxu0 %v3063
      %3305 = vmatprep.subr.mxu0 0.0
      %3306 = vmatpush1.msra.mxu0 %v3062
      %3307 = vmatprep.subr.mxu0 0.0
      %3308 = vmatpush2.msra.mxu0 0.0
      %3309 = vmatprep.subr.mxu0 0.0
      %3310 = vmatpush2.msra.mxu0 0.0
      %3311 = vmatprep.subr.mxu0 0.0
      %3312 = vmatpush2.msra.mxu0 0.0
      %3313 = vmatprep.subr.mxu0 0.0
      %3314 = vmatpush2.msra.mxu0 0.0
      %3315 = vmatprep.subr.mxu0 0.0
      %3316 = vmatpush2.msra.mxu0 0.0
      %3317 = vmatprep.subr.mxu0 0.0
      %3318 = vmatpush2.msra.mxu0 0.0
      %3319 = vmatprep.subr.mxu0 0.0
      %3320 = vmatpush2.msra.mxu0 0.0
      %3321 = vmatprep.subr.mxu0 0.0
      %3322 = vmatpush2.msra.mxu0 0.0
      %3323 = vmatprep.subr.mxu0 0.0
      %3324 = vmatpush2.msra.mxu0 0.0
      %3325 = vmatprep.subr.mxu0 0.0
      %3326 = vmatpush2.msra.mxu0 0.0
      %3327 = vmatprep.subr.mxu0 0.0
      %3328 = vmatpush2.msra.mxu0 0.0
      %3329 = vmatprep.subr.mxu0 0.0
      %3330 = vmatpush2.msra.mxu0 0.0
      %3331 = vmatprep.subr.mxu0 0.0
      %3332 = vmatpush2.msra.mxu0 0.0
      %3333 = vmatprep.subr.mxu0 0.0
      %3334 = vmatpush2.msra.mxu0 0.0
      %3335 = vmatprep.subr.mxu0 0.0
      %3336 = vmatpush2.msra.mxu0 0.0
      %3337 = vmatprep.subr.mxu0 0.0
      %3338 = vmatpush2.msra.mxu0 0.0
      %3339 = vmatprep.mubr.f32.mxu0 0.0
      %3340 = vmatmul.mubr.f32.gmra.mxu0 %v3252
      %v3341 = vpop.f32.mrf.mxu0
      %v3342 = vadd.f32 %v3214, %v3341
      %v3343 = vpop.f32.mrf.mxu0
      %3344 = vmatprep.mubr.f32.mxu0 0.0
      %3345 = vmatmul.mubr.f32.gmra.mxu0 %v3255
      %v3346 = vpop.f32.mrf.mxu0
      %v3347 = vadd.f32 %v3219, %v3346
      %v3348 = vpop.f32.mrf.mxu0
      %3349 = vmatprep.mubr.f32.mxu0 0.0
      %3350 = vmatmul.mubr.f32.gmra.mxu0 %v3258
      %v3351 = vpop.f32.mrf.mxu0
      %v3352 = vadd.f32 %v3224, %v3351
      %v3353 = vpop.f32.mrf.mxu0
      %3354 = vmatprep.mubr.f32.mxu0 0.0
      %3355 = vmatmul.mubr.f32.gmra.mxu0 %v3261
      %v3356 = vpop.f32.mrf.mxu0
      %v3357 = vadd.f32 %v3229, %v3356
      %v3358 = vpop.f32.mrf.mxu0
      %3359 = vmatprep.mubr.f32.mxu0 0.0
      %3360 = vmatmul.mubr.f32.gmra.mxu0 %v3264
      %v3361 = vpop.f32.mrf.mxu0
      %v3362 = vadd.f32 %v3234, %v3361
      %v3363 = vpop.f32.mrf.mxu0
      %3364 = vmatprep.mubr.f32.mxu0 0.0
      %3365 = vmatmul.mubr.f32.gmra.mxu0 %v3267
      %v3366 = vpop.f32.mrf.mxu0
      %v3367 = vadd.f32 %v3239, %v3366
      %v3368 = vpop.f32.mrf.mxu0
      %3369 = vmatprep.mubr.f32.mxu0 0.0
      %3370 = vmatmul.mubr.f32.gmra.mxu0 %v3270
      %v3371 = vpop.f32.mrf.mxu0
      %v3372 = vadd.f32 %v3244, %v3371
      %v3373 = vpop.f32.mrf.mxu0
      %3374 = vmatprep.mubr.f32.mxu0 0.0
      %3375 = vmatmul.mubr.f32.gmra.mxu0 %v3273
      %v3376 = vpop.f32.mrf.mxu0
      %v3377 = vadd.f32 %v3249, %v3376
      %v3378 = vpop.f32.mrf.mxu0
      %3379 = vdwg.mxu0
      %3380 = vxpose.xlu0.b32.start [1/16] %v3184, 128
      %3381 = vxpose.xlu0.b32.cont [2/16] 0.0, 128
      %3382 = vxpose.xlu0.b32.cont [3/16] 0.0, 128
      %3383 = vxpose.xlu0.b32.cont [4/16] 0.0, 128
      %3384 = vxpose.xlu0.b32.cont [5/16] 0.0, 128
      %3385 = vxpose.xlu0.b32.cont [6/16] 0.0, 128
      %3386 = vxpose.xlu0.b32.cont [7/16] 0.0, 128
      %3387 = vxpose.xlu0.b32.cont [8/16] 0.0, 128
      %3388 = vxpose.xlu0.b32.cont [9/16] 0.0, 128
      %3389 = vxpose.xlu0.b32.cont [10/16] 0.0, 128
      %3390 = vxpose.xlu0.b32.cont [11/16] 0.0, 128
      %3391 = vxpose.xlu0.b32.cont [12/16] 0.0, 128
      %3392 = vxpose.xlu0.b32.cont [13/16] 0.0, 128
      %3393 = vxpose.xlu0.b32.cont [14/16] 0.0, 128
      %3394 = vxpose.xlu0.b32.cont [15/16] 0.0, 128
      %3395 = vxpose.xlu0.b32.end [16/16] 0.0, 128
      %v3396 = vpop.trf.xlu0
      %v3397 = vpop.trf.xlu0
      %v3398 = vpop.trf.xlu0
      %v3399 = vpop.trf.xlu0
      %v3400 = vpop.trf.xlu0
      %v3401 = vpop.trf.xlu0
      %v3402 = vpop.trf.xlu0
      %v3403 = vpop.trf.xlu0
      %v3404 = vpop.trf.xlu0
      %v3405 = vpop.trf.xlu0
      %v3406 = vpop.trf.xlu0
      %v3407 = vpop.trf.xlu0
      %v3408 = vpop.trf.xlu0
      %v3409 = vpop.trf.xlu0
      %v3410 = vpop.trf.xlu0
      %v3411 = vpop.trf.xlu0
      %v3413 = vsel %vm906, %v3396, 0
      %v3416 = vsel %vm906, %v3397, 0
      %3418 = vmatprep.subr.mxu0 0.0
      %3419 = vmatpush1.msra.mxu0 0.0
      %3420 = vmatprep.subr.mxu0 0.0
      %3421 = vmatpush1.msra.mxu0 0.0
      %3422 = vmatprep.subr.mxu0 0.0
      %3423 = vmatpush1.msra.mxu0 0.0
      %3424 = vmatprep.subr.mxu0 0.0
      %3425 = vmatpush1.msra.mxu0 0.0
      %3426 = vmatprep.subr.mxu0 0.0
      %3427 = vmatpush1.msra.mxu0 0.0
      %3428 = vmatprep.subr.mxu0 0.0
      %3429 = vmatpush1.msra.mxu0 0.0
      %3430 = vmatprep.subr.mxu0 0.0
      %3431 = vmatpush1.msra.mxu0 0.0
      %3432 = vmatprep.subr.mxu0 0.0
      %3433 = vmatpush1.msra.mxu0 0.0
      %3434 = vmatprep.subr.mxu0 0.0
      %3435 = vmatpush1.msra.mxu0 0.0
      %3436 = vmatprep.subr.mxu0 0.0
      %3437 = vmatpush1.msra.mxu0 0.0
      %3438 = vmatprep.subr.mxu0 0.0
      %3439 = vmatpush1.msra.mxu0 0.0
      %3440 = vmatprep.subr.mxu0 0.0
      %3441 = vmatpush1.msra.mxu0 0.0
      %3442 = vmatprep.subr.mxu0 0.0
      %3443 = vmatpush1.msra.mxu0 0.0
      %3444 = vmatprep.subr.mxu0 0.0
      %3445 = vmatpush1.msra.mxu0 0.0
      %3446 = vmatprep.subr.mxu0 0.0
      %3447 = vmatpush1.msra.mxu0 0.0
      %3448 = vmatprep.subr.mxu0 0.0
      %3449 = vmatpush1.msra.mxu0 %v3342
      %3450 = vmatprep.subr.mxu0 0.0
      %3451 = vmatpush2.msra.mxu0 0.0
      %3452 = vmatprep.subr.mxu0 0.0
      %3453 = vmatpush2.msra.mxu0 0.0
      %3454 = vmatprep.subr.mxu0 0.0
      %3455 = vmatpush2.msra.mxu0 0.0
      %3456 = vmatprep.subr.mxu0 0.0
      %3457 = vmatpush2.msra.mxu0 0.0
      %3458 = vmatprep.subr.mxu0 0.0
      %3459 = vmatpush2.msra.mxu0 0.0
      %3460 = vmatprep.subr.mxu0 0.0
      %3461 = vmatpush2.msra.mxu0 0.0
      %3462 = vmatprep.subr.mxu0 0.0
      %3463 = vmatpush2.msra.mxu0 0.0
      %3464 = vmatprep.subr.mxu0 0.0
      %3465 = vmatpush2.msra.mxu0 0.0
      %3466 = vmatprep.subr.mxu0 0.0
      %3467 = vmatpush2.msra.mxu0 0.0
      %3468 = vmatprep.subr.mxu0 0.0
      %3469 = vmatpush2.msra.mxu0 0.0
      %3470 = vmatprep.subr.mxu0 0.0
      %3471 = vmatpush2.msra.mxu0 0.0
      %3472 = vmatprep.subr.mxu0 0.0
      %3473 = vmatpush2.msra.mxu0 0.0
      %3474 = vmatprep.subr.mxu0 0.0
      %3475 = vmatpush2.msra.mxu0 0.0
      %3476 = vmatprep.subr.mxu0 0.0
      %3477 = vmatpush2.msra.mxu0 0.0
      %3478 = vmatprep.subr.mxu0 0.0
      %3479 = vmatpush2.msra.mxu0 0.0
      %3480 = vmatprep.subr.mxu0 0.0
      %3481 = vmatpush2.msra.mxu0 0.0
      %3482 = vmatprep.mubr.f32.mxu0 0.0
      %3483 = vmatmul.mubr.f32.gmra.mxu0 %v3413
      %v3484 = vpop.f32.mrf.mxu0
      %v3485 = vadd.f32 0.0, %v3484
      %v3486 = vpop.f32.mrf.mxu0
      %3487 = vmatprep.mubr.f32.mxu0 0.0
      %3488 = vmatmul.mubr.f32.gmra.mxu0 %v3416
      %v3489 = vpop.f32.mrf.mxu0
      %v3490 = vadd.f32 0.0, %v3489
      %v3491 = vpop.f32.mrf.mxu0
      %3492 = vdwg.mxu0
      %v3493 = vmul.f32 %v3485, 0.35355338
      %v3494 = vmul.f32 %v3490, 0.35355338
      %v3495 = vsel %vm906, %v3493, -inf
      %3496 = vmax.xlane.f32.xlu0 %v3495
      %v3497 = vpop.xlane.xlu0 %3496
      %v3498 = vsel %vm906, %v3494, -inf
      %3499 = vmax.xlane.f32.xlu0 %v3498
      %v3500 = vpop.xlane.xlu0 %3499
      %v3501 = vsub.f32 %v3493, %v3497
      %v3502 = vsub.f32 %v3494, %v3500
      %v3503 = vmul.f32 %v3501, 1.442695
      %v3504 = vpow.pop %v3503
      %v3505 = vmul.f32 %v3502, 1.442695
      %v3506 = vpow.pop %v3505
      %v3507 = vsel %vm906, %v3504, 0.0
      %3508 = vadd.xlane.f32.xlu0 %v3507
      %v3509 = vpop.xlane.xlu0 %3508
      %v3510 = vsel %vm906, %v3506, 0.0
      %3511 = vadd.xlane.f32.xlu0 %v3510
      %v3512 = vpop.xlane.xlu0 %3511
      %v3513 = vrcp.pop %v3509
      %v3514 = vmul.f32 %v3504, %v3513
      %v3515 = vrcp.pop %v3512
      %v3516 = vmul.f32 %v3506, %v3515
      %v3518 = vsel %vm906, %v3362, 0
      %v3521 = vsel %vm906, %v3514, 0
      %v3524 = vsel %vm906, %v3516, 0
      %3526 = vmatprep.subr.mxu0 0.0
      %3527 = vmatpush1.xpose.msra.mxu0 0.0
      %3528 = vmatprep.subr.mxu0 0.0
      %3529 = vmatpush1.xpose.msra.mxu0 0.0
      %3530 = vmatprep.subr.mxu0 0.0
      %3531 = vmatpush1.xpose.msra.mxu0 0.0
      %3532 = vmatprep.subr.mxu0 0.0
      %3533 = vmatpush1.xpose.msra.mxu0 0.0
      %3534 = vmatprep.subr.mxu0 0.0
      %3535 = vmatpush1.xpose.msra.mxu0 0.0
      %3536 = vmatprep.subr.mxu0 0.0
      %3537 = vmatpush1.xpose.msra.mxu0 0.0
      %3538 = vmatprep.subr.mxu0 0.0
      %3539 = vmatpush1.xpose.msra.mxu0 0.0
      %3540 = vmatprep.subr.mxu0 0.0
      %3541 = vmatpush1.xpose.msra.mxu0 0.0
      %3542 = vmatprep.subr.mxu0 0.0
      %3543 = vmatpush1.xpose.msra.mxu0 0.0
      %3544 = vmatprep.subr.mxu0 0.0
      %3545 = vmatpush1.xpose.msra.mxu0 0.0
      %3546 = vmatprep.subr.mxu0 0.0
      %3547 = vmatpush1.xpose.msra.mxu0 0.0
      %3548 = vmatprep.subr.mxu0 0.0
      %3549 = vmatpush1.xpose.msra.mxu0 0.0
      %3550 = vmatprep.subr.mxu0 0.0
      %3551 = vmatpush1.xpose.msra.mxu0 0.0
      %3552 = vmatprep.subr.mxu0 0.0
      %3553 = vmatpush1.xpose.msra.mxu0 0.0
      %3554 = vmatprep.subr.mxu0 0.0
      %3555 = vmatpush1.xpose.msra.mxu0 %v3524
      %3556 = vmatprep.subr.mxu0 0.0
      %3557 = vmatpush1.xpose.msra.mxu0 %v3521
      %3558 = vmatprep.subr.mxu0 0.0
      %3559 = vmatpush2.xpose.msra.mxu0 0.0
      %3560 = vmatprep.subr.mxu0 0.0
      %3561 = vmatpush2.xpose.msra.mxu0 0.0
      %3562 = vmatprep.subr.mxu0 0.0
      %3563 = vmatpush2.xpose.msra.mxu0 0.0
      %3564 = vmatprep.subr.mxu0 0.0
      %3565 = vmatpush2.xpose.msra.mxu0 0.0
      %3566 = vmatprep.subr.mxu0 0.0
      %3567 = vmatpush2.xpose.msra.mxu0 0.0
      %3568 = vmatprep.subr.mxu0 0.0
      %3569 = vmatpush2.xpose.msra.mxu0 0.0
      %3570 = vmatprep.subr.mxu0 0.0
      %3571 = vmatpush2.xpose.msra.mxu0 0.0
      %3572 = vmatprep.subr.mxu0 0.0
      %3573 = vmatpush2.xpose.msra.mxu0 0.0
      %3574 = vmatprep.subr.mxu0 0.0
      %3575 = vmatpush2.xpose.msra.mxu0 0.0
      %3576 = vmatprep.subr.mxu0 0.0
      %3577 = vmatpush2.xpose.msra.mxu0 0.0
      %3578 = vmatprep.subr.mxu0 0.0
      %3579 = vmatpush2.xpose.msra.mxu0 0.0
      %3580 = vmatprep.subr.mxu0 0.0
      %3581 = vmatpush2.xpose.msra.mxu0 0.0
      %3582 = vmatprep.subr.mxu0 0.0
      %3583 = vmatpush2.xpose.msra.mxu0 0.0
      %3584 = vmatprep.subr.mxu0 0.0
      %3585 = vmatpush2.xpose.msra.mxu0 0.0
      %3586 = vmatprep.subr.mxu0 0.0
      %3587 = vmatpush2.xpose.msra.mxu0 0.0
      %3588 = vmatprep.subr.mxu0 0.0
      %3589 = vmatpush2.xpose.msra.mxu0 0.0
      %3590 = vmatprep.mubr.f32.mxu0 0.0
      %3591 = vmatmul.mubr.f32.gmra.mxu0 %v3518
      %v3592 = vpop.f32.mrf.mxu0
      %v3593 = vadd.f32 0.0, %v3592
      %v3594 = vpop.f32.mrf.mxu0
      %3595 = vdwg.mxu0
      %3596 = vst.msk [vmem:[#allocation2] sm:$0xff] %vm1091, %v3593
      %3597 = vxpose.xlu0.b32.start [1/16] %v3189, 128
      %3598 = vxpose.xlu0.b32.cont [2/16] 0.0, 128
      %3599 = vxpose.xlu0.b32.cont [3/16] 0.0, 128
      %3600 = vxpose.xlu0.b32.cont [4/16] 0.0, 128
      %3601 = vxpose.xlu0.b32.cont [5/16] 0.0, 128
      %3602 = vxpose.xlu0.b32.cont [6/16] 0.0, 128
      %3603 = vxpose.xlu0.b32.cont [7/16] 0.0, 128
      %3604 = vxpose.xlu0.b32.cont [8/16] 0.0, 128
      %3605 = vxpose.xlu0.b32.cont [9/16] 0.0, 128
      %3606 = vxpose.xlu0.b32.cont [10/16] 0.0, 128
      %3607 = vxpose.xlu0.b32.cont [11/16] 0.0, 128
      %3608 = vxpose.xlu0.b32.cont [12/16] 0.0, 128
      %3609 = vxpose.xlu0.b32.cont [13/16] 0.0, 128
      %3610 = vxpose.xlu0.b32.cont [14/16] 0.0, 128
      %3611 = vxpose.xlu0.b32.cont [15/16] 0.0, 128
      %3612 = vxpose.xlu0.b32.end [16/16] 0.0, 128
      %v3613 = vpop.trf.xlu0
      %v3614 = vpop.trf.xlu0
      %v3615 = vpop.trf.xlu0
      %v3616 = vpop.trf.xlu0
      %v3617 = vpop.trf.xlu0
      %v3618 = vpop.trf.xlu0
      %v3619 = vpop.trf.xlu0
      %v3620 = vpop.trf.xlu0
      %v3621 = vpop.trf.xlu0
      %v3622 = vpop.trf.xlu0
      %v3623 = vpop.trf.xlu0
      %v3624 = vpop.trf.xlu0
      %v3625 = vpop.trf.xlu0
      %v3626 = vpop.trf.xlu0
      %v3627 = vpop.trf.xlu0
      %v3628 = vpop.trf.xlu0
      %v3630 = vsel %vm906, %v3613, 0
      %v3633 = vsel %vm906, %v3614, 0
      %3635 = vmatprep.subr.mxu0 0.0
      %3636 = vmatpush1.msra.mxu0 0.0
      %3637 = vmatprep.subr.mxu0 0.0
      %3638 = vmatpush1.msra.mxu0 0.0
      %3639 = vmatprep.subr.mxu0 0.0
      %3640 = vmatpush1.msra.mxu0 0.0
      %3641 = vmatprep.subr.mxu0 0.0
      %3642 = vmatpush1.msra.mxu0 0.0
      %3643 = vmatprep.subr.mxu0 0.0
      %3644 = vmatpush1.msra.mxu0 0.0
      %3645 = vmatprep.subr.mxu0 0.0
      %3646 = vmatpush1.msra.mxu0 0.0
      %3647 = vmatprep.subr.mxu0 0.0
      %3648 = vmatpush1.msra.mxu0 0.0
      %3649 = vmatprep.subr.mxu0 0.0
      %3650 = vmatpush1.msra.mxu0 0.0
      %3651 = vmatprep.subr.mxu0 0.0
      %3652 = vmatpush1.msra.mxu0 0.0
      %3653 = vmatprep.subr.mxu0 0.0
      %3654 = vmatpush1.msra.mxu0 0.0
      %3655 = vmatprep.subr.mxu0 0.0
      %3656 = vmatpush1.msra.mxu0 0.0
      %3657 = vmatprep.subr.mxu0 0.0
      %3658 = vmatpush1.msra.mxu0 0.0
      %3659 = vmatprep.subr.mxu0 0.0
      %3660 = vmatpush1.msra.mxu0 0.0
      %3661 = vmatprep.subr.mxu0 0.0
      %3662 = vmatpush1.msra.mxu0 0.0
      %3663 = vmatprep.subr.mxu0 0.0
      %3664 = vmatpush1.msra.mxu0 0.0
      %3665 = vmatprep.subr.mxu0 0.0
      %3666 = vmatpush1.msra.mxu0 %v3347
      %3667 = vmatprep.subr.mxu0 0.0
      %3668 = vmatpush2.msra.mxu0 0.0
      %3669 = vmatprep.subr.mxu0 0.0
      %3670 = vmatpush2.msra.mxu0 0.0
      %3671 = vmatprep.subr.mxu0 0.0
      %3672 = vmatpush2.msra.mxu0 0.0
      %3673 = vmatprep.subr.mxu0 0.0
      %3674 = vmatpush2.msra.mxu0 0.0
      %3675 = vmatprep.subr.mxu0 0.0
      %3676 = vmatpush2.msra.mxu0 0.0
      %3677 = vmatprep.subr.mxu0 0.0
      %3678 = vmatpush2.msra.mxu0 0.0
      %3679 = vmatprep.subr.mxu0 0.0
      %3680 = vmatpush2.msra.mxu0 0.0
      %3681 = vmatprep.subr.mxu0 0.0
      %3682 = vmatpush2.msra.mxu0 0.0
      %3683 = vmatprep.subr.mxu0 0.0
      %3684 = vmatpush2.msra.mxu0 0.0
      %3685 = vmatprep.subr.mxu0 0.0
      %3686 = vmatpush2.msra.mxu0 0.0
      %3687 = vmatprep.subr.mxu0 0.0
      %3688 = vmatpush2.msra.mxu0 0.0
      %3689 = vmatprep.subr.mxu0 0.0
      %3690 = vmatpush2.msra.mxu0 0.0
      %3691 = vmatprep.subr.mxu0 0.0
      %3692 = vmatpush2.msra.mxu0 0.0
      %3693 = vmatprep.subr.mxu0 0.0
      %3694 = vmatpush2.msra.mxu0 0.0
      %3695 = vmatprep.subr.mxu0 0.0
      %3696 = vmatpush2.msra.mxu0 0.0
      %3697 = vmatprep.subr.mxu0 0.0
      %3698 = vmatpush2.msra.mxu0 0.0
      %3699 = vmatprep.mubr.f32.mxu0 0.0
      %3700 = vmatmul.mubr.f32.gmra.mxu0 %v3630
      %v3701 = vpop.f32.mrf.mxu0
      %v3702 = vadd.f32 0.0, %v3701
      %v3703 = vpop.f32.mrf.mxu0
      %3704 = vmatprep.mubr.f32.mxu0 0.0
      %3705 = vmatmul.mubr.f32.gmra.mxu0 %v3633
      %v3706 = vpop.f32.mrf.mxu0
      %v3707 = vadd.f32 0.0, %v3706
      %v3708 = vpop.f32.mrf.mxu0
      %3709 = vdwg.mxu0
      %v3710 = vmul.f32 %v3702, 0.35355338
      %v3711 = vmul.f32 %v3707, 0.35355338
      %v3712 = vsel %vm906, %v3710, -inf
      %3713 = vmax.xlane.f32.xlu0 %v3712
      %v3714 = vpop.xlane.xlu0 %3713
      %v3715 = vsel %vm906, %v3711, -inf
      %3716 = vmax.xlane.f32.xlu0 %v3715
      %v3717 = vpop.xlane.xlu0 %3716
      %v3718 = vsub.f32 %v3710, %v3714
      %v3719 = vsub.f32 %v3711, %v3717
      %v3720 = vmul.f32 %v3718, 1.442695
      %v3721 = vpow.pop %v3720
      %v3722 = vmul.f32 %v3719, 1.442695
      %v3723 = vpow.pop %v3722
      %v3724 = vsel %vm906, %v3721, 0.0
      %3725 = vadd.xlane.f32.xlu0 %v3724
      %v3726 = vpop.xlane.xlu0 %3725
      %v3727 = vsel %vm906, %v3723, 0.0
      %3728 = vadd.xlane.f32.xlu0 %v3727
      %v3729 = vpop.xlane.xlu0 %3728
      %v3730 = vrcp.pop %v3726
      %v3731 = vmul.f32 %v3721, %v3730
      %v3732 = vrcp.pop %v3729
      %v3733 = vmul.f32 %v3723, %v3732
      %v3735 = vsel %vm906, %v3367, 0
      %v3738 = vsel %vm906, %v3731, 0
      %v3741 = vsel %vm906, %v3733, 0
      %3743 = vmatprep.subr.mxu0 0.0
      %3744 = vmatpush1.xpose.msra.mxu0 0.0
      %3745 = vmatprep.subr.mxu0 0.0
      %3746 = vmatpush1.xpose.msra.mxu0 0.0
      %3747 = vmatprep.subr.mxu0 0.0
      %3748 = vmatpush1.xpose.msra.mxu0 0.0
      %3749 = vmatprep.subr.mxu0 0.0
      %3750 = vmatpush1.xpose.msra.mxu0 0.0
      %3751 = vmatprep.subr.mxu0 0.0
      %3752 = vmatpush1.xpose.msra.mxu0 0.0
      %3753 = vmatprep.subr.mxu0 0.0
      %3754 = vmatpush1.xpose.msra.mxu0 0.0
      %3755 = vmatprep.subr.mxu0 0.0
      %3756 = vmatpush1.xpose.msra.mxu0 0.0
      %3757 = vmatprep.subr.mxu0 0.0
      %3758 = vmatpush1.xpose.msra.mxu0 0.0
      %3759 = vmatprep.subr.mxu0 0.0
      %3760 = vmatpush1.xpose.msra.mxu0 0.0
      %3761 = vmatprep.subr.mxu0 0.0
      %3762 = vmatpush1.xpose.msra.mxu0 0.0
      %3763 = vmatprep.subr.mxu0 0.0
      %3764 = vmatpush1.xpose.msra.mxu0 0.0
      %3765 = vmatprep.subr.mxu0 0.0
      %3766 = vmatpush1.xpose.msra.mxu0 0.0
      %3767 = vmatprep.subr.mxu0 0.0
      %3768 = vmatpush1.xpose.msra.mxu0 0.0
      %3769 = vmatprep.subr.mxu0 0.0
      %3770 = vmatpush1.xpose.msra.mxu0 0.0
      %3771 = vmatprep.subr.mxu0 0.0
      %3772 = vmatpush1.xpose.msra.mxu0 %v3741
      %3773 = vmatprep.subr.mxu0 0.0
      %3774 = vmatpush1.xpose.msra.mxu0 %v3738
      %3775 = vmatprep.subr.mxu0 0.0
      %3776 = vmatpush2.xpose.msra.mxu0 0.0
      %3777 = vmatprep.subr.mxu0 0.0
      %3778 = vmatpush2.xpose.msra.mxu0 0.0
      %3779 = vmatprep.subr.mxu0 0.0
      %3780 = vmatpush2.xpose.msra.mxu0 0.0
      %3781 = vmatprep.subr.mxu0 0.0
      %3782 = vmatpush2.xpose.msra.mxu0 0.0
      %3783 = vmatprep.subr.mxu0 0.0
      %3784 = vmatpush2.xpose.msra.mxu0 0.0
      %3785 = vmatprep.subr.mxu0 0.0
      %3786 = vmatpush2.xpose.msra.mxu0 0.0
      %3787 = vmatprep.subr.mxu0 0.0
      %3788 = vmatpush2.xpose.msra.mxu0 0.0
      %3789 = vmatprep.subr.mxu0 0.0
      %3790 = vmatpush2.xpose.msra.mxu0 0.0
      %3791 = vmatprep.subr.mxu0 0.0
      %3792 = vmatpush2.xpose.msra.mxu0 0.0
      %3793 = vmatprep.subr.mxu0 0.0
      %3794 = vmatpush2.xpose.msra.mxu0 0.0
      %3795 = vmatprep.subr.mxu0 0.0
      %3796 = vmatpush2.xpose.msra.mxu0 0.0
      %3797 = vmatprep.subr.mxu0 0.0
      %3798 = vmatpush2.xpose.msra.mxu0 0.0
      %3799 = vmatprep.subr.mxu0 0.0
      %3800 = vmatpush2.xpose.msra.mxu0 0.0
      %3801 = vmatprep.subr.mxu0 0.0
      %3802 = vmatpush2.xpose.msra.mxu0 0.0
      %3803 = vmatprep.subr.mxu0 0.0
      %3804 = vmatpush2.xpose.msra.mxu0 0.0
      %3805 = vmatprep.subr.mxu0 0.0
      %3806 = vmatpush2.xpose.msra.mxu0 0.0
      %3807 = vmatprep.mubr.f32.mxu0 0.0
      %3808 = vmatmul.mubr.f32.gmra.mxu0 %v3735
      %v3809 = vpop.f32.mrf.mxu0
      %v3810 = vadd.f32 0.0, %v3809
      %v3811 = vpop.f32.mrf.mxu0
      %3812 = vdwg.mxu0
      %3813 = vst.msk [vmem:[#allocation2 + $0x8] sm:$0xff] %vm1091, %v3810
      %3814 = vxpose.xlu0.b32.start [1/16] %v3194, 128
      %3815 = vxpose.xlu0.b32.cont [2/16] 0.0, 128
      %3816 = vxpose.xlu0.b32.cont [3/16] 0.0, 128
      %3817 = vxpose.xlu0.b32.cont [4/16] 0.0, 128
      %3818 = vxpose.xlu0.b32.cont [5/16] 0.0, 128
      %3819 = vxpose.xlu0.b32.cont [6/16] 0.0, 128
      %3820 = vxpose.xlu0.b32.cont [7/16] 0.0, 128
      %3821 = vxpose.xlu0.b32.cont [8/16] 0.0, 128
      %3822 = vxpose.xlu0.b32.cont [9/16] 0.0, 128
      %3823 = vxpose.xlu0.b32.cont [10/16] 0.0, 128
      %3824 = vxpose.xlu0.b32.cont [11/16] 0.0, 128
      %3825 = vxpose.xlu0.b32.cont [12/16] 0.0, 128
      %3826 = vxpose.xlu0.b32.cont [13/16] 0.0, 128
      %3827 = vxpose.xlu0.b32.cont [14/16] 0.0, 128
      %3828 = vxpose.xlu0.b32.cont [15/16] 0.0, 128
      %3829 = vxpose.xlu0.b32.end [16/16] 0.0, 128
      %v3830 = vpop.trf.xlu0
      %v3831 = vpop.trf.xlu0
      %v3832 = vpop.trf.xlu0
      %v3833 = vpop.trf.xlu0
      %v3834 = vpop.trf.xlu0
      %v3835 = vpop.trf.xlu0
      %v3836 = vpop.trf.xlu0
      %v3837 = vpop.trf.xlu0
      %v3838 = vpop.trf.xlu0
      %v3839 = vpop.trf.xlu0
      %v3840 = vpop.trf.xlu0
      %v3841 = vpop.trf.xlu0
      %v3842 = vpop.trf.xlu0
      %v3843 = vpop.trf.xlu0
      %v3844 = vpop.trf.xlu0
      %v3845 = vpop.trf.xlu0
      %v3847 = vsel %vm906, %v3830, 0
      %v3850 = vsel %vm906, %v3831, 0
      %3852 = vmatprep.subr.mxu0 0.0
      %3853 = vmatpush1.msra.mxu0 0.0
      %3854 = vmatprep.subr.mxu0 0.0
      %3855 = vmatpush1.msra.mxu0 0.0
      %3856 = vmatprep.subr.mxu0 0.0
      %3857 = vmatpush1.msra.mxu0 0.0
      %3858 = vmatprep.subr.mxu0 0.0
      %3859 = vmatpush1.msra.mxu0 0.0
      %3860 = vmatprep.subr.mxu0 0.0
      %3861 = vmatpush1.msra.mxu0 0.0
      %3862 = vmatprep.subr.mxu0 0.0
      %3863 = vmatpush1.msra.mxu0 0.0
      %3864 = vmatprep.subr.mxu0 0.0
      %3865 = vmatpush1.msra.mxu0 0.0
      %3866 = vmatprep.subr.mxu0 0.0
      %3867 = vmatpush1.msra.mxu0 0.0
      %3868 = vmatprep.subr.mxu0 0.0
      %3869 = vmatpush1.msra.mxu0 0.0
      %3870 = vmatprep.subr.mxu0 0.0
      %3871 = vmatpush1.msra.mxu0 0.0
      %3872 = vmatprep.subr.mxu0 0.0
      %3873 = vmatpush1.msra.mxu0 0.0
      %3874 = vmatprep.subr.mxu0 0.0
      %3875 = vmatpush1.msra.mxu0 0.0
      %3876 = vmatprep.subr.mxu0 0.0
      %3877 = vmatpush1.msra.mxu0 0.0
      %3878 = vmatprep.subr.mxu0 0.0
      %3879 = vmatpush1.msra.mxu0 0.0
      %3880 = vmatprep.subr.mxu0 0.0
      %3881 = vmatpush1.msra.mxu0 0.0
      %3882 = vmatprep.subr.mxu0 0.0
      %3883 = vmatpush1.msra.mxu0 %v3352
      %3884 = vmatprep.subr.mxu0 0.0
      %3885 = vmatpush2.msra.mxu0 0.0
      %3886 = vmatprep.subr.mxu0 0.0
      %3887 = vmatpush2.msra.mxu0 0.0
      %3888 = vmatprep.subr.mxu0 0.0
      %3889 = vmatpush2.msra.mxu0 0.0
      %3890 = vmatprep.subr.mxu0 0.0
      %3891 = vmatpush2.msra.mxu0 0.0
      %3892 = vmatprep.subr.mxu0 0.0
      %3893 = vmatpush2.msra.mxu0 0.0
      %3894 = vmatprep.subr.mxu0 0.0
      %3895 = vmatpush2.msra.mxu0 0.0
      %3896 = vmatprep.subr.mxu0 0.0
      %3897 = vmatpush2.msra.mxu0 0.0
      %3898 = vmatprep.subr.mxu0 0.0
      %3899 = vmatpush2.msra.mxu0 0.0
      %3900 = vmatprep.subr.mxu0 0.0
      %3901 = vmatpush2.msra.mxu0 0.0
      %3902 = vmatprep.subr.mxu0 0.0
      %3903 = vmatpush2.msra.mxu0 0.0
      %3904 = vmatprep.subr.mxu0 0.0
      %3905 = vmatpush2.msra.mxu0 0.0
      %3906 = vmatprep.subr.mxu0 0.0
      %3907 = vmatpush2.msra.mxu0 0.0
      %3908 = vmatprep.subr.mxu0 0.0
      %3909 = vmatpush2.msra.mxu0 0.0
      %3910 = vmatprep.subr.mxu0 0.0
      %3911 = vmatpush2.msra.mxu0 0.0
      %3912 = vmatprep.subr.mxu0 0.0
      %3913 = vmatpush2.msra.mxu0 0.0
      %3914 = vmatprep.subr.mxu0 0.0
      %3915 = vmatpush2.msra.mxu0 0.0
      %3916 = vmatprep.mubr.f32.mxu0 0.0
      %3917 = vmatmul.mubr.f32.gmra.mxu0 %v3847
      %v3918 = vpop.f32.mrf.mxu0
      %v3919 = vadd.f32 0.0, %v3918
      %v3920 = vpop.f32.mrf.mxu0
      %3921 = vmatprep.mubr.f32.mxu0 0.0
      %3922 = vmatmul.mubr.f32.gmra.mxu0 %v3850
      %v3923 = vpop.f32.mrf.mxu0
      %v3924 = vadd.f32 0.0, %v3923
      %v3925 = vpop.f32.mrf.mxu0
      %3926 = vdwg.mxu0
      %v3927 = vmul.f32 %v3919, 0.35355338
      %v3928 = vmul.f32 %v3924, 0.35355338
      %v3929 = vsel %vm906, %v3927, -inf
      %3930 = vmax.xlane.f32.xlu0 %v3929
      %v3931 = vpop.xlane.xlu0 %3930
      %v3932 = vsel %vm906, %v3928, -inf
      %3933 = vmax.xlane.f32.xlu0 %v3932
      %v3934 = vpop.xlane.xlu0 %3933
      %v3935 = vsub.f32 %v3927, %v3931
      %v3936 = vsub.f32 %v3928, %v3934
      %v3937 = vmul.f32 %v3935, 1.442695
      %v3938 = vpow.pop %v3937
      %v3939 = vmul.f32 %v3936, 1.442695
      %v3940 = vpow.pop %v3939
      %v3941 = vsel %vm906, %v3938, 0.0
      %3942 = vadd.xlane.f32.xlu0 %v3941
      %v3943 = vpop.xlane.xlu0 %3942
      %v3944 = vsel %vm906, %v3940, 0.0
      %3945 = vadd.xlane.f32.xlu0 %v3944
      %v3946 = vpop.xlane.xlu0 %3945
      %v3947 = vrcp.pop %v3943
      %v3948 = vmul.f32 %v3938, %v3947
      %v3949 = vrcp.pop %v3946
      %v3950 = vmul.f32 %v3940, %v3949
      %v3952 = vsel %vm906, %v3372, 0
      %v3955 = vsel %vm906, %v3948, 0
      %v3958 = vsel %vm906, %v3950, 0
      %3960 = vmatprep.subr.mxu0 0.0
      %3961 = vmatpush1.xpose.msra.mxu0 0.0
      %3962 = vmatprep.subr.mxu0 0.0
      %3963 = vmatpush1.xpose.msra.mxu0 0.0
      %3964 = vmatprep.subr.mxu0 0.0
      %3965 = vmatpush1.xpose.msra.mxu0 0.0
      %3966 = vmatprep.subr.mxu0 0.0
      %3967 = vmatpush1.xpose.msra.mxu0 0.0
      %3968 = vmatprep.subr.mxu0 0.0
      %3969 = vmatpush1.xpose.msra.mxu0 0.0
      %3970 = vmatprep.subr.mxu0 0.0
      %3971 = vmatpush1.xpose.msra.mxu0 0.0
      %3972 = vmatprep.subr.mxu0 0.0
      %3973 = vmatpush1.xpose.msra.mxu0 0.0
      %3974 = vmatprep.subr.mxu0 0.0
      %3975 = vmatpush1.xpose.msra.mxu0 0.0
      %3976 = vmatprep.subr.mxu0 0.0
      %3977 = vmatpush1.xpose.msra.mxu0 0.0
      %3978 = vmatprep.subr.mxu0 0.0
      %3979 = vmatpush1.xpose.msra.mxu0 0.0
      %3980 = vmatprep.subr.mxu0 0.0
      %3981 = vmatpush1.xpose.msra.mxu0 0.0
      %3982 = vmatprep.subr.mxu0 0.0
      %3983 = vmatpush1.xpose.msra.mxu0 0.0
      %3984 = vmatprep.subr.mxu0 0.0
      %3985 = vmatpush1.xpose.msra.mxu0 0.0
      %3986 = vmatprep.subr.mxu0 0.0
      %3987 = vmatpush1.xpose.msra.mxu0 0.0
      %3988 = vmatprep.subr.mxu0 0.0
      %3989 = vmatpush1.xpose.msra.mxu0 %v3958
      %3990 = vmatprep.subr.mxu0 0.0
      %3991 = vmatpush1.xpose.msra.mxu0 %v3955
      %3992 = vmatprep.subr.mxu0 0.0
      %3993 = vmatpush2.xpose.msra.mxu0 0.0
      %3994 = vmatprep.subr.mxu0 0.0
      %3995 = vmatpush2.xpose.msra.mxu0 0.0
      %3996 = vmatprep.subr.mxu0 0.0
      %3997 = vmatpush2.xpose.msra.mxu0 0.0
      %3998 = vmatprep.subr.mxu0 0.0
      %3999 = vmatpush2.xpose.msra.mxu0 0.0
      %4000 = vmatprep.subr.mxu0 0.0
      %4001 = vmatpush2.xpose.msra.mxu0 0.0
      %4002 = vmatprep.subr.mxu0 0.0
      %4003 = vmatpush2.xpose.msra.mxu0 0.0
      %4004 = vmatprep.subr.mxu0 0.0
      %4005 = vmatpush2.xpose.msra.mxu0 0.0
      %4006 = vmatprep.subr.mxu0 0.0
      %4007 = vmatpush2.xpose.msra.mxu0 0.0
      %4008 = vmatprep.subr.mxu0 0.0
      %4009 = vmatpush2.xpose.msra.mxu0 0.0
      %4010 = vmatprep.subr.mxu0 0.0
      %4011 = vmatpush2.xpose.msra.mxu0 0.0
      %4012 = vmatprep.subr.mxu0 0.0
      %4013 = vmatpush2.xpose.msra.mxu0 0.0
      %4014 = vmatprep.subr.mxu0 0.0
      %4015 = vmatpush2.xpose.msra.mxu0 0.0
      %4016 = vmatprep.subr.mxu0 0.0
      %4017 = vmatpush2.xpose.msra.mxu0 0.0
      %4018 = vmatprep.subr.mxu0 0.0
      %4019 = vmatpush2.xpose.msra.mxu0 0.0
      %4020 = vmatprep.subr.mxu0 0.0
      %4021 = vmatpush2.xpose.msra.mxu0 0.0
      %4022 = vmatprep.subr.mxu0 0.0
      %4023 = vmatpush2.xpose.msra.mxu0 0.0
      %4024 = vmatprep.mubr.f32.mxu0 0.0
      %4025 = vmatmul.mubr.f32.gmra.mxu0 %v3952
      %v4026 = vpop.f32.mrf.mxu0
      %v4027 = vadd.f32 0.0, %v4026
      %v4028 = vpop.f32.mrf.mxu0
      %4029 = vdwg.mxu0
      %4030 = vst.msk [vmem:[#allocation2 + $0x10] sm:$0xff] %vm1091, %v4027
      %4031 = vxpose.xlu0.b32.start [1/16] %v3199, 128
      %4032 = vxpose.xlu0.b32.cont [2/16] 0.0, 128
      %4033 = vxpose.xlu0.b32.cont [3/16] 0.0, 128
      %4034 = vxpose.xlu0.b32.cont [4/16] 0.0, 128
      %4035 = vxpose.xlu0.b32.cont [5/16] 0.0, 128
      %4036 = vxpose.xlu0.b32.cont [6/16] 0.0, 128
      %4037 = vxpose.xlu0.b32.cont [7/16] 0.0, 128
      %4038 = vxpose.xlu0.b32.cont [8/16] 0.0, 128
      %4039 = vxpose.xlu0.b32.cont [9/16] 0.0, 128
      %4040 = vxpose.xlu0.b32.cont [10/16] 0.0, 128
      %4041 = vxpose.xlu0.b32.cont [11/16] 0.0, 128
      %4042 = vxpose.xlu0.b32.cont [12/16] 0.0, 128
      %4043 = vxpose.xlu0.b32.cont [13/16] 0.0, 128
      %4044 = vxpose.xlu0.b32.cont [14/16] 0.0, 128
      %4045 = vxpose.xlu0.b32.cont [15/16] 0.0, 128
      %4046 = vxpose.xlu0.b32.end [16/16] 0.0, 128
      %v4047 = vpop.trf.xlu0
      %v4048 = vpop.trf.xlu0
      %v4049 = vpop.trf.xlu0
      %v4050 = vpop.trf.xlu0
      %v4051 = vpop.trf.xlu0
      %v4052 = vpop.trf.xlu0
      %v4053 = vpop.trf.xlu0
      %v4054 = vpop.trf.xlu0
      %v4055 = vpop.trf.xlu0
      %v4056 = vpop.trf.xlu0
      %v4057 = vpop.trf.xlu0
      %v4058 = vpop.trf.xlu0
      %v4059 = vpop.trf.xlu0
      %v4060 = vpop.trf.xlu0
      %v4061 = vpop.trf.xlu0
      %v4062 = vpop.trf.xlu0
      %v4064 = vsel %vm906, %v4047, 0
      %v4067 = vsel %vm906, %v4048, 0
      %4069 = vmatprep.subr.mxu0 0.0
      %4070 = vmatpush1.msra.mxu0 0.0
      %4071 = vmatprep.subr.mxu0 0.0
      %4072 = vmatpush1.msra.mxu0 0.0
      %4073 = vmatprep.subr.mxu0 0.0
      %4074 = vmatpush1.msra.mxu0 0.0
      %4075 = vmatprep.subr.mxu0 0.0
      %4076 = vmatpush1.msra.mxu0 0.0
      %4077 = vmatprep.subr.mxu0 0.0
      %4078 = vmatpush1.msra.mxu0 0.0
      %4079 = vmatprep.subr.mxu0 0.0
      %4080 = vmatpush1.msra.mxu0 0.0
      %4081 = vmatprep.subr.mxu0 0.0
      %4082 = vmatpush1.msra.mxu0 0.0
      %4083 = vmatprep.subr.mxu0 0.0
      %4084 = vmatpush1.msra.mxu0 0.0
      %4085 = vmatprep.subr.mxu0 0.0
      %4086 = vmatpush1.msra.mxu0 0.0
      %4087 = vmatprep.subr.mxu0 0.0
      %4088 = vmatpush1.msra.mxu0 0.0
      %4089 = vmatprep.subr.mxu0 0.0
      %4090 = vmatpush1.msra.mxu0 0.0
      %4091 = vmatprep.subr.mxu0 0.0
      %4092 = vmatpush1.msra.mxu0 0.0
      %4093 = vmatprep.subr.mxu0 0.0
      %4094 = vmatpush1.msra.mxu0 0.0
      %4095 = vmatprep.subr.mxu0 0.0
      %4096 = vmatpush1.msra.mxu0 0.0
      %4097 = vmatprep.subr.mxu0 0.0
      %4098 = vmatpush1.msra.mxu0 0.0
      %4099 = vmatprep.subr.mxu0 0.0
      %4100 = vmatpush1.msra.mxu0 %v3357
      %4101 = vmatprep.subr.mxu0 0.0
      %4102 = vmatpush2.msra.mxu0 0.0
      %4103 = vmatprep.subr.mxu0 0.0
      %4104 = vmatpush2.msra.mxu0 0.0
      %4105 = vmatprep.subr.mxu0 0.0
      %4106 = vmatpush2.msra.mxu0 0.0
      %4107 = vmatprep.subr.mxu0 0.0
      %4108 = vmatpush2.msra.mxu0 0.0
      %4109 = vmatprep.subr.mxu0 0.0
      %4110 = vmatpush2.msra.mxu0 0.0
      %4111 = vmatprep.subr.mxu0 0.0
      %4112 = vmatpush2.msra.mxu0 0.0
      %4113 = vmatprep.subr.mxu0 0.0
      %4114 = vmatpush2.msra.mxu0 0.0
      %4115 = vmatprep.subr.mxu0 0.0
      %4116 = vmatpush2.msra.mxu0 0.0
      %4117 = vmatprep.subr.mxu0 0.0
      %4118 = vmatpush2.msra.mxu0 0.0
      %4119 = vmatprep.subr.mxu0 0.0
      %4120 = vmatpush2.msra.mxu0 0.0
      %4121 = vmatprep.subr.mxu0 0.0
      %4122 = vmatpush2.msra.mxu0 0.0
      %4123 = vmatprep.subr.mxu0 0.0
      %4124 = vmatpush2.msra.mxu0 0.0
      %4125 = vmatprep.subr.mxu0 0.0
      %4126 = vmatpush2.msra.mxu0 0.0
      %4127 = vmatprep.subr.mxu0 0.0
      %4128 = vmatpush2.msra.mxu0 0.0
      %4129 = vmatprep.subr.mxu0 0.0
      %4130 = vmatpush2.msra.mxu0 0.0
      %4131 = vmatprep.subr.mxu0 0.0
      %4132 = vmatpush2.msra.mxu0 0.0
      %4133 = vmatprep.mubr.f32.mxu0 0.0
      %4134 = vmatmul.mubr.f32.gmra.mxu0 %v4064
      %v4135 = vpop.f32.mrf.mxu0
      %v4136 = vadd.f32 0.0, %v4135
      %v4137 = vpop.f32.mrf.mxu0
      %4138 = vmatprep.mubr.f32.mxu0 0.0
      %4139 = vmatmul.mubr.f32.gmra.mxu0 %v4067
      %v4140 = vpop.f32.mrf.mxu0
      %v4141 = vadd.f32 0.0, %v4140
      %v4142 = vpop.f32.mrf.mxu0
      %4143 = vdwg.mxu0
      %v4144 = vmul.f32 %v4136, 0.35355338
      %v4145 = vmul.f32 %v4141, 0.35355338
      %v4146 = vsel %vm906, %v4144, -inf
      %4147 = vmax.xlane.f32.xlu0 %v4146
      %v4148 = vpop.xlane.xlu0 %4147
      %v4149 = vsel %vm906, %v4145, -inf
      %4150 = vmax.xlane.f32.xlu0 %v4149
      %v4151 = vpop.xlane.xlu0 %4150
      %v4152 = vsub.f32 %v4144, %v4148
      %v4153 = vsub.f32 %v4145, %v4151
      %v4154 = vmul.f32 %v4152, 1.442695
      %v4155 = vpow.pop %v4154
      %v4156 = vmul.f32 %v4153, 1.442695
      %v4157 = vpow.pop %v4156
      %v4158 = vsel %vm906, %v4155, 0.0
      %4159 = vadd.xlane.f32.xlu0 %v4158
      %v4160 = vpop.xlane.xlu0 %4159
      %v4161 = vsel %vm906, %v4157, 0.0
      %4162 = vadd.xlane.f32.xlu0 %v4161
      %v4163 = vpop.xlane.xlu0 %4162
      %v4164 = vrcp.pop %v4160
      %v4165 = vmul.f32 %v4155, %v4164
      %v4166 = vrcp.pop %v4163
      %v4167 = vmul.f32 %v4157, %v4166
      %v4169 = vsel %vm906, %v3377, 0
      %v4172 = vsel %vm906, %v4165, 0
      %v4175 = vsel %vm906, %v4167, 0
      %4177 = vmatprep.subr.mxu0 0.0
      %4178 = vmatpush1.xpose.msra.mxu0 0.0
      %4179 = vmatprep.subr.mxu0 0.0
      %4180 = vmatpush1.xpose.msra.mxu0 0.0
      %4181 = vmatprep.subr.mxu0 0.0
      %4182 = vmatpush1.xpose.msra.mxu0 0.0
      %4183 = vmatprep.subr.mxu0 0.0
      %4184 = vmatpush1.xpose.msra.mxu0 0.0
      %4185 = vmatprep.subr.mxu0 0.0
      %4186 = vmatpush1.xpose.msra.mxu0 0.0
      %4187 = vmatprep.subr.mxu0 0.0
      %4188 = vmatpush1.xpose.msra.mxu0 0.0
      %4189 = vmatprep.subr.mxu0 0.0
      %4190 = vmatpush1.xpose.msra.mxu0 0.0
      %4191 = vmatprep.subr.mxu0 0.0
      %4192 = vmatpush1.xpose.msra.mxu0 0.0
      %4193 = vmatprep.subr.mxu0 0.0
      %4194 = vmatpush1.xpose.msra.mxu0 0.0
      %4195 = vmatprep.subr.mxu0 0.0
      %4196 = vmatpush1.xpose.msra.mxu0 0.0
      %4197 = vmatprep.subr.mxu0 0.0
      %4198 = vmatpush1.xpose.msra.mxu0 0.0
      %4199 = vmatprep.subr.mxu0 0.0
      %4200 = vmatpush1.xpose.msra.mxu0 0.0
      %4201 = vmatprep.subr.mxu0 0.0
      %4202 = vmatpush1.xpose.msra.mxu0 0.0
      %4203 = vmatprep.subr.mxu0 0.0
      %4204 = vmatpush1.xpose.msra.mxu0 0.0
      %4205 = vmatprep.subr.mxu0 0.0
      %4206 = vmatpush1.xpose.msra.mxu0 %v4175
      %4207 = vmatprep.subr.mxu0 0.0
      %4208 = vmatpush1.xpose.msra.mxu0 %v4172
      %4209 = vmatprep.subr.mxu0 0.0
      %4210 = vmatpush2.xpose.msra.mxu0 0.0
      %4211 = vmatprep.subr.mxu0 0.0
      %4212 = vmatpush2.xpose.msra.mxu0 0.0
      %4213 = vmatprep.subr.mxu0 0.0
      %4214 = vmatpush2.xpose.msra.mxu0 0.0
      %4215 = vmatprep.subr.mxu0 0.0
      %4216 = vmatpush2.xpose.msra.mxu0 0.0
      %4217 = vmatprep.subr.mxu0 0.0
      %4218 = vmatpush2.xpose.msra.mxu0 0.0
      %4219 = vmatprep.subr.mxu0 0.0
      %4220 = vmatpush2.xpose.msra.mxu0 0.0
      %4221 = vmatprep.subr.mxu0 0.0
      %4222 = vmatpush2.xpose.msra.mxu0 0.0
      %4223 = vmatprep.subr.mxu0 0.0
      %4224 = vmatpush2.xpose.msra.mxu0 0.0
      %4225 = vmatprep.subr.mxu0 0.0
      %4226 = vmatpush2.xpose.msra.mxu0 0.0
      %4227 = vmatprep.subr.mxu0 0.0
      %4228 = vmatpush2.xpose.msra.mxu0 0.0
      %4229 = vmatprep.subr.mxu0 0.0
      %4230 = vmatpush2.xpose.msra.mxu0 0.0
      %4231 = vmatprep.subr.mxu0 0.0
      %4232 = vmatpush2.xpose.msra.mxu0 0.0
      %4233 = vmatprep.subr.mxu0 0.0
      %4234 = vmatpush2.xpose.msra.mxu0 0.0
      %4235 = vmatprep.subr.mxu0 0.0
      %4236 = vmatpush2.xpose.msra.mxu0 0.0
      %4237 = vmatprep.subr.mxu0 0.0
      %4238 = vmatpush2.xpose.msra.mxu0 0.0
      %4239 = vmatprep.subr.mxu0 0.0
      %4240 = vmatpush2.xpose.msra.mxu0 0.0
      %4241 = vmatprep.mubr.f32.mxu0 0.0
      %4242 = vmatmul.mubr.f32.gmra.mxu0 %v4169
      %v4243 = vpop.f32.mrf.mxu0
      %v4244 = vadd.f32 0.0, %v4243
      %v4245 = vpop.f32.mrf.mxu0
      %4246 = vdwg.mxu0
      %4247 = vst.msk [vmem:[#allocation2 + $0x18] sm:$0xff] %vm1091, %v4244
      %v4248 = vld [vmem:[#allocation2] sm:$0xff]
      %v4249 = vld [vmem:[#allocation2 + $0x8] sm:$0xff]
      %v4250 = vld [vmem:[#allocation2 + $0x10] sm:$0xff]
      %v4251 = vld [vmem:[#allocation2 + $0x18] sm:$0xff]
      %s4252 = scalar_lea.vmem %s4, 32
      %v4253 = vld [vmem:[%s4252] sm:$0xff]
      %v4254 = vld [vmem:[%s4252 + $0x8] sm:$0xff]
      %v4255 = vld [vmem:[%s4252 + $0x10] sm:$0xff]
      %v4256 = vld [vmem:[%s4252 + $0x18] sm:$0xff]
      %s4257 = scalar_lea.vmem %s5, 64
      %v4258 = vld [vmem:[%s4257] sm:$0xff]
      %v4259 = vld [vmem:[%s4257 + $0x8] sm:$0xff]
      %v4260 = vld [vmem:[%s4257 + $0x10] sm:$0xff]
      %v4261 = vld [vmem:[%s4257 + $0x18] sm:$0xff]
      %v4262 = vld [vmem:[%s4257 + $0x20] sm:$0xff]
      %v4263 = vld [vmem:[%s4257 + $0x28] sm:$0xff]
      %v4264 = vld [vmem:[%s4257 + $0x30] sm:$0xff]
      %v4265 = vld [vmem:[%s4257 + $0x38] sm:$0xff]
      %s4266 = scalar_lea.vmem %s6, 32
      %v4267 = vld [vmem:[%s4266] sm:$0xff]
      %v4268 = vld [vmem:[%s4266 + $0x8] sm:$0xff]
      %v4269 = vld [vmem:[%s4266 + $0x10] sm:$0xff]
      %v4270 = vld [vmem:[%s4266 + $0x18] sm:$0xff]
      %4271 = vset.pattern.permute.xlu0 1
      %4272 = vperm.xlu0 %4271, %v3067
      %v4273 = vpop.permute.xlu0 %4272
      %4275 = vset.pattern.permute.xlu0 1
      %4276 = vperm.xlu0 %4275, %v3068
      %v4277 = vpop.permute.xlu0 %4276
      %4279 = vset.pattern.permute.xlu0 1
      %4280 = vperm.xlu0 %4279, %v3069
      %v4281 = vpop.permute.xlu0 %4280
      %4283 = vset.pattern.permute.xlu0 1
      %4284 = vperm.xlu0 %4283, %v3070
      %v4285 = vpop.permute.xlu0 %4284
      %v4288 = vsel %vm599, %v4253, 0
      %v4291 = vsel %vm599, %v4254, 0
      %v4294 = vsel %vm599, %v4255, 0
      %v4297 = vsel %vm599, %v4256, 0
      %4299 = vmatprep.subr.mxu0 0.0
      %4300 = vmatpush1.msra.mxu0 0.0
      %4301 = vmatprep.subr.mxu0 0.0
      %4302 = vmatpush1.msra.mxu0 0.0
      %4303 = vmatprep.subr.mxu0 0.0
      %4304 = vmatpush1.msra.mxu0 0.0
      %4305 = vmatprep.subr.mxu0 0.0
      %4306 = vmatpush1.msra.mxu0 0.0
      %4307 = vmatprep.subr.mxu0 0.0
      %4308 = vmatpush1.msra.mxu0 0.0
      %4309 = vmatprep.subr.mxu0 0.0
      %4310 = vmatpush1.msra.mxu0 0.0
      %4311 = vmatprep.subr.mxu0 0.0
      %4312 = vmatpush1.msra.mxu0 0.0
      %4313 = vmatprep.subr.mxu0 0.0
      %4314 = vmatpush1.msra.mxu0 0.0
      %4315 = vmatprep.subr.mxu0 0.0
      %4316 = vmatpush1.msra.mxu0 0.0
      %4317 = vmatprep.subr.mxu0 0.0
      %4318 = vmatpush1.msra.mxu0 0.0
      %4319 = vmatprep.subr.mxu0 0.0
      %4320 = vmatpush1.msra.mxu0 0.0
      %4321 = vmatprep.subr.mxu0 0.0
      %4322 = vmatpush1.msra.mxu0 0.0
      %4323 = vmatprep.subr.mxu0 0.0
      %4324 = vmatpush1.msra.mxu0 %v4251
      %4325 = vmatprep.subr.mxu0 0.0
      %4326 = vmatpush1.msra.mxu0 %v4250
      %4327 = vmatprep.subr.mxu0 0.0
      %4328 = vmatpush1.msra.mxu0 %v4249
      %4329 = vmatprep.subr.mxu0 0.0
      %4330 = vmatpush1.msra.mxu0 %v4248
      %4331 = vmatprep.subr.mxu0 0.0
      %4332 = vmatpush2.msra.mxu0 0.0
      %4333 = vmatprep.subr.mxu0 0.0
      %4334 = vmatpush2.msra.mxu0 0.0
      %4335 = vmatprep.subr.mxu0 0.0
      %4336 = vmatpush2.msra.mxu0 0.0
      %4337 = vmatprep.subr.mxu0 0.0
      %4338 = vmatpush2.msra.mxu0 0.0
      %4339 = vmatprep.subr.mxu0 0.0
      %4340 = vmatpush2.msra.mxu0 0.0
      %4341 = vmatprep.subr.mxu0 0.0
      %4342 = vmatpush2.msra.mxu0 0.0
      %4343 = vmatprep.subr.mxu0 0.0
      %4344 = vmatpush2.msra.mxu0 0.0
      %4345 = vmatprep.subr.mxu0 0.0
      %4346 = vmatpush2.msra.mxu0 0.0
      %4347 = vmatprep.subr.mxu0 0.0
      %4348 = vmatpush2.msra.mxu0 0.0
      %4349 = vmatprep.subr.mxu0 0.0
      %4350 = vmatpush2.msra.mxu0 0.0
      %4351 = vmatprep.subr.mxu0 0.0
      %4352 = vmatpush2.msra.mxu0 0.0
      %4353 = vmatprep.subr.mxu0 0.0
      %4354 = vmatpush2.msra.mxu0 0.0
      %4355 = vmatprep.subr.mxu0 0.0
      %4356 = vmatpush2.msra.mxu0 0.0
      %4357 = vmatprep.subr.mxu0 0.0
      %4358 = vmatpush2.msra.mxu0 0.0
      %4359 = vmatprep.subr.mxu0 0.0
      %4360 = vmatpush2.msra.mxu0 0.0
      %4361 = vmatprep.subr.mxu0 0.0
      %4362 = vmatpush2.msra.mxu0 0.0
      %4363 = vmatprep.mubr.f32.mxu0 0.0
      %4364 = vmatmul.mubr.f32.gmra.mxu0 %v4288
      %v4365 = vpop.f32.mrf.mxu0
      %v4366 = vadd.f32 %v4273, %v4365
      %v4367 = vpop.f32.mrf.mxu0
      %4368 = vmatprep.mubr.f32.mxu0 0.0
      %4369 = vmatmul.mubr.f32.gmra.mxu0 %v4291
      %v4370 = vpop.f32.mrf.mxu0
      %v4371 = vadd.f32 %v4277, %v4370
      %v4372 = vpop.f32.mrf.mxu0
      %4373 = vmatprep.mubr.f32.mxu0 0.0
      %4374 = vmatmul.mubr.f32.gmra.mxu0 %v4294
      %v4375 = vpop.f32.mrf.mxu0
      %v4376 = vadd.f32 %v4281, %v4375
      %v4377 = vpop.f32.mrf.mxu0
      %4378 = vmatprep.mubr.f32.mxu0 0.0
      %4379 = vmatmul.mubr.f32.gmra.mxu0 %v4297
      %v4380 = vpop.f32.mrf.mxu0
      %v4381 = vadd.f32 %v4285, %v4380
      %v4382 = vpop.f32.mrf.mxu0
      %4383 = vdwg.mxu0
      %v4384 = vsel %vm1091, %v4366, 0.0
      %v4385 = vsel %vm1091, %v4371, 0.0
      %v4386 = vadd.f32 %v4384, %v4385
      %v4387 = vsel %vm1091, %v4376, 0.0
      %v4388 = vadd.f32 %v4386, %v4387
      %v4389 = vsel %vm1091, %v4381, 0.0
      %v4390 = vadd.f32 %v4388, %v4389
      %v4391 = vrot.slane %v4390, 4
      %v4392 = vadd.f32 %v4390, %v4391
      %v4393 = vrot.slane %v4392, 2
      %v4394 = vadd.f32 %v4392, %v4393
      %v4395 = vrot.slane %v4394, 1
      %v4396 = vadd.f32 %v4394, %v4395
      %v4397 = vmul.f32 %v4396, %v1890
      %v4398 = vsub.f32 %v4366, %v4397
      %v4399 = vsub.f32 %v4371, %v4397
      %v4400 = vsub.f32 %v4376, %v4397
      %v4401 = vsub.f32 %v4381, %v4397
      %v4402 = vmul.f32 %v4398, %v4398
      %v4403 = vmul.f32 %v4399, %v4399
      %v4404 = vmul.f32 %v4400, %v4400
      %v4405 = vmul.f32 %v4401, %v4401
      %v4406 = vsel %vm1091, %v4402, 0.0
      %v4407 = vsel %vm1091, %v4403, 0.0
      %v4408 = vadd.f32 %v4406, %v4407
      %v4409 = vsel %vm1091, %v4404, 0.0
      %v4410 = vadd.f32 %v4408, %v4409
      %v4411 = vsel %vm1091, %v4405, 0.0
      %v4412 = vadd.f32 %v4410, %v4411
      %v4413 = vrot.slane %v4412, 4
      %v4414 = vadd.f32 %v4412, %v4413
      %v4415 = vrot.slane %v4414, 2
      %v4416 = vadd.f32 %v4414, %v4415
      %v4417 = vrot.slane %v4416, 1
      %v4418 = vadd.f32 %v4416, %v4417
      %v4419 = vmul.f32 %v4418, %v1890
      %v4420 = vadd.f32 %v4419, 1e-05
      %v4421 = vrsqrt.pop %v4420
      %v4422 = vmul.f32 %v4398, %v4421
      %v4423 = vmul.f32 %v4399, %v4421
      %v4424 = vmul.f32 %v4400, %v4421
      %v4425 = vmul.f32 %v4401, %v4421
      %4426 = vset.pattern.permute.xlu0 3
      %4427 = vperm.xlu0 %4426, %v3067
      %v4428 = vpop.permute.xlu0 %4427
      %4430 = vset.pattern.permute.xlu0 3
      %4431 = vperm.xlu0 %4430, %v3068
      %v4432 = vpop.permute.xlu0 %4431
      %4434 = vset.pattern.permute.xlu0 3
      %4435 = vperm.xlu0 %4434, %v3069
      %v4436 = vpop.permute.xlu0 %4435
      %4438 = vset.pattern.permute.xlu0 3
      %4439 = vperm.xlu0 %4438, %v3070
      %v4440 = vpop.permute.xlu0 %4439
      %v4442 = vmul.f32 %v4422, %v4428
      %v4443 = vmul.f32 %v4423, %v4432
      %v4444 = vmul.f32 %v4424, %v4436
      %v4445 = vmul.f32 %v4425, %v4440
      %4446 = vset.pattern.permute.xlu0 4
      %4447 = vperm.xlu0 %4446, %v3067
      %v4448 = vpop.permute.xlu0 %4447
      %4450 = vset.pattern.permute.xlu0 4
      %4451 = vperm.xlu0 %4450, %v3068
      %v4452 = vpop.permute.xlu0 %4451
      %4454 = vset.pattern.permute.xlu0 4
      %4455 = vperm.xlu0 %4454, %v3069
      %v4456 = vpop.permute.xlu0 %4455
      %4458 = vset.pattern.permute.xlu0 4
      %4459 = vperm.xlu0 %4458, %v3070
      %v4460 = vpop.permute.xlu0 %4459
      %v4462 = vadd.f32 %v4442, %v4448
      %v4463 = vadd.f32 %v4443, %v4452
      %v4464 = vadd.f32 %v4444, %v4456
      %v4465 = vadd.f32 %v4445, %v4460
      %4466 = vset.pattern.permute.xlu0 1
      %4467 = vperm.xlu0 %4466, %v3072
      %v4468 = vpop.permute.xlu0 %4467
      %4470 = vset.pattern.permute.xlu0 1
      %4471 = vperm.xlu0 %4470, %v3073
      %v4472 = vpop.permute.xlu0 %4471
      %4474 = vset.pattern.permute.xlu0 1
      %4475 = vperm.xlu0 %4474, %v3074
      %v4476 = vpop.permute.xlu0 %4475
      %4478 = vset.pattern.permute.xlu0 1
      %4479 = vperm.xlu0 %4478, %v3075
      %v4480 = vpop.permute.xlu0 %4479
      %4482 = vset.pattern.permute.xlu0 1
      %4483 = vperm.xlu0 %4482, %v3076
      %v4484 = vpop.permute.xlu0 %4483
      %4486 = vset.pattern.permute.xlu0 1
      %4487 = vperm.xlu0 %4486, %v3077
      %v4488 = vpop.permute.xlu0 %4487
      %4490 = vset.pattern.permute.xlu0 1
      %4491 = vperm.xlu0 %4490, %v3078
      %v4492 = vpop.permute.xlu0 %4491
      %4494 = vset.pattern.permute.xlu0 1
      %4495 = vperm.xlu0 %4494, %v3079
      %v4496 = vpop.permute.xlu0 %4495
      %v4499 = vsel %vm1992, %v4258, 0
      %v4502 = vsel %vm1992, %v4259, 0
      %v4505 = vsel %vm1992, %v4260, 0
      %v4508 = vsel %vm1992, %v4261, 0
      %v4511 = vsel %vm1992, %v4262, 0
      %v4514 = vsel %vm1992, %v4263, 0
      %v4517 = vsel %vm1992, %v4264, 0
      %v4520 = vsel %vm1992, %v4265, 0
      %4522 = vmatprep.subr.mxu0 0.0
      %4523 = vmatpush1.msra.mxu0 0.0
      %4524 = vmatprep.subr.mxu0 0.0
      %4525 = vmatpush1.msra.mxu0 0.0
      %4526 = vmatprep.subr.mxu0 0.0
      %4527 = vmatpush1.msra.mxu0 0.0
      %4528 = vmatprep.subr.mxu0 0.0
      %4529 = vmatpush1.msra.mxu0 0.0
      %4530 = vmatprep.subr.mxu0 0.0
      %4531 = vmatpush1.msra.mxu0 0.0
      %4532 = vmatprep.subr.mxu0 0.0
      %4533 = vmatpush1.msra.mxu0 0.0
      %4534 = vmatprep.subr.mxu0 0.0
      %4535 = vmatpush1.msra.mxu0 0.0
      %4536 = vmatprep.subr.mxu0 0.0
      %4537 = vmatpush1.msra.mxu0 0.0
      %4538 = vmatprep.subr.mxu0 0.0
      %4539 = vmatpush1.msra.mxu0 %v4465
      %4540 = vmatprep.subr.mxu0 0.0
      %4541 = vmatpush1.msra.mxu0 %v4464
      %4542 = vmatprep.subr.mxu0 0.0
      %4543 = vmatpush1.msra.mxu0 %v4463
      %4544 = vmatprep.subr.mxu0 0.0
      %4545 = vmatpush1.msra.mxu0 %v4462
      %4546 = vmatprep.subr.mxu0 0.0
      %4547 = vmatpush1.msra.mxu0 %v2328
      %4548 = vmatprep.subr.mxu0 0.0
      %4549 = vmatpush1.msra.mxu0 %v2327
      %4550 = vmatprep.subr.mxu0 0.0
      %4551 = vmatpush1.msra.mxu0 %v2326
      %4552 = vmatprep.subr.mxu0 0.0
      %4553 = vmatpush1.msra.mxu0 %v2325
      %4554 = vmatprep.subr.mxu0 0.0
      %4555 = vmatpush2.msra.mxu0 0.0
      %4556 = vmatprep.subr.mxu0 0.0
      %4557 = vmatpush2.msra.mxu0 0.0
      %4558 = vmatprep.subr.mxu0 0.0
      %4559 = vmatpush2.msra.mxu0 0.0
      %4560 = vmatprep.subr.mxu0 0.0
      %4561 = vmatpush2.msra.mxu0 0.0
      %4562 = vmatprep.subr.mxu0 0.0
      %4563 = vmatpush2.msra.mxu0 0.0
      %4564 = vmatprep.subr.mxu0 0.0
      %4565 = vmatpush2.msra.mxu0 0.0
      %4566 = vmatprep.subr.mxu0 0.0
      %4567 = vmatpush2.msra.mxu0 0.0
      %4568 = vmatprep.subr.mxu0 0.0
      %4569 = vmatpush2.msra.mxu0 0.0
      %4570 = vmatprep.subr.mxu0 0.0
      %4571 = vmatpush2.msra.mxu0 0.0
      %4572 = vmatprep.subr.mxu0 0.0
      %4573 = vmatpush2.msra.mxu0 0.0
      %4574 = vmatprep.subr.mxu0 0.0
      %4575 = vmatpush2.msra.mxu0 0.0
      %4576 = vmatprep.subr.mxu0 0.0
      %4577 = vmatpush2.msra.mxu0 0.0
      %4578 = vmatprep.subr.mxu0 0.0
      %4579 = vmatpush2.msra.mxu0 0.0
      %4580 = vmatprep.subr.mxu0 0.0
      %4581 = vmatpush2.msra.mxu0 0.0
      %4582 = vmatprep.subr.mxu0 0.0
      %4583 = vmatpush2.msra.mxu0 0.0
      %4584 = vmatprep.subr.mxu0 0.0
      %4585 = vmatpush2.msra.mxu0 0.0
      %4586 = vmatprep.mubr.f32.mxu0 0.0
      %4587 = vmatmul.mubr.f32.gmra.mxu0 %v4499
      %v4588 = vpop.f32.mrf.mxu0
      %v4589 = vadd.f32 %v4468, %v4588
      %v4590 = vpop.f32.mrf.mxu0
      %4591 = vmatprep.mubr.f32.mxu0 0.0
      %4592 = vmatmul.mubr.f32.gmra.mxu0 %v4502
      %v4593 = vpop.f32.mrf.mxu0
      %v4594 = vadd.f32 %v4472, %v4593
      %v4595 = vpop.f32.mrf.mxu0
      %4596 = vmatprep.mubr.f32.mxu0 0.0
      %4597 = vmatmul.mubr.f32.gmra.mxu0 %v4505
      %v4598 = vpop.f32.mrf.mxu0
      %v4599 = vadd.f32 %v4476, %v4598
      %v4600 = vpop.f32.mrf.mxu0
      %4601 = vmatprep.mubr.f32.mxu0 0.0
      %4602 = vmatmul.mubr.f32.gmra.mxu0 %v4508
      %v4603 = vpop.f32.mrf.mxu0
      %v4604 = vadd.f32 %v4480, %v4603
      %v4605 = vpop.f32.mrf.mxu0
      %4606 = vmatprep.mubr.f32.mxu0 0.0
      %4607 = vmatmul.mubr.f32.gmra.mxu0 %v4511
      %v4608 = vpop.f32.mrf.mxu0
      %v4609 = vadd.f32 %v4484, %v4608
      %v4610 = vpop.f32.mrf.mxu0
      %4611 = vmatprep.mubr.f32.mxu0 0.0
      %4612 = vmatmul.mubr.f32.gmra.mxu0 %v4514
      %v4613 = vpop.f32.mrf.mxu0
      %v4614 = vadd.f32 %v4488, %v4613
      %v4615 = vpop.f32.mrf.mxu0
      %4616 = vmatprep.mubr.f32.mxu0 0.0
      %4617 = vmatmul.mubr.f32.gmra.mxu0 %v4517
      %v4618 = vpop.f32.mrf.mxu0
      %v4619 = vadd.f32 %v4492, %v4618
      %v4620 = vpop.f32.mrf.mxu0
      %4621 = vmatprep.mubr.f32.mxu0 0.0
      %4622 = vmatmul.mubr.f32.gmra.mxu0 %v4520
      %v4623 = vpop.f32.mrf.mxu0
      %v4624 = vadd.f32 %v4496, %v4623
      %v4625 = vpop.f32.mrf.mxu0
      %4626 = vdwg.mxu0
      %v4627 = vmax.f32 %v4589, 0.0
      %v4628 = vmax.f32 %v4594, 0.0
      %v4629 = vmax.f32 %v4599, 0.0
      %v4630 = vmax.f32 %v4604, 0.0
      %v4631 = vmax.f32 %v4609, 0.0
      %v4632 = vmax.f32 %v4614, 0.0
      %v4633 = vmax.f32 %v4619, 0.0
      %v4634 = vmax.f32 %v4624, 0.0
      %4635 = vset.pattern.permute.xlu0 2
      %4636 = vperm.xlu0 %4635, %v3067
      %v4637 = vpop.permute.xlu0 %4636
      %4639 = vset.pattern.permute.xlu0 2
      %4640 = vperm.xlu0 %4639, %v3068
      %v4641 = vpop.permute.xlu0 %4640
      %4643 = vset.pattern.permute.xlu0 2
      %4644 = vperm.xlu0 %4643, %v3069
      %v4645 = vpop.permute.xlu0 %4644
      %4647 = vset.pattern.permute.xlu0 2
      %4648 = vperm.xlu0 %4647, %v3070
      %v4649 = vpop.permute.xlu0 %4648
      %v4652 = vsel %vm1992, %v4267, 0
      %v4655 = vsel %vm1992, %v4268, 0
      %v4658 = vsel %vm1992, %v4269, 0
      %v4661 = vsel %vm1992, %v4270, 0
      %4663 = vmatprep.subr.mxu0 0.0
      %4664 = vmatpush1.msra.mxu0 0.0
      %4665 = vmatprep.subr.mxu0 0.0
      %4666 = vmatpush1.msra.mxu0 0.0
      %4667 = vmatprep.subr.mxu0 0.0
      %4668 = vmatpush1.msra.mxu0 0.0
      %4669 = vmatprep.subr.mxu0 0.0
      %4670 = vmatpush1.msra.mxu0 0.0
      %4671 = vmatprep.subr.mxu0 0.0
      %4672 = vmatpush1.msra.mxu0 0.0
      %4673 = vmatprep.subr.mxu0 0.0
      %4674 = vmatpush1.msra.mxu0 0.0
      %4675 = vmatprep.subr.mxu0 0.0
      %4676 = vmatpush1.msra.mxu0 0.0
      %4677 = vmatprep.subr.mxu0 0.0
      %4678 = vmatpush1.msra.mxu0 0.0
      %4679 = vmatprep.subr.mxu0 0.0
      %4680 = vmatpush1.msra.mxu0 %v4634
      %4681 = vmatprep.subr.mxu0 0.0
      %4682 = vmatpush1.msra.mxu0 %v4633
      %4683 = vmatprep.subr.mxu0 0.0
      %4684 = vmatpush1.msra.mxu0 %v4632
      %4685 = vmatprep.subr.mxu0 0.0
      %4686 = vmatpush1.msra.mxu0 %v4631
      %4687 = vmatprep.subr.mxu0 0.0
      %4688 = vmatpush1.msra.mxu0 %v4630
      %4689 = vmatprep.subr.mxu0 0.0
      %4690 = vmatpush1.msra.mxu0 %v4629
      %4691 = vmatprep.subr.mxu0 0.0
      %4692 = vmatpush1.msra.mxu0 %v4628
      %4693 = vmatprep.subr.mxu0 0.0
      %4694 = vmatpush1.msra.mxu0 %v4627
      %4695 = vmatprep.subr.mxu0 0.0
      %4696 = vmatpush2.msra.mxu0 0.0
      %4697 = vmatprep.subr.mxu0 0.0
      %4698 = vmatpush2.msra.mxu0 0.0
      %4699 = vmatprep.subr.mxu0 0.0
      %4700 = vmatpush2.msra.mxu0 0.0
      %4701 = vmatprep.subr.mxu0 0.0
      %4702 = vmatpush2.msra.mxu0 0.0
      %4703 = vmatprep.subr.mxu0 0.0
      %4704 = vmatpush2.msra.mxu0 0.0
      %4705 = vmatprep.subr.mxu0 0.0
      %4706 = vmatpush2.msra.mxu0 0.0
      %4707 = vmatprep.subr.mxu0 0.0
      %4708 = vmatpush2.msra.mxu0 0.0
      %4709 = vmatprep.subr.mxu0 0.0
      %4710 = vmatpush2.msra.mxu0 0.0
      %4711 = vmatprep.subr.mxu0 0.0
      %4712 = vmatpush2.msra.mxu0 0.0
      %4713 = vmatprep.subr.mxu0 0.0
      %4714 = vmatpush2.msra.mxu0 0.0
      %4715 = vmatprep.subr.mxu0 0.0
      %4716 = vmatpush2.msra.mxu0 0.0
      %4717 = vmatprep.subr.mxu0 0.0
      %4718 = vmatpush2.msra.mxu0 0.0
      %4719 = vmatprep.subr.mxu0 0.0
      %4720 = vmatpush2.msra.mxu0 0.0
      %4721 = vmatprep.subr.mxu0 0.0
      %4722 = vmatpush2.msra.mxu0 0.0
      %4723 = vmatprep.subr.mxu0 0.0
      %4724 = vmatpush2.msra.mxu0 0.0
      %4725 = vmatprep.subr.mxu0 0.0
      %4726 = vmatpush2.msra.mxu0 0.0
      %4727 = vmatprep.mubr.f32.mxu0 0.0
      %4728 = vmatmul.mubr.f32.gmra.mxu0 %v4652
      %v4729 = vpop.f32.mrf.mxu0
      %v4730 = vadd.f32 %v4637, %v4729
      %v4731 = vpop.f32.mrf.mxu0
      %4732 = vmatprep.mubr.f32.mxu0 0.0
      %4733 = vmatmul.mubr.f32.gmra.mxu0 %v4655
      %v4734 = vpop.f32.mrf.mxu0
      %v4735 = vadd.f32 %v4641, %v4734
      %v4736 = vpop.f32.mrf.mxu0
      %4737 = vmatprep.mubr.f32.mxu0 0.0
      %4738 = vmatmul.mubr.f32.gmra.mxu0 %v4658
      %v4739 = vpop.f32.mrf.mxu0
      %v4740 = vadd.f32 %v4645, %v4739
      %v4741 = vpop.f32.mrf.mxu0
      %4742 = vmatprep.mubr.f32.mxu0 0.0
      %4743 = vmatmul.mubr.f32.gmra.mxu0 %v4661
      %v4744 = vpop.f32.mrf.mxu0
      %v4745 = vadd.f32 %v4649, %v4744
      %v4746 = vpop.f32.mrf.mxu0
      %4747 = vdwg.mxu0
      %v4748 = vsel %vm1091, %v4730, 0.0
      %v4749 = vsel %vm1091, %v4735, 0.0
      %v4750 = vadd.f32 %v4748, %v4749
      %v4751 = vsel %vm1091, %v4740, 0.0
      %v4752 = vadd.f32 %v4750, %v4751
      %v4753 = vsel %vm1091, %v4745, 0.0
      %v4754 = vadd.f32 %v4752, %v4753
      %v4755 = vrot.slane %v4754, 4
      %v4756 = vadd.f32 %v4754, %v4755
      %v4757 = vrot.slane %v4756, 2
      %v4758 = vadd.f32 %v4756, %v4757
      %v4759 = vrot.slane %v4758, 1
      %v4760 = vadd.f32 %v4758, %v4759
      %v4761 = vmul.f32 %v4760, %v1890
      %v4762 = vsub.f32 %v4730, %v4761
      %v4763 = vsub.f32 %v4735, %v4761
      %v4764 = vsub.f32 %v4740, %v4761
      %v4765 = vsub.f32 %v4745, %v4761
      %v4766 = vmul.f32 %v4762, %v4762
      %v4767 = vmul.f32 %v4763, %v4763
      %v4768 = vmul.f32 %v4764, %v4764
      %v4769 = vmul.f32 %v4765, %v4765
      %v4770 = vsel %vm1091, %v4766, 0.0
      %v4771 = vsel %vm1091, %v4767, 0.0
      %v4772 = vadd.f32 %v4770, %v4771
      %v4773 = vsel %vm1091, %v4768, 0.0
      %v4774 = vadd.f32 %v4772, %v4773
      %v4775 = vsel %vm1091, %v4769, 0.0
      %v4776 = vadd.f32 %v4774, %v4775
      %v4777 = vrot.slane %v4776, 4
      %v4778 = vadd.f32 %v4776, %v4777
      %v4779 = vrot.slane %v4778, 2
      %v4780 = vadd.f32 %v4778, %v4779
      %v4781 = vrot.slane %v4780, 1
      %v4782 = vadd.f32 %v4780, %v4781
      %v4783 = vmul.f32 %v4782, %v1890
      %v4784 = vadd.f32 %v4783, 1e-05
      %v4785 = vrsqrt.pop %v4784
      %v4786 = vmul.f32 %v4762, %v4785
      %v4787 = vmul.f32 %v4763, %v4785
      %v4788 = vmul.f32 %v4764, %v4785
      %v4789 = vmul.f32 %v4765, %v4785
      %4790 = vset.pattern.permute.xlu0 5
      %4791 = vperm.xlu0 %4790, %v3067
      %v4792 = vpop.permute.xlu0 %4791
      %4794 = vset.pattern.permute.xlu0 5
      %4795 = vperm.xlu0 %4794, %v3068
      %v4796 = vpop.permute.xlu0 %4795
      %4798 = vset.pattern.permute.xlu0 5
      %4799 = vperm.xlu0 %4798, %v3069
      %v4800 = vpop.permute.xlu0 %4799
      %4802 = vset.pattern.permute.xlu0 5
      %4803 = vperm.xlu0 %4802, %v3070
      %v4804 = vpop.permute.xlu0 %4803
      %v4806 = vmul.f32 %v4786, %v4792
      %v4807 = vmul.f32 %v4787, %v4796
      %v4808 = vmul.f32 %v4788, %v4800
      %v4809 = vmul.f32 %v4789, %v4804
      %4810 = vset.pattern.permute.xlu0 6
      %4811 = vperm.xlu0 %4810, %v3067
      %v4812 = vpop.permute.xlu0 %4811
      %4814 = vset.pattern.permute.xlu0 6
      %4815 = vperm.xlu0 %4814, %v3068
      %v4816 = vpop.permute.xlu0 %4815
      %4818 = vset.pattern.permute.xlu0 6
      %4819 = vperm.xlu0 %4818, %v3069
      %v4820 = vpop.permute.xlu0 %4819
      %4822 = vset.pattern.permute.xlu0 6
      %4823 = vperm.xlu0 %4822, %v3070
      %v4824 = vpop.permute.xlu0 %4823
      %v4826 = vadd.f32 %v4806, %v4812
      %v4827 = vadd.f32 %v4807, %v4816
      %v4828 = vadd.f32 %v4808, %v4820
      %v4829 = vadd.f32 %v4809, %v4824
      %v4830 = vadd.f32 %v2325, %v4826
      %v4831 = vadd.f32 %v2326, %v4827
      %v4832 = vadd.f32 %v2327, %v4828
      %v4833 = vadd.f32 %v2328, %v4829
      %s4834 = scalar_lea.vmem %s13, 32
      %v4835 = vld [vmem:[%s4834] sm:$0xff]
      %v4836 = vld [vmem:[%s4834 + $0x8] sm:$0xff]
      %v4837 = vld [vmem:[%s4834 + $0x10] sm:$0xff]
      %v4838 = vld [vmem:[%s4834 + $0x18] sm:$0xff]
      %s4839 = scalar_lea.vmem %s14, 64
      %v4840 = vld [vmem:[%s4839] sm:$0xff]
      %v4841 = vld [vmem:[%s4839 + $0x8] sm:$0xff]
      %v4842 = vld [vmem:[%s4839 + $0x10] sm:$0xff]
      %v4843 = vld [vmem:[%s4839 + $0x18] sm:$0xff]
      %v4844 = vld [vmem:[%s4839 + $0x20] sm:$0xff]
      %v4845 = vld [vmem:[%s4839 + $0x28] sm:$0xff]
      %v4846 = vld [vmem:[%s4839 + $0x30] sm:$0xff]
      %v4847 = vld [vmem:[%s4839 + $0x38] sm:$0xff]
      %s4848 = scalar_lea.vmem %s9, 32
      %v4849 = vld [vmem:[%s4848] sm:$0xff]
      %v4850 = vld [vmem:[%s4848 + $0x8] sm:$0xff]
      %v4851 = vld [vmem:[%s4848 + $0x10] sm:$0xff]
      %v4852 = vld [vmem:[%s4848 + $0x18] sm:$0xff]
      %4854 = vset.pattern.permute.xlu0 0
      %4855 = vperm.xlu0 %4854, %v4835
      %v4856 = vpop.permute.xlu0 %4855
      %4859 = vset.pattern.permute.xlu0 0
      %4860 = vperm.xlu0 %4859, %v4836
      %v4861 = vpop.permute.xlu0 %4860
      %4864 = vset.pattern.permute.xlu0 0
      %4865 = vperm.xlu0 %4864, %v4837
      %v4866 = vpop.permute.xlu0 %4865
      %4869 = vset.pattern.permute.xlu0 0
      %4870 = vperm.xlu0 %4869, %v4838
      %v4871 = vpop.permute.xlu0 %4870
      %v4874 = vsel %vm599, %v4849, 0
      %v4877 = vsel %vm599, %v4850, 0
      %v4880 = vsel %vm599, %v4851, 0
      %v4883 = vsel %vm599, %v4852, 0
      %4885 = vmatprep.subr.mxu0 0.0
      %4886 = vmatpush1.msra.mxu0 0.0
      %4887 = vmatprep.subr.mxu0 0.0
      %4888 = vmatpush1.msra.mxu0 0.0
      %4889 = vmatprep.subr.mxu0 0.0
      %4890 = vmatpush1.msra.mxu0 0.0
      %4891 = vmatprep.subr.mxu0 0.0
      %4892 = vmatpush1.msra.mxu0 0.0
      %4893 = vmatprep.subr.mxu0 0.0
      %4894 = vmatpush1.msra.mxu0 0.0
      %4895 = vmatprep.subr.mxu0 0.0
      %4896 = vmatpush1.msra.mxu0 0.0
      %4897 = vmatprep.subr.mxu0 0.0
      %4898 = vmatpush1.msra.mxu0 0.0
      %4899 = vmatprep.subr.mxu0 0.0
      %4900 = vmatpush1.msra.mxu0 0.0
      %4901 = vmatprep.subr.mxu0 0.0
      %4902 = vmatpush1.msra.mxu0 0.0
      %4903 = vmatprep.subr.mxu0 0.0
      %4904 = vmatpush1.msra.mxu0 0.0
      %4905 = vmatprep.subr.mxu0 0.0
      %4906 = vmatpush1.msra.mxu0 0.0
      %4907 = vmatprep.subr.mxu0 0.0
      %4908 = vmatpush1.msra.mxu0 0.0
      %4909 = vmatprep.subr.mxu0 0.0
      %4910 = vmatpush1.msra.mxu0 %v2328
      %4911 = vmatprep.subr.mxu0 0.0
      %4912 = vmatpush1.msra.mxu0 %v2327
      %4913 = vmatprep.subr.mxu0 0.0
      %4914 = vmatpush1.msra.mxu0 %v2326
      %4915 = vmatprep.subr.mxu0 0.0
      %4916 = vmatpush1.msra.mxu0 %v2325
      %4917 = vmatprep.subr.mxu0 0.0
      %4918 = vmatpush2.msra.mxu0 0.0
      %4919 = vmatprep.subr.mxu0 0.0
      %4920 = vmatpush2.msra.mxu0 0.0
      %4921 = vmatprep.subr.mxu0 0.0
      %4922 = vmatpush2.msra.mxu0 0.0
      %4923 = vmatprep.subr.mxu0 0.0
      %4924 = vmatpush2.msra.mxu0 0.0
      %4925 = vmatprep.subr.mxu0 0.0
      %4926 = vmatpush2.msra.mxu0 0.0
      %4927 = vmatprep.subr.mxu0 0.0
      %4928 = vmatpush2.msra.mxu0 0.0
      %4929 = vmatprep.subr.mxu0 0.0
      %4930 = vmatpush2.msra.mxu0 0.0
      %4931 = vmatprep.subr.mxu0 0.0
      %4932 = vmatpush2.msra.mxu0 0.0
      %4933 = vmatprep.subr.mxu0 0.0
      %4934 = vmatpush2.msra.mxu0 0.0
      %4935 = vmatprep.subr.mxu0 0.0
      %4936 = vmatpush2.msra.mxu0 0.0
      %4937 = vmatprep.subr.mxu0 0.0
      %4938 = vmatpush2.msra.mxu0 0.0
      %4939 = vmatprep.subr.mxu0 0.0
      %4940 = vmatpush2.msra.mxu0 0.0
      %4941 = vmatprep.subr.mxu0 0.0
      %4942 = vmatpush2.msra.mxu0 0.0
      %4943 = vmatprep.subr.mxu0 0.0
      %4944 = vmatpush2.msra.mxu0 0.0
      %4945 = vmatprep.subr.mxu0 0.0
      %4946 = vmatpush2.msra.mxu0 0.0
      %4947 = vmatprep.subr.mxu0 0.0
      %4948 = vmatpush2.msra.mxu0 0.0
      %4949 = vmatprep.mubr.f32.mxu0 0.0
      %4950 = vmatmul.mubr.f32.gmra.mxu0 %v4874
      %v4951 = vpop.f32.mrf.mxu0
      %v4952 = vadd.f32 %v4856, %v4951
      %v4953 = vpop.f32.mrf.mxu0
      %4954 = vmatprep.mubr.f32.mxu0 0.0
      %4955 = vmatmul.mubr.f32.gmra.mxu0 %v4877
      %v4956 = vpop.f32.mrf.mxu0
      %v4957 = vadd.f32 %v4861, %v4956
      %v4958 = vpop.f32.mrf.mxu0
      %4959 = vmatprep.mubr.f32.mxu0 0.0
      %4960 = vmatmul.mubr.f32.gmra.mxu0 %v4880
      %v4961 = vpop.f32.mrf.mxu0
      %v4962 = vadd.f32 %v4866, %v4961
      %v4963 = vpop.f32.mrf.mxu0
      %4964 = vmatprep.mubr.f32.mxu0 0.0
      %4965 = vmatmul.mubr.f32.gmra.mxu0 %v4883
      %v4966 = vpop.f32.mrf.mxu0
      %v4967 = vadd.f32 %v4871, %v4966
      %v4968 = vpop.f32.mrf.mxu0
      %4969 = vdwg.mxu0
      %v4970 = vsel %vm1091, %v4952, 0.0
      %4971 = vadd.xlane.f32.xlu0 %v4970
      %v4972 = vpop.xlane.xlu0 %4971
      %v4973 = vsel %vm1091, %v4957, 0.0
      %4974 = vadd.xlane.f32.xlu0 %v4973
      %v4975 = vpop.xlane.xlu0 %4974
      %v4976 = vsel %vm1091, %v4962, 0.0
      %4977 = vadd.xlane.f32.xlu0 %v4976
      %v4978 = vpop.xlane.xlu0 %4977
      %v4979 = vsel %vm1091, %v4967, 0.0
      %4980 = vadd.xlane.f32.xlu0 %v4979
      %v4981 = vpop.xlane.xlu0 %4980
      %v4982 = vmul.f32 %v4972, %v2474
      %v4983 = vmul.f32 %v4975, %v2474
      %v4984 = vmul.f32 %v4978, %v2474
      %v4985 = vmul.f32 %v4981, %v2474
      %s4986 = scalar_lea.vmem %s10, 32
      %v4987 = vld [vmem:[%s4986] sm:$0xff]
      %v4988 = vld [vmem:[%s4986 + $0x8] sm:$0xff]
      %v4989 = vld [vmem:[%s4986 + $0x10] sm:$0xff]
      %v4990 = vld [vmem:[%s4986 + $0x18] sm:$0xff]
      %s4991 = scalar_lea.vmem %s11, 64
      %v4992 = vld [vmem:[%s4991] sm:$0xff]
      %v4993 = vld [vmem:[%s4991 + $0x8] sm:$0xff]
      %v4994 = vld [vmem:[%s4991 + $0x10] sm:$0xff]
      %v4995 = vld [vmem:[%s4991 + $0x18] sm:$0xff]
      %v4996 = vld [vmem:[%s4991 + $0x20] sm:$0xff]
      %v4997 = vld [vmem:[%s4991 + $0x28] sm:$0xff]
      %v4998 = vld [vmem:[%s4991 + $0x30] sm:$0xff]
      %v4999 = vld [vmem:[%s4991 + $0x38] sm:$0xff]
      %s5000 = scalar_lea.vmem %s12, 32
      %v5001 = vld [vmem:[%s5000] sm:$0xff]
      %v5002 = vld [vmem:[%s5000 + $0x8] sm:$0xff]
      %v5003 = vld [vmem:[%s5000 + $0x10] sm:$0xff]
      %v5004 = vld [vmem:[%s5000 + $0x18] sm:$0xff]
      %5005 = vset.pattern.permute.xlu0 1
      %5006 = vperm.xlu0 %5005, %v4835
      %v5007 = vpop.permute.xlu0 %5006
      %5009 = vset.pattern.permute.xlu0 1
      %5010 = vperm.xlu0 %5009, %v4836
      %v5011 = vpop.permute.xlu0 %5010
      %5013 = vset.pattern.permute.xlu0 1
      %5014 = vperm.xlu0 %5013, %v4837
      %v5015 = vpop.permute.xlu0 %5014
      %5017 = vset.pattern.permute.xlu0 1
      %5018 = vperm.xlu0 %5017, %v4838
      %v5019 = vpop.permute.xlu0 %5018
      %v5022 = vsel %vm599, %v4987, 0
      %v5025 = vsel %vm599, %v4988, 0
      %v5028 = vsel %vm599, %v4989, 0
      %v5031 = vsel %vm599, %v4990, 0
      %5033 = vmatprep.subr.mxu0 0.0
      %5034 = vmatpush1.msra.mxu0 0.0
      %5035 = vmatprep.subr.mxu0 0.0
      %5036 = vmatpush1.msra.mxu0 0.0
      %5037 = vmatprep.subr.mxu0 0.0
      %5038 = vmatpush1.msra.mxu0 0.0
      %5039 = vmatprep.subr.mxu0 0.0
      %5040 = vmatpush1.msra.mxu0 0.0
      %5041 = vmatprep.subr.mxu0 0.0
      %5042 = vmatpush1.msra.mxu0 0.0
      %5043 = vmatprep.subr.mxu0 0.0
      %5044 = vmatpush1.msra.mxu0 0.0
      %5045 = vmatprep.subr.mxu0 0.0
      %5046 = vmatpush1.msra.mxu0 0.0
      %5047 = vmatprep.subr.mxu0 0.0
      %5048 = vmatpush1.msra.mxu0 0.0
      %5049 = vmatprep.subr.mxu0 0.0
      %5050 = vmatpush1.msra.mxu0 0.0
      %5051 = vmatprep.subr.mxu0 0.0
      %5052 = vmatpush1.msra.mxu0 0.0
      %5053 = vmatprep.subr.mxu0 0.0
      %5054 = vmatpush1.msra.mxu0 0.0
      %5055 = vmatprep.subr.mxu0 0.0
      %5056 = vmatpush1.msra.mxu0 0.0
      %5057 = vmatprep.subr.mxu0 0.0
      %5058 = vmatpush1.msra.mxu0 %v4985
      %5059 = vmatprep.subr.mxu0 0.0
      %5060 = vmatpush1.msra.mxu0 %v4984
      %5061 = vmatprep.subr.mxu0 0.0
      %5062 = vmatpush1.msra.mxu0 %v4983
      %5063 = vmatprep.subr.mxu0 0.0
      %5064 = vmatpush1.msra.mxu0 %v4982
      %5065 = vmatprep.subr.mxu0 0.0
      %5066 = vmatpush2.msra.mxu0 0.0
      %5067 = vmatprep.subr.mxu0 0.0
      %5068 = vmatpush2.msra.mxu0 0.0
      %5069 = vmatprep.subr.mxu0 0.0
      %5070 = vmatpush2.msra.mxu0 0.0
      %5071 = vmatprep.subr.mxu0 0.0
      %5072 = vmatpush2.msra.mxu0 0.0
      %5073 = vmatprep.subr.mxu0 0.0
      %5074 = vmatpush2.msra.mxu0 0.0
      %5075 = vmatprep.subr.mxu0 0.0
      %5076 = vmatpush2.msra.mxu0 0.0
      %5077 = vmatprep.subr.mxu0 0.0
      %5078 = vmatpush2.msra.mxu0 0.0
      %5079 = vmatprep.subr.mxu0 0.0
      %5080 = vmatpush2.msra.mxu0 0.0
      %5081 = vmatprep.subr.mxu0 0.0
      %5082 = vmatpush2.msra.mxu0 0.0
      %5083 = vmatprep.subr.mxu0 0.0
      %5084 = vmatpush2.msra.mxu0 0.0
      %5085 = vmatprep.subr.mxu0 0.0
      %5086 = vmatpush2.msra.mxu0 0.0
      %5087 = vmatprep.subr.mxu0 0.0
      %5088 = vmatpush2.msra.mxu0 0.0
      %5089 = vmatprep.subr.mxu0 0.0
      %5090 = vmatpush2.msra.mxu0 0.0
      %5091 = vmatprep.subr.mxu0 0.0
      %5092 = vmatpush2.msra.mxu0 0.0
      %5093 = vmatprep.subr.mxu0 0.0
      %5094 = vmatpush2.msra.mxu0 0.0
      %5095 = vmatprep.subr.mxu0 0.0
      %5096 = vmatpush2.msra.mxu0 0.0
      %5097 = vmatprep.mubr.f32.mxu0 0.0
      %5098 = vmatmul.mubr.f32.gmra.mxu0 %v5022
      %v5099 = vpop.f32.mrf.mxu0
      %v5100 = vadd.f32 %v5007, %v5099
      %v5101 = vpop.f32.mrf.mxu0
      %5102 = vmatprep.mubr.f32.mxu0 0.0
      %5103 = vmatmul.mubr.f32.gmra.mxu0 %v5025
      %v5104 = vpop.f32.mrf.mxu0
      %v5105 = vadd.f32 %v5011, %v5104
      %v5106 = vpop.f32.mrf.mxu0
      %5107 = vmatprep.mubr.f32.mxu0 0.0
      %5108 = vmatmul.mubr.f32.gmra.mxu0 %v5028
      %v5109 = vpop.f32.mrf.mxu0
      %v5110 = vadd.f32 %v5015, %v5109
      %v5111 = vpop.f32.mrf.mxu0
      %5112 = vmatprep.mubr.f32.mxu0 0.0
      %5113 = vmatmul.mubr.f32.gmra.mxu0 %v5031
      %v5114 = vpop.f32.mrf.mxu0
      %v5115 = vadd.f32 %v5019, %v5114
      %v5116 = vpop.f32.mrf.mxu0
      %5117 = vdwg.mxu0
      %v5118 = vsel %vm906, %v5100, 0.0
      %v5119 = vsel %vm906, %v5105, 0.0
      %v5120 = vadd.f32 %v5118, %v5119
      %v5121 = vsel %vm906, %v5110, 0.0
      %v5122 = vadd.f32 %v5120, %v5121
      %v5123 = vsel %vm906, %v5115, 0.0
      %v5124 = vadd.f32 %v5122, %v5123
      %v5125 = vrot.slane %v5124, 4
      %v5126 = vadd.f32 %v5124, %v5125
      %v5127 = vrot.slane %v5126, 2
      %v5128 = vadd.f32 %v5126, %v5127
      %v5129 = vrot.slane %v5128, 1
      %v5130 = vadd.f32 %v5128, %v5129
      %v5131 = vmul.f32 %v5130, %v1890
      %v5132 = vsub.f32 %v5100, %v5131
      %v5133 = vsub.f32 %v5105, %v5131
      %v5134 = vsub.f32 %v5110, %v5131
      %v5135 = vsub.f32 %v5115, %v5131
      %v5136 = vmul.f32 %v5132, %v5132
      %v5137 = vmul.f32 %v5133, %v5133
      %v5138 = vmul.f32 %v5134, %v5134
      %v5139 = vmul.f32 %v5135, %v5135
      %v5140 = vsel %vm906, %v5136, 0.0
      %v5141 = vsel %vm906, %v5137, 0.0
      %v5142 = vadd.f32 %v5140, %v5141
      %v5143 = vsel %vm906, %v5138, 0.0
      %v5144 = vadd.f32 %v5142, %v5143
      %v5145 = vsel %vm906, %v5139, 0.0
      %v5146 = vadd.f32 %v5144, %v5145
      %v5147 = vrot.slane %v5146, 4
      %v5148 = vadd.f32 %v5146, %v5147
      %v5149 = vrot.slane %v5148, 2
      %v5150 = vadd.f32 %v5148, %v5149
      %v5151 = vrot.slane %v5150, 1
      %v5152 = vadd.f32 %v5150, %v5151
      %v5153 = vmul.f32 %v5152, %v1890
      %v5154 = vadd.f32 %v5153, 1e-05
      %v5155 = vrsqrt.pop %v5154
      %v5156 = vmul.f32 %v5132, %v5155
      %v5157 = vmul.f32 %v5133, %v5155
      %v5158 = vmul.f32 %v5134, %v5155
      %v5159 = vmul.f32 %v5135, %v5155
      %5160 = vset.pattern.permute.xlu0 3
      %5161 = vperm.xlu0 %5160, %v4835
      %v5162 = vpop.permute.xlu0 %5161
      %5164 = vset.pattern.permute.xlu0 3
      %5165 = vperm.xlu0 %5164, %v4836
      %v5166 = vpop.permute.xlu0 %5165
      %5168 = vset.pattern.permute.xlu0 3
      %5169 = vperm.xlu0 %5168, %v4837
      %v5170 = vpop.permute.xlu0 %5169
      %5172 = vset.pattern.permute.xlu0 3
      %5173 = vperm.xlu0 %5172, %v4838
      %v5174 = vpop.permute.xlu0 %5173
      %v5176 = vmul.f32 %v5156, %v5162
      %v5177 = vmul.f32 %v5157, %v5166
      %v5178 = vmul.f32 %v5158, %v5170
      %v5179 = vmul.f32 %v5159, %v5174
      %5180 = vset.pattern.permute.xlu0 4
      %5181 = vperm.xlu0 %5180, %v4835
      %v5182 = vpop.permute.xlu0 %5181
      %5184 = vset.pattern.permute.xlu0 4
      %5185 = vperm.xlu0 %5184, %v4836
      %v5186 = vpop.permute.xlu0 %5185
      %5188 = vset.pattern.permute.xlu0 4
      %5189 = vperm.xlu0 %5188, %v4837
      %v5190 = vpop.permute.xlu0 %5189
      %5192 = vset.pattern.permute.xlu0 4
      %5193 = vperm.xlu0 %5192, %v4838
      %v5194 = vpop.permute.xlu0 %5193
      %v5196 = vadd.f32 %v5176, %v5182
      %v5197 = vadd.f32 %v5177, %v5186
      %v5198 = vadd.f32 %v5178, %v5190
      %v5199 = vadd.f32 %v5179, %v5194
      %5201 = vset.pattern.permute.xlu0 0
      %5202 = vperm.xlu0 %5201, %v4840
      %v5203 = vpop.permute.xlu0 %5202
      %5206 = vset.pattern.permute.xlu0 0
      %5207 = vperm.xlu0 %5206, %v4841
      %v5208 = vpop.permute.xlu0 %5207
      %5211 = vset.pattern.permute.xlu0 0
      %5212 = vperm.xlu0 %5211, %v4842
      %v5213 = vpop.permute.xlu0 %5212
      %5216 = vset.pattern.permute.xlu0 0
      %5217 = vperm.xlu0 %5216, %v4843
      %v5218 = vpop.permute.xlu0 %5217
      %5221 = vset.pattern.permute.xlu0 0
      %5222 = vperm.xlu0 %5221, %v4844
      %v5223 = vpop.permute.xlu0 %5222
      %5226 = vset.pattern.permute.xlu0 0
      %5227 = vperm.xlu0 %5226, %v4845
      %v5228 = vpop.permute.xlu0 %5227
      %5231 = vset.pattern.permute.xlu0 0
      %5232 = vperm.xlu0 %5231, %v4846
      %v5233 = vpop.permute.xlu0 %5232
      %5236 = vset.pattern.permute.xlu0 0
      %5237 = vperm.xlu0 %5236, %v4847
      %v5238 = vpop.permute.xlu0 %5237
      %v5241 = vsel %vm1992, %v4992, 0
      %v5244 = vsel %vm1992, %v4993, 0
      %v5247 = vsel %vm1992, %v4994, 0
      %v5250 = vsel %vm1992, %v4995, 0
      %v5253 = vsel %vm1992, %v4996, 0
      %v5256 = vsel %vm1992, %v4997, 0
      %v5259 = vsel %vm1992, %v4998, 0
      %v5262 = vsel %vm1992, %v4999, 0
      %5264 = vmatprep.subr.mxu0 0.0
      %5265 = vmatpush1.msra.mxu0 0.0
      %5266 = vmatprep.subr.mxu0 0.0
      %5267 = vmatpush1.msra.mxu0 0.0
      %5268 = vmatprep.subr.mxu0 0.0
      %5269 = vmatpush1.msra.mxu0 0.0
      %5270 = vmatprep.subr.mxu0 0.0
      %5271 = vmatpush1.msra.mxu0 0.0
      %5272 = vmatprep.subr.mxu0 0.0
      %5273 = vmatpush1.msra.mxu0 0.0
      %5274 = vmatprep.subr.mxu0 0.0
      %5275 = vmatpush1.msra.mxu0 0.0
      %5276 = vmatprep.subr.mxu0 0.0
      %5277 = vmatpush1.msra.mxu0 0.0
      %5278 = vmatprep.subr.mxu0 0.0
      %5279 = vmatpush1.msra.mxu0 0.0
      %5280 = vmatprep.subr.mxu0 0.0
      %5281 = vmatpush1.msra.mxu0 %v5199
      %5282 = vmatprep.subr.mxu0 0.0
      %5283 = vmatpush1.msra.mxu0 %v5198
      %5284 = vmatprep.subr.mxu0 0.0
      %5285 = vmatpush1.msra.mxu0 %v5197
      %5286 = vmatprep.subr.mxu0 0.0
      %5287 = vmatpush1.msra.mxu0 %v5196
      %5288 = vmatprep.subr.mxu0 0.0
      %5289 = vmatpush1.msra.mxu0 %v3065
      %5290 = vmatprep.subr.mxu0 0.0
      %5291 = vmatpush1.msra.mxu0 %v3064
      %5292 = vmatprep.subr.mxu0 0.0
      %5293 = vmatpush1.msra.mxu0 %v3063
      %5294 = vmatprep.subr.mxu0 0.0
      %5295 = vmatpush1.msra.mxu0 %v3062
      %5296 = vmatprep.subr.mxu0 0.0
      %5297 = vmatpush2.msra.mxu0 0.0
      %5298 = vmatprep.subr.mxu0 0.0
      %5299 = vmatpush2.msra.mxu0 0.0
      %5300 = vmatprep.subr.mxu0 0.0
      %5301 = vmatpush2.msra.mxu0 0.0
      %5302 = vmatprep.subr.mxu0 0.0
      %5303 = vmatpush2.msra.mxu0 0.0
      %5304 = vmatprep.subr.mxu0 0.0
      %5305 = vmatpush2.msra.mxu0 0.0
      %5306 = vmatprep.subr.mxu0 0.0
      %5307 = vmatpush2.msra.mxu0 0.0
      %5308 = vmatprep.subr.mxu0 0.0
      %5309 = vmatpush2.msra.mxu0 0.0
      %5310 = vmatprep.subr.mxu0 0.0
      %5311 = vmatpush2.msra.mxu0 0.0
      %5312 = vmatprep.subr.mxu0 0.0
      %5313 = vmatpush2.msra.mxu0 0.0
      %5314 = vmatprep.subr.mxu0 0.0
      %5315 = vmatpush2.msra.mxu0 0.0
      %5316 = vmatprep.subr.mxu0 0.0
      %5317 = vmatpush2.msra.mxu0 0.0
      %5318 = vmatprep.subr.mxu0 0.0
      %5319 = vmatpush2.msra.mxu0 0.0
      %5320 = vmatprep.subr.mxu0 0.0
      %5321 = vmatpush2.msra.mxu0 0.0
      %5322 = vmatprep.subr.mxu0 0.0
      %5323 = vmatpush2.msra.mxu0 0.0
      %5324 = vmatprep.subr.mxu0 0.0
      %5325 = vmatpush2.msra.mxu0 0.0
      %5326 = vmatprep.subr.mxu0 0.0
      %5327 = vmatpush2.msra.mxu0 0.0
      %5328 = vmatprep.mubr.f32.mxu0 0.0
      %5329 = vmatmul.mubr.f32.gmra.mxu0 %v5241
      %v5330 = vpop.f32.mrf.mxu0
      %v5331 = vadd.f32 %v5203, %v5330
      %v5332 = vpop.f32.mrf.mxu0
      %5333 = vmatprep.mubr.f32.mxu0 0.0
      %5334 = vmatmul.mubr.f32.gmra.mxu0 %v5244
      %v5335 = vpop.f32.mrf.mxu0
      %v5336 = vadd.f32 %v5208, %v5335
      %v5337 = vpop.f32.mrf.mxu0
      %5338 = vmatprep.mubr.f32.mxu0 0.0
      %5339 = vmatmul.mubr.f32.gmra.mxu0 %v5247
      %v5340 = vpop.f32.mrf.mxu0
      %v5341 = vadd.f32 %v5213, %v5340
      %v5342 = vpop.f32.mrf.mxu0
      %5343 = vmatprep.mubr.f32.mxu0 0.0
      %5344 = vmatmul.mubr.f32.gmra.mxu0 %v5250
      %v5345 = vpop.f32.mrf.mxu0
      %v5346 = vadd.f32 %v5218, %v5345
      %v5347 = vpop.f32.mrf.mxu0
      %5348 = vmatprep.mubr.f32.mxu0 0.0
      %5349 = vmatmul.mubr.f32.gmra.mxu0 %v5253
      %v5350 = vpop.f32.mrf.mxu0
      %v5351 = vadd.f32 %v5223, %v5350
      %v5352 = vpop.f32.mrf.mxu0
      %5353 = vmatprep.mubr.f32.mxu0 0.0
      %5354 = vmatmul.mubr.f32.gmra.mxu0 %v5256
      %v5355 = vpop.f32.mrf.mxu0
      %v5356 = vadd.f32 %v5228, %v5355
      %v5357 = vpop.f32.mrf.mxu0
      %5358 = vmatprep.mubr.f32.mxu0 0.0
      %5359 = vmatmul.mubr.f32.gmra.mxu0 %v5259
      %v5360 = vpop.f32.mrf.mxu0
      %v5361 = vadd.f32 %v5233, %v5360
      %v5362 = vpop.f32.mrf.mxu0
      %5363 = vmatprep.mubr.f32.mxu0 0.0
      %5364 = vmatmul.mubr.f32.gmra.mxu0 %v5262
      %v5365 = vpop.f32.mrf.mxu0
      %v5366 = vadd.f32 %v5238, %v5365
      %v5367 = vpop.f32.mrf.mxu0
      %5368 = vdwg.mxu0
      %v5369 = vmax.f32 %v5331, 0.0
      %v5370 = vmax.f32 %v5336, 0.0
      %v5371 = vmax.f32 %v5341, 0.0
      %v5372 = vmax.f32 %v5346, 0.0
      %v5373 = vmax.f32 %v5351, 0.0
      %v5374 = vmax.f32 %v5356, 0.0
      %v5375 = vmax.f32 %v5361, 0.0
      %v5376 = vmax.f32 %v5366, 0.0
      %5377 = vset.pattern.permute.xlu0 2
      %5378 = vperm.xlu0 %5377, %v4835
      %v5379 = vpop.permute.xlu0 %5378
      %5381 = vset.pattern.permute.xlu0 2
      %5382 = vperm.xlu0 %5381, %v4836
      %v5383 = vpop.permute.xlu0 %5382
      %5385 = vset.pattern.permute.xlu0 2
      %5386 = vperm.xlu0 %5385, %v4837
      %v5387 = vpop.permute.xlu0 %5386
      %5389 = vset.pattern.permute.xlu0 2
      %5390 = vperm.xlu0 %5389, %v4838
      %v5391 = vpop.permute.xlu0 %5390
      %v5394 = vsel %vm1992, %v5001, 0
      %v5397 = vsel %vm1992, %v5002, 0
      %v5400 = vsel %vm1992, %v5003, 0
      %v5403 = vsel %vm1992, %v5004, 0
      %5405 = vmatprep.subr.mxu0 0.0
      %5406 = vmatpush1.msra.mxu0 0.0
      %5407 = vmatprep.subr.mxu0 0.0
      %5408 = vmatpush1.msra.mxu0 0.0
      %5409 = vmatprep.subr.mxu0 0.0
      %5410 = vmatpush1.msra.mxu0 0.0
      %5411 = vmatprep.subr.mxu0 0.0
      %5412 = vmatpush1.msra.mxu0 0.0
      %5413 = vmatprep.subr.mxu0 0.0
      %5414 = vmatpush1.msra.mxu0 0.0
      %5415 = vmatprep.subr.mxu0 0.0
      %5416 = vmatpush1.msra.mxu0 0.0
      %5417 = vmatprep.subr.mxu0 0.0
      %5418 = vmatpush1.msra.mxu0 0.0
      %5419 = vmatprep.subr.mxu0 0.0
      %5420 = vmatpush1.msra.mxu0 0.0
      %5421 = vmatprep.subr.mxu0 0.0
      %5422 = vmatpush1.msra.mxu0 %v5376
      %5423 = vmatprep.subr.mxu0 0.0
      %5424 = vmatpush1.msra.mxu0 %v5375
      %5425 = vmatprep.subr.mxu0 0.0
      %5426 = vmatpush1.msra.mxu0 %v5374
      %5427 = vmatprep.subr.mxu0 0.0
      %5428 = vmatpush1.msra.mxu0 %v5373
      %5429 = vmatprep.subr.mxu0 0.0
      %5430 = vmatpush1.msra.mxu0 %v5372
      %5431 = vmatprep.subr.mxu0 0.0
      %5432 = vmatpush1.msra.mxu0 %v5371
      %5433 = vmatprep.subr.mxu0 0.0
      %5434 = vmatpush1.msra.mxu0 %v5370
      %5435 = vmatprep.subr.mxu0 0.0
      %5436 = vmatpush1.msra.mxu0 %v5369
      %5437 = vmatprep.subr.mxu0 0.0
      %5438 = vmatpush2.msra.mxu0 0.0
      %5439 = vmatprep.subr.mxu0 0.0
      %5440 = vmatpush2.msra.mxu0 0.0
      %5441 = vmatprep.subr.mxu0 0.0
      %5442 = vmatpush2.msra.mxu0 0.0
      %5443 = vmatprep.subr.mxu0 0.0
      %5444 = vmatpush2.msra.mxu0 0.0
      %5445 = vmatprep.subr.mxu0 0.0
      %5446 = vmatpush2.msra.mxu0 0.0
      %5447 = vmatprep.subr.mxu0 0.0
      %5448 = vmatpush2.msra.mxu0 0.0
      %5449 = vmatprep.subr.mxu0 0.0
      %5450 = vmatpush2.msra.mxu0 0.0
      %5451 = vmatprep.subr.mxu0 0.0
      %5452 = vmatpush2.msra.mxu0 0.0
      %5453 = vmatprep.subr.mxu0 0.0
      %5454 = vmatpush2.msra.mxu0 0.0
      %5455 = vmatprep.subr.mxu0 0.0
      %5456 = vmatpush2.msra.mxu0 0.0
      %5457 = vmatprep.subr.mxu0 0.0
      %5458 = vmatpush2.msra.mxu0 0.0
      %5459 = vmatprep.subr.mxu0 0.0
      %5460 = vmatpush2.msra.mxu0 0.0
      %5461 = vmatprep.subr.mxu0 0.0
      %5462 = vmatpush2.msra.mxu0 0.0
      %5463 = vmatprep.subr.mxu0 0.0
      %5464 = vmatpush2.msra.mxu0 0.0
      %5465 = vmatprep.subr.mxu0 0.0
      %5466 = vmatpush2.msra.mxu0 0.0
      %5467 = vmatprep.subr.mxu0 0.0
      %5468 = vmatpush2.msra.mxu0 0.0
      %5469 = vmatprep.mubr.f32.mxu0 0.0
      %5470 = vmatmul.mubr.f32.gmra.mxu0 %v5394
      %v5471 = vpop.f32.mrf.mxu0
      %v5472 = vadd.f32 %v5379, %v5471
      %v5473 = vpop.f32.mrf.mxu0
      %5474 = vmatprep.mubr.f32.mxu0 0.0
      %5475 = vmatmul.mubr.f32.gmra.mxu0 %v5397
      %v5476 = vpop.f32.mrf.mxu0
      %v5477 = vadd.f32 %v5383, %v5476
      %v5478 = vpop.f32.mrf.mxu0
      %5479 = vmatprep.mubr.f32.mxu0 0.0
      %5480 = vmatmul.mubr.f32.gmra.mxu0 %v5400
      %v5481 = vpop.f32.mrf.mxu0
      %v5482 = vadd.f32 %v5387, %v5481
      %v5483 = vpop.f32.mrf.mxu0
      %5484 = vmatprep.mubr.f32.mxu0 0.0
      %5485 = vmatmul.mubr.f32.gmra.mxu0 %v5403
      %v5486 = vpop.f32.mrf.mxu0
      %v5487 = vadd.f32 %v5391, %v5486
      %v5488 = vpop.f32.mrf.mxu0
      %5489 = vdwg.mxu0
      %v5490 = vsel %vm906, %v5472, 0.0
      %v5491 = vsel %vm906, %v5477, 0.0
      %v5492 = vadd.f32 %v5490, %v5491
      %v5493 = vsel %vm906, %v5482, 0.0
      %v5494 = vadd.f32 %v5492, %v5493
      %v5495 = vsel %vm906, %v5487, 0.0
      %v5496 = vadd.f32 %v5494, %v5495
      %v5497 = vrot.slane %v5496, 4
      %v5498 = vadd.f32 %v5496, %v5497
      %v5499 = vrot.slane %v5498, 2
      %v5500 = vadd.f32 %v5498, %v5499
      %v5501 = vrot.slane %v5500, 1
      %v5502 = vadd.f32 %v5500, %v5501
      %v5503 = vmul.f32 %v5502, %v1890
      %v5504 = vsub.f32 %v5472, %v5503
      %v5505 = vsub.f32 %v5477, %v5503
      %v5506 = vsub.f32 %v5482, %v5503
      %v5507 = vsub.f32 %v5487, %v5503
      %v5508 = vmul.f32 %v5504, %v5504
      %v5509 = vmul.f32 %v5505, %v5505
      %v5510 = vmul.f32 %v5506, %v5506
      %v5511 = vmul.f32 %v5507, %v5507
      %v5512 = vsel %vm906, %v5508, 0.0
      %v5513 = vsel %vm906, %v5509, 0.0
      %v5514 = vadd.f32 %v5512, %v5513
      %v5515 = vsel %vm906, %v5510, 0.0
      %v5516 = vadd.f32 %v5514, %v5515
      %v5517 = vsel %vm906, %v5511, 0.0
      %v5518 = vadd.f32 %v5516, %v5517
      %v5519 = vrot.slane %v5518, 4
      %v5520 = vadd.f32 %v5518, %v5519
      %v5521 = vrot.slane %v5520, 2
      %v5522 = vadd.f32 %v5520, %v5521
      %v5523 = vrot.slane %v5522, 1
      %v5524 = vadd.f32 %v5522, %v5523
      %v5525 = vmul.f32 %v5524, %v1890
      %v5526 = vadd.f32 %v5525, 1e-05
      %v5527 = vrsqrt.pop %v5526
      %v5528 = vmul.f32 %v5504, %v5527
      %v5529 = vmul.f32 %v5505, %v5527
      %v5530 = vmul.f32 %v5506, %v5527
      %v5531 = vmul.f32 %v5507, %v5527
      %5532 = vset.pattern.permute.xlu0 5
      %5533 = vperm.xlu0 %5532, %v4835
      %v5534 = vpop.permute.xlu0 %5533
      %5536 = vset.pattern.permute.xlu0 5
      %5537 = vperm.xlu0 %5536, %v4836
      %v5538 = vpop.permute.xlu0 %5537
      %5540 = vset.pattern.permute.xlu0 5
      %5541 = vperm.xlu0 %5540, %v4837
      %v5542 = vpop.permute.xlu0 %5541
      %5544 = vset.pattern.permute.xlu0 5
      %5545 = vperm.xlu0 %5544, %v4838
      %v5546 = vpop.permute.xlu0 %5545
      %v5548 = vmul.f32 %v5528, %v5534
      %v5549 = vmul.f32 %v5529, %v5538
      %v5550 = vmul.f32 %v5530, %v5542
      %v5551 = vmul.f32 %v5531, %v5546
      %5552 = vset.pattern.permute.xlu0 6
      %5553 = vperm.xlu0 %5552, %v4835
      %v5554 = vpop.permute.xlu0 %5553
      %5556 = vset.pattern.permute.xlu0 6
      %5557 = vperm.xlu0 %5556, %v4836
      %v5558 = vpop.permute.xlu0 %5557
      %5560 = vset.pattern.permute.xlu0 6
      %5561 = vperm.xlu0 %5560, %v4837
      %v5562 = vpop.permute.xlu0 %5561
      %5564 = vset.pattern.permute.xlu0 6
      %5565 = vperm.xlu0 %5564, %v4838
      %v5566 = vpop.permute.xlu0 %5565
      %v5568 = vadd.f32 %v5548, %v5554
      %v5569 = vadd.f32 %v5549, %v5558
      %v5570 = vadd.f32 %v5550, %v5562
      %v5571 = vadd.f32 %v5551, %v5566
      %v5572 = vadd.f32 %v3062, %v5568
      %v5573 = vadd.f32 %v3063, %v5569
      %v5574 = vadd.f32 %v3064, %v5570
      %v5575 = vadd.f32 %v3065, %v5571
      %5576 = vst.msk [vmem:[%s549] sm:$0xff] %vm1091, %v4830
      %5577 = vst.msk [vmem:[%s549 + $0x8] sm:$0xff] %vm1091, %v4831
      %5578 = vst.msk [vmem:[%s549 + $0x10] sm:$0xff] %vm1091, %v4832
      %5579 = vst.msk [vmem:[%s549 + $0x18] sm:$0xff] %vm1091, %v4833
      %5580 = vst.msk [vmem:[%s554] sm:$0xff] %vm906, %v5572
      %5581 = vst.msk [vmem:[%s554 + $0x8] sm:$0xff] %vm906, %v5573
      %5582 = vst.msk [vmem:[%s554 + $0x10] sm:$0xff] %vm906, %v5574
      %5583 = vst.msk [vmem:[%s554 + $0x18] sm:$0xff] %vm906, %v5575
      %p5584 = scmp.lt.s32.totalorder %s28, 1
      %s5585 = scalar_select %p5584, %s28, 1
      %s5586 = smul.addr %s5585, 4
      %s5587 = smul.addr %s5586, 8
      %s5588 = scalar_lea.vmem %s15, %s5587
      %p5589 = scmp.lt.s32.totalorder %s28, 1
      %s5590 = scalar_select %p5589, %s28, 1
      %s5591 = smul.addr %s5590, 4
      %s5592 = smul.addr %s5591, 8
      %s5593 = scalar_lea.vmem %s16, %s5592
      // Predicated region
      $region81: #{attentional_gnn_fine.1} parent=79 // pred_check
        %p5594 = pneg %p371
      $region82: #{attentional_gnn_fine.1} parent=79 // pred_check_branch
        %5596 = sbr.rel (%p5594) target = $region84
      $region83: #{attentional_gnn_fine.1} parent=79 // pred_region
        _
      $region84: #{attentional_gnn_fine.1} parent=79 // pred_fallthru
        _
      // Predicated region
      $region85: #{attentional_gnn_fine.1} parent=79 // pred_check
        %p5597 = pneg %p397
      $region86: #{attentional_gnn_fine.1} parent=79 // pred_check_branch
        %5599 = sbr.rel (%p5597) target = $region88
      $region87: #{attentional_gnn_fine.1} parent=79 // pred_region
        _
      $region88: #{attentional_gnn_fine.1} parent=79 // pred_fallthru
        _
    $region80: #{attentional_gnn_fine.1} parent=5 // pred_fallthru
      _
    %p5600 = scmp.le.s32.totalorder 2, %s23
    // Predicated region
    $region89: #{attentional_gnn_fine.1} parent=5 // pred_check
      %p5601 = pneg %p5600
    $region90: #{attentional_gnn_fine.1} parent=5 // pred_check_branch
      %5603 = sbr.rel (%p5601) target = $region92
    $region91: #{attentional_gnn_fine.1} parent=5 // pred_region
      %s5604 = ssub.s32 %s23, 2
      // Predicated region
      $region93: #{attentional_gnn_fine.1} parent=91 // pred_check
        %p5605 = pneg %p377
      $region94: #{attentional_gnn_fine.1} parent=91 // pred_check_branch
        %5607 = sbr.rel (%p5605) target = $region96
      $region95: #{attentional_gnn_fine.1} parent=91 // pred_region
        %p5608 = scmp.lt.s32.totalorder %s29, 1
        %s5609 = scalar_select %p5608, %s29, 1
        %s5610 = smul.addr %s5609, 4
        %s5611 = smul.addr %s5610, 8
        %s5612 = scalar_lea.vmem %s15, %s5611
      $region96: #{attentional_gnn_fine.1} parent=91 // pred_fallthru
        _
      // Predicated region
      $region97: #{attentional_gnn_fine.1} parent=91 // pred_check
        %p5613 = pneg %p403
      $region98: #{attentional_gnn_fine.1} parent=91 // pred_check_branch
        %5615 = sbr.rel (%p5613) target = $region100
      $region99: #{attentional_gnn_fine.1} parent=91 // pred_region
        %p5616 = scmp.lt.s32.totalorder %s29, 1
        %s5617 = scalar_select %p5616, %s29, 1
        %s5618 = smul.addr %s5617, 4
        %s5619 = smul.addr %s5618, 8
        %s5620 = scalar_lea.vmem %s16, %s5619
      $region100: #{attentional_gnn_fine.1} parent=91 // pred_fallthru
        _
    $region92: #{attentional_gnn_fine.1} parent=5 // pred_fallthru
      _
  $region6: #{attentional_gnn_fine.1} parent=0 // loop_footer
    %s27 = sadd.s32 1, %s23
  $region7: #{attentional_gnn_fine.1} parent=0 // loop_footer_branch
    %22 = sbr.rel target = $region3
  $region8: #{attentional_gnn_fine.1} parent=0 // loop_exit
    _

</llo_original>
